<compile_context>
chip_gen: v5e
topology: v5e:2x2
jax: 0.10.0
libtpu: 0.0.40
codegen_flags: <defaults>
</compile_context>

<pallas_src>
import functools

import jax
import jax.numpy as jnp
from jax.experimental import pallas as pl
from jax.experimental.pallas import tpu as pltpu

_NEG_BIG = -1e30   # large-but-finite mask value (avoids -inf arithmetic / NaNs)
_OUT_LANES = 128   # lane-dense output slab width


# ----------------------------------------------------------------------------
# Kernel: fused linear -> softmax(f32) -> top-k
# ----------------------------------------------------------------------------
def _gate_kernel(x_ref, wt_ref, wout_ref, iout_ref, *, n_experts, topk,
                 route_scale):
    # x_ref    : (TM, D)        token tile (bf16)
    # wt_ref   : (D, E_pad)     gate weight, pre-transposed & lane-padded
    # wout_ref : (TM, 128)      routing weights slab (x dtype), first topk lanes valid
    # iout_ref : (TM, 128)      expert index slab (int32), first topk lanes valid
    x = x_ref[...]
    wt = wt_ref[...]

    # scores = x @ W^T with f32 accumulation on the MXU (plain (1,)x(0,) matmul)
    scores = jax.lax.dot_general(
        x, wt, (((1,), (0,)), ((), ())), preferred_element_type=jnp.float32)
    tm, e_pad = scores.shape

    col = jax.lax.broadcasted_iota(jnp.int32, (tm, e_pad), 1)
    valid = col < n_experts
    scores = jnp.where(valid, scores, _NEG_BIG)

    # f32 softmax statistics (matches torch .softmax(dim=-1, dtype=float32)).
    # Padded columns contribute exp(_NEG_BIG - m) == 0 to the denominator.
    m = jnp.max(scores, axis=-1, keepdims=True)         # (TM, 1)
    e = jnp.exp(scores - m)
    denom = jnp.sum(e, axis=-1, keepdims=True)          # (TM, 1)

    # Iterative top-k directly on the masked scores (softmax is monotone per
    # row, so indices are identical to top-k on the probabilities). Ties
    # resolve to the lowest index, matching jax.lax.top_k / torch.topk.
    work = scores
    vals = []
    idxs = []
    for _ in range(topk):
        mval = jnp.max(work, axis=-1, keepdims=True)                   # (TM, 1)
        idx = jnp.min(jnp.where(work == mval, col, e_pad),
                      axis=-1, keepdims=True)                          # (TM, 1)
        vals.append(jnp.exp(mval - m))     # un-normalized softmax numerator
        idxs.append(idx)
        work = jnp.where(col == idx, _NEG_BIG, work)                   # remove it

    num = jnp.concatenate(vals, axis=-1)                               # (TM, topk)
    weights = num * pl.reciprocal(denom, approx=True) * route_scale
    indices = jnp.concatenate(idxs, axis=-1).astype(jnp.int32)         # (TM, topk)

    # Lane-dense (TM, 128) output slabs: zero-fill then store the topk lanes.
    wout_ref[...] = jnp.zeros_like(wout_ref)
    iout_ref[...] = jnp.zeros_like(iout_ref)
    wout_ref[:, :topk] = weights.astype(wout_ref.dtype)
    iout_ref[:, :topk] = indices


# ----------------------------------------------------------------------------
# One-time weight preparation (hoisted out of the per-call path)
# ----------------------------------------------------------------------------
def prepare_gate_weight(weight):
    """(E, D) gate weight -> (D, E_pad) transposed, lane-dense (E_pad % 128 == 0)."""
    e, d = weight.shape
    e_pad = max(128, ((e + 127) // 128) * 128)
    w_t = jnp.zeros((d, e_pad), weight.dtype).at[:, :e].set(weight.T)
    return w_t


# ----------------------------------------------------------------------------
# Wrapper
# ----------------------------------------------------------------------------
def gate_forward(x, w_t, *, n_experts, topk, route_scale=1.0, tm=256):
    """Gate forward.

    x:   (N, D) tokens.
    w_t: (D, E_pad) pre-transposed / padded gate weight (prepare_gate_weight).
    Returns (routing weights (N, topk) in x.dtype, expert indices (N, topk) int32).
    """
    n, d = x.shape
    d2, e_pad = w_t.shape
    assert d == d2, "weight inner dim must match x"
    assert n_experts <= e_pad and e_pad % 128 == 0
    assert topk <= _OUT_LANES

    n_tiles = pl.cdiv(n, tm)

    kernel = functools.partial(
        _gate_kernel, n_experts=n_experts, topk=topk, route_scale=route_scale)

    in_itemsize = jnp.dtype(x.dtype).itemsize
    w_itemsize = jnp.dtype(w_t.dtype).itemsize

    # Explicit scoped-VMEM budget (keeps v5e's 16 MiB default from binding):
    #   x tile double-buffered + weight (double-buffered, conservative) +
    #   output slabs double-buffered + f32/int32 score intermediates.
    vmem_bytes = 2 * tm * d * in_itemsize
    vmem_bytes += 2 * e_pad * d * w_itemsize
    vmem_bytes += 2 * tm * _OUT_LANES * (in_itemsize + 4)
    vmem_bytes += 6 * tm * e_pad * 4
    vmem_limit = min(100 * 1024 * 1024,
                     max(32 * 1024 * 1024, int(vmem_bytes * 1.5) + (4 << 20)))

    flops = 2 * n_tiles * tm * d * e_pad
    bytes_accessed = (n_tiles * tm * d + e_pad * d) * in_itemsize \
        + n * _OUT_LANES * (in_itemsize + 4)

    w_slab, i_slab = pl.pallas_call(
        kernel,
        grid=(n_tiles,),
        in_specs=[
            pl.BlockSpec((tm, d), lambda i: (i, 0)),        # token row tile
            pl.BlockSpec((d, e_pad), lambda i: (0, 0)),     # weight, VMEM-resident
        ],
        out_specs=[
            pl.BlockSpec((tm, _OUT_LANES), lambda i: (i, 0)),
            pl.BlockSpec((tm, _OUT_LANES), lambda i: (i, 0)),
        ],
        out_shape=(
            jax.ShapeDtypeStruct((n, _OUT_LANES), x.dtype),
            jax.ShapeDtypeStruct((n, _OUT_LANES), jnp.int32),
        ),
        compiler_params=pltpu.CompilerParams(
            dimension_semantics=("parallel",),
            vmem_limit_bytes=vmem_limit),
        cost_estimate=pl.CostEstimate(
            flops=flops,
            transcendentals=n_tiles * tm * e_pad,
            bytes_accessed=bytes_accessed),
    )(x, w_t)

    return w_slab[:, :topk], i_slab[:, :topk]


# ----------------------------------------------------------------------------
# Pure-JAX reference (torch semantics for the default config)
# ----------------------------------------------------------------------------
def gate_reference(x, weight, *, topk, route_scale=1.0):
    scores = jax.lax.dot_general(
        x, weight, (((1,), (1,)), ((), ())), preferred_element_type=jnp.float32)
    probs = jax.nn.softmax(scores, axis=-1)          # f32 softmax
    vals, idxs = jax.lax.top_k(probs, topk)          # topk on original_scores
    return (vals * route_scale).astype(x.dtype), idxs


# ----------------------------------------------------------------------------
# Main
# ----------------------------------------------------------------------------
if __name__ == "__main__":
    # Scaled-down-but-consistent Gate config (defaults: softmax, 1 group, no bias)
    DIM = 256          # model dim (down from 2048)
    N_EXPERTS = 64     # n_routed_experts
    TOPK = 6           # n_activated_experts
    ROUTE_SCALE = 1.0
    N_TOKENS = 384     # not a multiple of TM=256 -> exercises the ragged last block

    key = jax.random.PRNGKey(0)
    kx, kw = jax.random.split(key)
    x = jax.random.normal(kx, (N_TOKENS, DIM), jnp.float32).astype(jnp.bfloat16)
    weight = (0.02 * jax.random.normal(kw, (N_EXPERTS, DIM), jnp.float32)
              ).astype(jnp.bfloat16)

    # Weight pad + transpose hoisted out of the per-call (jitted) path.
    w_t = prepare_gate_weight(weight)

    fwd = jax.jit(functools.partial(gate_forward, n_experts=N_EXPERTS,
                                    topk=TOPK, route_scale=ROUTE_SCALE))
    w_out, i_out = fwd(x, w_t)
    w_out, i_out = jax.block_until_ready((w_out, i_out))

    w_ref, i_ref = gate_reference(x, weight, topk=TOPK, route_scale=ROUTE_SCALE)
    w_ref, i_ref = jax.block_until_ready((w_ref, i_ref))

    assert w_out.shape == (N_TOKENS, TOPK) and w_out.dtype == x.dtype
    assert i_out.shape == (N_TOKENS, TOPK) and i_out.dtype == jnp.int32
    assert bool(jnp.all(jnp.isfinite(w_out.astype(jnp.float32))))
    assert bool(jnp.all((i_out >= 0) & (i_out < N_EXPERTS)))

    # Indices: exact parity with lax.top_k expected; tolerate tie-order-only
    # differences (kernel ranks f32 scores, reference ranks rounded probs).
    if not bool(jnp.array_equal(i_out, i_ref.astype(jnp.int32))):
        scores_ref = jax.lax.dot_general(
            x, weight, (((1,), (1,)), ((), ())),
            preferred_element_type=jnp.float32)
        probs_ref = jax.nn.softmax(scores_ref, axis=-1)
        gathered = jnp.take_along_axis(probs_ref, i_out, axis=-1)
        assert bool(jnp.allclose(gathered, w_ref.astype(jnp.float32),
                                 atol=1e-6, rtol=1e-6))

    assert bool(jnp.allclose(w_out.astype(jnp.float32), w_ref.astype(jnp.float32),
                             atol=2e-2, rtol=2e-2))
    print("KERNEL_OK")
</pallas_src>

<mosaic_0001>
module attributes {stable_mosaic.version = 11 : i64} {
  func.func @_gate_kernel(%arg0: i32, %arg1: memref<256x256xbf16, #tpu.memory_space<vmem>>, %arg2: memref<256x128xbf16, #tpu.memory_space<vmem>>, %arg3: memref<256x128xbf16, #tpu.memory_space<vmem>>, %arg4: memref<256x128xi32, #tpu.memory_space<vmem>>) attributes {dimension_semantics = [#tpu.dimension_semantics<parallel>], iteration_bounds = array<i64: 2>, scalar_prefetch = 0 : i64, scratch_operands = 0 : i64, tpu.core_type = #tpu.core_type<tc>, window_params = [{transform_indices = @transform_0, window_bounds = array<i64: 256, 256>}, {pipeline_mode = #tpu.pipeline_mode<synchronous>, transform_indices = @transform_1, window_bounds = array<i64: 256, 128>}, {transform_indices = @transform_2, window_bounds = array<i64: 256, 128>}, {transform_indices = @transform_3, window_bounds = array<i64: 256, 128>}]} {
    %c0 = arith.constant 0 : index
    %c0_0 = arith.constant 0 : index
    %0 = vector.load %arg1[%c0, %c0_0] : memref<256x256xbf16, #tpu.memory_space<vmem>>, vector<256x256xbf16>
    %c0_1 = arith.constant 0 : index
    %c0_2 = arith.constant 0 : index
    %1 = vector.load %arg2[%c0_1, %c0_2] : memref<256x128xbf16, #tpu.memory_space<vmem>>, vector<256x128xbf16>
    %cst = arith.constant dense<0.000000e+00> : vector<256x128xf32>
    %2 = tpu.matmul %0, %1, %cst {dimension_numbers = #tpu.dot_dimension_numbers<[1], [0], [0], [1], [0, 0, 1, 1], [], []>} : vector<256x256xbf16>, vector<256x128xbf16>, vector<256x128xf32> -> vector<256x128xf32>
    %3 = tpu.iota {dimensions = array<i32: 1>} : vector<256x128xi32>
    %c64_i32 = arith.constant 64 : i32
    %4 = vector.broadcast %c64_i32 : i32 to vector<256x128xi32>
    %5 = arith.cmpi slt, %3, %4 : vector<256x128xi32>
    %cst_3 = arith.constant -1.000000e+30 : f32
    %6 = vector.broadcast %cst_3 : f32 to vector<256x128xf32>
    %7 = arith.select %5, %2, %6 : vector<256x128xi1>, vector<256x128xf32>
    %cst_4 = arith.constant dense<0xFF800000> : vector<256xf32>
    %8 = vector.multi_reduction <maximumf>, %7, %cst_4 [1] : vector<256x128xf32> to vector<256xf32>
    %9 = vector.shape_cast %8 : vector<256xf32> to vector<256x1xf32>
    %10 = vector.broadcast %9 : vector<256x1xf32> to vector<256x128xf32>
    %11 = arith.subf %7, %10 : vector<256x128xf32>
    %12 = math.exp %11 : vector<256x128xf32>
    %cst_5 = arith.constant dense<0.000000e+00> : vector<256xf32>
    %13 = vector.multi_reduction <add>, %12, %cst_5 [1] : vector<256x128xf32> to vector<256xf32>
    %14 = vector.shape_cast %13 : vector<256xf32> to vector<256x1xf32>
    %cst_6 = arith.constant dense<0xFF800000> : vector<256xf32>
    %15 = vector.multi_reduction <maximumf>, %7, %cst_6 [1] : vector<256x128xf32> to vector<256xf32>
    %16 = vector.shape_cast %15 : vector<256xf32> to vector<256x1xf32>
    %17 = vector.broadcast %16 : vector<256x1xf32> to vector<256x128xf32>
    %18 = arith.cmpf oeq, %7, %17 : vector<256x128xf32>
    %c128_i32 = arith.constant 128 : i32
    %19 = vector.broadcast %c128_i32 : i32 to vector<256x128xi32>
    %20 = arith.select %18, %3, %19 : vector<256x128xi1>, vector<256x128xi32>
    %cst_7 = arith.constant dense<2147483647> : vector<256xi32>
    %21 = vector.multi_reduction <minsi>, %20, %cst_7 [1] : vector<256x128xi32> to vector<256xi32>
    %22 = vector.shape_cast %21 : vector<256xi32> to vector<256x1xi32>
    %23 = arith.subf %16, %9 : vector<256x1xf32>
    %24 = math.exp %23 : vector<256x1xf32>
    %25 = vector.broadcast %22 : vector<256x1xi32> to vector<256x128xi32>
    %26 = arith.cmpi eq, %3, %25 : vector<256x128xi32>
    %cst_8 = arith.constant -1.000000e+30 : f32
    %27 = vector.broadcast %cst_8 : f32 to vector<256x128xf32>
    %28 = arith.select %26, %27, %7 : vector<256x128xi1>, vector<256x128xf32>
    %cst_9 = arith.constant dense<0xFF800000> : vector<256xf32>
    %29 = vector.multi_reduction <maximumf>, %28, %cst_9 [1] : vector<256x128xf32> to vector<256xf32>
    %30 = vector.shape_cast %29 : vector<256xf32> to vector<256x1xf32>
    %31 = vector.broadcast %30 : vector<256x1xf32> to vector<256x128xf32>
    %32 = arith.cmpf oeq, %28, %31 : vector<256x128xf32>
    %c128_i32_10 = arith.constant 128 : i32
    %33 = vector.broadcast %c128_i32_10 : i32 to vector<256x128xi32>
    %34 = arith.select %32, %3, %33 : vector<256x128xi1>, vector<256x128xi32>
    %cst_11 = arith.constant dense<2147483647> : vector<256xi32>
    %35 = vector.multi_reduction <minsi>, %34, %cst_11 [1] : vector<256x128xi32> to vector<256xi32>
    %36 = vector.shape_cast %35 : vector<256xi32> to vector<256x1xi32>
    %37 = arith.subf %30, %9 : vector<256x1xf32>
    %38 = math.exp %37 : vector<256x1xf32>
    %39 = vector.broadcast %36 : vector<256x1xi32> to vector<256x128xi32>
    %40 = arith.cmpi eq, %3, %39 : vector<256x128xi32>
    %cst_12 = arith.constant -1.000000e+30 : f32
    %41 = vector.broadcast %cst_12 : f32 to vector<256x128xf32>
    %42 = arith.select %40, %41, %28 : vector<256x128xi1>, vector<256x128xf32>
    %cst_13 = arith.constant dense<0xFF800000> : vector<256xf32>
    %43 = vector.multi_reduction <maximumf>, %42, %cst_13 [1] : vector<256x128xf32> to vector<256xf32>
    %44 = vector.shape_cast %43 : vector<256xf32> to vector<256x1xf32>
    %45 = vector.broadcast %44 : vector<256x1xf32> to vector<256x128xf32>
    %46 = arith.cmpf oeq, %42, %45 : vector<256x128xf32>
    %c128_i32_14 = arith.constant 128 : i32
    %47 = vector.broadcast %c128_i32_14 : i32 to vector<256x128xi32>
    %48 = arith.select %46, %3, %47 : vector<256x128xi1>, vector<256x128xi32>
    %cst_15 = arith.constant dense<2147483647> : vector<256xi32>
    %49 = vector.multi_reduction <minsi>, %48, %cst_15 [1] : vector<256x128xi32> to vector<256xi32>
    %50 = vector.shape_cast %49 : vector<256xi32> to vector<256x1xi32>
    %51 = arith.subf %44, %9 : vector<256x1xf32>
    %52 = math.exp %51 : vector<256x1xf32>
    %53 = vector.broadcast %50 : vector<256x1xi32> to vector<256x128xi32>
    %54 = arith.cmpi eq, %3, %53 : vector<256x128xi32>
    %cst_16 = arith.constant -1.000000e+30 : f32
    %55 = vector.broadcast %cst_16 : f32 to vector<256x128xf32>
    %56 = arith.select %54, %55, %42 : vector<256x128xi1>, vector<256x128xf32>
    %cst_17 = arith.constant dense<0xFF800000> : vector<256xf32>
    %57 = vector.multi_reduction <maximumf>, %56, %cst_17 [1] : vector<256x128xf32> to vector<256xf32>
    %58 = vector.shape_cast %57 : vector<256xf32> to vector<256x1xf32>
    %59 = vector.broadcast %58 : vector<256x1xf32> to vector<256x128xf32>
    %60 = arith.cmpf oeq, %56, %59 : vector<256x128xf32>
    %c128_i32_18 = arith.constant 128 : i32
    %61 = vector.broadcast %c128_i32_18 : i32 to vector<256x128xi32>
    %62 = arith.select %60, %3, %61 : vector<256x128xi1>, vector<256x128xi32>
    %cst_19 = arith.constant dense<2147483647> : vector<256xi32>
    %63 = vector.multi_reduction <minsi>, %62, %cst_19 [1] : vector<256x128xi32> to vector<256xi32>
    %64 = vector.shape_cast %63 : vector<256xi32> to vector<256x1xi32>
    %65 = arith.subf %58, %9 : vector<256x1xf32>
    %66 = math.exp %65 : vector<256x1xf32>
    %67 = vector.broadcast %64 : vector<256x1xi32> to vector<256x128xi32>
    %68 = arith.cmpi eq, %3, %67 : vector<256x128xi32>
    %cst_20 = arith.constant -1.000000e+30 : f32
    %69 = vector.broadcast %cst_20 : f32 to vector<256x128xf32>
    %70 = arith.select %68, %69, %56 : vector<256x128xi1>, vector<256x128xf32>
    %cst_21 = arith.constant dense<0xFF800000> : vector<256xf32>
    %71 = vector.multi_reduction <maximumf>, %70, %cst_21 [1] : vector<256x128xf32> to vector<256xf32>
    %72 = vector.shape_cast %71 : vector<256xf32> to vector<256x1xf32>
    %73 = vector.broadcast %72 : vector<256x1xf32> to vector<256x128xf32>
    %74 = arith.cmpf oeq, %70, %73 : vector<256x128xf32>
    %c128_i32_22 = arith.constant 128 : i32
    %75 = vector.broadcast %c128_i32_22 : i32 to vector<256x128xi32>
    %76 = arith.select %74, %3, %75 : vector<256x128xi1>, vector<256x128xi32>
    %cst_23 = arith.constant dense<2147483647> : vector<256xi32>
    %77 = vector.multi_reduction <minsi>, %76, %cst_23 [1] : vector<256x128xi32> to vector<256xi32>
    %78 = vector.shape_cast %77 : vector<256xi32> to vector<256x1xi32>
    %79 = arith.subf %72, %9 : vector<256x1xf32>
    %80 = math.exp %79 : vector<256x1xf32>
    %81 = vector.broadcast %78 : vector<256x1xi32> to vector<256x128xi32>
    %82 = arith.cmpi eq, %3, %81 : vector<256x128xi32>
    %cst_24 = arith.constant -1.000000e+30 : f32
    %83 = vector.broadcast %cst_24 : f32 to vector<256x128xf32>
    %84 = arith.select %82, %83, %70 : vector<256x128xi1>, vector<256x128xf32>
    %cst_25 = arith.constant dense<0xFF800000> : vector<256xf32>
    %85 = vector.multi_reduction <maximumf>, %84, %cst_25 [1] : vector<256x128xf32> to vector<256xf32>
    %86 = vector.shape_cast %85 : vector<256xf32> to vector<256x1xf32>
    %87 = vector.broadcast %86 : vector<256x1xf32> to vector<256x128xf32>
    %88 = arith.cmpf oeq, %84, %87 : vector<256x128xf32>
    %c128_i32_26 = arith.constant 128 : i32
    %89 = vector.broadcast %c128_i32_26 : i32 to vector<256x128xi32>
    %90 = arith.select %88, %3, %89 : vector<256x128xi1>, vector<256x128xi32>
    %cst_27 = arith.constant dense<2147483647> : vector<256xi32>
    %91 = vector.multi_reduction <minsi>, %90, %cst_27 [1] : vector<256x128xi32> to vector<256xi32>
    %92 = vector.shape_cast %91 : vector<256xi32> to vector<256x1xi32>
    %93 = arith.subf %86, %9 : vector<256x1xf32>
    %94 = math.exp %93 : vector<256x1xf32>
    %95 = tpu.concatenate %24, %38, %52, %66, %80, %94 in 1 : vector<256x1xf32>, vector<256x1xf32>, vector<256x1xf32>, vector<256x1xf32>, vector<256x1xf32>, vector<256x1xf32> -> vector<256x6xf32>
    %96 = tpu.reciprocal %14 {approx = true} : vector<256x1xf32> -> vector<256x1xf32>
    %97 = vector.broadcast %96 : vector<256x1xf32> to vector<256x6xf32>
    %98 = arith.mulf %95, %97 : vector<256x6xf32>
    %cst_28 = arith.constant 1.000000e+00 : f32
    %99 = vector.broadcast %cst_28 : f32 to vector<256x6xf32>
    %100 = arith.mulf %98, %99 : vector<256x6xf32>
    %101 = tpu.concatenate %22, %36, %50, %64, %78, %92 in 1 : vector<256x1xi32>, vector<256x1xi32>, vector<256x1xi32>, vector<256x1xi32>, vector<256x1xi32>, vector<256x1xi32> -> vector<256x6xi32>
    %cst_29 = arith.constant 0.000000e+00 : bf16
    %102 = vector.broadcast %cst_29 : bf16 to vector<256x128xbf16>
    %c0_30 = arith.constant 0 : index
    %c0_31 = arith.constant 0 : index
    %103 = vector.load %arg3[%c0_30, %c0_31] : memref<256x128xbf16, #tpu.memory_space<vmem>>, vector<256x128xbf16>
    tpu.vector_store %arg3[%c0_30, %c0_31], %102 {strides = array<i32>} : memref<256x128xbf16, #tpu.memory_space<vmem>>, vector<256x128xbf16>,
    %c0_i32 = arith.constant 0 : i32
    %104 = vector.broadcast %c0_i32 : i32 to vector<256x128xi32>
    %c0_32 = arith.constant 0 : index
    %c0_33 = arith.constant 0 : index
    %105 = vector.load %arg4[%c0_32, %c0_33] : memref<256x128xi32, #tpu.memory_space<vmem>>, vector<256x128xi32>
    tpu.vector_store %arg4[%c0_32, %c0_33], %104 {strides = array<i32>} : memref<256x128xi32, #tpu.memory_space<vmem>>, vector<256x128xi32>,
    %106 = arith.truncf %100 : vector<256x6xf32> to vector<256x6xbf16>
    %c0_34 = arith.constant 0 : index
    %c0_35 = arith.constant 0 : index
    %107 = vector.load %arg3[%c0_34, %c0_35] : memref<256x128xbf16, #tpu.memory_space<vmem>>, vector<256x6xbf16>
    tpu.vector_store %arg3[%c0_34, %c0_35], %106 {strides = array<i32>} : memref<256x128xbf16, #tpu.memory_space<vmem>>, vector<256x6xbf16>,
    %c0_36 = arith.constant 0 : index
    %c0_37 = arith.constant 0 : index
    %108 = vector.load %arg4[%c0_36, %c0_37] : memref<256x128xi32, #tpu.memory_space<vmem>>, vector<256x6xi32>
    tpu.vector_store %arg4[%c0_36, %c0_37], %101 {strides = array<i32>} : memref<256x128xi32, #tpu.memory_space<vmem>>, vector<256x6xi32>,
    return
  }
  func.func @transform_0(%arg0: i32) -> (i32, i32) {
    %c0_i32 = arith.constant 0 : i32
    %c0_i32_0 = arith.constant 0 : i32
    return %arg0, %c0_i32 : i32, i32
  }
  func.func @transform_1(%arg0: i32) -> (i32, i32) {
    %c0_i32 = arith.constant 0 : i32
    %c0_i32_0 = arith.constant 0 : i32
    %c0_i32_1 = arith.constant 0 : i32
    return %c0_i32, %c0_i32_0 : i32, i32
  }
  func.func @transform_2(%arg0: i32) -> (i32, i32) {
    %c0_i32 = arith.constant 0 : i32
    %c0_i32_0 = arith.constant 0 : i32
    return %arg0, %c0_i32 : i32, i32
  }
  func.func @transform_3(%arg0: i32) -> (i32, i32) {
    %c0_i32 = arith.constant 0 : i32
    %c0_i32_0 = arith.constant 0 : i32
    return %arg0, %c0_i32 : i32, i32
  }
}

</mosaic_0001>

<llo_original>
// kernel: gate_forward.1
$region0: #{gate_forward.1}
  #allocation0 [shape = 'u32[]', space=smem, size = 0x4, offset = 0x4, fixed_abs, tag = 'smem constant byte address 0x4 - core index']
  #allocation1 [shape = 'u32[72,128]{1,0:T(1,128)}', space=vmem, size = 0x9000, scoped, tag = 'internal scratch']
  %s0 = inlined_call_operand.hbm [shape: bf16[384,256], index: 0, kind: input, shape index: {}]
  %s1 = inlined_call_operand.hbm [shape: bf16[256,128], index: 1, kind: input, shape index: {}]
  %s2 = inlined_call_operand.vmem [shape: bf16[384,128], index: 2, kind: output, shape index: {0}]
  %s3 = inlined_call_operand.vmem [shape: s32[384,128], index: 3, kind: output, shape index: {1}]
  %4 = xla_tuple %s2, %s3
  %s5 = sld [smem:[#allocation0]]
  $region149: #{gate_forward.1} parent=0
    _
  %s7 = ssub.s32 1, %s5
  %s8 = scalar_select 0, %s7, %s5
  $region1: #{gate_forward.1} parent=0
    #allocation2 [shape = 'u8[262144]{0}', space=vmem, size = 0x40000, scoped, tag = 'input window, operand 0']
    #allocation3 [shape = 's32[2]{0}', space=sflag, size = 0x8, scoped, tag = 'scoped memory for gate_forward.1']
    #allocation4 [shape = 'u8[65536]{0}', space=vmem, size = 0x10000, scoped, tag = 'input window, operand 1, single buffered']
    #allocation5 [shape = 's32[1]{0}', space=sflag, size = 0x4, scoped, tag = 'scoped memory for gate_forward.1']
    #allocation6 [shape = 'u8[131072]{0}', space=vmem, size = 0x20000, scoped, tag = 'output window, operand 0']
    #allocation7 [shape = 'u8[262144]{0}', space=vmem, size = 0x40000, scoped, tag = 'output window, operand 1']
    %9 = vsyncpa [#allocation3], 0
    %s10 = scalar_lea.sflag [#allocation3], 1
    %11 = vsyncpa %s10, 0
    %12 = vsyncpa [#allocation5], 0
    loop: start=0, step=1, limit=4
    $region2: #{gate_forward.1} parent=1 // loop_pre_header
      _
    $region3: #{gate_forward.1} parent=1 // loop_header
      %s14 = sphi 0, %s18
      %p15 = scmp.ge.s32.totalorder %s14, 4
      %s24 = sphi 0, %s26
      %s27 = sphi 0, %s24
      %s28 = sphi 0, %s27
      %s44 = sphi 0, %s28
      %s48 = sphi 0, %s48
      %s50 = sphi 0, %s48
      %s51 = sphi 0, %s50
      %s65 = sphi 0, %s51
      %s71 = sphi 0, %s73
      %s74 = sphi 0, %s71
      %s75 = sphi 0, %s74
      %s91 = sphi 0, %s75
      %s97 = sphi 0, %s99
      %s100 = sphi 0, %s97
      %s101 = sphi 0, %s100
      %s117 = sphi 0, %s101
    $region4: #{gate_forward.1} parent=1 // loop_header_branch
      %17 = sbr.rel (%p15) target = $region8
    $region5: #{gate_forward.1} parent=1 // loop_body
      %s19 = ssub.s32 %s14, 1
      %s20 = ssub.s32 %s14, 2
      %s21 = sadd.s32 %s14, 1
      %s22 = ssub.s32 %s14, %s21
      %p23 = scmp.eq.s32.totalorder %s22, 0
      %s25 = sadd.s32 %s24, 1
      %s26 = scalar_select %p23, %s24, %s25
      %p29 = pneg %p23
      %p30 = scmp.eq.s32.totalorder %s14, 1
      %p31 = por %p29, %p30
      %p32 = scmp.ne.s32.totalorder %s24, %s27
      %p33 = scmp.eq.s32.totalorder %s14, 0
      %p34 = por %p32, %p33
      %p35 = scmp.ne.s32.totalorder %s24, %s27
      %p36 = scmp.eq.s32.totalorder %s19, 1
      %p37 = por %p35, %p36
      %p38 = scmp.ne.s32.totalorder %s27, %s28
      %p39 = scmp.eq.s32.totalorder %s19, 0
      %p40 = por %p38, %p39
      %p41 = scmp.ne.s32.totalorder %s27, %s28
      %p42 = scmp.eq.s32.totalorder %s20, 1
      %p43 = por %p41, %p42
      %p45 = scmp.ne.s32.totalorder %s28, %s44
      %p46 = scmp.eq.s32.totalorder %s20, 0
      %p47 = por %p45, %p46
      %s49 = sadd.s32 %s48, 1
      %p52 = scmp.eq.s32.totalorder %s14, 1
      %p53 = scmp.ne.s32.totalorder %s48, %s50
      %p54 = scmp.eq.s32.totalorder %s14, 0
      %p55 = por %p53, %p54
      %p56 = scmp.ne.s32.totalorder %s48, %s50
      %p57 = scmp.eq.s32.totalorder %s19, 1
      %p58 = por %p56, %p57
      %p59 = scmp.ne.s32.totalorder %s50, %s51
      %p60 = scmp.eq.s32.totalorder %s19, 0
      %p61 = por %p59, %p60
      %p62 = scmp.ne.s32.totalorder %s50, %s51
      %p63 = scmp.eq.s32.totalorder %s20, 1
      %p64 = por %p62, %p63
      %p66 = scmp.ne.s32.totalorder %s51, %s65
      %p67 = scmp.eq.s32.totalorder %s20, 0
      %p68 = por %p66, %p67
      %s69 = ssub.s32 %s14, %s21
      %p70 = scmp.eq.s32.totalorder %s69, 0
      %s72 = sadd.s32 %s71, 1
      %s73 = scalar_select %p70, %s71, %s72
      %p76 = pneg %p70
      %p77 = scmp.eq.s32.totalorder %s14, 1
      %p78 = por %p76, %p77
      %p79 = scmp.ne.s32.totalorder %s71, %s74
      %p80 = scmp.eq.s32.totalorder %s14, 0
      %p81 = por %p79, %p80
      %p82 = scmp.ne.s32.totalorder %s71, %s74
      %p83 = scmp.eq.s32.totalorder %s19, 1
      %p84 = por %p82, %p83
      %p85 = scmp.ne.s32.totalorder %s74, %s75
      %p86 = scmp.eq.s32.totalorder %s19, 0
      %p87 = por %p85, %p86
      %p88 = scmp.ne.s32.totalorder %s74, %s75
      %p89 = scmp.eq.s32.totalorder %s20, 1
      %p90 = por %p88, %p89
      %p92 = scmp.ne.s32.totalorder %s75, %s91
      %p93 = scmp.eq.s32.totalorder %s20, 0
      %p94 = por %p92, %p93
      %s95 = ssub.s32 %s14, %s21
      %p96 = scmp.eq.s32.totalorder %s95, 0
      %s98 = sadd.s32 %s97, 1
      %s99 = scalar_select %p96, %s97, %s98
      %p102 = pneg %p96
      %p103 = scmp.eq.s32.totalorder %s14, 1
      %p104 = por %p102, %p103
      %p105 = scmp.ne.s32.totalorder %s97, %s100
      %p106 = scmp.eq.s32.totalorder %s14, 0
      %p107 = por %p105, %p106
      %p108 = scmp.ne.s32.totalorder %s97, %s100
      %p109 = scmp.eq.s32.totalorder %s19, 1
      %p110 = por %p108, %p109
      %p111 = scmp.ne.s32.totalorder %s100, %s101
      %p112 = scmp.eq.s32.totalorder %s19, 0
      %p113 = por %p111, %p112
      %p114 = scmp.ne.s32.totalorder %s100, %s101
      %p115 = scmp.eq.s32.totalorder %s20, 1
      %p116 = por %p114, %p115
      %p118 = scmp.ne.s32.totalorder %s101, %s117
      %p119 = scmp.eq.s32.totalorder %s20, 0
      %p120 = por %p118, %p119
      %p121 = scmp.le.s32.totalorder 1, %s14
      %p122 = scmp.lt.s32.totalorder %s14, 3
      %p123 = pnand %p121, %p122
      %p124 = pneg %p123
      // Predicated region
      $region9: #{gate_forward.1} parent=5 // pred_check
        _
      $region10: #{gate_forward.1} parent=5 // pred_check_branch
        %126 = sbr.rel (%p123) target = $region12
      $region11: #{gate_forward.1} parent=5 // pred_region
        %s127 = ssub.s32 %s14, 1
        // Predicated region
        $region13: #{gate_forward.1} parent=11 // pred_check
          %p128 = pneg %p61
        $region14: #{gate_forward.1} parent=11 // pred_check_branch
          %130 = sbr.rel (%p128) target = $region16
        $region15: #{gate_forward.1} parent=11 // pred_region
          %132 = vsyncadd [#allocation5], 0
          %s133 = sshll.u32 %s1, 4
          %s134 = int_to_ptr.hbm [resolvable:$true] %s133
          %s135 = sshll.u32 [#allocation4], 4
          %s136 = int_to_ptr.vmem [resolvable:$true] %s135
          %141 = dma.hbm_to_vmem [thread:$0]  %s134, 2048, %s136, [#allocation5], 64, 64, 4
        $region16: #{gate_forward.1} parent=11 // pred_fallthru
          _
      $region12: #{gate_forward.1} parent=5 // pred_fallthru
        _
      %p142 = scmp.lt.s32.totalorder %s14, 2
      // Predicated region
      $region17: #{gate_forward.1} parent=5 // pred_check
        %p143 = pneg %p142
      $region18: #{gate_forward.1} parent=5 // pred_check_branch
        %145 = sbr.rel (%p143) target = $region20
      $region19: #{gate_forward.1} parent=5 // pred_region
        // Predicated region
        $region21: #{gate_forward.1} parent=19 // pred_check
          %p146 = pneg %p34
        $region22: #{gate_forward.1} parent=19 // pred_check_branch
          %148 = sbr.rel (%p146) target = $region24
        $region23: #{gate_forward.1} parent=19 // pred_region
          %s149 = sand.u32 %s24, 1
          %s150 = scalar_lea.sflag [#allocation3], %s149
          %s151 = sand.u32 %s24, 1
          %s152 = smul.addr %s151, 256
          %s153 = scalar_lea.vmem [#allocation2], %s152
          %s154 = smul.u32 32, %s14
          %s155 = ssub.s32 48, %s154
          %p156 = scmp.lt.s32.totalorder %s155, 32
          %s157 = scalar_select %p156, %s155, 32
          %s158 = smul.u32 4, %s157
          %s159 = smul.u32 %s158, 2
          %s160 = ssub.s32 256, %s159
          %s161 = sshll.u32 %s160, 4
          %162 = vsyncadd %s150, %s161
          %p163 = scmp.ne.s32.totalorder 0, %s159
          %s164 = smul.addr %s154, 2
          %s165 = smul.addr %s164, 4
          %s166 = scalar_lea.hbm %s0, %s165
          %s167 = smul.u32 8, %s157
          %s168 = sshll.u32 %s166, 4
          %s169 = int_to_ptr.hbm [resolvable:$true] %s168
          %s170 = sshll.u32 %s153, 4
          %s171 = int_to_ptr.vmem [resolvable:$true] %s170
          %s172 = sshll.u32 %s167, 4
          %176 = dma.hbm_to_vmem [thread:$0]  (%p163), %s169, %s172, %s171, %s150, 128, 128, 8
        $region24: #{gate_forward.1} parent=19 // pred_fallthru
          _
      $region20: #{gate_forward.1} parent=5 // pred_fallthru
        _
      %p177 = scmp.le.s32.totalorder 1, %s14
      %p178 = scmp.lt.s32.totalorder %s14, 3
      %p179 = pnand %p177, %p178
      %p180 = pneg %p179
      // Predicated region
      $region25: #{gate_forward.1} parent=5 // pred_check
        _
      $region26: #{gate_forward.1} parent=5 // pred_check_branch
        %182 = sbr.rel (%p179) target = $region28
      $region27: #{gate_forward.1} parent=5 // pred_region
        %s183 = ssub.s32 %s14, 1
        %s184 = sand.u32 %s27, 1
        %s185 = scalar_lea.sflag [#allocation3], %s184
        %s186 = sand.u32 %s27, 1
        %s187 = smul.addr %s186, 256
        %s188 = scalar_lea.vmem [#allocation2], %s187
        // Predicated region
        $region29: #{gate_forward.1} parent=27 // pred_check
          %p189 = pneg %p40
        $region30: #{gate_forward.1} parent=27 // pred_check_branch
          %191 = sbr.rel (%p189) target = $region32
        $region31: #{gate_forward.1} parent=27 // pred_region
          %193 = dma.done %s185, 4096
        $region32: #{gate_forward.1} parent=27 // pred_fallthru
          _
        // Predicated region
        $region33: #{gate_forward.1} parent=27 // pred_check
          %p194 = pneg %p61
        $region34: #{gate_forward.1} parent=27 // pred_check_branch
          %196 = sbr.rel (%p194) target = $region36
        $region35: #{gate_forward.1} parent=27 // pred_region
          %198 = dma.done [#allocation5], 2048
        $region36: #{gate_forward.1} parent=27 // pred_fallthru
          _
        %s199 = sand.u32 %s27, 1
        %s200 = scalar_lea.sflag [#allocation3], %s199
        %s201 = sand.u32 %s27, 1
        %s202 = smul.addr %s201, 256
        %s203 = scalar_lea.vmem [#allocation2], %s202
        %p204 = pneg %p40
        %p205 = pneg %p37
        %p206 = pneg %p61
        %p207 = pneg %p58
        %p208 = pneg %p87
        %p209 = pneg %p84
        %s210 = sand.u32 %s74, 1
        %s211 = sand.u32 %s74, 1
        %s212 = smul.addr %s211, 128
        %s213 = scalar_lea.vmem [#allocation6], %s212
        %p214 = pneg %p113
        %p215 = pneg %p110
        %s216 = sand.u32 %s100, 1
        %s217 = sand.u32 %s100, 1
        %s218 = smul.addr %s217, 256
        %s219 = scalar_lea.vmem [#allocation7], %s218
        %s220 = smul.u32 32, %s19
        %s221 = ssub.s32 48, %s220
        %p222 = scmp.lt.s32.totalorder %s221, 32
        %s223 = scalar_select %p222, %s221, 32
        %s224 = smul.u32 4, %s223
        %s225 = smul.u32 %s224, 2
        %s226 = smul.u32 32, %s19
        %s227 = ssub.s32 48, %s226
        %p228 = scmp.lt.s32.totalorder %s227, 32
        %s229 = scalar_select %p228, %s227, 32
        %s230 = smul.u32 4, %s229
        %s231 = smul.u32 32, %s19
        %s232 = ssub.s32 48, %s231
        %p233 = scmp.lt.s32.totalorder %s232, 32
        %s234 = scalar_select %p233, %s232, 32
        %s235 = smul.u32 8, %s234
        %v237 = vld [vmem:[%s188] sm:$0xff]
        %v238 = vld [vmem:[%s188 + $0x8] sm:$0xff]
        %v239 = vld [vmem:[%s188 + $0x10] sm:$0xff]
        %v240 = vld [vmem:[%s188 + $0x18] sm:$0xff]
        %v241 = vld [vmem:[%s188 + $0x20] sm:$0xff]
        %v242 = vld [vmem:[%s188 + $0x28] sm:$0xff]
        %v243 = vld [vmem:[%s188 + $0x30] sm:$0xff]
        %v244 = vld [vmem:[%s188 + $0x38] sm:$0xff]
        %v245 = vld [vmem:[%s188 + $0x40] sm:$0xff]
        %v246 = vld [vmem:[%s188 + $0x48] sm:$0xff]
        %v247 = vld [vmem:[%s188 + $0x50] sm:$0xff]
        %v248 = vld [vmem:[%s188 + $0x58] sm:$0xff]
        %v249 = vld [vmem:[%s188 + $0x60] sm:$0xff]
        %v250 = vld [vmem:[%s188 + $0x68] sm:$0xff]
        %v251 = vld [vmem:[%s188 + $0x70] sm:$0xff]
        %v252 = vld [vmem:[%s188 + $0x78] sm:$0xff]
        %v253 = vld [vmem:[%s188 + $0x80] sm:$0xff]
        %v254 = vld [vmem:[%s188 + $0x88] sm:$0xff]
        %v255 = vld [vmem:[%s188 + $0x90] sm:$0xff]
        %v256 = vld [vmem:[%s188 + $0x98] sm:$0xff]
        %v257 = vld [vmem:[%s188 + $0xa0] sm:$0xff]
        %v258 = vld [vmem:[%s188 + $0xa8] sm:$0xff]
        %v259 = vld [vmem:[%s188 + $0xb0] sm:$0xff]
        %v260 = vld [vmem:[%s188 + $0xb8] sm:$0xff]
        %v261 = vld [vmem:[%s188 + $0xc0] sm:$0xff]
        %v262 = vld [vmem:[%s188 + $0xc8] sm:$0xff]
        %v263 = vld [vmem:[%s188 + $0xd0] sm:$0xff]
        %v264 = vld [vmem:[%s188 + $0xd8] sm:$0xff]
        %v265 = vld [vmem:[%s188 + $0xe0] sm:$0xff]
        %v266 = vld [vmem:[%s188 + $0xe8] sm:$0xff]
        %v267 = vld [vmem:[%s188 + $0xf0] sm:$0xff]
        %v268 = vld [vmem:[%s188 + $0xf8] sm:$0xff]
        %v269 = vld [vmem:[#allocation4] sm:$0xf]
        %v270 = vld [vmem:[#allocation4 + $0x4] sm:$0xf]
        %v271 = vld [vmem:[#allocation4 + $0x8] sm:$0xf]
        %v272 = vld [vmem:[#allocation4 + $0xc] sm:$0xf]
        %v273 = vld [vmem:[#allocation4 + $0x10] sm:$0xf]
        %v274 = vld [vmem:[#allocation4 + $0x14] sm:$0xf]
        %v275 = vld [vmem:[#allocation4 + $0x18] sm:$0xf]
        %v276 = vld [vmem:[#allocation4 + $0x1c] sm:$0xf]
        %v277 = vld [vmem:[#allocation4 + $0x20] sm:$0xf]
        %v278 = vld [vmem:[#allocation4 + $0x24] sm:$0xf]
        %v279 = vld [vmem:[#allocation4 + $0x28] sm:$0xf]
        %v280 = vld [vmem:[#allocation4 + $0x2c] sm:$0xf]
        %v281 = vld [vmem:[#allocation4 + $0x30] sm:$0xf]
        %v282 = vld [vmem:[#allocation4 + $0x34] sm:$0xf]
        %v283 = vld [vmem:[#allocation4 + $0x38] sm:$0xf]
        %v284 = vld [vmem:[#allocation4 + $0x3c] sm:$0xf]
        %v285 = vld [vmem:[#allocation4 + $0x40] sm:$0xf]
        %v286 = vld [vmem:[#allocation4 + $0x44] sm:$0xf]
        %v287 = vld [vmem:[#allocation4 + $0x48] sm:$0xf]
        %v288 = vld [vmem:[#allocation4 + $0x4c] sm:$0xf]
        %v289 = vld [vmem:[#allocation4 + $0x50] sm:$0xf]
        %v290 = vld [vmem:[#allocation4 + $0x54] sm:$0xf]
        %v291 = vld [vmem:[#allocation4 + $0x58] sm:$0xf]
        %v292 = vld [vmem:[#allocation4 + $0x5c] sm:$0xf]
        %v293 = vld [vmem:[#allocation4 + $0x60] sm:$0xf]
        %v294 = vld [vmem:[#allocation4 + $0x64] sm:$0xf]
        %v295 = vld [vmem:[#allocation4 + $0x68] sm:$0xf]
        %v296 = vld [vmem:[#allocation4 + $0x6c] sm:$0xf]
        %v297 = vld [vmem:[#allocation4 + $0x70] sm:$0xf]
        %v298 = vld [vmem:[#allocation4 + $0x74] sm:$0xf]
        %v299 = vld [vmem:[#allocation4 + $0x78] sm:$0xf]
        %v300 = vld [vmem:[#allocation4 + $0x7c] sm:$0xf]
        %v333 = vunpack.c.l.b16 %v237
        %v334 = vunpack.c.h.b16 %v237
        %v335 = vunpack.c.l.b16 %v238
        %v336 = vunpack.c.h.b16 %v238
        %v337 = vunpack.c.l.b16 %v239
        %v338 = vunpack.c.h.b16 %v239
        %v339 = vunpack.c.l.b16 %v240
        %v340 = vunpack.c.h.b16 %v240
        %v341 = vunpack.c.l.b16 %v241
        %v342 = vunpack.c.h.b16 %v241
        %v343 = vunpack.c.l.b16 %v242
        %v344 = vunpack.c.h.b16 %v242
        %v345 = vunpack.c.l.b16 %v243
        %v346 = vunpack.c.h.b16 %v243
        %v347 = vunpack.c.l.b16 %v244
        %v348 = vunpack.c.h.b16 %v244
        %v349 = vunpack.c.l.b16 %v245
        %v350 = vunpack.c.h.b16 %v245
        %v351 = vunpack.c.l.b16 %v246
        %v352 = vunpack.c.h.b16 %v246
        %v353 = vunpack.c.l.b16 %v247
        %v354 = vunpack.c.h.b16 %v247
        %v355 = vunpack.c.l.b16 %v248
        %v356 = vunpack.c.h.b16 %v248
        %v357 = vunpack.c.l.b16 %v249
        %v358 = vunpack.c.h.b16 %v249
        %v359 = vunpack.c.l.b16 %v250
        %v360 = vunpack.c.h.b16 %v250
        %v361 = vunpack.c.l.b16 %v251
        %v362 = vunpack.c.h.b16 %v251
        %v363 = vunpack.c.l.b16 %v252
        %v364 = vunpack.c.h.b16 %v252
        %v365 = vunpack.c.l.b16 %v253
        %v366 = vunpack.c.h.b16 %v253
        %v367 = vunpack.c.l.b16 %v254
        %v368 = vunpack.c.h.b16 %v254
        %v369 = vunpack.c.l.b16 %v255
        %v370 = vunpack.c.h.b16 %v255
        %v371 = vunpack.c.l.b16 %v256
        %v372 = vunpack.c.h.b16 %v256
        %v373 = vunpack.c.l.b16 %v257
        %v374 = vunpack.c.h.b16 %v257
        %v375 = vunpack.c.l.b16 %v258
        %v376 = vunpack.c.h.b16 %v258
        %v377 = vunpack.c.l.b16 %v259
        %v378 = vunpack.c.h.b16 %v259
        %v379 = vunpack.c.l.b16 %v260
        %v380 = vunpack.c.h.b16 %v260
        %v381 = vunpack.c.l.b16 %v261
        %v382 = vunpack.c.h.b16 %v261
        %v383 = vunpack.c.l.b16 %v262
        %v384 = vunpack.c.h.b16 %v262
        %v385 = vunpack.c.l.b16 %v263
        %v386 = vunpack.c.h.b16 %v263
        %v387 = vunpack.c.l.b16 %v264
        %v388 = vunpack.c.h.b16 %v264
        %v389 = vunpack.c.l.b16 %v265
        %v390 = vunpack.c.h.b16 %v265
        %v391 = vunpack.c.l.b16 %v266
        %v392 = vunpack.c.h.b16 %v266
        %v393 = vunpack.c.l.b16 %v267
        %v394 = vunpack.c.h.b16 %v267
        %v395 = vunpack.c.l.b16 %v268
        %v396 = vunpack.c.h.b16 %v268
        %v397 = vpack.c.b16 %v335, %v333
        %v398 = vpack.c.b16 %v336, %v334
        %v399 = vpack.c.b16 %v339, %v337
        %v400 = vpack.c.b16 %v340, %v338
        %v401 = vpack.c.b16 %v343, %v341
        %v402 = vpack.c.b16 %v344, %v342
        %v403 = vpack.c.b16 %v347, %v345
        %v404 = vpack.c.b16 %v348, %v346
        %v405 = vpack.c.b16 %v351, %v349
        %v406 = vpack.c.b16 %v352, %v350
        %v407 = vpack.c.b16 %v355, %v353
        %v408 = vpack.c.b16 %v356, %v354
        %v409 = vpack.c.b16 %v359, %v357
        %v410 = vpack.c.b16 %v360, %v358
        %v411 = vpack.c.b16 %v363, %v361
        %v412 = vpack.c.b16 %v364, %v362
        %v413 = vpack.c.b16 %v367, %v365
        %v414 = vpack.c.b16 %v368, %v366
        %v415 = vpack.c.b16 %v371, %v369
        %v416 = vpack.c.b16 %v372, %v370
        %v417 = vpack.c.b16 %v375, %v373
        %v418 = vpack.c.b16 %v376, %v374
        %v419 = vpack.c.b16 %v379, %v377
        %v420 = vpack.c.b16 %v380, %v378
        %v421 = vpack.c.b16 %v383, %v381
        %v422 = vpack.c.b16 %v384, %v382
        %v423 = vpack.c.b16 %v387, %v385
        %v424 = vpack.c.b16 %v388, %v386
        %v425 = vpack.c.b16 %v391, %v389
        %v426 = vpack.c.b16 %v392, %v390
        %v427 = vpack.c.b16 %v395, %v393
        %v428 = vpack.c.b16 %v396, %v394
        %v493 = vunpack.c.l.b16 %v269
        %v494 = vunpack.c.l.b16 %v270
        %v495 = vunpack.c.l.b16 %v271
        %v496 = vunpack.c.l.b16 %v272
        %v497 = vunpack.c.l.b16 %v273
        %v498 = vunpack.c.l.b16 %v274
        %v499 = vunpack.c.l.b16 %v275
        %v500 = vunpack.c.l.b16 %v276
        %v501 = vunpack.c.l.b16 %v277
        %v502 = vunpack.c.l.b16 %v278
        %v503 = vunpack.c.l.b16 %v279
        %v504 = vunpack.c.l.b16 %v280
        %v505 = vunpack.c.l.b16 %v281
        %v506 = vunpack.c.l.b16 %v282
        %v507 = vunpack.c.l.b16 %v283
        %v508 = vunpack.c.l.b16 %v284
        %v509 = vunpack.c.l.b16 %v285
        %v510 = vunpack.c.l.b16 %v286
        %v511 = vunpack.c.l.b16 %v287
        %v512 = vunpack.c.l.b16 %v288
        %v513 = vunpack.c.l.b16 %v289
        %v514 = vunpack.c.l.b16 %v290
        %v515 = vunpack.c.l.b16 %v291
        %v516 = vunpack.c.l.b16 %v292
        %v517 = vunpack.c.l.b16 %v293
        %v518 = vunpack.c.l.b16 %v294
        %v519 = vunpack.c.l.b16 %v295
        %v520 = vunpack.c.l.b16 %v296
        %v521 = vunpack.c.l.b16 %v297
        %v522 = vunpack.c.l.b16 %v298
        %v523 = vunpack.c.l.b16 %v299
        %v524 = vunpack.c.l.b16 %v300
        %v525 = vpack.c.b16 %v494, %v493
        %v526 = vpack.c.b16 %v496, %v495
        %v527 = vpack.c.b16 %v498, %v497
        %v528 = vpack.c.b16 %v500, %v499
        %v529 = vpack.c.b16 %v502, %v501
        %v530 = vpack.c.b16 %v504, %v503
        %v531 = vpack.c.b16 %v506, %v505
        %v532 = vpack.c.b16 %v508, %v507
        %v533 = vpack.c.b16 %v510, %v509
        %v534 = vpack.c.b16 %v512, %v511
        %v535 = vpack.c.b16 %v514, %v513
        %v536 = vpack.c.b16 %v516, %v515
        %v537 = vpack.c.b16 %v518, %v517
        %v538 = vpack.c.b16 %v520, %v519
        %v539 = vpack.c.b16 %v522, %v521
        %v540 = vpack.c.b16 %v524, %v523
        %557 = vmatpush.bf16.msra.mxu0 %v532
        %558 = vmatpush.bf16.msra.mxu0 %v531
        %559 = vmatpush.bf16.msra.mxu0 %v530
        %560 = vmatpush.bf16.msra.mxu0 %v529
        %561 = vmatpush.bf16.msra.mxu0 %v528
        %562 = vmatpush.bf16.msra.mxu0 %v527
        %563 = vmatpush.bf16.msra.mxu0 %v526
        %564 = vmatpush.bf16.msra.mxu0 %v525
        %565 = vmatmul.bf16.gmra.mxu0 %v397
        %v566 = vpop.f32.mrf.mxu0
        %v567 = vadd.f32 0.0, %v566
        %v568 = vpop.f32.mrf.mxu0
        %v569 = vadd.f32 0.0, %v568
        %570 = vmatmul.bf16.gmra.mxu0 %v399
        %v571 = vpop.f32.mrf.mxu0
        %v572 = vadd.f32 0.0, %v571
        %v573 = vpop.f32.mrf.mxu0
        %v574 = vadd.f32 0.0, %v573
        %575 = vmatmul.bf16.gmra.mxu0 %v401
        %v576 = vpop.f32.mrf.mxu0
        %v577 = vadd.f32 0.0, %v576
        %v578 = vpop.f32.mrf.mxu0
        %v579 = vadd.f32 0.0, %v578
        %580 = vmatmul.bf16.gmra.mxu0 %v403
        %v581 = vpop.f32.mrf.mxu0
        %v582 = vadd.f32 0.0, %v581
        %v583 = vpop.f32.mrf.mxu0
        %v584 = vadd.f32 0.0, %v583
        %585 = vmatmul.bf16.gmra.mxu0 %v405
        %v586 = vpop.f32.mrf.mxu0
        %v587 = vadd.f32 0.0, %v586
        %v588 = vpop.f32.mrf.mxu0
        %v589 = vadd.f32 0.0, %v588
        %590 = vmatmul.bf16.gmra.mxu0 %v407
        %v591 = vpop.f32.mrf.mxu0
        %v592 = vadd.f32 0.0, %v591
        %v593 = vpop.f32.mrf.mxu0
        %v594 = vadd.f32 0.0, %v593
        %595 = vmatmul.bf16.gmra.mxu0 %v409
        %v596 = vpop.f32.mrf.mxu0
        %v597 = vadd.f32 0.0, %v596
        %v598 = vpop.f32.mrf.mxu0
        %v599 = vadd.f32 0.0, %v598
        %600 = vmatmul.bf16.gmra.mxu0 %v411
        %v601 = vpop.f32.mrf.mxu0
        %v602 = vadd.f32 0.0, %v601
        %v603 = vpop.f32.mrf.mxu0
        %v604 = vadd.f32 0.0, %v603
        %605 = vmatmul.bf16.gmra.mxu0 %v413
        %v606 = vpop.f32.mrf.mxu0
        %v607 = vadd.f32 0.0, %v606
        %v608 = vpop.f32.mrf.mxu0
        %v609 = vadd.f32 0.0, %v608
        %610 = vmatmul.bf16.gmra.mxu0 %v415
        %v611 = vpop.f32.mrf.mxu0
        %v612 = vadd.f32 0.0, %v611
        %v613 = vpop.f32.mrf.mxu0
        %v614 = vadd.f32 0.0, %v613
        %615 = vmatmul.bf16.gmra.mxu0 %v417
        %v616 = vpop.f32.mrf.mxu0
        %v617 = vadd.f32 0.0, %v616
        %v618 = vpop.f32.mrf.mxu0
        %v619 = vadd.f32 0.0, %v618
        %620 = vmatmul.bf16.gmra.mxu0 %v419
        %v621 = vpop.f32.mrf.mxu0
        %v622 = vadd.f32 0.0, %v621
        %v623 = vpop.f32.mrf.mxu0
        %v624 = vadd.f32 0.0, %v623
        %625 = vmatmul.bf16.gmra.mxu0 %v421
        %v626 = vpop.f32.mrf.mxu0
        %v627 = vadd.f32 0.0, %v626
        %v628 = vpop.f32.mrf.mxu0
        %v629 = vadd.f32 0.0, %v628
        %630 = vmatmul.bf16.gmra.mxu0 %v423
        %v631 = vpop.f32.mrf.mxu0
        %v632 = vadd.f32 0.0, %v631
        %v633 = vpop.f32.mrf.mxu0
        %v634 = vadd.f32 0.0, %v633
        %635 = vmatmul.bf16.gmra.mxu0 %v425
        %v636 = vpop.f32.mrf.mxu0
        %v637 = vadd.f32 0.0, %v636
        %v638 = vpop.f32.mrf.mxu0
        %v639 = vadd.f32 0.0, %v638
        %640 = vmatmul.bf16.gmra.mxu0 %v427
        %v641 = vpop.f32.mrf.mxu0
        %v642 = vadd.f32 0.0, %v641
        %v643 = vpop.f32.mrf.mxu0
        %v644 = vadd.f32 0.0, %v643
        %645 = vdwg.mxu0
        %646 = vmatpush.bf16.msra.mxu0 %v540
        %647 = vmatpush.bf16.msra.mxu0 %v539
        %648 = vmatpush.bf16.msra.mxu0 %v538
        %649 = vmatpush.bf16.msra.mxu0 %v537
        %650 = vmatpush.bf16.msra.mxu0 %v536
        %651 = vmatpush.bf16.msra.mxu0 %v535
        %652 = vmatpush.bf16.msra.mxu0 %v534
        %653 = vmatpush.bf16.msra.mxu0 %v533
        %654 = vmatmul.bf16.gmra.mxu0 %v398
        %v655 = vpop.f32.mrf.mxu0
        %v656 = vadd.f32 %v567, %v655
        %v657 = vpop.f32.mrf.mxu0
        %v658 = vadd.f32 %v569, %v657
        %659 = vmatmul.bf16.gmra.mxu0 %v400
        %v660 = vpop.f32.mrf.mxu0
        %v661 = vadd.f32 %v572, %v660
        %v662 = vpop.f32.mrf.mxu0
        %v663 = vadd.f32 %v574, %v662
        %664 = vmatmul.bf16.gmra.mxu0 %v402
        %v665 = vpop.f32.mrf.mxu0
        %v666 = vadd.f32 %v577, %v665
        %v667 = vpop.f32.mrf.mxu0
        %v668 = vadd.f32 %v579, %v667
        %669 = vmatmul.bf16.gmra.mxu0 %v404
        %v670 = vpop.f32.mrf.mxu0
        %v671 = vadd.f32 %v582, %v670
        %v672 = vpop.f32.mrf.mxu0
        %v673 = vadd.f32 %v584, %v672
        %674 = vmatmul.bf16.gmra.mxu0 %v406
        %v675 = vpop.f32.mrf.mxu0
        %v676 = vadd.f32 %v587, %v675
        %v677 = vpop.f32.mrf.mxu0
        %v678 = vadd.f32 %v589, %v677
        %679 = vmatmul.bf16.gmra.mxu0 %v408
        %v680 = vpop.f32.mrf.mxu0
        %v681 = vadd.f32 %v592, %v680
        %v682 = vpop.f32.mrf.mxu0
        %v683 = vadd.f32 %v594, %v682
        %684 = vmatmul.bf16.gmra.mxu0 %v410
        %v685 = vpop.f32.mrf.mxu0
        %v686 = vadd.f32 %v597, %v685
        %v687 = vpop.f32.mrf.mxu0
        %v688 = vadd.f32 %v599, %v687
        %689 = vmatmul.bf16.gmra.mxu0 %v412
        %v690 = vpop.f32.mrf.mxu0
        %v691 = vadd.f32 %v602, %v690
        %v692 = vpop.f32.mrf.mxu0
        %v693 = vadd.f32 %v604, %v692
        %694 = vmatmul.bf16.gmra.mxu0 %v414
        %v695 = vpop.f32.mrf.mxu0
        %v696 = vadd.f32 %v607, %v695
        %v697 = vpop.f32.mrf.mxu0
        %v698 = vadd.f32 %v609, %v697
        %699 = vmatmul.bf16.gmra.mxu0 %v416
        %v700 = vpop.f32.mrf.mxu0
        %v701 = vadd.f32 %v612, %v700
        %v702 = vpop.f32.mrf.mxu0
        %v703 = vadd.f32 %v614, %v702
        %704 = vmatmul.bf16.gmra.mxu0 %v418
        %v705 = vpop.f32.mrf.mxu0
        %v706 = vadd.f32 %v617, %v705
        %v707 = vpop.f32.mrf.mxu0
        %v708 = vadd.f32 %v619, %v707
        %709 = vmatmul.bf16.gmra.mxu0 %v420
        %v710 = vpop.f32.mrf.mxu0
        %v711 = vadd.f32 %v622, %v710
        %v712 = vpop.f32.mrf.mxu0
        %v713 = vadd.f32 %v624, %v712
        %714 = vmatmul.bf16.gmra.mxu0 %v422
        %v715 = vpop.f32.mrf.mxu0
        %v716 = vadd.f32 %v627, %v715
        %v717 = vpop.f32.mrf.mxu0
        %v718 = vadd.f32 %v629, %v717
        %719 = vmatmul.bf16.gmra.mxu0 %v424
        %v720 = vpop.f32.mrf.mxu0
        %v721 = vadd.f32 %v632, %v720
        %v722 = vpop.f32.mrf.mxu0
        %v723 = vadd.f32 %v634, %v722
        %724 = vmatmul.bf16.gmra.mxu0 %v426
        %v725 = vpop.f32.mrf.mxu0
        %v726 = vadd.f32 %v637, %v725
        %v727 = vpop.f32.mrf.mxu0
        %v728 = vadd.f32 %v639, %v727
        %729 = vmatmul.bf16.gmra.mxu0 %v428
        %v730 = vpop.f32.mrf.mxu0
        %v731 = vadd.f32 %v642, %v730
        %v732 = vpop.f32.mrf.mxu0
        %v733 = vadd.f32 %v644, %v732
        %734 = vdwg.mxu0
        %v735 = vlaneseq
        %v736 = vand.u32 %v735, 127
        %vm737 = vcmp.lt.s32.totalorder %v736, 64
        %v738 = vsel %vm737, %v656, -1e+30
        %v739 = vsel %vm737, %v658, -1e+30
        %v740 = vsel %vm737, %v661, -1e+30
        %v741 = vsel %vm737, %v663, -1e+30
        %v742 = vsel %vm737, %v666, -1e+30
        %v743 = vsel %vm737, %v668, -1e+30
        %v744 = vsel %vm737, %v671, -1e+30
        %v745 = vsel %vm737, %v673, -1e+30
        %v746 = vsel %vm737, %v676, -1e+30
        %v747 = vsel %vm737, %v678, -1e+30
        %v748 = vsel %vm737, %v681, -1e+30
        %v749 = vsel %vm737, %v683, -1e+30
        %v750 = vsel %vm737, %v686, -1e+30
        %v751 = vsel %vm737, %v688, -1e+30
        %v752 = vsel %vm737, %v691, -1e+30
        %v753 = vsel %vm737, %v693, -1e+30
        %v754 = vsel %vm737, %v696, -1e+30
        %v755 = vsel %vm737, %v698, -1e+30
        %v756 = vsel %vm737, %v701, -1e+30
        %v757 = vsel %vm737, %v703, -1e+30
        %v758 = vsel %vm737, %v706, -1e+30
        %v759 = vsel %vm737, %v708, -1e+30
        %v760 = vsel %vm737, %v711, -1e+30
        %v761 = vsel %vm737, %v713, -1e+30
        %v762 = vsel %vm737, %v716, -1e+30
        %v763 = vsel %vm737, %v718, -1e+30
        %v764 = vsel %vm737, %v721, -1e+30
        %v765 = vsel %vm737, %v723, -1e+30
        %v766 = vsel %vm737, %v726, -1e+30
        %v767 = vsel %vm737, %v728, -1e+30
        %v768 = vsel %vm737, %v731, -1e+30
        %v769 = vsel %vm737, %v733, -1e+30
        %770 = vmax.xlane.f32.xlu0 %v738
        %v771 = vpop.xlane.xlu0 %770
        %772 = vmax.xlane.f32.xlu0 %v739
        %v773 = vpop.xlane.xlu0 %772
        %774 = vmax.xlane.f32.xlu0 %v740
        %v775 = vpop.xlane.xlu0 %774
        %776 = vmax.xlane.f32.xlu0 %v741
        %v777 = vpop.xlane.xlu0 %776
        %778 = vmax.xlane.f32.xlu0 %v742
        %v779 = vpop.xlane.xlu0 %778
        %780 = vmax.xlane.f32.xlu0 %v743
        %v781 = vpop.xlane.xlu0 %780
        %782 = vmax.xlane.f32.xlu0 %v744
        %v783 = vpop.xlane.xlu0 %782
        %784 = vmax.xlane.f32.xlu0 %v745
        %v785 = vpop.xlane.xlu0 %784
        %786 = vmax.xlane.f32.xlu0 %v746
        %v787 = vpop.xlane.xlu0 %786
        %788 = vmax.xlane.f32.xlu0 %v747
        %v789 = vpop.xlane.xlu0 %788
        %790 = vmax.xlane.f32.xlu0 %v748
        %v791 = vpop.xlane.xlu0 %790
        %792 = vmax.xlane.f32.xlu0 %v749
        %v793 = vpop.xlane.xlu0 %792
        %794 = vmax.xlane.f32.xlu0 %v750
        %v795 = vpop.xlane.xlu0 %794
        %796 = vmax.xlane.f32.xlu0 %v751
        %v797 = vpop.xlane.xlu0 %796
        %798 = vmax.xlane.f32.xlu0 %v752
        %v799 = vpop.xlane.xlu0 %798
        %800 = vmax.xlane.f32.xlu0 %v753
        %v801 = vpop.xlane.xlu0 %800
        %802 = vmax.xlane.f32.xlu0 %v754
        %v803 = vpop.xlane.xlu0 %802
        %804 = vmax.xlane.f32.xlu0 %v755
        %v805 = vpop.xlane.xlu0 %804
        %806 = vmax.xlane.f32.xlu0 %v756
        %v807 = vpop.xlane.xlu0 %806
        %808 = vmax.xlane.f32.xlu0 %v757
        %v809 = vpop.xlane.xlu0 %808
        %810 = vmax.xlane.f32.xlu0 %v758
        %v811 = vpop.xlane.xlu0 %810
        %812 = vmax.xlane.f32.xlu0 %v759
        %v813 = vpop.xlane.xlu0 %812
        %814 = vmax.xlane.f32.xlu0 %v760
        %v815 = vpop.xlane.xlu0 %814
        %816 = vmax.xlane.f32.xlu0 %v761
        %v817 = vpop.xlane.xlu0 %816
        %818 = vmax.xlane.f32.xlu0 %v762
        %v819 = vpop.xlane.xlu0 %818
        %820 = vmax.xlane.f32.xlu0 %v763
        %v821 = vpop.xlane.xlu0 %820
        %822 = vmax.xlane.f32.xlu0 %v764
        %v823 = vpop.xlane.xlu0 %822
        %824 = vmax.xlane.f32.xlu0 %v765
        %v825 = vpop.xlane.xlu0 %824
        %826 = vmax.xlane.f32.xlu0 %v766
        %v827 = vpop.xlane.xlu0 %826
        %828 = vmax.xlane.f32.xlu0 %v767
        %v829 = vpop.xlane.xlu0 %828
        %830 = vmax.xlane.f32.xlu0 %v768
        %v831 = vpop.xlane.xlu0 %830
        %832 = vmax.xlane.f32.xlu0 %v769
        %v833 = vpop.xlane.xlu0 %832
        %v834 = vsub.f32 %v738, %v771
        %v835 = vsub.f32 %v739, %v773
        %v836 = vsub.f32 %v740, %v775
        %v837 = vsub.f32 %v741, %v777
        %v838 = vsub.f32 %v742, %v779
        %v839 = vsub.f32 %v743, %v781
        %v840 = vsub.f32 %v744, %v783
        %v841 = vsub.f32 %v745, %v785
        %v842 = vsub.f32 %v746, %v787
        %v843 = vsub.f32 %v747, %v789
        %v844 = vsub.f32 %v748, %v791
        %v845 = vsub.f32 %v749, %v793
        %v846 = vsub.f32 %v750, %v795
        %v847 = vsub.f32 %v751, %v797
        %v848 = vsub.f32 %v752, %v799
        %v849 = vsub.f32 %v753, %v801
        %v850 = vsub.f32 %v754, %v803
        %v851 = vsub.f32 %v755, %v805
        %v852 = vsub.f32 %v756, %v807
        %v853 = vsub.f32 %v757, %v809
        %v854 = vsub.f32 %v758, %v811
        %v855 = vsub.f32 %v759, %v813
        %v856 = vsub.f32 %v760, %v815
        %v857 = vsub.f32 %v761, %v817
        %v858 = vsub.f32 %v762, %v819
        %v859 = vsub.f32 %v763, %v821
        %v860 = vsub.f32 %v764, %v823
        %v861 = vsub.f32 %v765, %v825
        %v862 = vsub.f32 %v766, %v827
        %v863 = vsub.f32 %v767, %v829
        %v864 = vsub.f32 %v768, %v831
        %v865 = vsub.f32 %v769, %v833
        %v866 = vmul.f32 %v834, 1.442695
        %v867 = vpow.pop %v866
        %v868 = vmul.f32 %v835, 1.442695
        %v869 = vpow.pop %v868
        %v870 = vmul.f32 %v836, 1.442695
        %v871 = vpow.pop %v870
        %v872 = vmul.f32 %v837, 1.442695
        %v873 = vpow.pop %v872
        %v874 = vmul.f32 %v838, 1.442695
        %v875 = vpow.pop %v874
        %v876 = vmul.f32 %v839, 1.442695
        %v877 = vpow.pop %v876
        %v878 = vmul.f32 %v840, 1.442695
        %v879 = vpow.pop %v878
        %v880 = vmul.f32 %v841, 1.442695
        %v881 = vpow.pop %v880
        %v882 = vmul.f32 %v842, 1.442695
        %v883 = vpow.pop %v882
        %v884 = vmul.f32 %v843, 1.442695
        %v885 = vpow.pop %v884
        %v886 = vmul.f32 %v844, 1.442695
        %v887 = vpow.pop %v886
        %v888 = vmul.f32 %v845, 1.442695
        %v889 = vpow.pop %v888
        %v890 = vmul.f32 %v846, 1.442695
        %v891 = vpow.pop %v890
        %v892 = vmul.f32 %v847, 1.442695
        %v893 = vpow.pop %v892
        %v894 = vmul.f32 %v848, 1.442695
        %v895 = vpow.pop %v894
        %v896 = vmul.f32 %v849, 1.442695
        %v897 = vpow.pop %v896
        %v898 = vmul.f32 %v850, 1.442695
        %v899 = vpow.pop %v898
        %v900 = vmul.f32 %v851, 1.442695
        %v901 = vpow.pop %v900
        %v902 = vmul.f32 %v852, 1.442695
        %v903 = vpow.pop %v902
        %v904 = vmul.f32 %v853, 1.442695
        %v905 = vpow.pop %v904
        %v906 = vmul.f32 %v854, 1.442695
        %v907 = vpow.pop %v906
        %v908 = vmul.f32 %v855, 1.442695
        %v909 = vpow.pop %v908
        %v910 = vmul.f32 %v856, 1.442695
        %v911 = vpow.pop %v910
        %v912 = vmul.f32 %v857, 1.442695
        %v913 = vpow.pop %v912
        %v914 = vmul.f32 %v858, 1.442695
        %v915 = vpow.pop %v914
        %v916 = vmul.f32 %v859, 1.442695
        %v917 = vpow.pop %v916
        %v918 = vmul.f32 %v860, 1.442695
        %v919 = vpow.pop %v918
        %v920 = vmul.f32 %v861, 1.442695
        %v921 = vpow.pop %v920
        %v922 = vmul.f32 %v862, 1.442695
        %v923 = vpow.pop %v922
        %v924 = vmul.f32 %v863, 1.442695
        %v925 = vpow.pop %v924
        %v926 = vmul.f32 %v864, 1.442695
        %v927 = vpow.pop %v926
        %v928 = vmul.f32 %v865, 1.442695
        %v929 = vpow.pop %v928
        %930 = vadd.xlane.f32.xlu0 %v867
        %v931 = vpop.xlane.xlu0 %930
        %932 = vadd.xlane.f32.xlu0 %v869
        %v933 = vpop.xlane.xlu0 %932
        %934 = vadd.xlane.f32.xlu0 %v871
        %v935 = vpop.xlane.xlu0 %934
        %936 = vadd.xlane.f32.xlu0 %v873
        %v937 = vpop.xlane.xlu0 %936
        %938 = vadd.xlane.f32.xlu0 %v875
        %v939 = vpop.xlane.xlu0 %938
        %940 = vadd.xlane.f32.xlu0 %v877
        %v941 = vpop.xlane.xlu0 %940
        %942 = vadd.xlane.f32.xlu0 %v879
        %v943 = vpop.xlane.xlu0 %942
        %944 = vadd.xlane.f32.xlu0 %v881
        %v945 = vpop.xlane.xlu0 %944
        %946 = vadd.xlane.f32.xlu0 %v883
        %v947 = vpop.xlane.xlu0 %946
        %948 = vadd.xlane.f32.xlu0 %v885
        %v949 = vpop.xlane.xlu0 %948
        %950 = vadd.xlane.f32.xlu0 %v887
        %v951 = vpop.xlane.xlu0 %950
        %952 = vadd.xlane.f32.xlu0 %v889
        %v953 = vpop.xlane.xlu0 %952
        %954 = vadd.xlane.f32.xlu0 %v891
        %v955 = vpop.xlane.xlu0 %954
        %956 = vadd.xlane.f32.xlu0 %v893
        %v957 = vpop.xlane.xlu0 %956
        %958 = vadd.xlane.f32.xlu0 %v895
        %v959 = vpop.xlane.xlu0 %958
        %960 = vadd.xlane.f32.xlu0 %v897
        %v961 = vpop.xlane.xlu0 %960
        %962 = vadd.xlane.f32.xlu0 %v899
        %v963 = vpop.xlane.xlu0 %962
        %964 = vadd.xlane.f32.xlu0 %v901
        %v965 = vpop.xlane.xlu0 %964
        %966 = vadd.xlane.f32.xlu0 %v903
        %v967 = vpop.xlane.xlu0 %966
        %968 = vadd.xlane.f32.xlu0 %v905
        %v969 = vpop.xlane.xlu0 %968
        %970 = vadd.xlane.f32.xlu0 %v907
        %v971 = vpop.xlane.xlu0 %970
        %972 = vadd.xlane.f32.xlu0 %v909
        %v973 = vpop.xlane.xlu0 %972
        %974 = vadd.xlane.f32.xlu0 %v911
        %v975 = vpop.xlane.xlu0 %974
        %976 = vadd.xlane.f32.xlu0 %v913
        %v977 = vpop.xlane.xlu0 %976
        %978 = vadd.xlane.f32.xlu0 %v915
        %v979 = vpop.xlane.xlu0 %978
        %980 = vadd.xlane.f32.xlu0 %v917
        %v981 = vpop.xlane.xlu0 %980
        %982 = vadd.xlane.f32.xlu0 %v919
        %v983 = vpop.xlane.xlu0 %982
        %984 = vadd.xlane.f32.xlu0 %v921
        %v985 = vpop.xlane.xlu0 %984
        %986 = vadd.xlane.f32.xlu0 %v923
        %v987 = vpop.xlane.xlu0 %986
        %988 = vadd.xlane.f32.xlu0 %v925
        %v989 = vpop.xlane.xlu0 %988
        %990 = vadd.xlane.f32.xlu0 %v927
        %v991 = vpop.xlane.xlu0 %990
        %992 = vadd.xlane.f32.xlu0 %v929
        %v993 = vpop.xlane.xlu0 %992
        %vm994 = vcmp.eq.f32.partialorder %v738, %v771
        %vm995 = vcmp.eq.f32.partialorder %v739, %v773
        %vm996 = vcmp.eq.f32.partialorder %v740, %v775
        %vm997 = vcmp.eq.f32.partialorder %v741, %v777
        %vm998 = vcmp.eq.f32.partialorder %v742, %v779
        %vm999 = vcmp.eq.f32.partialorder %v743, %v781
        %vm1000 = vcmp.eq.f32.partialorder %v744, %v783
        %vm1001 = vcmp.eq.f32.partialorder %v745, %v785
        %vm1002 = vcmp.eq.f32.partialorder %v746, %v787
        %vm1003 = vcmp.eq.f32.partialorder %v747, %v789
        %vm1004 = vcmp.eq.f32.partialorder %v748, %v791
        %vm1005 = vcmp.eq.f32.partialorder %v749, %v793
        %vm1006 = vcmp.eq.f32.partialorder %v750, %v795
        %vm1007 = vcmp.eq.f32.partialorder %v751, %v797
        %vm1008 = vcmp.eq.f32.partialorder %v752, %v799
        %vm1009 = vcmp.eq.f32.partialorder %v753, %v801
        %vm1010 = vcmp.eq.f32.partialorder %v754, %v803
        %vm1011 = vcmp.eq.f32.partialorder %v755, %v805
        %vm1012 = vcmp.eq.f32.partialorder %v756, %v807
        %vm1013 = vcmp.eq.f32.partialorder %v757, %v809
        %vm1014 = vcmp.eq.f32.partialorder %v758, %v811
        %vm1015 = vcmp.eq.f32.partialorder %v759, %v813
        %vm1016 = vcmp.eq.f32.partialorder %v760, %v815
        %vm1017 = vcmp.eq.f32.partialorder %v761, %v817
        %vm1018 = vcmp.eq.f32.partialorder %v762, %v819
        %vm1019 = vcmp.eq.f32.partialorder %v763, %v821
        %vm1020 = vcmp.eq.f32.partialorder %v764, %v823
        %vm1021 = vcmp.eq.f32.partialorder %v765, %v825
        %vm1022 = vcmp.eq.f32.partialorder %v766, %v827
        %vm1023 = vcmp.eq.f32.partialorder %v767, %v829
        %vm1024 = vcmp.eq.f32.partialorder %v768, %v831
        %vm1025 = vcmp.eq.f32.partialorder %v769, %v833
        %v1026 = vsel %vm994, %v736, 128
        %v1027 = vsel %vm995, %v736, 128
        %v1028 = vsel %vm996, %v736, 128
        %v1029 = vsel %vm997, %v736, 128
        %v1030 = vsel %vm998, %v736, 128
        %v1031 = vsel %vm999, %v736, 128
        %v1032 = vsel %vm1000, %v736, 128
        %v1033 = vsel %vm1001, %v736, 128
        %v1034 = vsel %vm1002, %v736, 128
        %v1035 = vsel %vm1003, %v736, 128
        %v1036 = vsel %vm1004, %v736, 128
        %v1037 = vsel %vm1005, %v736, 128
        %v1038 = vsel %vm1006, %v736, 128
        %v1039 = vsel %vm1007, %v736, 128
        %v1040 = vsel %vm1008, %v736, 128
        %v1041 = vsel %vm1009, %v736, 128
        %v1042 = vsel %vm1010, %v736, 128
        %v1043 = vsel %vm1011, %v736, 128
        %v1044 = vsel %vm1012, %v736, 128
        %v1045 = vsel %vm1013, %v736, 128
        %v1046 = vsel %vm1014, %v736, 128
        %v1047 = vsel %vm1015, %v736, 128
        %v1048 = vsel %vm1016, %v736, 128
        %v1049 = vsel %vm1017, %v736, 128
        %v1050 = vsel %vm1018, %v736, 128
        %v1051 = vsel %vm1019, %v736, 128
        %v1052 = vsel %vm1020, %v736, 128
        %v1053 = vsel %vm1021, %v736, 128
        %v1054 = vsel %vm1022, %v736, 128
        %v1055 = vsel %vm1023, %v736, 128
        %v1056 = vsel %vm1024, %v736, 128
        %v1057 = vsel %vm1025, %v736, 128
        %v1058 = vand.u32 %v1026, 65535
        %v1059 = vshra.s32 %v1026, 16
        %v1060 = vcvt.s32.f32 %v1058
        %v1061 = vcvt.s32.f32 %v1059
        %1062 = vmin.xlane.f32.xlu0 %v1061
        %v1063 = vpop.xlane.xlu0 %1062
        %vm1064 = vcmp.eq.f32.partialorder %v1061, %v1063
        %v1065 = vsel %vm1064, %v1060, inf
        %1066 = vmin.xlane.f32.xlu0 %v1065
        %v1067 = vpop.xlane.xlu0 %1066
        %v1068 = vcvt.f32.s32 %v1067
        %v1069 = vcvt.f32.s32 %v1063
        %v1070 = vshll.u32 %v1069, 16
        %v1071 = vadd.s32 %v1070, %v1068
        %v1072 = vand.u32 %v1027, 65535
        %v1073 = vshra.s32 %v1027, 16
        %v1074 = vcvt.s32.f32 %v1072
        %v1075 = vcvt.s32.f32 %v1073
        %1076 = vmin.xlane.f32.xlu0 %v1075
        %v1077 = vpop.xlane.xlu0 %1076
        %vm1078 = vcmp.eq.f32.partialorder %v1075, %v1077
        %v1079 = vsel %vm1078, %v1074, inf
        %1080 = vmin.xlane.f32.xlu0 %v1079
        %v1081 = vpop.xlane.xlu0 %1080
        %v1082 = vcvt.f32.s32 %v1081
        %v1083 = vcvt.f32.s32 %v1077
        %v1084 = vshll.u32 %v1083, 16
        %v1085 = vadd.s32 %v1084, %v1082
        %v1086 = vand.u32 %v1028, 65535
        %v1087 = vshra.s32 %v1028, 16
        %v1088 = vcvt.s32.f32 %v1086
        %v1089 = vcvt.s32.f32 %v1087
        %1090 = vmin.xlane.f32.xlu0 %v1089
        %v1091 = vpop.xlane.xlu0 %1090
        %vm1092 = vcmp.eq.f32.partialorder %v1089, %v1091
        %v1093 = vsel %vm1092, %v1088, inf
        %1094 = vmin.xlane.f32.xlu0 %v1093
        %v1095 = vpop.xlane.xlu0 %1094
        %v1096 = vcvt.f32.s32 %v1095
        %v1097 = vcvt.f32.s32 %v1091
        %v1098 = vshll.u32 %v1097, 16
        %v1099 = vadd.s32 %v1098, %v1096
        %v1100 = vand.u32 %v1029, 65535
        %v1101 = vshra.s32 %v1029, 16
        %v1102 = vcvt.s32.f32 %v1100
        %v1103 = vcvt.s32.f32 %v1101
        %1104 = vmin.xlane.f32.xlu0 %v1103
        %v1105 = vpop.xlane.xlu0 %1104
        %vm1106 = vcmp.eq.f32.partialorder %v1103, %v1105
        %v1107 = vsel %vm1106, %v1102, inf
        %1108 = vmin.xlane.f32.xlu0 %v1107
        %v1109 = vpop.xlane.xlu0 %1108
        %v1110 = vcvt.f32.s32 %v1109
        %v1111 = vcvt.f32.s32 %v1105
        %v1112 = vshll.u32 %v1111, 16
        %v1113 = vadd.s32 %v1112, %v1110
        %v1114 = vand.u32 %v1030, 65535
        %v1115 = vshra.s32 %v1030, 16
        %v1116 = vcvt.s32.f32 %v1114
        %v1117 = vcvt.s32.f32 %v1115
        %1118 = vmin.xlane.f32.xlu0 %v1117
        %v1119 = vpop.xlane.xlu0 %1118
        %vm1120 = vcmp.eq.f32.partialorder %v1117, %v1119
        %v1121 = vsel %vm1120, %v1116, inf
        %1122 = vmin.xlane.f32.xlu0 %v1121
        %v1123 = vpop.xlane.xlu0 %1122
        %v1124 = vcvt.f32.s32 %v1123
        %v1125 = vcvt.f32.s32 %v1119
        %v1126 = vshll.u32 %v1125, 16
        %v1127 = vadd.s32 %v1126, %v1124
        %v1128 = vand.u32 %v1031, 65535
        %v1129 = vshra.s32 %v1031, 16
        %v1130 = vcvt.s32.f32 %v1128
        %v1131 = vcvt.s32.f32 %v1129
        %1132 = vmin.xlane.f32.xlu0 %v1131
        %v1133 = vpop.xlane.xlu0 %1132
        %vm1134 = vcmp.eq.f32.partialorder %v1131, %v1133
        %v1135 = vsel %vm1134, %v1130, inf
        %1136 = vmin.xlane.f32.xlu0 %v1135
        %v1137 = vpop.xlane.xlu0 %1136
        %v1138 = vcvt.f32.s32 %v1137
        %v1139 = vcvt.f32.s32 %v1133
        %v1140 = vshll.u32 %v1139, 16
        %v1141 = vadd.s32 %v1140, %v1138
        %v1142 = vand.u32 %v1032, 65535
        %v1143 = vshra.s32 %v1032, 16
        %v1144 = vcvt.s32.f32 %v1142
        %v1145 = vcvt.s32.f32 %v1143
        %1146 = vmin.xlane.f32.xlu0 %v1145
        %v1147 = vpop.xlane.xlu0 %1146
        %vm1148 = vcmp.eq.f32.partialorder %v1145, %v1147
        %v1149 = vsel %vm1148, %v1144, inf
        %1150 = vmin.xlane.f32.xlu0 %v1149
        %v1151 = vpop.xlane.xlu0 %1150
        %v1152 = vcvt.f32.s32 %v1151
        %v1153 = vcvt.f32.s32 %v1147
        %v1154 = vshll.u32 %v1153, 16
        %v1155 = vadd.s32 %v1154, %v1152
        %v1156 = vand.u32 %v1033, 65535
        %v1157 = vshra.s32 %v1033, 16
        %v1158 = vcvt.s32.f32 %v1156
        %v1159 = vcvt.s32.f32 %v1157
        %1160 = vmin.xlane.f32.xlu0 %v1159
        %v1161 = vpop.xlane.xlu0 %1160
        %vm1162 = vcmp.eq.f32.partialorder %v1159, %v1161
        %v1163 = vsel %vm1162, %v1158, inf
        %1164 = vmin.xlane.f32.xlu0 %v1163
        %v1165 = vpop.xlane.xlu0 %1164
        %v1166 = vcvt.f32.s32 %v1165
        %v1167 = vcvt.f32.s32 %v1161
        %v1168 = vshll.u32 %v1167, 16
        %v1169 = vadd.s32 %v1168, %v1166
        %v1170 = vand.u32 %v1034, 65535
        %v1171 = vshra.s32 %v1034, 16
        %v1172 = vcvt.s32.f32 %v1170
        %v1173 = vcvt.s32.f32 %v1171
        %1174 = vmin.xlane.f32.xlu0 %v1173
        %v1175 = vpop.xlane.xlu0 %1174
        %vm1176 = vcmp.eq.f32.partialorder %v1173, %v1175
        %v1177 = vsel %vm1176, %v1172, inf
        %1178 = vmin.xlane.f32.xlu0 %v1177
        %v1179 = vpop.xlane.xlu0 %1178
        %v1180 = vcvt.f32.s32 %v1179
        %v1181 = vcvt.f32.s32 %v1175
        %v1182 = vshll.u32 %v1181, 16
        %v1183 = vadd.s32 %v1182, %v1180
        %v1184 = vand.u32 %v1035, 65535
        %v1185 = vshra.s32 %v1035, 16
        %v1186 = vcvt.s32.f32 %v1184
        %v1187 = vcvt.s32.f32 %v1185
        %1188 = vmin.xlane.f32.xlu0 %v1187
        %v1189 = vpop.xlane.xlu0 %1188
        %vm1190 = vcmp.eq.f32.partialorder %v1187, %v1189
        %v1191 = vsel %vm1190, %v1186, inf
        %1192 = vmin.xlane.f32.xlu0 %v1191
        %v1193 = vpop.xlane.xlu0 %1192
        %v1194 = vcvt.f32.s32 %v1193
        %v1195 = vcvt.f32.s32 %v1189
        %v1196 = vshll.u32 %v1195, 16
        %v1197 = vadd.s32 %v1196, %v1194
        %v1198 = vand.u32 %v1036, 65535
        %v1199 = vshra.s32 %v1036, 16
        %v1200 = vcvt.s32.f32 %v1198
        %v1201 = vcvt.s32.f32 %v1199
        %1202 = vmin.xlane.f32.xlu0 %v1201
        %v1203 = vpop.xlane.xlu0 %1202
        %vm1204 = vcmp.eq.f32.partialorder %v1201, %v1203
        %v1205 = vsel %vm1204, %v1200, inf
        %1206 = vmin.xlane.f32.xlu0 %v1205
        %v1207 = vpop.xlane.xlu0 %1206
        %v1208 = vcvt.f32.s32 %v1207
        %v1209 = vcvt.f32.s32 %v1203
        %v1210 = vshll.u32 %v1209, 16
        %v1211 = vadd.s32 %v1210, %v1208
        %v1212 = vand.u32 %v1037, 65535
        %v1213 = vshra.s32 %v1037, 16
        %v1214 = vcvt.s32.f32 %v1212
        %v1215 = vcvt.s32.f32 %v1213
        %1216 = vmin.xlane.f32.xlu0 %v1215
        %v1217 = vpop.xlane.xlu0 %1216
        %vm1218 = vcmp.eq.f32.partialorder %v1215, %v1217
        %v1219 = vsel %vm1218, %v1214, inf
        %1220 = vmin.xlane.f32.xlu0 %v1219
        %v1221 = vpop.xlane.xlu0 %1220
        %v1222 = vcvt.f32.s32 %v1221
        %v1223 = vcvt.f32.s32 %v1217
        %v1224 = vshll.u32 %v1223, 16
        %v1225 = vadd.s32 %v1224, %v1222
        %v1226 = vand.u32 %v1038, 65535
        %v1227 = vshra.s32 %v1038, 16
        %v1228 = vcvt.s32.f32 %v1226
        %v1229 = vcvt.s32.f32 %v1227
        %1230 = vmin.xlane.f32.xlu0 %v1229
        %v1231 = vpop.xlane.xlu0 %1230
        %vm1232 = vcmp.eq.f32.partialorder %v1229, %v1231
        %v1233 = vsel %vm1232, %v1228, inf
        %1234 = vmin.xlane.f32.xlu0 %v1233
        %v1235 = vpop.xlane.xlu0 %1234
        %v1236 = vcvt.f32.s32 %v1235
        %v1237 = vcvt.f32.s32 %v1231
        %v1238 = vshll.u32 %v1237, 16
        %v1239 = vadd.s32 %v1238, %v1236
        %v1240 = vand.u32 %v1039, 65535
        %v1241 = vshra.s32 %v1039, 16
        %v1242 = vcvt.s32.f32 %v1240
        %v1243 = vcvt.s32.f32 %v1241
        %1244 = vmin.xlane.f32.xlu0 %v1243
        %v1245 = vpop.xlane.xlu0 %1244
        %vm1246 = vcmp.eq.f32.partialorder %v1243, %v1245
        %v1247 = vsel %vm1246, %v1242, inf
        %1248 = vmin.xlane.f32.xlu0 %v1247
        %v1249 = vpop.xlane.xlu0 %1248
        %v1250 = vcvt.f32.s32 %v1249
        %v1251 = vcvt.f32.s32 %v1245
        %v1252 = vshll.u32 %v1251, 16
        %v1253 = vadd.s32 %v1252, %v1250
        %v1254 = vand.u32 %v1040, 65535
        %v1255 = vshra.s32 %v1040, 16
        %v1256 = vcvt.s32.f32 %v1254
        %v1257 = vcvt.s32.f32 %v1255
        %1258 = vmin.xlane.f32.xlu0 %v1257
        %v1259 = vpop.xlane.xlu0 %1258
        %vm1260 = vcmp.eq.f32.partialorder %v1257, %v1259
        %v1261 = vsel %vm1260, %v1256, inf
        %1262 = vmin.xlane.f32.xlu0 %v1261
        %v1263 = vpop.xlane.xlu0 %1262
        %v1264 = vcvt.f32.s32 %v1263
        %v1265 = vcvt.f32.s32 %v1259
        %v1266 = vshll.u32 %v1265, 16
        %v1267 = vadd.s32 %v1266, %v1264
        %v1268 = vand.u32 %v1041, 65535
        %v1269 = vshra.s32 %v1041, 16
        %v1270 = vcvt.s32.f32 %v1268
        %v1271 = vcvt.s32.f32 %v1269
        %1272 = vmin.xlane.f32.xlu0 %v1271
        %v1273 = vpop.xlane.xlu0 %1272
        %vm1274 = vcmp.eq.f32.partialorder %v1271, %v1273
        %v1275 = vsel %vm1274, %v1270, inf
        %1276 = vmin.xlane.f32.xlu0 %v1275
        %v1277 = vpop.xlane.xlu0 %1276
        %v1278 = vcvt.f32.s32 %v1277
        %v1279 = vcvt.f32.s32 %v1273
        %v1280 = vshll.u32 %v1279, 16
        %v1281 = vadd.s32 %v1280, %v1278
        %v1282 = vand.u32 %v1042, 65535
        %v1283 = vshra.s32 %v1042, 16
        %v1284 = vcvt.s32.f32 %v1282
        %v1285 = vcvt.s32.f32 %v1283
        %1286 = vmin.xlane.f32.xlu0 %v1285
        %v1287 = vpop.xlane.xlu0 %1286
        %vm1288 = vcmp.eq.f32.partialorder %v1285, %v1287
        %v1289 = vsel %vm1288, %v1284, inf
        %1290 = vmin.xlane.f32.xlu0 %v1289
        %v1291 = vpop.xlane.xlu0 %1290
        %v1292 = vcvt.f32.s32 %v1291
        %v1293 = vcvt.f32.s32 %v1287
        %v1294 = vshll.u32 %v1293, 16
        %v1295 = vadd.s32 %v1294, %v1292
        %v1296 = vand.u32 %v1043, 65535
        %v1297 = vshra.s32 %v1043, 16
        %v1298 = vcvt.s32.f32 %v1296
        %v1299 = vcvt.s32.f32 %v1297
        %1300 = vmin.xlane.f32.xlu0 %v1299
        %v1301 = vpop.xlane.xlu0 %1300
        %vm1302 = vcmp.eq.f32.partialorder %v1299, %v1301
        %v1303 = vsel %vm1302, %v1298, inf
        %1304 = vmin.xlane.f32.xlu0 %v1303
        %v1305 = vpop.xlane.xlu0 %1304
        %v1306 = vcvt.f32.s32 %v1305
        %v1307 = vcvt.f32.s32 %v1301
        %v1308 = vshll.u32 %v1307, 16
        %v1309 = vadd.s32 %v1308, %v1306
        %v1310 = vand.u32 %v1044, 65535
        %v1311 = vshra.s32 %v1044, 16
        %v1312 = vcvt.s32.f32 %v1310
        %v1313 = vcvt.s32.f32 %v1311
        %1314 = vmin.xlane.f32.xlu0 %v1313
        %v1315 = vpop.xlane.xlu0 %1314
        %vm1316 = vcmp.eq.f32.partialorder %v1313, %v1315
        %v1317 = vsel %vm1316, %v1312, inf
        %1318 = vmin.xlane.f32.xlu0 %v1317
        %v1319 = vpop.xlane.xlu0 %1318
        %v1320 = vcvt.f32.s32 %v1319
        %v1321 = vcvt.f32.s32 %v1315
        %v1322 = vshll.u32 %v1321, 16
        %v1323 = vadd.s32 %v1322, %v1320
        %v1324 = vand.u32 %v1045, 65535
        %v1325 = vshra.s32 %v1045, 16
        %v1326 = vcvt.s32.f32 %v1324
        %v1327 = vcvt.s32.f32 %v1325
        %1328 = vmin.xlane.f32.xlu0 %v1327
        %v1329 = vpop.xlane.xlu0 %1328
        %vm1330 = vcmp.eq.f32.partialorder %v1327, %v1329
        %v1331 = vsel %vm1330, %v1326, inf
        %1332 = vmin.xlane.f32.xlu0 %v1331
        %v1333 = vpop.xlane.xlu0 %1332
        %v1334 = vcvt.f32.s32 %v1333
        %v1335 = vcvt.f32.s32 %v1329
        %v1336 = vshll.u32 %v1335, 16
        %v1337 = vadd.s32 %v1336, %v1334
        %v1338 = vand.u32 %v1046, 65535
        %v1339 = vshra.s32 %v1046, 16
        %v1340 = vcvt.s32.f32 %v1338
        %v1341 = vcvt.s32.f32 %v1339
        %1342 = vmin.xlane.f32.xlu0 %v1341
        %v1343 = vpop.xlane.xlu0 %1342
        %vm1344 = vcmp.eq.f32.partialorder %v1341, %v1343
        %v1345 = vsel %vm1344, %v1340, inf
        %1346 = vmin.xlane.f32.xlu0 %v1345
        %v1347 = vpop.xlane.xlu0 %1346
        %v1348 = vcvt.f32.s32 %v1347
        %v1349 = vcvt.f32.s32 %v1343
        %v1350 = vshll.u32 %v1349, 16
        %v1351 = vadd.s32 %v1350, %v1348
        %v1352 = vand.u32 %v1047, 65535
        %v1353 = vshra.s32 %v1047, 16
        %v1354 = vcvt.s32.f32 %v1352
        %v1355 = vcvt.s32.f32 %v1353
        %1356 = vmin.xlane.f32.xlu0 %v1355
        %v1357 = vpop.xlane.xlu0 %1356
        %vm1358 = vcmp.eq.f32.partialorder %v1355, %v1357
        %v1359 = vsel %vm1358, %v1354, inf
        %1360 = vmin.xlane.f32.xlu0 %v1359
        %v1361 = vpop.xlane.xlu0 %1360
        %v1362 = vcvt.f32.s32 %v1361
        %v1363 = vcvt.f32.s32 %v1357
        %v1364 = vshll.u32 %v1363, 16
        %v1365 = vadd.s32 %v1364, %v1362
        %v1366 = vand.u32 %v1048, 65535
        %v1367 = vshra.s32 %v1048, 16
        %v1368 = vcvt.s32.f32 %v1366
        %v1369 = vcvt.s32.f32 %v1367
        %1370 = vmin.xlane.f32.xlu0 %v1369
        %v1371 = vpop.xlane.xlu0 %1370
        %vm1372 = vcmp.eq.f32.partialorder %v1369, %v1371
        %v1373 = vsel %vm1372, %v1368, inf
        %1374 = vmin.xlane.f32.xlu0 %v1373
        %v1375 = vpop.xlane.xlu0 %1374
        %v1376 = vcvt.f32.s32 %v1375
        %v1377 = vcvt.f32.s32 %v1371
        %v1378 = vshll.u32 %v1377, 16
        %v1379 = vadd.s32 %v1378, %v1376
        %v1380 = vand.u32 %v1049, 65535
        %v1381 = vshra.s32 %v1049, 16
        %v1382 = vcvt.s32.f32 %v1380
        %v1383 = vcvt.s32.f32 %v1381
        %1384 = vmin.xlane.f32.xlu0 %v1383
        %v1385 = vpop.xlane.xlu0 %1384
        %vm1386 = vcmp.eq.f32.partialorder %v1383, %v1385
        %v1387 = vsel %vm1386, %v1382, inf
        %1388 = vmin.xlane.f32.xlu0 %v1387
        %v1389 = vpop.xlane.xlu0 %1388
        %v1390 = vcvt.f32.s32 %v1389
        %v1391 = vcvt.f32.s32 %v1385
        %v1392 = vshll.u32 %v1391, 16
        %v1393 = vadd.s32 %v1392, %v1390
        %v1394 = vand.u32 %v1050, 65535
        %v1395 = vshra.s32 %v1050, 16
        %v1396 = vcvt.s32.f32 %v1394
        %v1397 = vcvt.s32.f32 %v1395
        %1398 = vmin.xlane.f32.xlu0 %v1397
        %v1399 = vpop.xlane.xlu0 %1398
        %vm1400 = vcmp.eq.f32.partialorder %v1397, %v1399
        %v1401 = vsel %vm1400, %v1396, inf
        %1402 = vmin.xlane.f32.xlu0 %v1401
        %v1403 = vpop.xlane.xlu0 %1402
        %v1404 = vcvt.f32.s32 %v1403
        %v1405 = vcvt.f32.s32 %v1399
        %v1406 = vshll.u32 %v1405, 16
        %v1407 = vadd.s32 %v1406, %v1404
        %v1408 = vand.u32 %v1051, 65535
        %v1409 = vshra.s32 %v1051, 16
        %v1410 = vcvt.s32.f32 %v1408
        %v1411 = vcvt.s32.f32 %v1409
        %1412 = vmin.xlane.f32.xlu0 %v1411
        %v1413 = vpop.xlane.xlu0 %1412
        %vm1414 = vcmp.eq.f32.partialorder %v1411, %v1413
        %v1415 = vsel %vm1414, %v1410, inf
        %1416 = vmin.xlane.f32.xlu0 %v1415
        %v1417 = vpop.xlane.xlu0 %1416
        %v1418 = vcvt.f32.s32 %v1417
        %v1419 = vcvt.f32.s32 %v1413
        %v1420 = vshll.u32 %v1419, 16
        %v1421 = vadd.s32 %v1420, %v1418
        %v1422 = vand.u32 %v1052, 65535
        %v1423 = vshra.s32 %v1052, 16
        %v1424 = vcvt.s32.f32 %v1422
        %v1425 = vcvt.s32.f32 %v1423
        %1426 = vmin.xlane.f32.xlu0 %v1425
        %v1427 = vpop.xlane.xlu0 %1426
        %vm1428 = vcmp.eq.f32.partialorder %v1425, %v1427
        %v1429 = vsel %vm1428, %v1424, inf
        %1430 = vmin.xlane.f32.xlu0 %v1429
        %v1431 = vpop.xlane.xlu0 %1430
        %v1432 = vcvt.f32.s32 %v1431
        %v1433 = vcvt.f32.s32 %v1427
        %v1434 = vshll.u32 %v1433, 16
        %v1435 = vadd.s32 %v1434, %v1432
        %v1436 = vand.u32 %v1053, 65535
        %v1437 = vshra.s32 %v1053, 16
        %v1438 = vcvt.s32.f32 %v1436
        %v1439 = vcvt.s32.f32 %v1437
        %1440 = vmin.xlane.f32.xlu0 %v1439
        %v1441 = vpop.xlane.xlu0 %1440
        %vm1442 = vcmp.eq.f32.partialorder %v1439, %v1441
        %v1443 = vsel %vm1442, %v1438, inf
        %1444 = vmin.xlane.f32.xlu0 %v1443
        %v1445 = vpop.xlane.xlu0 %1444
        %v1446 = vcvt.f32.s32 %v1445
        %v1447 = vcvt.f32.s32 %v1441
        %v1448 = vshll.u32 %v1447, 16
        %v1449 = vadd.s32 %v1448, %v1446
        %v1450 = vand.u32 %v1054, 65535
        %v1451 = vshra.s32 %v1054, 16
        %v1452 = vcvt.s32.f32 %v1450
        %v1453 = vcvt.s32.f32 %v1451
        %1454 = vmin.xlane.f32.xlu0 %v1453
        %v1455 = vpop.xlane.xlu0 %1454
        %vm1456 = vcmp.eq.f32.partialorder %v1453, %v1455
        %v1457 = vsel %vm1456, %v1452, inf
        %1458 = vmin.xlane.f32.xlu0 %v1457
        %v1459 = vpop.xlane.xlu0 %1458
        %v1460 = vcvt.f32.s32 %v1459
        %v1461 = vcvt.f32.s32 %v1455
        %v1462 = vshll.u32 %v1461, 16
        %v1463 = vadd.s32 %v1462, %v1460
        %v1464 = vand.u32 %v1055, 65535
        %v1465 = vshra.s32 %v1055, 16
        %v1466 = vcvt.s32.f32 %v1464
        %v1467 = vcvt.s32.f32 %v1465
        %1468 = vmin.xlane.f32.xlu0 %v1467
        %v1469 = vpop.xlane.xlu0 %1468
        %vm1470 = vcmp.eq.f32.partialorder %v1467, %v1469
        %v1471 = vsel %vm1470, %v1466, inf
        %1472 = vmin.xlane.f32.xlu0 %v1471
        %v1473 = vpop.xlane.xlu0 %1472
        %v1474 = vcvt.f32.s32 %v1473
        %v1475 = vcvt.f32.s32 %v1469
        %v1476 = vshll.u32 %v1475, 16
        %v1477 = vadd.s32 %v1476, %v1474
        %v1478 = vand.u32 %v1056, 65535
        %v1479 = vshra.s32 %v1056, 16
        %v1480 = vcvt.s32.f32 %v1478
        %v1481 = vcvt.s32.f32 %v1479
        %1482 = vmin.xlane.f32.xlu0 %v1481
        %v1483 = vpop.xlane.xlu0 %1482
        %vm1484 = vcmp.eq.f32.partialorder %v1481, %v1483
        %v1485 = vsel %vm1484, %v1480, inf
        %1486 = vmin.xlane.f32.xlu0 %v1485
        %v1487 = vpop.xlane.xlu0 %1486
        %v1488 = vcvt.f32.s32 %v1487
        %v1489 = vcvt.f32.s32 %v1483
        %v1490 = vshll.u32 %v1489, 16
        %v1491 = vadd.s32 %v1490, %v1488
        %v1492 = vand.u32 %v1057, 65535
        %v1493 = vshra.s32 %v1057, 16
        %v1494 = vcvt.s32.f32 %v1492
        %v1495 = vcvt.s32.f32 %v1493
        %1496 = vmin.xlane.f32.xlu0 %v1495
        %v1497 = vpop.xlane.xlu0 %1496
        %vm1498 = vcmp.eq.f32.partialorder %v1495, %v1497
        %v1499 = vsel %vm1498, %v1494, inf
        %1500 = vmin.xlane.f32.xlu0 %v1499
        %v1501 = vpop.xlane.xlu0 %1500
        %v1502 = vcvt.f32.s32 %v1501
        %v1503 = vcvt.f32.s32 %v1497
        %v1504 = vshll.u32 %v1503, 16
        %v1505 = vadd.s32 %v1504, %v1502
        %v1506 = vsub.f32 %v771, %v771
        %v1507 = vsub.f32 %v773, %v773
        %v1508 = vsub.f32 %v775, %v775
        %v1509 = vsub.f32 %v777, %v777
        %v1510 = vsub.f32 %v779, %v779
        %v1511 = vsub.f32 %v781, %v781
        %v1512 = vsub.f32 %v783, %v783
        %v1513 = vsub.f32 %v785, %v785
        %v1514 = vsub.f32 %v787, %v787
        %v1515 = vsub.f32 %v789, %v789
        %v1516 = vsub.f32 %v791, %v791
        %v1517 = vsub.f32 %v793, %v793
        %v1518 = vsub.f32 %v795, %v795
        %v1519 = vsub.f32 %v797, %v797
        %v1520 = vsub.f32 %v799, %v799
        %v1521 = vsub.f32 %v801, %v801
        %v1522 = vsub.f32 %v803, %v803
        %v1523 = vsub.f32 %v805, %v805
        %v1524 = vsub.f32 %v807, %v807
        %v1525 = vsub.f32 %v809, %v809
        %v1526 = vsub.f32 %v811, %v811
        %v1527 = vsub.f32 %v813, %v813
        %v1528 = vsub.f32 %v815, %v815
        %v1529 = vsub.f32 %v817, %v817
        %v1530 = vsub.f32 %v819, %v819
        %v1531 = vsub.f32 %v821, %v821
        %v1532 = vsub.f32 %v823, %v823
        %v1533 = vsub.f32 %v825, %v825
        %v1534 = vsub.f32 %v827, %v827
        %v1535 = vsub.f32 %v829, %v829
        %v1536 = vsub.f32 %v831, %v831
        %v1537 = vsub.f32 %v833, %v833
        %v1538 = vmul.f32 %v1506, 1.442695
        %v1539 = vpow.pop %v1538
        %v1540 = vmul.f32 %v1507, 1.442695
        %v1541 = vpow.pop %v1540
        %v1542 = vmul.f32 %v1508, 1.442695
        %v1543 = vpow.pop %v1542
        %v1544 = vmul.f32 %v1509, 1.442695
        %v1545 = vpow.pop %v1544
        %v1546 = vmul.f32 %v1510, 1.442695
        %v1547 = vpow.pop %v1546
        %v1548 = vmul.f32 %v1511, 1.442695
        %v1549 = vpow.pop %v1548
        %v1550 = vmul.f32 %v1512, 1.442695
        %v1551 = vpow.pop %v1550
        %v1552 = vmul.f32 %v1513, 1.442695
        %v1553 = vpow.pop %v1552
        %v1554 = vmul.f32 %v1514, 1.442695
        %v1555 = vpow.pop %v1554
        %v1556 = vmul.f32 %v1515, 1.442695
        %v1557 = vpow.pop %v1556
        %v1558 = vmul.f32 %v1516, 1.442695
        %v1559 = vpow.pop %v1558
        %v1560 = vmul.f32 %v1517, 1.442695
        %v1561 = vpow.pop %v1560
        %v1562 = vmul.f32 %v1518, 1.442695
        %v1563 = vpow.pop %v1562
        %v1564 = vmul.f32 %v1519, 1.442695
        %v1565 = vpow.pop %v1564
        %v1566 = vmul.f32 %v1520, 1.442695
        %v1567 = vpow.pop %v1566
        %v1568 = vmul.f32 %v1521, 1.442695
        %v1569 = vpow.pop %v1568
        %v1570 = vmul.f32 %v1522, 1.442695
        %v1571 = vpow.pop %v1570
        %v1572 = vmul.f32 %v1523, 1.442695
        %v1573 = vpow.pop %v1572
        %v1574 = vmul.f32 %v1524, 1.442695
        %v1575 = vpow.pop %v1574
        %v1576 = vmul.f32 %v1525, 1.442695
        %v1577 = vpow.pop %v1576
        %v1578 = vmul.f32 %v1526, 1.442695
        %v1579 = vpow.pop %v1578
        %v1580 = vmul.f32 %v1527, 1.442695
        %v1581 = vpow.pop %v1580
        %v1582 = vmul.f32 %v1528, 1.442695
        %v1583 = vpow.pop %v1582
        %v1584 = vmul.f32 %v1529, 1.442695
        %v1585 = vpow.pop %v1584
        %v1586 = vmul.f32 %v1530, 1.442695
        %v1587 = vpow.pop %v1586
        %v1588 = vmul.f32 %v1531, 1.442695
        %v1589 = vpow.pop %v1588
        %v1590 = vmul.f32 %v1532, 1.442695
        %v1591 = vpow.pop %v1590
        %v1592 = vmul.f32 %v1533, 1.442695
        %v1593 = vpow.pop %v1592
        %v1594 = vmul.f32 %v1534, 1.442695
        %v1595 = vpow.pop %v1594
        %v1596 = vmul.f32 %v1535, 1.442695
        %v1597 = vpow.pop %v1596
        %v1598 = vmul.f32 %v1536, 1.442695
        %v1599 = vpow.pop %v1598
        %v1600 = vmul.f32 %v1537, 1.442695
        %v1601 = vpow.pop %v1600
        %vm1602 = vcmp.eq.s32.totalorder %v736, %v1071
        %vm1603 = vcmp.eq.s32.totalorder %v736, %v1085
        %vm1604 = vcmp.eq.s32.totalorder %v736, %v1099
        %vm1605 = vcmp.eq.s32.totalorder %v736, %v1113
        %vm1606 = vcmp.eq.s32.totalorder %v736, %v1127
        %vm1607 = vcmp.eq.s32.totalorder %v736, %v1141
        %vm1608 = vcmp.eq.s32.totalorder %v736, %v1155
        %vm1609 = vcmp.eq.s32.totalorder %v736, %v1169
        %vm1610 = vcmp.eq.s32.totalorder %v736, %v1183
        %vm1611 = vcmp.eq.s32.totalorder %v736, %v1197
        %vm1612 = vcmp.eq.s32.totalorder %v736, %v1211
        %vm1613 = vcmp.eq.s32.totalorder %v736, %v1225
        %vm1614 = vcmp.eq.s32.totalorder %v736, %v1239
        %vm1615 = vcmp.eq.s32.totalorder %v736, %v1253
        %vm1616 = vcmp.eq.s32.totalorder %v736, %v1267
        %vm1617 = vcmp.eq.s32.totalorder %v736, %v1281
        %vm1618 = vcmp.eq.s32.totalorder %v736, %v1295
        %vm1619 = vcmp.eq.s32.totalorder %v736, %v1309
        %vm1620 = vcmp.eq.s32.totalorder %v736, %v1323
        %vm1621 = vcmp.eq.s32.totalorder %v736, %v1337
        %vm1622 = vcmp.eq.s32.totalorder %v736, %v1351
        %vm1623 = vcmp.eq.s32.totalorder %v736, %v1365
        %vm1624 = vcmp.eq.s32.totalorder %v736, %v1379
        %vm1625 = vcmp.eq.s32.totalorder %v736, %v1393
        %vm1626 = vcmp.eq.s32.totalorder %v736, %v1407
        %vm1627 = vcmp.eq.s32.totalorder %v736, %v1421
        %vm1628 = vcmp.eq.s32.totalorder %v736, %v1435
        %vm1629 = vcmp.eq.s32.totalorder %v736, %v1449
        %vm1630 = vcmp.eq.s32.totalorder %v736, %v1463
        %vm1631 = vcmp.eq.s32.totalorder %v736, %v1477
        %vm1632 = vcmp.eq.s32.totalorder %v736, %v1491
        %vm1633 = vcmp.eq.s32.totalorder %v736, %v1505
        %v1634 = vsel %vm1602, -1e+30, %v738
        %v1635 = vsel %vm1603, -1e+30, %v739
        %v1636 = vsel %vm1604, -1e+30, %v740
        %v1637 = vsel %vm1605, -1e+30, %v741
        %v1638 = vsel %vm1606, -1e+30, %v742
        %v1639 = vsel %vm1607, -1e+30, %v743
        %v1640 = vsel %vm1608, -1e+30, %v744
        %v1641 = vsel %vm1609, -1e+30, %v745
        %v1642 = vsel %vm1610, -1e+30, %v746
        %v1643 = vsel %vm1611, -1e+30, %v747
        %v1644 = vsel %vm1612, -1e+30, %v748
        %v1645 = vsel %vm1613, -1e+30, %v749
        %v1646 = vsel %vm1614, -1e+30, %v750
        %v1647 = vsel %vm1615, -1e+30, %v751
        %v1648 = vsel %vm1616, -1e+30, %v752
        %v1649 = vsel %vm1617, -1e+30, %v753
        %v1650 = vsel %vm1618, -1e+30, %v754
        %v1651 = vsel %vm1619, -1e+30, %v755
        %v1652 = vsel %vm1620, -1e+30, %v756
        %v1653 = vsel %vm1621, -1e+30, %v757
        %v1654 = vsel %vm1622, -1e+30, %v758
        %v1655 = vsel %vm1623, -1e+30, %v759
        %v1656 = vsel %vm1624, -1e+30, %v760
        %v1657 = vsel %vm1625, -1e+30, %v761
        %v1658 = vsel %vm1626, -1e+30, %v762
        %v1659 = vsel %vm1627, -1e+30, %v763
        %v1660 = vsel %vm1628, -1e+30, %v764
        %v1661 = vsel %vm1629, -1e+30, %v765
        %v1662 = vsel %vm1630, -1e+30, %v766
        %v1663 = vsel %vm1631, -1e+30, %v767
        %v1664 = vsel %vm1632, -1e+30, %v768
        %v1665 = vsel %vm1633, -1e+30, %v769
        %1666 = vmax.xlane.f32.xlu0 %v1634
        %v1667 = vpop.xlane.xlu0 %1666
        %1668 = vmax.xlane.f32.xlu0 %v1635
        %v1669 = vpop.xlane.xlu0 %1668
        %1670 = vmax.xlane.f32.xlu0 %v1636
        %v1671 = vpop.xlane.xlu0 %1670
        %1672 = vmax.xlane.f32.xlu0 %v1637
        %v1673 = vpop.xlane.xlu0 %1672
        %1674 = vmax.xlane.f32.xlu0 %v1638
        %v1675 = vpop.xlane.xlu0 %1674
        %1676 = vmax.xlane.f32.xlu0 %v1639
        %v1677 = vpop.xlane.xlu0 %1676
        %1678 = vmax.xlane.f32.xlu0 %v1640
        %v1679 = vpop.xlane.xlu0 %1678
        %1680 = vmax.xlane.f32.xlu0 %v1641
        %v1681 = vpop.xlane.xlu0 %1680
        %1682 = vmax.xlane.f32.xlu0 %v1642
        %v1683 = vpop.xlane.xlu0 %1682
        %1684 = vmax.xlane.f32.xlu0 %v1643
        %v1685 = vpop.xlane.xlu0 %1684
        %1686 = vmax.xlane.f32.xlu0 %v1644
        %v1687 = vpop.xlane.xlu0 %1686
        %1688 = vmax.xlane.f32.xlu0 %v1645
        %v1689 = vpop.xlane.xlu0 %1688
        %1690 = vmax.xlane.f32.xlu0 %v1646
        %v1691 = vpop.xlane.xlu0 %1690
        %1692 = vmax.xlane.f32.xlu0 %v1647
        %v1693 = vpop.xlane.xlu0 %1692
        %1694 = vmax.xlane.f32.xlu0 %v1648
        %v1695 = vpop.xlane.xlu0 %1694
        %1696 = vmax.xlane.f32.xlu0 %v1649
        %v1697 = vpop.xlane.xlu0 %1696
        %1698 = vmax.xlane.f32.xlu0 %v1650
        %v1699 = vpop.xlane.xlu0 %1698
        %1700 = vmax.xlane.f32.xlu0 %v1651
        %v1701 = vpop.xlane.xlu0 %1700
        %1702 = vmax.xlane.f32.xlu0 %v1652
        %v1703 = vpop.xlane.xlu0 %1702
        %1704 = vmax.xlane.f32.xlu0 %v1653
        %v1705 = vpop.xlane.xlu0 %1704
        %1706 = vmax.xlane.f32.xlu0 %v1654
        %v1707 = vpop.xlane.xlu0 %1706
        %1708 = vmax.xlane.f32.xlu0 %v1655
        %v1709 = vpop.xlane.xlu0 %1708
        %1710 = vmax.xlane.f32.xlu0 %v1656
        %v1711 = vpop.xlane.xlu0 %1710
        %1712 = vmax.xlane.f32.xlu0 %v1657
        %v1713 = vpop.xlane.xlu0 %1712
        %1714 = vmax.xlane.f32.xlu0 %v1658
        %v1715 = vpop.xlane.xlu0 %1714
        %1716 = vmax.xlane.f32.xlu0 %v1659
        %v1717 = vpop.xlane.xlu0 %1716
        %1718 = vmax.xlane.f32.xlu0 %v1660
        %v1719 = vpop.xlane.xlu0 %1718
        %1720 = vmax.xlane.f32.xlu0 %v1661
        %v1721 = vpop.xlane.xlu0 %1720
        %1722 = vmax.xlane.f32.xlu0 %v1662
        %v1723 = vpop.xlane.xlu0 %1722
        %1724 = vmax.xlane.f32.xlu0 %v1663
        %v1725 = vpop.xlane.xlu0 %1724
        %1726 = vmax.xlane.f32.xlu0 %v1664
        %v1727 = vpop.xlane.xlu0 %1726
        %1728 = vmax.xlane.f32.xlu0 %v1665
        %v1729 = vpop.xlane.xlu0 %1728
        %vm1730 = vcmp.eq.f32.partialorder %v1634, %v1667
        %vm1731 = vcmp.eq.f32.partialorder %v1635, %v1669
        %vm1732 = vcmp.eq.f32.partialorder %v1636, %v1671
        %vm1733 = vcmp.eq.f32.partialorder %v1637, %v1673
        %vm1734 = vcmp.eq.f32.partialorder %v1638, %v1675
        %vm1735 = vcmp.eq.f32.partialorder %v1639, %v1677
        %vm1736 = vcmp.eq.f32.partialorder %v1640, %v1679
        %vm1737 = vcmp.eq.f32.partialorder %v1641, %v1681
        %vm1738 = vcmp.eq.f32.partialorder %v1642, %v1683
        %vm1739 = vcmp.eq.f32.partialorder %v1643, %v1685
        %vm1740 = vcmp.eq.f32.partialorder %v1644, %v1687
        %vm1741 = vcmp.eq.f32.partialorder %v1645, %v1689
        %vm1742 = vcmp.eq.f32.partialorder %v1646, %v1691
        %vm1743 = vcmp.eq.f32.partialorder %v1647, %v1693
        %vm1744 = vcmp.eq.f32.partialorder %v1648, %v1695
        %vm1745 = vcmp.eq.f32.partialorder %v1649, %v1697
        %vm1746 = vcmp.eq.f32.partialorder %v1650, %v1699
        %vm1747 = vcmp.eq.f32.partialorder %v1651, %v1701
        %vm1748 = vcmp.eq.f32.partialorder %v1652, %v1703
        %vm1749 = vcmp.eq.f32.partialorder %v1653, %v1705
        %vm1750 = vcmp.eq.f32.partialorder %v1654, %v1707
        %vm1751 = vcmp.eq.f32.partialorder %v1655, %v1709
        %vm1752 = vcmp.eq.f32.partialorder %v1656, %v1711
        %vm1753 = vcmp.eq.f32.partialorder %v1657, %v1713
        %vm1754 = vcmp.eq.f32.partialorder %v1658, %v1715
        %vm1755 = vcmp.eq.f32.partialorder %v1659, %v1717
        %vm1756 = vcmp.eq.f32.partialorder %v1660, %v1719
        %vm1757 = vcmp.eq.f32.partialorder %v1661, %v1721
        %vm1758 = vcmp.eq.f32.partialorder %v1662, %v1723
        %vm1759 = vcmp.eq.f32.partialorder %v1663, %v1725
        %vm1760 = vcmp.eq.f32.partialorder %v1664, %v1727
        %vm1761 = vcmp.eq.f32.partialorder %v1665, %v1729
        %v1762 = vsel %vm1730, %v736, 128
        %v1763 = vsel %vm1731, %v736, 128
        %v1764 = vsel %vm1732, %v736, 128
        %v1765 = vsel %vm1733, %v736, 128
        %v1766 = vsel %vm1734, %v736, 128
        %v1767 = vsel %vm1735, %v736, 128
        %v1768 = vsel %vm1736, %v736, 128
        %v1769 = vsel %vm1737, %v736, 128
        %v1770 = vsel %vm1738, %v736, 128
        %v1771 = vsel %vm1739, %v736, 128
        %v1772 = vsel %vm1740, %v736, 128
        %v1773 = vsel %vm1741, %v736, 128
        %v1774 = vsel %vm1742, %v736, 128
        %v1775 = vsel %vm1743, %v736, 128
        %v1776 = vsel %vm1744, %v736, 128
        %v1777 = vsel %vm1745, %v736, 128
        %v1778 = vsel %vm1746, %v736, 128
        %v1779 = vsel %vm1747, %v736, 128
        %v1780 = vsel %vm1748, %v736, 128
        %v1781 = vsel %vm1749, %v736, 128
        %v1782 = vsel %vm1750, %v736, 128
        %v1783 = vsel %vm1751, %v736, 128
        %v1784 = vsel %vm1752, %v736, 128
        %v1785 = vsel %vm1753, %v736, 128
        %v1786 = vsel %vm1754, %v736, 128
        %v1787 = vsel %vm1755, %v736, 128
        %v1788 = vsel %vm1756, %v736, 128
        %v1789 = vsel %vm1757, %v736, 128
        %v1790 = vsel %vm1758, %v736, 128
        %v1791 = vsel %vm1759, %v736, 128
        %v1792 = vsel %vm1760, %v736, 128
        %v1793 = vsel %vm1761, %v736, 128
        %v1794 = vand.u32 %v1762, 65535
        %v1795 = vshra.s32 %v1762, 16
        %v1796 = vcvt.s32.f32 %v1794
        %v1797 = vcvt.s32.f32 %v1795
        %1798 = vmin.xlane.f32.xlu0 %v1797
        %v1799 = vpop.xlane.xlu0 %1798
        %vm1800 = vcmp.eq.f32.partialorder %v1797, %v1799
        %v1801 = vsel %vm1800, %v1796, inf
        %1802 = vmin.xlane.f32.xlu0 %v1801
        %v1803 = vpop.xlane.xlu0 %1802
        %v1804 = vcvt.f32.s32 %v1803
        %v1805 = vcvt.f32.s32 %v1799
        %v1806 = vshll.u32 %v1805, 16
        %v1807 = vadd.s32 %v1806, %v1804
        %v1808 = vand.u32 %v1763, 65535
        %v1809 = vshra.s32 %v1763, 16
        %v1810 = vcvt.s32.f32 %v1808
        %v1811 = vcvt.s32.f32 %v1809
        %1812 = vmin.xlane.f32.xlu0 %v1811
        %v1813 = vpop.xlane.xlu0 %1812
        %vm1814 = vcmp.eq.f32.partialorder %v1811, %v1813
        %v1815 = vsel %vm1814, %v1810, inf
        %1816 = vmin.xlane.f32.xlu0 %v1815
        %v1817 = vpop.xlane.xlu0 %1816
        %v1818 = vcvt.f32.s32 %v1817
        %v1819 = vcvt.f32.s32 %v1813
        %v1820 = vshll.u32 %v1819, 16
        %v1821 = vadd.s32 %v1820, %v1818
        %v1822 = vand.u32 %v1764, 65535
        %v1823 = vshra.s32 %v1764, 16
        %v1824 = vcvt.s32.f32 %v1822
        %v1825 = vcvt.s32.f32 %v1823
        %1826 = vmin.xlane.f32.xlu0 %v1825
        %v1827 = vpop.xlane.xlu0 %1826
        %vm1828 = vcmp.eq.f32.partialorder %v1825, %v1827
        %v1829 = vsel %vm1828, %v1824, inf
        %1830 = vmin.xlane.f32.xlu0 %v1829
        %v1831 = vpop.xlane.xlu0 %1830
        %v1832 = vcvt.f32.s32 %v1831
        %v1833 = vcvt.f32.s32 %v1827
        %v1834 = vshll.u32 %v1833, 16
        %v1835 = vadd.s32 %v1834, %v1832
        %v1836 = vand.u32 %v1765, 65535
        %v1837 = vshra.s32 %v1765, 16
        %v1838 = vcvt.s32.f32 %v1836
        %v1839 = vcvt.s32.f32 %v1837
        %1840 = vmin.xlane.f32.xlu0 %v1839
        %v1841 = vpop.xlane.xlu0 %1840
        %vm1842 = vcmp.eq.f32.partialorder %v1839, %v1841
        %v1843 = vsel %vm1842, %v1838, inf
        %1844 = vmin.xlane.f32.xlu0 %v1843
        %v1845 = vpop.xlane.xlu0 %1844
        %v1846 = vcvt.f32.s32 %v1845
        %v1847 = vcvt.f32.s32 %v1841
        %v1848 = vshll.u32 %v1847, 16
        %v1849 = vadd.s32 %v1848, %v1846
        %v1850 = vand.u32 %v1766, 65535
        %v1851 = vshra.s32 %v1766, 16
        %v1852 = vcvt.s32.f32 %v1850
        %v1853 = vcvt.s32.f32 %v1851
        %1854 = vmin.xlane.f32.xlu0 %v1853
        %v1855 = vpop.xlane.xlu0 %1854
        %vm1856 = vcmp.eq.f32.partialorder %v1853, %v1855
        %v1857 = vsel %vm1856, %v1852, inf
        %1858 = vmin.xlane.f32.xlu0 %v1857
        %v1859 = vpop.xlane.xlu0 %1858
        %v1860 = vcvt.f32.s32 %v1859
        %v1861 = vcvt.f32.s32 %v1855
        %v1862 = vshll.u32 %v1861, 16
        %v1863 = vadd.s32 %v1862, %v1860
        %v1864 = vand.u32 %v1767, 65535
        %v1865 = vshra.s32 %v1767, 16
        %v1866 = vcvt.s32.f32 %v1864
        %v1867 = vcvt.s32.f32 %v1865
        %1868 = vmin.xlane.f32.xlu0 %v1867
        %v1869 = vpop.xlane.xlu0 %1868
        %vm1870 = vcmp.eq.f32.partialorder %v1867, %v1869
        %v1871 = vsel %vm1870, %v1866, inf
        %1872 = vmin.xlane.f32.xlu0 %v1871
        %v1873 = vpop.xlane.xlu0 %1872
        %v1874 = vcvt.f32.s32 %v1873
        %v1875 = vcvt.f32.s32 %v1869
        %v1876 = vshll.u32 %v1875, 16
        %v1877 = vadd.s32 %v1876, %v1874
        %v1878 = vand.u32 %v1768, 65535
        %v1879 = vshra.s32 %v1768, 16
        %v1880 = vcvt.s32.f32 %v1878
        %v1881 = vcvt.s32.f32 %v1879
        %1882 = vmin.xlane.f32.xlu0 %v1881
        %v1883 = vpop.xlane.xlu0 %1882
        %vm1884 = vcmp.eq.f32.partialorder %v1881, %v1883
        %v1885 = vsel %vm1884, %v1880, inf
        %1886 = vmin.xlane.f32.xlu0 %v1885
        %v1887 = vpop.xlane.xlu0 %1886
        %v1888 = vcvt.f32.s32 %v1887
        %v1889 = vcvt.f32.s32 %v1883
        %v1890 = vshll.u32 %v1889, 16
        %v1891 = vadd.s32 %v1890, %v1888
        %v1892 = vand.u32 %v1769, 65535
        %v1893 = vshra.s32 %v1769, 16
        %v1894 = vcvt.s32.f32 %v1892
        %v1895 = vcvt.s32.f32 %v1893
        %1896 = vmin.xlane.f32.xlu0 %v1895
        %v1897 = vpop.xlane.xlu0 %1896
        %vm1898 = vcmp.eq.f32.partialorder %v1895, %v1897
        %v1899 = vsel %vm1898, %v1894, inf
        %1900 = vmin.xlane.f32.xlu0 %v1899
        %v1901 = vpop.xlane.xlu0 %1900
        %v1902 = vcvt.f32.s32 %v1901
        %v1903 = vcvt.f32.s32 %v1897
        %v1904 = vshll.u32 %v1903, 16
        %v1905 = vadd.s32 %v1904, %v1902
        %v1906 = vand.u32 %v1770, 65535
        %v1907 = vshra.s32 %v1770, 16
        %v1908 = vcvt.s32.f32 %v1906
        %v1909 = vcvt.s32.f32 %v1907
        %1910 = vmin.xlane.f32.xlu0 %v1909
        %v1911 = vpop.xlane.xlu0 %1910
        %vm1912 = vcmp.eq.f32.partialorder %v1909, %v1911
        %v1913 = vsel %vm1912, %v1908, inf
        %1914 = vmin.xlane.f32.xlu0 %v1913
        %v1915 = vpop.xlane.xlu0 %1914
        %v1916 = vcvt.f32.s32 %v1915
        %v1917 = vcvt.f32.s32 %v1911
        %v1918 = vshll.u32 %v1917, 16
        %v1919 = vadd.s32 %v1918, %v1916
        %v1920 = vand.u32 %v1771, 65535
        %v1921 = vshra.s32 %v1771, 16
        %v1922 = vcvt.s32.f32 %v1920
        %v1923 = vcvt.s32.f32 %v1921
        %1924 = vmin.xlane.f32.xlu0 %v1923
        %v1925 = vpop.xlane.xlu0 %1924
        %vm1926 = vcmp.eq.f32.partialorder %v1923, %v1925
        %v1927 = vsel %vm1926, %v1922, inf
        %1928 = vmin.xlane.f32.xlu0 %v1927
        %v1929 = vpop.xlane.xlu0 %1928
        %v1930 = vcvt.f32.s32 %v1929
        %v1931 = vcvt.f32.s32 %v1925
        %v1932 = vshll.u32 %v1931, 16
        %v1933 = vadd.s32 %v1932, %v1930
        %v1934 = vand.u32 %v1772, 65535
        %v1935 = vshra.s32 %v1772, 16
        %v1936 = vcvt.s32.f32 %v1934
        %v1937 = vcvt.s32.f32 %v1935
        %1938 = vmin.xlane.f32.xlu0 %v1937
        %v1939 = vpop.xlane.xlu0 %1938
        %vm1940 = vcmp.eq.f32.partialorder %v1937, %v1939
        %v1941 = vsel %vm1940, %v1936, inf
        %1942 = vmin.xlane.f32.xlu0 %v1941
        %v1943 = vpop.xlane.xlu0 %1942
        %v1944 = vcvt.f32.s32 %v1943
        %v1945 = vcvt.f32.s32 %v1939
        %v1946 = vshll.u32 %v1945, 16
        %v1947 = vadd.s32 %v1946, %v1944
        %v1948 = vand.u32 %v1773, 65535
        %v1949 = vshra.s32 %v1773, 16
        %v1950 = vcvt.s32.f32 %v1948
        %v1951 = vcvt.s32.f32 %v1949
        %1952 = vmin.xlane.f32.xlu0 %v1951
        %v1953 = vpop.xlane.xlu0 %1952
        %vm1954 = vcmp.eq.f32.partialorder %v1951, %v1953
        %v1955 = vsel %vm1954, %v1950, inf
        %1956 = vmin.xlane.f32.xlu0 %v1955
        %v1957 = vpop.xlane.xlu0 %1956
        %v1958 = vcvt.f32.s32 %v1957
        %v1959 = vcvt.f32.s32 %v1953
        %v1960 = vshll.u32 %v1959, 16
        %v1961 = vadd.s32 %v1960, %v1958
        %v1962 = vand.u32 %v1774, 65535
        %v1963 = vshra.s32 %v1774, 16
        %v1964 = vcvt.s32.f32 %v1962
        %v1965 = vcvt.s32.f32 %v1963
        %1966 = vmin.xlane.f32.xlu0 %v1965
        %v1967 = vpop.xlane.xlu0 %1966
        %vm1968 = vcmp.eq.f32.partialorder %v1965, %v1967
        %v1969 = vsel %vm1968, %v1964, inf
        %1970 = vmin.xlane.f32.xlu0 %v1969
        %v1971 = vpop.xlane.xlu0 %1970
        %v1972 = vcvt.f32.s32 %v1971
        %v1973 = vcvt.f32.s32 %v1967
        %v1974 = vshll.u32 %v1973, 16
        %v1975 = vadd.s32 %v1974, %v1972
        %v1976 = vand.u32 %v1775, 65535
        %v1977 = vshra.s32 %v1775, 16
        %v1978 = vcvt.s32.f32 %v1976
        %v1979 = vcvt.s32.f32 %v1977
        %1980 = vmin.xlane.f32.xlu0 %v1979
        %v1981 = vpop.xlane.xlu0 %1980
        %vm1982 = vcmp.eq.f32.partialorder %v1979, %v1981
        %v1983 = vsel %vm1982, %v1978, inf
        %1984 = vmin.xlane.f32.xlu0 %v1983
        %v1985 = vpop.xlane.xlu0 %1984
        %v1986 = vcvt.f32.s32 %v1985
        %v1987 = vcvt.f32.s32 %v1981
        %v1988 = vshll.u32 %v1987, 16
        %v1989 = vadd.s32 %v1988, %v1986
        %v1990 = vand.u32 %v1776, 65535
        %v1991 = vshra.s32 %v1776, 16
        %v1992 = vcvt.s32.f32 %v1990
        %v1993 = vcvt.s32.f32 %v1991
        %1994 = vmin.xlane.f32.xlu0 %v1993
        %v1995 = vpop.xlane.xlu0 %1994
        %vm1996 = vcmp.eq.f32.partialorder %v1993, %v1995
        %v1997 = vsel %vm1996, %v1992, inf
        %1998 = vmin.xlane.f32.xlu0 %v1997
        %v1999 = vpop.xlane.xlu0 %1998
        %v2000 = vcvt.f32.s32 %v1999
        %v2001 = vcvt.f32.s32 %v1995
        %v2002 = vshll.u32 %v2001, 16
        %v2003 = vadd.s32 %v2002, %v2000
        %v2004 = vand.u32 %v1777, 65535
        %v2005 = vshra.s32 %v1777, 16
        %v2006 = vcvt.s32.f32 %v2004
        %v2007 = vcvt.s32.f32 %v2005
        %2008 = vmin.xlane.f32.xlu0 %v2007
        %v2009 = vpop.xlane.xlu0 %2008
        %vm2010 = vcmp.eq.f32.partialorder %v2007, %v2009
        %v2011 = vsel %vm2010, %v2006, inf
        %2012 = vmin.xlane.f32.xlu0 %v2011
        %v2013 = vpop.xlane.xlu0 %2012
        %v2014 = vcvt.f32.s32 %v2013
        %v2015 = vcvt.f32.s32 %v2009
        %v2016 = vshll.u32 %v2015, 16
        %v2017 = vadd.s32 %v2016, %v2014
        %v2018 = vand.u32 %v1778, 65535
        %v2019 = vshra.s32 %v1778, 16
        %v2020 = vcvt.s32.f32 %v2018
        %v2021 = vcvt.s32.f32 %v2019
        %2022 = vmin.xlane.f32.xlu0 %v2021
        %v2023 = vpop.xlane.xlu0 %2022
        %vm2024 = vcmp.eq.f32.partialorder %v2021, %v2023
        %v2025 = vsel %vm2024, %v2020, inf
        %2026 = vmin.xlane.f32.xlu0 %v2025
        %v2027 = vpop.xlane.xlu0 %2026
        %v2028 = vcvt.f32.s32 %v2027
        %v2029 = vcvt.f32.s32 %v2023
        %v2030 = vshll.u32 %v2029, 16
        %v2031 = vadd.s32 %v2030, %v2028
        %v2032 = vand.u32 %v1779, 65535
        %v2033 = vshra.s32 %v1779, 16
        %v2034 = vcvt.s32.f32 %v2032
        %v2035 = vcvt.s32.f32 %v2033
        %2036 = vmin.xlane.f32.xlu0 %v2035
        %v2037 = vpop.xlane.xlu0 %2036
        %vm2038 = vcmp.eq.f32.partialorder %v2035, %v2037
        %v2039 = vsel %vm2038, %v2034, inf
        %2040 = vmin.xlane.f32.xlu0 %v2039
        %v2041 = vpop.xlane.xlu0 %2040
        %v2042 = vcvt.f32.s32 %v2041
        %v2043 = vcvt.f32.s32 %v2037
        %v2044 = vshll.u32 %v2043, 16
        %v2045 = vadd.s32 %v2044, %v2042
        %v2046 = vand.u32 %v1780, 65535
        %v2047 = vshra.s32 %v1780, 16
        %v2048 = vcvt.s32.f32 %v2046
        %v2049 = vcvt.s32.f32 %v2047
        %2050 = vmin.xlane.f32.xlu0 %v2049
        %v2051 = vpop.xlane.xlu0 %2050
        %vm2052 = vcmp.eq.f32.partialorder %v2049, %v2051
        %v2053 = vsel %vm2052, %v2048, inf
        %2054 = vmin.xlane.f32.xlu0 %v2053
        %v2055 = vpop.xlane.xlu0 %2054
        %v2056 = vcvt.f32.s32 %v2055
        %v2057 = vcvt.f32.s32 %v2051
        %v2058 = vshll.u32 %v2057, 16
        %v2059 = vadd.s32 %v2058, %v2056
        %v2060 = vand.u32 %v1781, 65535
        %v2061 = vshra.s32 %v1781, 16
        %v2062 = vcvt.s32.f32 %v2060
        %v2063 = vcvt.s32.f32 %v2061
        %2064 = vmin.xlane.f32.xlu0 %v2063
        %v2065 = vpop.xlane.xlu0 %2064
        %vm2066 = vcmp.eq.f32.partialorder %v2063, %v2065
        %v2067 = vsel %vm2066, %v2062, inf
        %2068 = vmin.xlane.f32.xlu0 %v2067
        %v2069 = vpop.xlane.xlu0 %2068
        %v2070 = vcvt.f32.s32 %v2069
        %v2071 = vcvt.f32.s32 %v2065
        %v2072 = vshll.u32 %v2071, 16
        %v2073 = vadd.s32 %v2072, %v2070
        %v2074 = vand.u32 %v1782, 65535
        %v2075 = vshra.s32 %v1782, 16
        %v2076 = vcvt.s32.f32 %v2074
        %v2077 = vcvt.s32.f32 %v2075
        %2078 = vmin.xlane.f32.xlu0 %v2077
        %v2079 = vpop.xlane.xlu0 %2078
        %vm2080 = vcmp.eq.f32.partialorder %v2077, %v2079
        %v2081 = vsel %vm2080, %v2076, inf
        %2082 = vmin.xlane.f32.xlu0 %v2081
        %v2083 = vpop.xlane.xlu0 %2082
        %v2084 = vcvt.f32.s32 %v2083
        %v2085 = vcvt.f32.s32 %v2079
        %v2086 = vshll.u32 %v2085, 16
        %v2087 = vadd.s32 %v2086, %v2084
        %v2088 = vand.u32 %v1783, 65535
        %v2089 = vshra.s32 %v1783, 16
        %v2090 = vcvt.s32.f32 %v2088
        %v2091 = vcvt.s32.f32 %v2089
        %2092 = vmin.xlane.f32.xlu0 %v2091
        %v2093 = vpop.xlane.xlu0 %2092
        %vm2094 = vcmp.eq.f32.partialorder %v2091, %v2093
        %v2095 = vsel %vm2094, %v2090, inf
        %2096 = vmin.xlane.f32.xlu0 %v2095
        %v2097 = vpop.xlane.xlu0 %2096
        %v2098 = vcvt.f32.s32 %v2097
        %v2099 = vcvt.f32.s32 %v2093
        %v2100 = vshll.u32 %v2099, 16
        %v2101 = vadd.s32 %v2100, %v2098
        %v2102 = vand.u32 %v1784, 65535
        %v2103 = vshra.s32 %v1784, 16
        %v2104 = vcvt.s32.f32 %v2102
        %v2105 = vcvt.s32.f32 %v2103
        %2106 = vmin.xlane.f32.xlu0 %v2105
        %v2107 = vpop.xlane.xlu0 %2106
        %vm2108 = vcmp.eq.f32.partialorder %v2105, %v2107
        %v2109 = vsel %vm2108, %v2104, inf
        %2110 = vmin.xlane.f32.xlu0 %v2109
        %v2111 = vpop.xlane.xlu0 %2110
        %v2112 = vcvt.f32.s32 %v2111
        %v2113 = vcvt.f32.s32 %v2107
        %v2114 = vshll.u32 %v2113, 16
        %v2115 = vadd.s32 %v2114, %v2112
        %v2116 = vand.u32 %v1785, 65535
        %v2117 = vshra.s32 %v1785, 16
        %v2118 = vcvt.s32.f32 %v2116
        %v2119 = vcvt.s32.f32 %v2117
        %2120 = vmin.xlane.f32.xlu0 %v2119
        %v2121 = vpop.xlane.xlu0 %2120
        %vm2122 = vcmp.eq.f32.partialorder %v2119, %v2121
        %v2123 = vsel %vm2122, %v2118, inf
        %2124 = vmin.xlane.f32.xlu0 %v2123
        %v2125 = vpop.xlane.xlu0 %2124
        %v2126 = vcvt.f32.s32 %v2125
        %v2127 = vcvt.f32.s32 %v2121
        %v2128 = vshll.u32 %v2127, 16
        %v2129 = vadd.s32 %v2128, %v2126
        %v2130 = vand.u32 %v1786, 65535
        %v2131 = vshra.s32 %v1786, 16
        %v2132 = vcvt.s32.f32 %v2130
        %v2133 = vcvt.s32.f32 %v2131
        %2134 = vmin.xlane.f32.xlu0 %v2133
        %v2135 = vpop.xlane.xlu0 %2134
        %vm2136 = vcmp.eq.f32.partialorder %v2133, %v2135
        %v2137 = vsel %vm2136, %v2132, inf
        %2138 = vmin.xlane.f32.xlu0 %v2137
        %v2139 = vpop.xlane.xlu0 %2138
        %v2140 = vcvt.f32.s32 %v2139
        %v2141 = vcvt.f32.s32 %v2135
        %v2142 = vshll.u32 %v2141, 16
        %v2143 = vadd.s32 %v2142, %v2140
        %v2144 = vand.u32 %v1787, 65535
        %v2145 = vshra.s32 %v1787, 16
        %v2146 = vcvt.s32.f32 %v2144
        %v2147 = vcvt.s32.f32 %v2145
        %2148 = vmin.xlane.f32.xlu0 %v2147
        %v2149 = vpop.xlane.xlu0 %2148
        %vm2150 = vcmp.eq.f32.partialorder %v2147, %v2149
        %v2151 = vsel %vm2150, %v2146, inf
        %2152 = vmin.xlane.f32.xlu0 %v2151
        %v2153 = vpop.xlane.xlu0 %2152
        %v2154 = vcvt.f32.s32 %v2153
        %v2155 = vcvt.f32.s32 %v2149
        %v2156 = vshll.u32 %v2155, 16
        %v2157 = vadd.s32 %v2156, %v2154
        %v2158 = vand.u32 %v1788, 65535
        %v2159 = vshra.s32 %v1788, 16
        %v2160 = vcvt.s32.f32 %v2158
        %v2161 = vcvt.s32.f32 %v2159
        %2162 = vmin.xlane.f32.xlu0 %v2161
        %v2163 = vpop.xlane.xlu0 %2162
        %vm2164 = vcmp.eq.f32.partialorder %v2161, %v2163
        %v2165 = vsel %vm2164, %v2160, inf
        %2166 = vmin.xlane.f32.xlu0 %v2165
        %v2167 = vpop.xlane.xlu0 %2166
        %v2168 = vcvt.f32.s32 %v2167
        %v2169 = vcvt.f32.s32 %v2163
        %v2170 = vshll.u32 %v2169, 16
        %v2171 = vadd.s32 %v2170, %v2168
        %v2172 = vand.u32 %v1789, 65535
        %v2173 = vshra.s32 %v1789, 16
        %v2174 = vcvt.s32.f32 %v2172
        %v2175 = vcvt.s32.f32 %v2173
        %2176 = vmin.xlane.f32.xlu0 %v2175
        %v2177 = vpop.xlane.xlu0 %2176
        %vm2178 = vcmp.eq.f32.partialorder %v2175, %v2177
        %v2179 = vsel %vm2178, %v2174, inf
        %2180 = vmin.xlane.f32.xlu0 %v2179
        %v2181 = vpop.xlane.xlu0 %2180
        %v2182 = vcvt.f32.s32 %v2181
        %v2183 = vcvt.f32.s32 %v2177
        %v2184 = vshll.u32 %v2183, 16
        %v2185 = vadd.s32 %v2184, %v2182
        %v2186 = vand.u32 %v1790, 65535
        %v2187 = vshra.s32 %v1790, 16
        %v2188 = vcvt.s32.f32 %v2186
        %v2189 = vcvt.s32.f32 %v2187
        %2190 = vmin.xlane.f32.xlu0 %v2189
        %v2191 = vpop.xlane.xlu0 %2190
        %vm2192 = vcmp.eq.f32.partialorder %v2189, %v2191
        %v2193 = vsel %vm2192, %v2188, inf
        %2194 = vmin.xlane.f32.xlu0 %v2193
        %v2195 = vpop.xlane.xlu0 %2194
        %v2196 = vcvt.f32.s32 %v2195
        %v2197 = vcvt.f32.s32 %v2191
        %v2198 = vshll.u32 %v2197, 16
        %v2199 = vadd.s32 %v2198, %v2196
        %v2200 = vand.u32 %v1791, 65535
        %v2201 = vshra.s32 %v1791, 16
        %v2202 = vcvt.s32.f32 %v2200
        %v2203 = vcvt.s32.f32 %v2201
        %2204 = vmin.xlane.f32.xlu0 %v2203
        %v2205 = vpop.xlane.xlu0 %2204
        %vm2206 = vcmp.eq.f32.partialorder %v2203, %v2205
        %v2207 = vsel %vm2206, %v2202, inf
        %2208 = vmin.xlane.f32.xlu0 %v2207
        %v2209 = vpop.xlane.xlu0 %2208
        %v2210 = vcvt.f32.s32 %v2209
        %v2211 = vcvt.f32.s32 %v2205
        %v2212 = vshll.u32 %v2211, 16
        %v2213 = vadd.s32 %v2212, %v2210
        %v2214 = vand.u32 %v1792, 65535
        %v2215 = vshra.s32 %v1792, 16
        %v2216 = vcvt.s32.f32 %v2214
        %v2217 = vcvt.s32.f32 %v2215
        %2218 = vmin.xlane.f32.xlu0 %v2217
        %v2219 = vpop.xlane.xlu0 %2218
        %vm2220 = vcmp.eq.f32.partialorder %v2217, %v2219
        %v2221 = vsel %vm2220, %v2216, inf
        %2222 = vmin.xlane.f32.xlu0 %v2221
        %v2223 = vpop.xlane.xlu0 %2222
        %v2224 = vcvt.f32.s32 %v2223
        %v2225 = vcvt.f32.s32 %v2219
        %v2226 = vshll.u32 %v2225, 16
        %v2227 = vadd.s32 %v2226, %v2224
        %v2228 = vand.u32 %v1793, 65535
        %v2229 = vshra.s32 %v1793, 16
        %v2230 = vcvt.s32.f32 %v2228
        %v2231 = vcvt.s32.f32 %v2229
        %2232 = vmin.xlane.f32.xlu0 %v2231
        %v2233 = vpop.xlane.xlu0 %2232
        %vm2234 = vcmp.eq.f32.partialorder %v2231, %v2233
        %v2235 = vsel %vm2234, %v2230, inf
        %2236 = vmin.xlane.f32.xlu0 %v2235
        %v2237 = vpop.xlane.xlu0 %2236
        %v2238 = vcvt.f32.s32 %v2237
        %v2239 = vcvt.f32.s32 %v2233
        %v2240 = vshll.u32 %v2239, 16
        %v2241 = vadd.s32 %v2240, %v2238
        %v2242 = vsub.f32 %v1667, %v771
        %v2243 = vsub.f32 %v1669, %v773
        %v2244 = vsub.f32 %v1671, %v775
        %v2245 = vsub.f32 %v1673, %v777
        %v2246 = vsub.f32 %v1675, %v779
        %v2247 = vsub.f32 %v1677, %v781
        %v2248 = vsub.f32 %v1679, %v783
        %v2249 = vsub.f32 %v1681, %v785
        %v2250 = vsub.f32 %v1683, %v787
        %v2251 = vsub.f32 %v1685, %v789
        %v2252 = vsub.f32 %v1687, %v791
        %v2253 = vsub.f32 %v1689, %v793
        %v2254 = vsub.f32 %v1691, %v795
        %v2255 = vsub.f32 %v1693, %v797
        %v2256 = vsub.f32 %v1695, %v799
        %v2257 = vsub.f32 %v1697, %v801
        %v2258 = vsub.f32 %v1699, %v803
        %v2259 = vsub.f32 %v1701, %v805
        %v2260 = vsub.f32 %v1703, %v807
        %v2261 = vsub.f32 %v1705, %v809
        %v2262 = vsub.f32 %v1707, %v811
        %v2263 = vsub.f32 %v1709, %v813
        %v2264 = vsub.f32 %v1711, %v815
        %v2265 = vsub.f32 %v1713, %v817
        %v2266 = vsub.f32 %v1715, %v819
        %v2267 = vsub.f32 %v1717, %v821
        %v2268 = vsub.f32 %v1719, %v823
        %v2269 = vsub.f32 %v1721, %v825
        %v2270 = vsub.f32 %v1723, %v827
        %v2271 = vsub.f32 %v1725, %v829
        %v2272 = vsub.f32 %v1727, %v831
        %v2273 = vsub.f32 %v1729, %v833
        %v2274 = vmul.f32 %v2242, 1.442695
        %v2275 = vpow.pop %v2274
        %v2276 = vmul.f32 %v2243, 1.442695
        %v2277 = vpow.pop %v2276
        %v2278 = vmul.f32 %v2244, 1.442695
        %v2279 = vpow.pop %v2278
        %v2280 = vmul.f32 %v2245, 1.442695
        %v2281 = vpow.pop %v2280
        %v2282 = vmul.f32 %v2246, 1.442695
        %v2283 = vpow.pop %v2282
        %v2284 = vmul.f32 %v2247, 1.442695
        %v2285 = vpow.pop %v2284
        %v2286 = vmul.f32 %v2248, 1.442695
        %v2287 = vpow.pop %v2286
        %v2288 = vmul.f32 %v2249, 1.442695
        %v2289 = vpow.pop %v2288
        %v2290 = vmul.f32 %v2250, 1.442695
        %v2291 = vpow.pop %v2290
        %v2292 = vmul.f32 %v2251, 1.442695
        %v2293 = vpow.pop %v2292
        %v2294 = vmul.f32 %v2252, 1.442695
        %v2295 = vpow.pop %v2294
        %v2296 = vmul.f32 %v2253, 1.442695
        %v2297 = vpow.pop %v2296
        %v2298 = vmul.f32 %v2254, 1.442695
        %v2299 = vpow.pop %v2298
        %v2300 = vmul.f32 %v2255, 1.442695
        %v2301 = vpow.pop %v2300
        %v2302 = vmul.f32 %v2256, 1.442695
        %v2303 = vpow.pop %v2302
        %v2304 = vmul.f32 %v2257, 1.442695
        %v2305 = vpow.pop %v2304
        %v2306 = vmul.f32 %v2258, 1.442695
        %v2307 = vpow.pop %v2306
        %v2308 = vmul.f32 %v2259, 1.442695
        %v2309 = vpow.pop %v2308
        %v2310 = vmul.f32 %v2260, 1.442695
        %v2311 = vpow.pop %v2310
        %v2312 = vmul.f32 %v2261, 1.442695
        %v2313 = vpow.pop %v2312
        %v2314 = vmul.f32 %v2262, 1.442695
        %v2315 = vpow.pop %v2314
        %v2316 = vmul.f32 %v2263, 1.442695
        %v2317 = vpow.pop %v2316
        %v2318 = vmul.f32 %v2264, 1.442695
        %v2319 = vpow.pop %v2318
        %v2320 = vmul.f32 %v2265, 1.442695
        %v2321 = vpow.pop %v2320
        %v2322 = vmul.f32 %v2266, 1.442695
        %v2323 = vpow.pop %v2322
        %v2324 = vmul.f32 %v2267, 1.442695
        %v2325 = vpow.pop %v2324
        %v2326 = vmul.f32 %v2268, 1.442695
        %v2327 = vpow.pop %v2326
        %v2328 = vmul.f32 %v2269, 1.442695
        %v2329 = vpow.pop %v2328
        %v2330 = vmul.f32 %v2270, 1.442695
        %v2331 = vpow.pop %v2330
        %v2332 = vmul.f32 %v2271, 1.442695
        %v2333 = vpow.pop %v2332
        %v2334 = vmul.f32 %v2272, 1.442695
        %v2335 = vpow.pop %v2334
        %v2336 = vmul.f32 %v2273, 1.442695
        %v2337 = vpow.pop %v2336
        %vm2338 = vcmp.eq.s32.totalorder %v736, %v1807
        %vm2339 = vcmp.eq.s32.totalorder %v736, %v1821
        %vm2340 = vcmp.eq.s32.totalorder %v736, %v1835
        %vm2341 = vcmp.eq.s32.totalorder %v736, %v1849
        %vm2342 = vcmp.eq.s32.totalorder %v736, %v1863
        %vm2343 = vcmp.eq.s32.totalorder %v736, %v1877
        %vm2344 = vcmp.eq.s32.totalorder %v736, %v1891
        %vm2345 = vcmp.eq.s32.totalorder %v736, %v1905
        %vm2346 = vcmp.eq.s32.totalorder %v736, %v1919
        %vm2347 = vcmp.eq.s32.totalorder %v736, %v1933
        %vm2348 = vcmp.eq.s32.totalorder %v736, %v1947
        %vm2349 = vcmp.eq.s32.totalorder %v736, %v1961
        %vm2350 = vcmp.eq.s32.totalorder %v736, %v1975
        %vm2351 = vcmp.eq.s32.totalorder %v736, %v1989
        %vm2352 = vcmp.eq.s32.totalorder %v736, %v2003
        %vm2353 = vcmp.eq.s32.totalorder %v736, %v2017
        %vm2354 = vcmp.eq.s32.totalorder %v736, %v2031
        %vm2355 = vcmp.eq.s32.totalorder %v736, %v2045
        %vm2356 = vcmp.eq.s32.totalorder %v736, %v2059
        %vm2357 = vcmp.eq.s32.totalorder %v736, %v2073
        %vm2358 = vcmp.eq.s32.totalorder %v736, %v2087
        %vm2359 = vcmp.eq.s32.totalorder %v736, %v2101
        %vm2360 = vcmp.eq.s32.totalorder %v736, %v2115
        %vm2361 = vcmp.eq.s32.totalorder %v736, %v2129
        %vm2362 = vcmp.eq.s32.totalorder %v736, %v2143
        %vm2363 = vcmp.eq.s32.totalorder %v736, %v2157
        %vm2364 = vcmp.eq.s32.totalorder %v736, %v2171
        %vm2365 = vcmp.eq.s32.totalorder %v736, %v2185
        %vm2366 = vcmp.eq.s32.totalorder %v736, %v2199
        %vm2367 = vcmp.eq.s32.totalorder %v736, %v2213
        %vm2368 = vcmp.eq.s32.totalorder %v736, %v2227
        %vm2369 = vcmp.eq.s32.totalorder %v736, %v2241
        %v2370 = vsel %vm2338, -1e+30, %v1634
        %v2371 = vsel %vm2339, -1e+30, %v1635
        %v2372 = vsel %vm2340, -1e+30, %v1636
        %v2373 = vsel %vm2341, -1e+30, %v1637
        %v2374 = vsel %vm2342, -1e+30, %v1638
        %v2375 = vsel %vm2343, -1e+30, %v1639
        %v2376 = vsel %vm2344, -1e+30, %v1640
        %v2377 = vsel %vm2345, -1e+30, %v1641
        %v2378 = vsel %vm2346, -1e+30, %v1642
        %v2379 = vsel %vm2347, -1e+30, %v1643
        %v2380 = vsel %vm2348, -1e+30, %v1644
        %v2381 = vsel %vm2349, -1e+30, %v1645
        %v2382 = vsel %vm2350, -1e+30, %v1646
        %v2383 = vsel %vm2351, -1e+30, %v1647
        %v2384 = vsel %vm2352, -1e+30, %v1648
        %v2385 = vsel %vm2353, -1e+30, %v1649
        %v2386 = vsel %vm2354, -1e+30, %v1650
        %v2387 = vsel %vm2355, -1e+30, %v1651
        %v2388 = vsel %vm2356, -1e+30, %v1652
        %v2389 = vsel %vm2357, -1e+30, %v1653
        %v2390 = vsel %vm2358, -1e+30, %v1654
        %v2391 = vsel %vm2359, -1e+30, %v1655
        %v2392 = vsel %vm2360, -1e+30, %v1656
        %v2393 = vsel %vm2361, -1e+30, %v1657
        %v2394 = vsel %vm2362, -1e+30, %v1658
        %v2395 = vsel %vm2363, -1e+30, %v1659
        %v2396 = vsel %vm2364, -1e+30, %v1660
        %v2397 = vsel %vm2365, -1e+30, %v1661
        %v2398 = vsel %vm2366, -1e+30, %v1662
        %v2399 = vsel %vm2367, -1e+30, %v1663
        %v2400 = vsel %vm2368, -1e+30, %v1664
        %v2401 = vsel %vm2369, -1e+30, %v1665
        %2402 = vmax.xlane.f32.xlu0 %v2370
        %v2403 = vpop.xlane.xlu0 %2402
        %2404 = vmax.xlane.f32.xlu0 %v2371
        %v2405 = vpop.xlane.xlu0 %2404
        %2406 = vmax.xlane.f32.xlu0 %v2372
        %v2407 = vpop.xlane.xlu0 %2406
        %2408 = vmax.xlane.f32.xlu0 %v2373
        %v2409 = vpop.xlane.xlu0 %2408
        %2410 = vmax.xlane.f32.xlu0 %v2374
        %v2411 = vpop.xlane.xlu0 %2410
        %2412 = vmax.xlane.f32.xlu0 %v2375
        %v2413 = vpop.xlane.xlu0 %2412
        %2414 = vmax.xlane.f32.xlu0 %v2376
        %v2415 = vpop.xlane.xlu0 %2414
        %2416 = vmax.xlane.f32.xlu0 %v2377
        %v2417 = vpop.xlane.xlu0 %2416
        %2418 = vmax.xlane.f32.xlu0 %v2378
        %v2419 = vpop.xlane.xlu0 %2418
        %2420 = vmax.xlane.f32.xlu0 %v2379
        %v2421 = vpop.xlane.xlu0 %2420
        %2422 = vmax.xlane.f32.xlu0 %v2380
        %v2423 = vpop.xlane.xlu0 %2422
        %2424 = vmax.xlane.f32.xlu0 %v2381
        %v2425 = vpop.xlane.xlu0 %2424
        %2426 = vmax.xlane.f32.xlu0 %v2382
        %v2427 = vpop.xlane.xlu0 %2426
        %2428 = vmax.xlane.f32.xlu0 %v2383
        %v2429 = vpop.xlane.xlu0 %2428
        %2430 = vmax.xlane.f32.xlu0 %v2384
        %v2431 = vpop.xlane.xlu0 %2430
        %2432 = vmax.xlane.f32.xlu0 %v2385
        %v2433 = vpop.xlane.xlu0 %2432
        %2434 = vmax.xlane.f32.xlu0 %v2386
        %v2435 = vpop.xlane.xlu0 %2434
        %2436 = vmax.xlane.f32.xlu0 %v2387
        %v2437 = vpop.xlane.xlu0 %2436
        %2438 = vmax.xlane.f32.xlu0 %v2388
        %v2439 = vpop.xlane.xlu0 %2438
        %2440 = vmax.xlane.f32.xlu0 %v2389
        %v2441 = vpop.xlane.xlu0 %2440
        %2442 = vmax.xlane.f32.xlu0 %v2390
        %v2443 = vpop.xlane.xlu0 %2442
        %2444 = vmax.xlane.f32.xlu0 %v2391
        %v2445 = vpop.xlane.xlu0 %2444
        %2446 = vmax.xlane.f32.xlu0 %v2392
        %v2447 = vpop.xlane.xlu0 %2446
        %2448 = vmax.xlane.f32.xlu0 %v2393
        %v2449 = vpop.xlane.xlu0 %2448
        %2450 = vmax.xlane.f32.xlu0 %v2394
        %v2451 = vpop.xlane.xlu0 %2450
        %2452 = vmax.xlane.f32.xlu0 %v2395
        %v2453 = vpop.xlane.xlu0 %2452
        %2454 = vmax.xlane.f32.xlu0 %v2396
        %v2455 = vpop.xlane.xlu0 %2454
        %2456 = vmax.xlane.f32.xlu0 %v2397
        %v2457 = vpop.xlane.xlu0 %2456
        %2458 = vmax.xlane.f32.xlu0 %v2398
        %v2459 = vpop.xlane.xlu0 %2458
        %2460 = vmax.xlane.f32.xlu0 %v2399
        %v2461 = vpop.xlane.xlu0 %2460
        %2462 = vmax.xlane.f32.xlu0 %v2400
        %v2463 = vpop.xlane.xlu0 %2462
        %2464 = vmax.xlane.f32.xlu0 %v2401
        %v2465 = vpop.xlane.xlu0 %2464
        %vm2466 = vcmp.eq.f32.partialorder %v2370, %v2403
        %vm2467 = vcmp.eq.f32.partialorder %v2371, %v2405
        %vm2468 = vcmp.eq.f32.partialorder %v2372, %v2407
        %vm2469 = vcmp.eq.f32.partialorder %v2373, %v2409
        %vm2470 = vcmp.eq.f32.partialorder %v2374, %v2411
        %vm2471 = vcmp.eq.f32.partialorder %v2375, %v2413
        %vm2472 = vcmp.eq.f32.partialorder %v2376, %v2415
        %vm2473 = vcmp.eq.f32.partialorder %v2377, %v2417
        %vm2474 = vcmp.eq.f32.partialorder %v2378, %v2419
        %vm2475 = vcmp.eq.f32.partialorder %v2379, %v2421
        %vm2476 = vcmp.eq.f32.partialorder %v2380, %v2423
        %vm2477 = vcmp.eq.f32.partialorder %v2381, %v2425
        %vm2478 = vcmp.eq.f32.partialorder %v2382, %v2427
        %vm2479 = vcmp.eq.f32.partialorder %v2383, %v2429
        %vm2480 = vcmp.eq.f32.partialorder %v2384, %v2431
        %vm2481 = vcmp.eq.f32.partialorder %v2385, %v2433
        %vm2482 = vcmp.eq.f32.partialorder %v2386, %v2435
        %vm2483 = vcmp.eq.f32.partialorder %v2387, %v2437
        %vm2484 = vcmp.eq.f32.partialorder %v2388, %v2439
        %vm2485 = vcmp.eq.f32.partialorder %v2389, %v2441
        %vm2486 = vcmp.eq.f32.partialorder %v2390, %v2443
        %vm2487 = vcmp.eq.f32.partialorder %v2391, %v2445
        %vm2488 = vcmp.eq.f32.partialorder %v2392, %v2447
        %vm2489 = vcmp.eq.f32.partialorder %v2393, %v2449
        %vm2490 = vcmp.eq.f32.partialorder %v2394, %v2451
        %vm2491 = vcmp.eq.f32.partialorder %v2395, %v2453
        %vm2492 = vcmp.eq.f32.partialorder %v2396, %v2455
        %vm2493 = vcmp.eq.f32.partialorder %v2397, %v2457
        %vm2494 = vcmp.eq.f32.partialorder %v2398, %v2459
        %vm2495 = vcmp.eq.f32.partialorder %v2399, %v2461
        %vm2496 = vcmp.eq.f32.partialorder %v2400, %v2463
        %vm2497 = vcmp.eq.f32.partialorder %v2401, %v2465
        %v2498 = vsel %vm2466, %v736, 128
        %v2499 = vsel %vm2467, %v736, 128
        %v2500 = vsel %vm2468, %v736, 128
        %v2501 = vsel %vm2469, %v736, 128
        %v2502 = vsel %vm2470, %v736, 128
        %v2503 = vsel %vm2471, %v736, 128
        %v2504 = vsel %vm2472, %v736, 128
        %v2505 = vsel %vm2473, %v736, 128
        %v2506 = vsel %vm2474, %v736, 128
        %v2507 = vsel %vm2475, %v736, 128
        %v2508 = vsel %vm2476, %v736, 128
        %v2509 = vsel %vm2477, %v736, 128
        %v2510 = vsel %vm2478, %v736, 128
        %v2511 = vsel %vm2479, %v736, 128
        %v2512 = vsel %vm2480, %v736, 128
        %v2513 = vsel %vm2481, %v736, 128
        %v2514 = vsel %vm2482, %v736, 128
        %v2515 = vsel %vm2483, %v736, 128
        %v2516 = vsel %vm2484, %v736, 128
        %v2517 = vsel %vm2485, %v736, 128
        %v2518 = vsel %vm2486, %v736, 128
        %v2519 = vsel %vm2487, %v736, 128
        %v2520 = vsel %vm2488, %v736, 128
        %v2521 = vsel %vm2489, %v736, 128
        %v2522 = vsel %vm2490, %v736, 128
        %v2523 = vsel %vm2491, %v736, 128
        %v2524 = vsel %vm2492, %v736, 128
        %v2525 = vsel %vm2493, %v736, 128
        %v2526 = vsel %vm2494, %v736, 128
        %v2527 = vsel %vm2495, %v736, 128
        %v2528 = vsel %vm2496, %v736, 128
        %v2529 = vsel %vm2497, %v736, 128
        %v2530 = vand.u32 %v2498, 65535
        %v2531 = vshra.s32 %v2498, 16
        %v2532 = vcvt.s32.f32 %v2530
        %v2533 = vcvt.s32.f32 %v2531
        %2534 = vmin.xlane.f32.xlu0 %v2533
        %v2535 = vpop.xlane.xlu0 %2534
        %vm2536 = vcmp.eq.f32.partialorder %v2533, %v2535
        %v2537 = vsel %vm2536, %v2532, inf
        %2538 = vmin.xlane.f32.xlu0 %v2537
        %v2539 = vpop.xlane.xlu0 %2538
        %v2540 = vcvt.f32.s32 %v2539
        %v2541 = vcvt.f32.s32 %v2535
        %v2542 = vshll.u32 %v2541, 16
        %v2543 = vadd.s32 %v2542, %v2540
        %v2544 = vand.u32 %v2499, 65535
        %v2545 = vshra.s32 %v2499, 16
        %v2546 = vcvt.s32.f32 %v2544
        %v2547 = vcvt.s32.f32 %v2545
        %2548 = vmin.xlane.f32.xlu0 %v2547
        %v2549 = vpop.xlane.xlu0 %2548
        %vm2550 = vcmp.eq.f32.partialorder %v2547, %v2549
        %v2551 = vsel %vm2550, %v2546, inf
        %2552 = vmin.xlane.f32.xlu0 %v2551
        %v2553 = vpop.xlane.xlu0 %2552
        %v2554 = vcvt.f32.s32 %v2553
        %v2555 = vcvt.f32.s32 %v2549
        %v2556 = vshll.u32 %v2555, 16
        %v2557 = vadd.s32 %v2556, %v2554
        %v2558 = vand.u32 %v2500, 65535
        %v2559 = vshra.s32 %v2500, 16
        %v2560 = vcvt.s32.f32 %v2558
        %v2561 = vcvt.s32.f32 %v2559
        %2562 = vmin.xlane.f32.xlu0 %v2561
        %v2563 = vpop.xlane.xlu0 %2562
        %vm2564 = vcmp.eq.f32.partialorder %v2561, %v2563
        %v2565 = vsel %vm2564, %v2560, inf
        %2566 = vmin.xlane.f32.xlu0 %v2565
        %v2567 = vpop.xlane.xlu0 %2566
        %v2568 = vcvt.f32.s32 %v2567
        %v2569 = vcvt.f32.s32 %v2563
        %v2570 = vshll.u32 %v2569, 16
        %v2571 = vadd.s32 %v2570, %v2568
        %v2572 = vand.u32 %v2501, 65535
        %v2573 = vshra.s32 %v2501, 16
        %v2574 = vcvt.s32.f32 %v2572
        %v2575 = vcvt.s32.f32 %v2573
        %2576 = vmin.xlane.f32.xlu0 %v2575
        %v2577 = vpop.xlane.xlu0 %2576
        %vm2578 = vcmp.eq.f32.partialorder %v2575, %v2577
        %v2579 = vsel %vm2578, %v2574, inf
        %2580 = vmin.xlane.f32.xlu0 %v2579
        %v2581 = vpop.xlane.xlu0 %2580
        %v2582 = vcvt.f32.s32 %v2581
        %v2583 = vcvt.f32.s32 %v2577
        %v2584 = vshll.u32 %v2583, 16
        %v2585 = vadd.s32 %v2584, %v2582
        %v2586 = vand.u32 %v2502, 65535
        %v2587 = vshra.s32 %v2502, 16
        %v2588 = vcvt.s32.f32 %v2586
        %v2589 = vcvt.s32.f32 %v2587
        %2590 = vmin.xlane.f32.xlu0 %v2589
        %v2591 = vpop.xlane.xlu0 %2590
        %vm2592 = vcmp.eq.f32.partialorder %v2589, %v2591
        %v2593 = vsel %vm2592, %v2588, inf
        %2594 = vmin.xlane.f32.xlu0 %v2593
        %v2595 = vpop.xlane.xlu0 %2594
        %v2596 = vcvt.f32.s32 %v2595
        %v2597 = vcvt.f32.s32 %v2591
        %v2598 = vshll.u32 %v2597, 16
        %v2599 = vadd.s32 %v2598, %v2596
        %v2600 = vand.u32 %v2503, 65535
        %v2601 = vshra.s32 %v2503, 16
        %v2602 = vcvt.s32.f32 %v2600
        %v2603 = vcvt.s32.f32 %v2601
        %2604 = vmin.xlane.f32.xlu0 %v2603
        %v2605 = vpop.xlane.xlu0 %2604
        %vm2606 = vcmp.eq.f32.partialorder %v2603, %v2605
        %v2607 = vsel %vm2606, %v2602, inf
        %2608 = vmin.xlane.f32.xlu0 %v2607
        %v2609 = vpop.xlane.xlu0 %2608
        %v2610 = vcvt.f32.s32 %v2609
        %v2611 = vcvt.f32.s32 %v2605
        %v2612 = vshll.u32 %v2611, 16
        %v2613 = vadd.s32 %v2612, %v2610
        %v2614 = vand.u32 %v2504, 65535
        %v2615 = vshra.s32 %v2504, 16
        %v2616 = vcvt.s32.f32 %v2614
        %v2617 = vcvt.s32.f32 %v2615
        %2618 = vmin.xlane.f32.xlu0 %v2617
        %v2619 = vpop.xlane.xlu0 %2618
        %vm2620 = vcmp.eq.f32.partialorder %v2617, %v2619
        %v2621 = vsel %vm2620, %v2616, inf
        %2622 = vmin.xlane.f32.xlu0 %v2621
        %v2623 = vpop.xlane.xlu0 %2622
        %v2624 = vcvt.f32.s32 %v2623
        %v2625 = vcvt.f32.s32 %v2619
        %v2626 = vshll.u32 %v2625, 16
        %v2627 = vadd.s32 %v2626, %v2624
        %v2628 = vand.u32 %v2505, 65535
        %v2629 = vshra.s32 %v2505, 16
        %v2630 = vcvt.s32.f32 %v2628
        %v2631 = vcvt.s32.f32 %v2629
        %2632 = vmin.xlane.f32.xlu0 %v2631
        %v2633 = vpop.xlane.xlu0 %2632
        %vm2634 = vcmp.eq.f32.partialorder %v2631, %v2633
        %v2635 = vsel %vm2634, %v2630, inf
        %2636 = vmin.xlane.f32.xlu0 %v2635
        %v2637 = vpop.xlane.xlu0 %2636
        %v2638 = vcvt.f32.s32 %v2637
        %v2639 = vcvt.f32.s32 %v2633
        %v2640 = vshll.u32 %v2639, 16
        %v2641 = vadd.s32 %v2640, %v2638
        %v2642 = vand.u32 %v2506, 65535
        %v2643 = vshra.s32 %v2506, 16
        %v2644 = vcvt.s32.f32 %v2642
        %v2645 = vcvt.s32.f32 %v2643
        %2646 = vmin.xlane.f32.xlu0 %v2645
        %v2647 = vpop.xlane.xlu0 %2646
        %vm2648 = vcmp.eq.f32.partialorder %v2645, %v2647
        %v2649 = vsel %vm2648, %v2644, inf
        %2650 = vmin.xlane.f32.xlu0 %v2649
        %v2651 = vpop.xlane.xlu0 %2650
        %v2652 = vcvt.f32.s32 %v2651
        %v2653 = vcvt.f32.s32 %v2647
        %v2654 = vshll.u32 %v2653, 16
        %v2655 = vadd.s32 %v2654, %v2652
        %v2656 = vand.u32 %v2507, 65535
        %v2657 = vshra.s32 %v2507, 16
        %v2658 = vcvt.s32.f32 %v2656
        %v2659 = vcvt.s32.f32 %v2657
        %2660 = vmin.xlane.f32.xlu0 %v2659
        %v2661 = vpop.xlane.xlu0 %2660
        %vm2662 = vcmp.eq.f32.partialorder %v2659, %v2661
        %v2663 = vsel %vm2662, %v2658, inf
        %2664 = vmin.xlane.f32.xlu0 %v2663
        %v2665 = vpop.xlane.xlu0 %2664
        %v2666 = vcvt.f32.s32 %v2665
        %v2667 = vcvt.f32.s32 %v2661
        %v2668 = vshll.u32 %v2667, 16
        %v2669 = vadd.s32 %v2668, %v2666
        %v2670 = vand.u32 %v2508, 65535
        %v2671 = vshra.s32 %v2508, 16
        %v2672 = vcvt.s32.f32 %v2670
        %v2673 = vcvt.s32.f32 %v2671
        %2674 = vmin.xlane.f32.xlu0 %v2673
        %v2675 = vpop.xlane.xlu0 %2674
        %vm2676 = vcmp.eq.f32.partialorder %v2673, %v2675
        %v2677 = vsel %vm2676, %v2672, inf
        %2678 = vmin.xlane.f32.xlu0 %v2677
        %v2679 = vpop.xlane.xlu0 %2678
        %v2680 = vcvt.f32.s32 %v2679
        %v2681 = vcvt.f32.s32 %v2675
        %v2682 = vshll.u32 %v2681, 16
        %v2683 = vadd.s32 %v2682, %v2680
        %v2684 = vand.u32 %v2509, 65535
        %v2685 = vshra.s32 %v2509, 16
        %v2686 = vcvt.s32.f32 %v2684
        %v2687 = vcvt.s32.f32 %v2685
        %2688 = vmin.xlane.f32.xlu0 %v2687
        %v2689 = vpop.xlane.xlu0 %2688
        %vm2690 = vcmp.eq.f32.partialorder %v2687, %v2689
        %v2691 = vsel %vm2690, %v2686, inf
        %2692 = vmin.xlane.f32.xlu0 %v2691
        %v2693 = vpop.xlane.xlu0 %2692
        %v2694 = vcvt.f32.s32 %v2693
        %v2695 = vcvt.f32.s32 %v2689
        %v2696 = vshll.u32 %v2695, 16
        %v2697 = vadd.s32 %v2696, %v2694
        %v2698 = vand.u32 %v2510, 65535
        %v2699 = vshra.s32 %v2510, 16
        %v2700 = vcvt.s32.f32 %v2698
        %v2701 = vcvt.s32.f32 %v2699
        %2702 = vmin.xlane.f32.xlu0 %v2701
        %v2703 = vpop.xlane.xlu0 %2702
        %vm2704 = vcmp.eq.f32.partialorder %v2701, %v2703
        %v2705 = vsel %vm2704, %v2700, inf
        %2706 = vmin.xlane.f32.xlu0 %v2705
        %v2707 = vpop.xlane.xlu0 %2706
        %v2708 = vcvt.f32.s32 %v2707
        %v2709 = vcvt.f32.s32 %v2703
        %v2710 = vshll.u32 %v2709, 16
        %v2711 = vadd.s32 %v2710, %v2708
        %v2712 = vand.u32 %v2511, 65535
        %v2713 = vshra.s32 %v2511, 16
        %v2714 = vcvt.s32.f32 %v2712
        %v2715 = vcvt.s32.f32 %v2713
        %2716 = vmin.xlane.f32.xlu0 %v2715
        %v2717 = vpop.xlane.xlu0 %2716
        %vm2718 = vcmp.eq.f32.partialorder %v2715, %v2717
        %v2719 = vsel %vm2718, %v2714, inf
        %2720 = vmin.xlane.f32.xlu0 %v2719
        %v2721 = vpop.xlane.xlu0 %2720
        %v2722 = vcvt.f32.s32 %v2721
        %v2723 = vcvt.f32.s32 %v2717
        %v2724 = vshll.u32 %v2723, 16
        %v2725 = vadd.s32 %v2724, %v2722
        %v2726 = vand.u32 %v2512, 65535
        %v2727 = vshra.s32 %v2512, 16
        %v2728 = vcvt.s32.f32 %v2726
        %v2729 = vcvt.s32.f32 %v2727
        %2730 = vmin.xlane.f32.xlu0 %v2729
        %v2731 = vpop.xlane.xlu0 %2730
        %vm2732 = vcmp.eq.f32.partialorder %v2729, %v2731
        %v2733 = vsel %vm2732, %v2728, inf
        %2734 = vmin.xlane.f32.xlu0 %v2733
        %v2735 = vpop.xlane.xlu0 %2734
        %v2736 = vcvt.f32.s32 %v2735
        %v2737 = vcvt.f32.s32 %v2731
        %v2738 = vshll.u32 %v2737, 16
        %v2739 = vadd.s32 %v2738, %v2736
        %v2740 = vand.u32 %v2513, 65535
        %v2741 = vshra.s32 %v2513, 16
        %v2742 = vcvt.s32.f32 %v2740
        %v2743 = vcvt.s32.f32 %v2741
        %2744 = vmin.xlane.f32.xlu0 %v2743
        %v2745 = vpop.xlane.xlu0 %2744
        %vm2746 = vcmp.eq.f32.partialorder %v2743, %v2745
        %v2747 = vsel %vm2746, %v2742, inf
        %2748 = vmin.xlane.f32.xlu0 %v2747
        %v2749 = vpop.xlane.xlu0 %2748
        %v2750 = vcvt.f32.s32 %v2749
        %v2751 = vcvt.f32.s32 %v2745
        %v2752 = vshll.u32 %v2751, 16
        %v2753 = vadd.s32 %v2752, %v2750
        %v2754 = vand.u32 %v2514, 65535
        %v2755 = vshra.s32 %v2514, 16
        %v2756 = vcvt.s32.f32 %v2754
        %v2757 = vcvt.s32.f32 %v2755
        %2758 = vmin.xlane.f32.xlu0 %v2757
        %v2759 = vpop.xlane.xlu0 %2758
        %vm2760 = vcmp.eq.f32.partialorder %v2757, %v2759
        %v2761 = vsel %vm2760, %v2756, inf
        %2762 = vmin.xlane.f32.xlu0 %v2761
        %v2763 = vpop.xlane.xlu0 %2762
        %v2764 = vcvt.f32.s32 %v2763
        %v2765 = vcvt.f32.s32 %v2759
        %v2766 = vshll.u32 %v2765, 16
        %v2767 = vadd.s32 %v2766, %v2764
        %v2768 = vand.u32 %v2515, 65535
        %v2769 = vshra.s32 %v2515, 16
        %v2770 = vcvt.s32.f32 %v2768
        %v2771 = vcvt.s32.f32 %v2769
        %2772 = vmin.xlane.f32.xlu0 %v2771
        %v2773 = vpop.xlane.xlu0 %2772
        %vm2774 = vcmp.eq.f32.partialorder %v2771, %v2773
        %v2775 = vsel %vm2774, %v2770, inf
        %2776 = vmin.xlane.f32.xlu0 %v2775
        %v2777 = vpop.xlane.xlu0 %2776
        %v2778 = vcvt.f32.s32 %v2777
        %v2779 = vcvt.f32.s32 %v2773
        %v2780 = vshll.u32 %v2779, 16
        %v2781 = vadd.s32 %v2780, %v2778
        %v2782 = vand.u32 %v2516, 65535
        %v2783 = vshra.s32 %v2516, 16
        %v2784 = vcvt.s32.f32 %v2782
        %v2785 = vcvt.s32.f32 %v2783
        %2786 = vmin.xlane.f32.xlu0 %v2785
        %v2787 = vpop.xlane.xlu0 %2786
        %vm2788 = vcmp.eq.f32.partialorder %v2785, %v2787
        %v2789 = vsel %vm2788, %v2784, inf
        %2790 = vmin.xlane.f32.xlu0 %v2789
        %v2791 = vpop.xlane.xlu0 %2790
        %v2792 = vcvt.f32.s32 %v2791
        %v2793 = vcvt.f32.s32 %v2787
        %v2794 = vshll.u32 %v2793, 16
        %v2795 = vadd.s32 %v2794, %v2792
        %v2796 = vand.u32 %v2517, 65535
        %v2797 = vshra.s32 %v2517, 16
        %v2798 = vcvt.s32.f32 %v2796
        %v2799 = vcvt.s32.f32 %v2797
        %2800 = vmin.xlane.f32.xlu0 %v2799
        %v2801 = vpop.xlane.xlu0 %2800
        %vm2802 = vcmp.eq.f32.partialorder %v2799, %v2801
        %v2803 = vsel %vm2802, %v2798, inf
        %2804 = vmin.xlane.f32.xlu0 %v2803
        %v2805 = vpop.xlane.xlu0 %2804
        %v2806 = vcvt.f32.s32 %v2805
        %v2807 = vcvt.f32.s32 %v2801
        %v2808 = vshll.u32 %v2807, 16
        %v2809 = vadd.s32 %v2808, %v2806
        %v2810 = vand.u32 %v2518, 65535
        %v2811 = vshra.s32 %v2518, 16
        %v2812 = vcvt.s32.f32 %v2810
        %v2813 = vcvt.s32.f32 %v2811
        %2814 = vmin.xlane.f32.xlu0 %v2813
        %v2815 = vpop.xlane.xlu0 %2814
        %vm2816 = vcmp.eq.f32.partialorder %v2813, %v2815
        %v2817 = vsel %vm2816, %v2812, inf
        %2818 = vmin.xlane.f32.xlu0 %v2817
        %v2819 = vpop.xlane.xlu0 %2818
        %v2820 = vcvt.f32.s32 %v2819
        %v2821 = vcvt.f32.s32 %v2815
        %v2822 = vshll.u32 %v2821, 16
        %v2823 = vadd.s32 %v2822, %v2820
        %v2824 = vand.u32 %v2519, 65535
        %v2825 = vshra.s32 %v2519, 16
        %v2826 = vcvt.s32.f32 %v2824
        %v2827 = vcvt.s32.f32 %v2825
        %2828 = vmin.xlane.f32.xlu0 %v2827
        %v2829 = vpop.xlane.xlu0 %2828
        %vm2830 = vcmp.eq.f32.partialorder %v2827, %v2829
        %v2831 = vsel %vm2830, %v2826, inf
        %2832 = vmin.xlane.f32.xlu0 %v2831
        %v2833 = vpop.xlane.xlu0 %2832
        %v2834 = vcvt.f32.s32 %v2833
        %v2835 = vcvt.f32.s32 %v2829
        %v2836 = vshll.u32 %v2835, 16
        %v2837 = vadd.s32 %v2836, %v2834
        %v2838 = vand.u32 %v2520, 65535
        %v2839 = vshra.s32 %v2520, 16
        %v2840 = vcvt.s32.f32 %v2838
        %v2841 = vcvt.s32.f32 %v2839
        %2842 = vmin.xlane.f32.xlu0 %v2841
        %v2843 = vpop.xlane.xlu0 %2842
        %vm2844 = vcmp.eq.f32.partialorder %v2841, %v2843
        %v2845 = vsel %vm2844, %v2840, inf
        %2846 = vmin.xlane.f32.xlu0 %v2845
        %v2847 = vpop.xlane.xlu0 %2846
        %v2848 = vcvt.f32.s32 %v2847
        %v2849 = vcvt.f32.s32 %v2843
        %v2850 = vshll.u32 %v2849, 16
        %v2851 = vadd.s32 %v2850, %v2848
        %v2852 = vand.u32 %v2521, 65535
        %v2853 = vshra.s32 %v2521, 16
        %v2854 = vcvt.s32.f32 %v2852
        %v2855 = vcvt.s32.f32 %v2853
        %2856 = vmin.xlane.f32.xlu0 %v2855
        %v2857 = vpop.xlane.xlu0 %2856
        %vm2858 = vcmp.eq.f32.partialorder %v2855, %v2857
        %v2859 = vsel %vm2858, %v2854, inf
        %2860 = vmin.xlane.f32.xlu0 %v2859
        %v2861 = vpop.xlane.xlu0 %2860
        %v2862 = vcvt.f32.s32 %v2861
        %v2863 = vcvt.f32.s32 %v2857
        %v2864 = vshll.u32 %v2863, 16
        %v2865 = vadd.s32 %v2864, %v2862
        %v2866 = vand.u32 %v2522, 65535
        %v2867 = vshra.s32 %v2522, 16
        %v2868 = vcvt.s32.f32 %v2866
        %v2869 = vcvt.s32.f32 %v2867
        %2870 = vmin.xlane.f32.xlu0 %v2869
        %v2871 = vpop.xlane.xlu0 %2870
        %vm2872 = vcmp.eq.f32.partialorder %v2869, %v2871
        %v2873 = vsel %vm2872, %v2868, inf
        %2874 = vmin.xlane.f32.xlu0 %v2873
        %v2875 = vpop.xlane.xlu0 %2874
        %v2876 = vcvt.f32.s32 %v2875
        %v2877 = vcvt.f32.s32 %v2871
        %v2878 = vshll.u32 %v2877, 16
        %v2879 = vadd.s32 %v2878, %v2876
        %v2880 = vand.u32 %v2523, 65535
        %v2881 = vshra.s32 %v2523, 16
        %v2882 = vcvt.s32.f32 %v2880
        %v2883 = vcvt.s32.f32 %v2881
        %2884 = vmin.xlane.f32.xlu0 %v2883
        %v2885 = vpop.xlane.xlu0 %2884
        %vm2886 = vcmp.eq.f32.partialorder %v2883, %v2885
        %v2887 = vsel %vm2886, %v2882, inf
        %2888 = vmin.xlane.f32.xlu0 %v2887
        %v2889 = vpop.xlane.xlu0 %2888
        %v2890 = vcvt.f32.s32 %v2889
        %v2891 = vcvt.f32.s32 %v2885
        %v2892 = vshll.u32 %v2891, 16
        %v2893 = vadd.s32 %v2892, %v2890
        %v2894 = vand.u32 %v2524, 65535
        %v2895 = vshra.s32 %v2524, 16
        %v2896 = vcvt.s32.f32 %v2894
        %v2897 = vcvt.s32.f32 %v2895
        %2898 = vmin.xlane.f32.xlu0 %v2897
        %v2899 = vpop.xlane.xlu0 %2898
        %vm2900 = vcmp.eq.f32.partialorder %v2897, %v2899
        %v2901 = vsel %vm2900, %v2896, inf
        %2902 = vmin.xlane.f32.xlu0 %v2901
        %v2903 = vpop.xlane.xlu0 %2902
        %v2904 = vcvt.f32.s32 %v2903
        %v2905 = vcvt.f32.s32 %v2899
        %v2906 = vshll.u32 %v2905, 16
        %v2907 = vadd.s32 %v2906, %v2904
        %v2908 = vand.u32 %v2525, 65535
        %v2909 = vshra.s32 %v2525, 16
        %v2910 = vcvt.s32.f32 %v2908
        %v2911 = vcvt.s32.f32 %v2909
        %2912 = vmin.xlane.f32.xlu0 %v2911
        %v2913 = vpop.xlane.xlu0 %2912
        %vm2914 = vcmp.eq.f32.partialorder %v2911, %v2913
        %v2915 = vsel %vm2914, %v2910, inf
        %2916 = vmin.xlane.f32.xlu0 %v2915
        %v2917 = vpop.xlane.xlu0 %2916
        %v2918 = vcvt.f32.s32 %v2917
        %v2919 = vcvt.f32.s32 %v2913
        %v2920 = vshll.u32 %v2919, 16
        %v2921 = vadd.s32 %v2920, %v2918
        %v2922 = vand.u32 %v2526, 65535
        %v2923 = vshra.s32 %v2526, 16
        %v2924 = vcvt.s32.f32 %v2922
        %v2925 = vcvt.s32.f32 %v2923
        %2926 = vmin.xlane.f32.xlu0 %v2925
        %v2927 = vpop.xlane.xlu0 %2926
        %vm2928 = vcmp.eq.f32.partialorder %v2925, %v2927
        %v2929 = vsel %vm2928, %v2924, inf
        %2930 = vmin.xlane.f32.xlu0 %v2929
        %v2931 = vpop.xlane.xlu0 %2930
        %v2932 = vcvt.f32.s32 %v2931
        %v2933 = vcvt.f32.s32 %v2927
        %v2934 = vshll.u32 %v2933, 16
        %v2935 = vadd.s32 %v2934, %v2932
        %v2936 = vand.u32 %v2527, 65535
        %v2937 = vshra.s32 %v2527, 16
        %v2938 = vcvt.s32.f32 %v2936
        %v2939 = vcvt.s32.f32 %v2937
        %2940 = vmin.xlane.f32.xlu0 %v2939
        %v2941 = vpop.xlane.xlu0 %2940
        %vm2942 = vcmp.eq.f32.partialorder %v2939, %v2941
        %v2943 = vsel %vm2942, %v2938, inf
        %2944 = vmin.xlane.f32.xlu0 %v2943
        %v2945 = vpop.xlane.xlu0 %2944
        %v2946 = vcvt.f32.s32 %v2945
        %v2947 = vcvt.f32.s32 %v2941
        %v2948 = vshll.u32 %v2947, 16
        %v2949 = vadd.s32 %v2948, %v2946
        %v2950 = vand.u32 %v2528, 65535
        %v2951 = vshra.s32 %v2528, 16
        %v2952 = vcvt.s32.f32 %v2950
        %v2953 = vcvt.s32.f32 %v2951
        %2954 = vmin.xlane.f32.xlu0 %v2953
        %v2955 = vpop.xlane.xlu0 %2954
        %vm2956 = vcmp.eq.f32.partialorder %v2953, %v2955
        %v2957 = vsel %vm2956, %v2952, inf
        %2958 = vmin.xlane.f32.xlu0 %v2957
        %v2959 = vpop.xlane.xlu0 %2958
        %v2960 = vcvt.f32.s32 %v2959
        %v2961 = vcvt.f32.s32 %v2955
        %v2962 = vshll.u32 %v2961, 16
        %v2963 = vadd.s32 %v2962, %v2960
        %v2964 = vand.u32 %v2529, 65535
        %v2965 = vshra.s32 %v2529, 16
        %v2966 = vcvt.s32.f32 %v2964
        %v2967 = vcvt.s32.f32 %v2965
        %2968 = vmin.xlane.f32.xlu0 %v2967
        %v2969 = vpop.xlane.xlu0 %2968
        %vm2970 = vcmp.eq.f32.partialorder %v2967, %v2969
        %v2971 = vsel %vm2970, %v2966, inf
        %2972 = vmin.xlane.f32.xlu0 %v2971
        %v2973 = vpop.xlane.xlu0 %2972
        %v2974 = vcvt.f32.s32 %v2973
        %v2975 = vcvt.f32.s32 %v2969
        %v2976 = vshll.u32 %v2975, 16
        %v2977 = vadd.s32 %v2976, %v2974
        %v2978 = vsub.f32 %v2403, %v771
        %v2979 = vsub.f32 %v2405, %v773
        %v2980 = vsub.f32 %v2407, %v775
        %v2981 = vsub.f32 %v2409, %v777
        %v2982 = vsub.f32 %v2411, %v779
        %v2983 = vsub.f32 %v2413, %v781
        %v2984 = vsub.f32 %v2415, %v783
        %v2985 = vsub.f32 %v2417, %v785
        %v2986 = vsub.f32 %v2419, %v787
        %v2987 = vsub.f32 %v2421, %v789
        %v2988 = vsub.f32 %v2423, %v791
        %v2989 = vsub.f32 %v2425, %v793
        %v2990 = vsub.f32 %v2427, %v795
        %v2991 = vsub.f32 %v2429, %v797
        %v2992 = vsub.f32 %v2431, %v799
        %v2993 = vsub.f32 %v2433, %v801
        %v2994 = vsub.f32 %v2435, %v803
        %v2995 = vsub.f32 %v2437, %v805
        %v2996 = vsub.f32 %v2439, %v807
        %v2997 = vsub.f32 %v2441, %v809
        %v2998 = vsub.f32 %v2443, %v811
        %v2999 = vsub.f32 %v2445, %v813
        %v3000 = vsub.f32 %v2447, %v815
        %v3001 = vsub.f32 %v2449, %v817
        %v3002 = vsub.f32 %v2451, %v819
        %v3003 = vsub.f32 %v2453, %v821
        %v3004 = vsub.f32 %v2455, %v823
        %v3005 = vsub.f32 %v2457, %v825
        %v3006 = vsub.f32 %v2459, %v827
        %v3007 = vsub.f32 %v2461, %v829
        %v3008 = vsub.f32 %v2463, %v831
        %v3009 = vsub.f32 %v2465, %v833
        %v3010 = vmul.f32 %v2978, 1.442695
        %v3011 = vpow.pop %v3010
        %v3012 = vmul.f32 %v2979, 1.442695
        %v3013 = vpow.pop %v3012
        %v3014 = vmul.f32 %v2980, 1.442695
        %v3015 = vpow.pop %v3014
        %v3016 = vmul.f32 %v2981, 1.442695
        %v3017 = vpow.pop %v3016
        %v3018 = vmul.f32 %v2982, 1.442695
        %v3019 = vpow.pop %v3018
        %v3020 = vmul.f32 %v2983, 1.442695
        %v3021 = vpow.pop %v3020
        %v3022 = vmul.f32 %v2984, 1.442695
        %v3023 = vpow.pop %v3022
        %v3024 = vmul.f32 %v2985, 1.442695
        %v3025 = vpow.pop %v3024
        %v3026 = vmul.f32 %v2986, 1.442695
        %v3027 = vpow.pop %v3026
        %v3028 = vmul.f32 %v2987, 1.442695
        %v3029 = vpow.pop %v3028
        %v3030 = vmul.f32 %v2988, 1.442695
        %v3031 = vpow.pop %v3030
        %v3032 = vmul.f32 %v2989, 1.442695
        %v3033 = vpow.pop %v3032
        %v3034 = vmul.f32 %v2990, 1.442695
        %v3035 = vpow.pop %v3034
        %v3036 = vmul.f32 %v2991, 1.442695
        %v3037 = vpow.pop %v3036
        %v3038 = vmul.f32 %v2992, 1.442695
        %v3039 = vpow.pop %v3038
        %v3040 = vmul.f32 %v2993, 1.442695
        %v3041 = vpow.pop %v3040
        %v3042 = vmul.f32 %v2994, 1.442695
        %v3043 = vpow.pop %v3042
        %v3044 = vmul.f32 %v2995, 1.442695
        %v3045 = vpow.pop %v3044
        %v3046 = vmul.f32 %v2996, 1.442695
        %v3047 = vpow.pop %v3046
        %v3048 = vmul.f32 %v2997, 1.442695
        %v3049 = vpow.pop %v3048
        %v3050 = vmul.f32 %v2998, 1.442695
        %v3051 = vpow.pop %v3050
        %v3052 = vmul.f32 %v2999, 1.442695
        %v3053 = vpow.pop %v3052
        %v3054 = vmul.f32 %v3000, 1.442695
        %v3055 = vpow.pop %v3054
        %v3056 = vmul.f32 %v3001, 1.442695
        %v3057 = vpow.pop %v3056
        %v3058 = vmul.f32 %v3002, 1.442695
        %v3059 = vpow.pop %v3058
        %v3060 = vmul.f32 %v3003, 1.442695
        %v3061 = vpow.pop %v3060
        %v3062 = vmul.f32 %v3004, 1.442695
        %v3063 = vpow.pop %v3062
        %v3064 = vmul.f32 %v3005, 1.442695
        %v3065 = vpow.pop %v3064
        %v3066 = vmul.f32 %v3006, 1.442695
        %v3067 = vpow.pop %v3066
        %v3068 = vmul.f32 %v3007, 1.442695
        %v3069 = vpow.pop %v3068
        %v3070 = vmul.f32 %v3008, 1.442695
        %v3071 = vpow.pop %v3070
        %v3072 = vmul.f32 %v3009, 1.442695
        %v3073 = vpow.pop %v3072
        %vm3074 = vcmp.eq.s32.totalorder %v736, %v2543
        %vm3075 = vcmp.eq.s32.totalorder %v736, %v2557
        %vm3076 = vcmp.eq.s32.totalorder %v736, %v2571
        %vm3077 = vcmp.eq.s32.totalorder %v736, %v2585
        %vm3078 = vcmp.eq.s32.totalorder %v736, %v2599
        %vm3079 = vcmp.eq.s32.totalorder %v736, %v2613
        %vm3080 = vcmp.eq.s32.totalorder %v736, %v2627
        %vm3081 = vcmp.eq.s32.totalorder %v736, %v2641
        %vm3082 = vcmp.eq.s32.totalorder %v736, %v2655
        %vm3083 = vcmp.eq.s32.totalorder %v736, %v2669
        %vm3084 = vcmp.eq.s32.totalorder %v736, %v2683
        %vm3085 = vcmp.eq.s32.totalorder %v736, %v2697
        %vm3086 = vcmp.eq.s32.totalorder %v736, %v2711
        %vm3087 = vcmp.eq.s32.totalorder %v736, %v2725
        %vm3088 = vcmp.eq.s32.totalorder %v736, %v2739
        %vm3089 = vcmp.eq.s32.totalorder %v736, %v2753
        %vm3090 = vcmp.eq.s32.totalorder %v736, %v2767
        %vm3091 = vcmp.eq.s32.totalorder %v736, %v2781
        %vm3092 = vcmp.eq.s32.totalorder %v736, %v2795
        %vm3093 = vcmp.eq.s32.totalorder %v736, %v2809
        %vm3094 = vcmp.eq.s32.totalorder %v736, %v2823
        %vm3095 = vcmp.eq.s32.totalorder %v736, %v2837
        %vm3096 = vcmp.eq.s32.totalorder %v736, %v2851
        %vm3097 = vcmp.eq.s32.totalorder %v736, %v2865
        %vm3098 = vcmp.eq.s32.totalorder %v736, %v2879
        %vm3099 = vcmp.eq.s32.totalorder %v736, %v2893
        %vm3100 = vcmp.eq.s32.totalorder %v736, %v2907
        %vm3101 = vcmp.eq.s32.totalorder %v736, %v2921
        %vm3102 = vcmp.eq.s32.totalorder %v736, %v2935
        %vm3103 = vcmp.eq.s32.totalorder %v736, %v2949
        %vm3104 = vcmp.eq.s32.totalorder %v736, %v2963
        %vm3105 = vcmp.eq.s32.totalorder %v736, %v2977
        %v3106 = vsel %vm3074, -1e+30, %v2370
        %v3107 = vsel %vm3075, -1e+30, %v2371
        %v3108 = vsel %vm3076, -1e+30, %v2372
        %v3109 = vsel %vm3077, -1e+30, %v2373
        %v3110 = vsel %vm3078, -1e+30, %v2374
        %v3111 = vsel %vm3079, -1e+30, %v2375
        %v3112 = vsel %vm3080, -1e+30, %v2376
        %v3113 = vsel %vm3081, -1e+30, %v2377
        %v3114 = vsel %vm3082, -1e+30, %v2378
        %v3115 = vsel %vm3083, -1e+30, %v2379
        %v3116 = vsel %vm3084, -1e+30, %v2380
        %v3117 = vsel %vm3085, -1e+30, %v2381
        %v3118 = vsel %vm3086, -1e+30, %v2382
        %v3119 = vsel %vm3087, -1e+30, %v2383
        %v3120 = vsel %vm3088, -1e+30, %v2384
        %v3121 = vsel %vm3089, -1e+30, %v2385
        %v3122 = vsel %vm3090, -1e+30, %v2386
        %v3123 = vsel %vm3091, -1e+30, %v2387
        %v3124 = vsel %vm3092, -1e+30, %v2388
        %v3125 = vsel %vm3093, -1e+30, %v2389
        %v3126 = vsel %vm3094, -1e+30, %v2390
        %v3127 = vsel %vm3095, -1e+30, %v2391
        %v3128 = vsel %vm3096, -1e+30, %v2392
        %v3129 = vsel %vm3097, -1e+30, %v2393
        %v3130 = vsel %vm3098, -1e+30, %v2394
        %v3131 = vsel %vm3099, -1e+30, %v2395
        %v3132 = vsel %vm3100, -1e+30, %v2396
        %v3133 = vsel %vm3101, -1e+30, %v2397
        %v3134 = vsel %vm3102, -1e+30, %v2398
        %v3135 = vsel %vm3103, -1e+30, %v2399
        %v3136 = vsel %vm3104, -1e+30, %v2400
        %v3137 = vsel %vm3105, -1e+30, %v2401
        %3138 = vmax.xlane.f32.xlu0 %v3106
        %v3139 = vpop.xlane.xlu0 %3138
        %3140 = vmax.xlane.f32.xlu0 %v3107
        %v3141 = vpop.xlane.xlu0 %3140
        %3142 = vmax.xlane.f32.xlu0 %v3108
        %v3143 = vpop.xlane.xlu0 %3142
        %3144 = vmax.xlane.f32.xlu0 %v3109
        %v3145 = vpop.xlane.xlu0 %3144
        %3146 = vmax.xlane.f32.xlu0 %v3110
        %v3147 = vpop.xlane.xlu0 %3146
        %3148 = vmax.xlane.f32.xlu0 %v3111
        %v3149 = vpop.xlane.xlu0 %3148
        %3150 = vmax.xlane.f32.xlu0 %v3112
        %v3151 = vpop.xlane.xlu0 %3150
        %3152 = vmax.xlane.f32.xlu0 %v3113
        %v3153 = vpop.xlane.xlu0 %3152
        %3154 = vmax.xlane.f32.xlu0 %v3114
        %v3155 = vpop.xlane.xlu0 %3154
        %3156 = vmax.xlane.f32.xlu0 %v3115
        %v3157 = vpop.xlane.xlu0 %3156
        %3158 = vmax.xlane.f32.xlu0 %v3116
        %v3159 = vpop.xlane.xlu0 %3158
        %3160 = vmax.xlane.f32.xlu0 %v3117
        %v3161 = vpop.xlane.xlu0 %3160
        %3162 = vmax.xlane.f32.xlu0 %v3118
        %v3163 = vpop.xlane.xlu0 %3162
        %3164 = vmax.xlane.f32.xlu0 %v3119
        %v3165 = vpop.xlane.xlu0 %3164
        %3166 = vmax.xlane.f32.xlu0 %v3120
        %v3167 = vpop.xlane.xlu0 %3166
        %3168 = vmax.xlane.f32.xlu0 %v3121
        %v3169 = vpop.xlane.xlu0 %3168
        %3170 = vmax.xlane.f32.xlu0 %v3122
        %v3171 = vpop.xlane.xlu0 %3170
        %3172 = vmax.xlane.f32.xlu0 %v3123
        %v3173 = vpop.xlane.xlu0 %3172
        %3174 = vmax.xlane.f32.xlu0 %v3124
        %v3175 = vpop.xlane.xlu0 %3174
        %3176 = vmax.xlane.f32.xlu0 %v3125
        %v3177 = vpop.xlane.xlu0 %3176
        %3178 = vmax.xlane.f32.xlu0 %v3126
        %v3179 = vpop.xlane.xlu0 %3178
        %3180 = vmax.xlane.f32.xlu0 %v3127
        %v3181 = vpop.xlane.xlu0 %3180
        %3182 = vmax.xlane.f32.xlu0 %v3128
        %v3183 = vpop.xlane.xlu0 %3182
        %3184 = vmax.xlane.f32.xlu0 %v3129
        %v3185 = vpop.xlane.xlu0 %3184
        %3186 = vmax.xlane.f32.xlu0 %v3130
        %v3187 = vpop.xlane.xlu0 %3186
        %3188 = vmax.xlane.f32.xlu0 %v3131
        %v3189 = vpop.xlane.xlu0 %3188
        %3190 = vmax.xlane.f32.xlu0 %v3132
        %v3191 = vpop.xlane.xlu0 %3190
        %3192 = vmax.xlane.f32.xlu0 %v3133
        %v3193 = vpop.xlane.xlu0 %3192
        %3194 = vmax.xlane.f32.xlu0 %v3134
        %v3195 = vpop.xlane.xlu0 %3194
        %3196 = vmax.xlane.f32.xlu0 %v3135
        %v3197 = vpop.xlane.xlu0 %3196
        %3198 = vmax.xlane.f32.xlu0 %v3136
        %v3199 = vpop.xlane.xlu0 %3198
        %3200 = vmax.xlane.f32.xlu0 %v3137
        %v3201 = vpop.xlane.xlu0 %3200
        %vm3202 = vcmp.eq.f32.partialorder %v3106, %v3139
        %vm3203 = vcmp.eq.f32.partialorder %v3107, %v3141
        %vm3204 = vcmp.eq.f32.partialorder %v3108, %v3143
        %vm3205 = vcmp.eq.f32.partialorder %v3109, %v3145
        %vm3206 = vcmp.eq.f32.partialorder %v3110, %v3147
        %vm3207 = vcmp.eq.f32.partialorder %v3111, %v3149
        %vm3208 = vcmp.eq.f32.partialorder %v3112, %v3151
        %vm3209 = vcmp.eq.f32.partialorder %v3113, %v3153
        %vm3210 = vcmp.eq.f32.partialorder %v3114, %v3155
        %vm3211 = vcmp.eq.f32.partialorder %v3115, %v3157
        %vm3212 = vcmp.eq.f32.partialorder %v3116, %v3159
        %vm3213 = vcmp.eq.f32.partialorder %v3117, %v3161
        %vm3214 = vcmp.eq.f32.partialorder %v3118, %v3163
        %vm3215 = vcmp.eq.f32.partialorder %v3119, %v3165
        %vm3216 = vcmp.eq.f32.partialorder %v3120, %v3167
        %vm3217 = vcmp.eq.f32.partialorder %v3121, %v3169
        %vm3218 = vcmp.eq.f32.partialorder %v3122, %v3171
        %vm3219 = vcmp.eq.f32.partialorder %v3123, %v3173
        %vm3220 = vcmp.eq.f32.partialorder %v3124, %v3175
        %vm3221 = vcmp.eq.f32.partialorder %v3125, %v3177
        %vm3222 = vcmp.eq.f32.partialorder %v3126, %v3179
        %vm3223 = vcmp.eq.f32.partialorder %v3127, %v3181
        %vm3224 = vcmp.eq.f32.partialorder %v3128, %v3183
        %vm3225 = vcmp.eq.f32.partialorder %v3129, %v3185
        %vm3226 = vcmp.eq.f32.partialorder %v3130, %v3187
        %vm3227 = vcmp.eq.f32.partialorder %v3131, %v3189
        %vm3228 = vcmp.eq.f32.partialorder %v3132, %v3191
        %vm3229 = vcmp.eq.f32.partialorder %v3133, %v3193
        %vm3230 = vcmp.eq.f32.partialorder %v3134, %v3195
        %vm3231 = vcmp.eq.f32.partialorder %v3135, %v3197
        %vm3232 = vcmp.eq.f32.partialorder %v3136, %v3199
        %vm3233 = vcmp.eq.f32.partialorder %v3137, %v3201
        %v3234 = vsel %vm3202, %v736, 128
        %v3235 = vsel %vm3203, %v736, 128
        %v3236 = vsel %vm3204, %v736, 128
        %v3237 = vsel %vm3205, %v736, 128
        %v3238 = vsel %vm3206, %v736, 128
        %v3239 = vsel %vm3207, %v736, 128
        %v3240 = vsel %vm3208, %v736, 128
        %v3241 = vsel %vm3209, %v736, 128
        %v3242 = vsel %vm3210, %v736, 128
        %v3243 = vsel %vm3211, %v736, 128
        %v3244 = vsel %vm3212, %v736, 128
        %v3245 = vsel %vm3213, %v736, 128
        %v3246 = vsel %vm3214, %v736, 128
        %v3247 = vsel %vm3215, %v736, 128
        %v3248 = vsel %vm3216, %v736, 128
        %v3249 = vsel %vm3217, %v736, 128
        %v3250 = vsel %vm3218, %v736, 128
        %v3251 = vsel %vm3219, %v736, 128
        %v3252 = vsel %vm3220, %v736, 128
        %v3253 = vsel %vm3221, %v736, 128
        %v3254 = vsel %vm3222, %v736, 128
        %v3255 = vsel %vm3223, %v736, 128
        %v3256 = vsel %vm3224, %v736, 128
        %v3257 = vsel %vm3225, %v736, 128
        %v3258 = vsel %vm3226, %v736, 128
        %v3259 = vsel %vm3227, %v736, 128
        %v3260 = vsel %vm3228, %v736, 128
        %v3261 = vsel %vm3229, %v736, 128
        %v3262 = vsel %vm3230, %v736, 128
        %v3263 = vsel %vm3231, %v736, 128
        %v3264 = vsel %vm3232, %v736, 128
        %v3265 = vsel %vm3233, %v736, 128
        %v3266 = vand.u32 %v3234, 65535
        %v3267 = vshra.s32 %v3234, 16
        %v3268 = vcvt.s32.f32 %v3266
        %v3269 = vcvt.s32.f32 %v3267
        %3270 = vmin.xlane.f32.xlu0 %v3269
        %v3271 = vpop.xlane.xlu0 %3270
        %vm3272 = vcmp.eq.f32.partialorder %v3269, %v3271
        %v3273 = vsel %vm3272, %v3268, inf
        %3274 = vmin.xlane.f32.xlu0 %v3273
        %v3275 = vpop.xlane.xlu0 %3274
        %v3276 = vcvt.f32.s32 %v3275
        %v3277 = vcvt.f32.s32 %v3271
        %v3278 = vshll.u32 %v3277, 16
        %v3279 = vadd.s32 %v3278, %v3276
        %v3280 = vand.u32 %v3235, 65535
        %v3281 = vshra.s32 %v3235, 16
        %v3282 = vcvt.s32.f32 %v3280
        %v3283 = vcvt.s32.f32 %v3281
        %3284 = vmin.xlane.f32.xlu0 %v3283
        %v3285 = vpop.xlane.xlu0 %3284
        %vm3286 = vcmp.eq.f32.partialorder %v3283, %v3285
        %v3287 = vsel %vm3286, %v3282, inf
        %3288 = vmin.xlane.f32.xlu0 %v3287
        %v3289 = vpop.xlane.xlu0 %3288
        %v3290 = vcvt.f32.s32 %v3289
        %v3291 = vcvt.f32.s32 %v3285
        %v3292 = vshll.u32 %v3291, 16
        %v3293 = vadd.s32 %v3292, %v3290
        %v3294 = vand.u32 %v3236, 65535
        %v3295 = vshra.s32 %v3236, 16
        %v3296 = vcvt.s32.f32 %v3294
        %v3297 = vcvt.s32.f32 %v3295
        %3298 = vmin.xlane.f32.xlu0 %v3297
        %v3299 = vpop.xlane.xlu0 %3298
        %vm3300 = vcmp.eq.f32.partialorder %v3297, %v3299
        %v3301 = vsel %vm3300, %v3296, inf
        %3302 = vmin.xlane.f32.xlu0 %v3301
        %v3303 = vpop.xlane.xlu0 %3302
        %v3304 = vcvt.f32.s32 %v3303
        %v3305 = vcvt.f32.s32 %v3299
        %v3306 = vshll.u32 %v3305, 16
        %v3307 = vadd.s32 %v3306, %v3304
        %v3308 = vand.u32 %v3237, 65535
        %v3309 = vshra.s32 %v3237, 16
        %v3310 = vcvt.s32.f32 %v3308
        %v3311 = vcvt.s32.f32 %v3309
        %3312 = vmin.xlane.f32.xlu0 %v3311
        %v3313 = vpop.xlane.xlu0 %3312
        %vm3314 = vcmp.eq.f32.partialorder %v3311, %v3313
        %v3315 = vsel %vm3314, %v3310, inf
        %3316 = vmin.xlane.f32.xlu0 %v3315
        %v3317 = vpop.xlane.xlu0 %3316
        %v3318 = vcvt.f32.s32 %v3317
        %v3319 = vcvt.f32.s32 %v3313
        %v3320 = vshll.u32 %v3319, 16
        %v3321 = vadd.s32 %v3320, %v3318
        %v3322 = vand.u32 %v3238, 65535
        %v3323 = vshra.s32 %v3238, 16
        %v3324 = vcvt.s32.f32 %v3322
        %v3325 = vcvt.s32.f32 %v3323
        %3326 = vmin.xlane.f32.xlu0 %v3325
        %v3327 = vpop.xlane.xlu0 %3326
        %vm3328 = vcmp.eq.f32.partialorder %v3325, %v3327
        %v3329 = vsel %vm3328, %v3324, inf
        %3330 = vmin.xlane.f32.xlu0 %v3329
        %v3331 = vpop.xlane.xlu0 %3330
        %v3332 = vcvt.f32.s32 %v3331
        %v3333 = vcvt.f32.s32 %v3327
        %v3334 = vshll.u32 %v3333, 16
        %v3335 = vadd.s32 %v3334, %v3332
        %v3336 = vand.u32 %v3239, 65535
        %v3337 = vshra.s32 %v3239, 16
        %v3338 = vcvt.s32.f32 %v3336
        %v3339 = vcvt.s32.f32 %v3337
        %3340 = vmin.xlane.f32.xlu0 %v3339
        %v3341 = vpop.xlane.xlu0 %3340
        %vm3342 = vcmp.eq.f32.partialorder %v3339, %v3341
        %v3343 = vsel %vm3342, %v3338, inf
        %3344 = vmin.xlane.f32.xlu0 %v3343
        %v3345 = vpop.xlane.xlu0 %3344
        %v3346 = vcvt.f32.s32 %v3345
        %v3347 = vcvt.f32.s32 %v3341
        %v3348 = vshll.u32 %v3347, 16
        %v3349 = vadd.s32 %v3348, %v3346
        %v3350 = vand.u32 %v3240, 65535
        %v3351 = vshra.s32 %v3240, 16
        %v3352 = vcvt.s32.f32 %v3350
        %v3353 = vcvt.s32.f32 %v3351
        %3354 = vmin.xlane.f32.xlu0 %v3353
        %v3355 = vpop.xlane.xlu0 %3354
        %vm3356 = vcmp.eq.f32.partialorder %v3353, %v3355
        %v3357 = vsel %vm3356, %v3352, inf
        %3358 = vmin.xlane.f32.xlu0 %v3357
        %v3359 = vpop.xlane.xlu0 %3358
        %v3360 = vcvt.f32.s32 %v3359
        %v3361 = vcvt.f32.s32 %v3355
        %v3362 = vshll.u32 %v3361, 16
        %v3363 = vadd.s32 %v3362, %v3360
        %v3364 = vand.u32 %v3241, 65535
        %v3365 = vshra.s32 %v3241, 16
        %v3366 = vcvt.s32.f32 %v3364
        %v3367 = vcvt.s32.f32 %v3365
        %3368 = vmin.xlane.f32.xlu0 %v3367
        %v3369 = vpop.xlane.xlu0 %3368
        %vm3370 = vcmp.eq.f32.partialorder %v3367, %v3369
        %v3371 = vsel %vm3370, %v3366, inf
        %3372 = vmin.xlane.f32.xlu0 %v3371
        %v3373 = vpop.xlane.xlu0 %3372
        %v3374 = vcvt.f32.s32 %v3373
        %v3375 = vcvt.f32.s32 %v3369
        %v3376 = vshll.u32 %v3375, 16
        %v3377 = vadd.s32 %v3376, %v3374
        %v3378 = vand.u32 %v3242, 65535
        %v3379 = vshra.s32 %v3242, 16
        %v3380 = vcvt.s32.f32 %v3378
        %v3381 = vcvt.s32.f32 %v3379
        %3382 = vmin.xlane.f32.xlu0 %v3381
        %v3383 = vpop.xlane.xlu0 %3382
        %vm3384 = vcmp.eq.f32.partialorder %v3381, %v3383
        %v3385 = vsel %vm3384, %v3380, inf
        %3386 = vmin.xlane.f32.xlu0 %v3385
        %v3387 = vpop.xlane.xlu0 %3386
        %v3388 = vcvt.f32.s32 %v3387
        %v3389 = vcvt.f32.s32 %v3383
        %v3390 = vshll.u32 %v3389, 16
        %v3391 = vadd.s32 %v3390, %v3388
        %v3392 = vand.u32 %v3243, 65535
        %v3393 = vshra.s32 %v3243, 16
        %v3394 = vcvt.s32.f32 %v3392
        %v3395 = vcvt.s32.f32 %v3393
        %3396 = vmin.xlane.f32.xlu0 %v3395
        %v3397 = vpop.xlane.xlu0 %3396
        %vm3398 = vcmp.eq.f32.partialorder %v3395, %v3397
        %v3399 = vsel %vm3398, %v3394, inf
        %3400 = vmin.xlane.f32.xlu0 %v3399
        %v3401 = vpop.xlane.xlu0 %3400
        %v3402 = vcvt.f32.s32 %v3401
        %v3403 = vcvt.f32.s32 %v3397
        %v3404 = vshll.u32 %v3403, 16
        %v3405 = vadd.s32 %v3404, %v3402
        %v3406 = vand.u32 %v3244, 65535
        %v3407 = vshra.s32 %v3244, 16
        %v3408 = vcvt.s32.f32 %v3406
        %v3409 = vcvt.s32.f32 %v3407
        %3410 = vmin.xlane.f32.xlu0 %v3409
        %v3411 = vpop.xlane.xlu0 %3410
        %vm3412 = vcmp.eq.f32.partialorder %v3409, %v3411
        %v3413 = vsel %vm3412, %v3408, inf
        %3414 = vmin.xlane.f32.xlu0 %v3413
        %v3415 = vpop.xlane.xlu0 %3414
        %v3416 = vcvt.f32.s32 %v3415
        %v3417 = vcvt.f32.s32 %v3411
        %v3418 = vshll.u32 %v3417, 16
        %v3419 = vadd.s32 %v3418, %v3416
        %v3420 = vand.u32 %v3245, 65535
        %v3421 = vshra.s32 %v3245, 16
        %v3422 = vcvt.s32.f32 %v3420
        %v3423 = vcvt.s32.f32 %v3421
        %3424 = vmin.xlane.f32.xlu0 %v3423
        %v3425 = vpop.xlane.xlu0 %3424
        %vm3426 = vcmp.eq.f32.partialorder %v3423, %v3425
        %v3427 = vsel %vm3426, %v3422, inf
        %3428 = vmin.xlane.f32.xlu0 %v3427
        %v3429 = vpop.xlane.xlu0 %3428
        %v3430 = vcvt.f32.s32 %v3429
        %v3431 = vcvt.f32.s32 %v3425
        %v3432 = vshll.u32 %v3431, 16
        %v3433 = vadd.s32 %v3432, %v3430
        %v3434 = vand.u32 %v3246, 65535
        %v3435 = vshra.s32 %v3246, 16
        %v3436 = vcvt.s32.f32 %v3434
        %v3437 = vcvt.s32.f32 %v3435
        %3438 = vmin.xlane.f32.xlu0 %v3437
        %v3439 = vpop.xlane.xlu0 %3438
        %vm3440 = vcmp.eq.f32.partialorder %v3437, %v3439
        %v3441 = vsel %vm3440, %v3436, inf
        %3442 = vmin.xlane.f32.xlu0 %v3441
        %v3443 = vpop.xlane.xlu0 %3442
        %v3444 = vcvt.f32.s32 %v3443
        %v3445 = vcvt.f32.s32 %v3439
        %v3446 = vshll.u32 %v3445, 16
        %v3447 = vadd.s32 %v3446, %v3444
        %v3448 = vand.u32 %v3247, 65535
        %v3449 = vshra.s32 %v3247, 16
        %v3450 = vcvt.s32.f32 %v3448
        %v3451 = vcvt.s32.f32 %v3449
        %3452 = vmin.xlane.f32.xlu0 %v3451
        %v3453 = vpop.xlane.xlu0 %3452
        %vm3454 = vcmp.eq.f32.partialorder %v3451, %v3453
        %v3455 = vsel %vm3454, %v3450, inf
        %3456 = vmin.xlane.f32.xlu0 %v3455
        %v3457 = vpop.xlane.xlu0 %3456
        %v3458 = vcvt.f32.s32 %v3457
        %v3459 = vcvt.f32.s32 %v3453
        %v3460 = vshll.u32 %v3459, 16
        %v3461 = vadd.s32 %v3460, %v3458
        %v3462 = vand.u32 %v3248, 65535
        %v3463 = vshra.s32 %v3248, 16
        %v3464 = vcvt.s32.f32 %v3462
        %v3465 = vcvt.s32.f32 %v3463
        %3466 = vmin.xlane.f32.xlu0 %v3465
        %v3467 = vpop.xlane.xlu0 %3466
        %vm3468 = vcmp.eq.f32.partialorder %v3465, %v3467
        %v3469 = vsel %vm3468, %v3464, inf
        %3470 = vmin.xlane.f32.xlu0 %v3469
        %v3471 = vpop.xlane.xlu0 %3470
        %v3472 = vcvt.f32.s32 %v3471
        %v3473 = vcvt.f32.s32 %v3467
        %v3474 = vshll.u32 %v3473, 16
        %v3475 = vadd.s32 %v3474, %v3472
        %v3476 = vand.u32 %v3249, 65535
        %v3477 = vshra.s32 %v3249, 16
        %v3478 = vcvt.s32.f32 %v3476
        %v3479 = vcvt.s32.f32 %v3477
        %3480 = vmin.xlane.f32.xlu0 %v3479
        %v3481 = vpop.xlane.xlu0 %3480
        %vm3482 = vcmp.eq.f32.partialorder %v3479, %v3481
        %v3483 = vsel %vm3482, %v3478, inf
        %3484 = vmin.xlane.f32.xlu0 %v3483
        %v3485 = vpop.xlane.xlu0 %3484
        %v3486 = vcvt.f32.s32 %v3485
        %v3487 = vcvt.f32.s32 %v3481
        %v3488 = vshll.u32 %v3487, 16
        %v3489 = vadd.s32 %v3488, %v3486
        %v3490 = vand.u32 %v3250, 65535
        %v3491 = vshra.s32 %v3250, 16
        %v3492 = vcvt.s32.f32 %v3490
        %v3493 = vcvt.s32.f32 %v3491
        %3494 = vmin.xlane.f32.xlu0 %v3493
        %v3495 = vpop.xlane.xlu0 %3494
        %vm3496 = vcmp.eq.f32.partialorder %v3493, %v3495
        %v3497 = vsel %vm3496, %v3492, inf
        %3498 = vmin.xlane.f32.xlu0 %v3497
        %v3499 = vpop.xlane.xlu0 %3498
        %v3500 = vcvt.f32.s32 %v3499
        %v3501 = vcvt.f32.s32 %v3495
        %v3502 = vshll.u32 %v3501, 16
        %v3503 = vadd.s32 %v3502, %v3500
        %v3504 = vand.u32 %v3251, 65535
        %v3505 = vshra.s32 %v3251, 16
        %v3506 = vcvt.s32.f32 %v3504
        %v3507 = vcvt.s32.f32 %v3505
        %3508 = vmin.xlane.f32.xlu0 %v3507
        %v3509 = vpop.xlane.xlu0 %3508
        %vm3510 = vcmp.eq.f32.partialorder %v3507, %v3509
        %v3511 = vsel %vm3510, %v3506, inf
        %3512 = vmin.xlane.f32.xlu0 %v3511
        %v3513 = vpop.xlane.xlu0 %3512
        %v3514 = vcvt.f32.s32 %v3513
        %v3515 = vcvt.f32.s32 %v3509
        %v3516 = vshll.u32 %v3515, 16
        %v3517 = vadd.s32 %v3516, %v3514
        %v3518 = vand.u32 %v3252, 65535
        %v3519 = vshra.s32 %v3252, 16
        %v3520 = vcvt.s32.f32 %v3518
        %v3521 = vcvt.s32.f32 %v3519
        %3522 = vmin.xlane.f32.xlu0 %v3521
        %v3523 = vpop.xlane.xlu0 %3522
        %vm3524 = vcmp.eq.f32.partialorder %v3521, %v3523
        %v3525 = vsel %vm3524, %v3520, inf
        %3526 = vmin.xlane.f32.xlu0 %v3525
        %v3527 = vpop.xlane.xlu0 %3526
        %v3528 = vcvt.f32.s32 %v3527
        %v3529 = vcvt.f32.s32 %v3523
        %v3530 = vshll.u32 %v3529, 16
        %v3531 = vadd.s32 %v3530, %v3528
        %v3532 = vand.u32 %v3253, 65535
        %v3533 = vshra.s32 %v3253, 16
        %v3534 = vcvt.s32.f32 %v3532
        %v3535 = vcvt.s32.f32 %v3533
        %3536 = vmin.xlane.f32.xlu0 %v3535
        %v3537 = vpop.xlane.xlu0 %3536
        %vm3538 = vcmp.eq.f32.partialorder %v3535, %v3537
        %v3539 = vsel %vm3538, %v3534, inf
        %3540 = vmin.xlane.f32.xlu0 %v3539
        %v3541 = vpop.xlane.xlu0 %3540
        %v3542 = vcvt.f32.s32 %v3541
        %v3543 = vcvt.f32.s32 %v3537
        %v3544 = vshll.u32 %v3543, 16
        %v3545 = vadd.s32 %v3544, %v3542
        %v3546 = vand.u32 %v3254, 65535
        %v3547 = vshra.s32 %v3254, 16
        %v3548 = vcvt.s32.f32 %v3546
        %v3549 = vcvt.s32.f32 %v3547
        %3550 = vmin.xlane.f32.xlu0 %v3549
        %v3551 = vpop.xlane.xlu0 %3550
        %vm3552 = vcmp.eq.f32.partialorder %v3549, %v3551
        %v3553 = vsel %vm3552, %v3548, inf
        %3554 = vmin.xlane.f32.xlu0 %v3553
        %v3555 = vpop.xlane.xlu0 %3554
        %v3556 = vcvt.f32.s32 %v3555
        %v3557 = vcvt.f32.s32 %v3551
        %v3558 = vshll.u32 %v3557, 16
        %v3559 = vadd.s32 %v3558, %v3556
        %v3560 = vand.u32 %v3255, 65535
        %v3561 = vshra.s32 %v3255, 16
        %v3562 = vcvt.s32.f32 %v3560
        %v3563 = vcvt.s32.f32 %v3561
        %3564 = vmin.xlane.f32.xlu0 %v3563
        %v3565 = vpop.xlane.xlu0 %3564
        %vm3566 = vcmp.eq.f32.partialorder %v3563, %v3565
        %v3567 = vsel %vm3566, %v3562, inf
        %3568 = vmin.xlane.f32.xlu0 %v3567
        %v3569 = vpop.xlane.xlu0 %3568
        %v3570 = vcvt.f32.s32 %v3569
        %v3571 = vcvt.f32.s32 %v3565
        %v3572 = vshll.u32 %v3571, 16
        %v3573 = vadd.s32 %v3572, %v3570
        %v3574 = vand.u32 %v3256, 65535
        %v3575 = vshra.s32 %v3256, 16
        %v3576 = vcvt.s32.f32 %v3574
        %v3577 = vcvt.s32.f32 %v3575
        %3578 = vmin.xlane.f32.xlu0 %v3577
        %v3579 = vpop.xlane.xlu0 %3578
        %vm3580 = vcmp.eq.f32.partialorder %v3577, %v3579
        %v3581 = vsel %vm3580, %v3576, inf
        %3582 = vmin.xlane.f32.xlu0 %v3581
        %v3583 = vpop.xlane.xlu0 %3582
        %v3584 = vcvt.f32.s32 %v3583
        %v3585 = vcvt.f32.s32 %v3579
        %v3586 = vshll.u32 %v3585, 16
        %v3587 = vadd.s32 %v3586, %v3584
        %v3588 = vand.u32 %v3257, 65535
        %v3589 = vshra.s32 %v3257, 16
        %v3590 = vcvt.s32.f32 %v3588
        %v3591 = vcvt.s32.f32 %v3589
        %3592 = vmin.xlane.f32.xlu0 %v3591
        %v3593 = vpop.xlane.xlu0 %3592
        %vm3594 = vcmp.eq.f32.partialorder %v3591, %v3593
        %v3595 = vsel %vm3594, %v3590, inf
        %3596 = vmin.xlane.f32.xlu0 %v3595
        %v3597 = vpop.xlane.xlu0 %3596
        %v3598 = vcvt.f32.s32 %v3597
        %v3599 = vcvt.f32.s32 %v3593
        %v3600 = vshll.u32 %v3599, 16
        %v3601 = vadd.s32 %v3600, %v3598
        %v3602 = vand.u32 %v3258, 65535
        %v3603 = vshra.s32 %v3258, 16
        %v3604 = vcvt.s32.f32 %v3602
        %v3605 = vcvt.s32.f32 %v3603
        %3606 = vmin.xlane.f32.xlu0 %v3605
        %v3607 = vpop.xlane.xlu0 %3606
        %vm3608 = vcmp.eq.f32.partialorder %v3605, %v3607
        %v3609 = vsel %vm3608, %v3604, inf
        %3610 = vmin.xlane.f32.xlu0 %v3609
        %v3611 = vpop.xlane.xlu0 %3610
        %v3612 = vcvt.f32.s32 %v3611
        %v3613 = vcvt.f32.s32 %v3607
        %v3614 = vshll.u32 %v3613, 16
        %v3615 = vadd.s32 %v3614, %v3612
        %v3616 = vand.u32 %v3259, 65535
        %v3617 = vshra.s32 %v3259, 16
        %v3618 = vcvt.s32.f32 %v3616
        %v3619 = vcvt.s32.f32 %v3617
        %3620 = vmin.xlane.f32.xlu0 %v3619
        %v3621 = vpop.xlane.xlu0 %3620
        %vm3622 = vcmp.eq.f32.partialorder %v3619, %v3621
        %v3623 = vsel %vm3622, %v3618, inf
        %3624 = vmin.xlane.f32.xlu0 %v3623
        %v3625 = vpop.xlane.xlu0 %3624
        %v3626 = vcvt.f32.s32 %v3625
        %v3627 = vcvt.f32.s32 %v3621
        %v3628 = vshll.u32 %v3627, 16
        %v3629 = vadd.s32 %v3628, %v3626
        %v3630 = vand.u32 %v3260, 65535
        %v3631 = vshra.s32 %v3260, 16
        %v3632 = vcvt.s32.f32 %v3630
        %v3633 = vcvt.s32.f32 %v3631
        %3634 = vmin.xlane.f32.xlu0 %v3633
        %v3635 = vpop.xlane.xlu0 %3634
        %vm3636 = vcmp.eq.f32.partialorder %v3633, %v3635
        %v3637 = vsel %vm3636, %v3632, inf
        %3638 = vmin.xlane.f32.xlu0 %v3637
        %v3639 = vpop.xlane.xlu0 %3638
        %v3640 = vcvt.f32.s32 %v3639
        %v3641 = vcvt.f32.s32 %v3635
        %v3642 = vshll.u32 %v3641, 16
        %v3643 = vadd.s32 %v3642, %v3640
        %v3644 = vand.u32 %v3261, 65535
        %v3645 = vshra.s32 %v3261, 16
        %v3646 = vcvt.s32.f32 %v3644
        %v3647 = vcvt.s32.f32 %v3645
        %3648 = vmin.xlane.f32.xlu0 %v3647
        %v3649 = vpop.xlane.xlu0 %3648
        %vm3650 = vcmp.eq.f32.partialorder %v3647, %v3649
        %v3651 = vsel %vm3650, %v3646, inf
        %3652 = vmin.xlane.f32.xlu0 %v3651
        %v3653 = vpop.xlane.xlu0 %3652
        %v3654 = vcvt.f32.s32 %v3653
        %v3655 = vcvt.f32.s32 %v3649
        %v3656 = vshll.u32 %v3655, 16
        %v3657 = vadd.s32 %v3656, %v3654
        %v3658 = vand.u32 %v3262, 65535
        %v3659 = vshra.s32 %v3262, 16
        %v3660 = vcvt.s32.f32 %v3658
        %v3661 = vcvt.s32.f32 %v3659
        %3662 = vmin.xlane.f32.xlu0 %v3661
        %v3663 = vpop.xlane.xlu0 %3662
        %vm3664 = vcmp.eq.f32.partialorder %v3661, %v3663
        %v3665 = vsel %vm3664, %v3660, inf
        %3666 = vmin.xlane.f32.xlu0 %v3665
        %v3667 = vpop.xlane.xlu0 %3666
        %v3668 = vcvt.f32.s32 %v3667
        %v3669 = vcvt.f32.s32 %v3663
        %v3670 = vshll.u32 %v3669, 16
        %v3671 = vadd.s32 %v3670, %v3668
        %v3672 = vand.u32 %v3263, 65535
        %v3673 = vshra.s32 %v3263, 16
        %v3674 = vcvt.s32.f32 %v3672
        %v3675 = vcvt.s32.f32 %v3673
        %3676 = vmin.xlane.f32.xlu0 %v3675
        %v3677 = vpop.xlane.xlu0 %3676
        %vm3678 = vcmp.eq.f32.partialorder %v3675, %v3677
        %v3679 = vsel %vm3678, %v3674, inf
        %3680 = vmin.xlane.f32.xlu0 %v3679
        %v3681 = vpop.xlane.xlu0 %3680
        %v3682 = vcvt.f32.s32 %v3681
        %v3683 = vcvt.f32.s32 %v3677
        %v3684 = vshll.u32 %v3683, 16
        %v3685 = vadd.s32 %v3684, %v3682
        %v3686 = vand.u32 %v3264, 65535
        %v3687 = vshra.s32 %v3264, 16
        %v3688 = vcvt.s32.f32 %v3686
        %v3689 = vcvt.s32.f32 %v3687
        %3690 = vmin.xlane.f32.xlu0 %v3689
        %v3691 = vpop.xlane.xlu0 %3690
        %vm3692 = vcmp.eq.f32.partialorder %v3689, %v3691
        %v3693 = vsel %vm3692, %v3688, inf
        %3694 = vmin.xlane.f32.xlu0 %v3693
        %v3695 = vpop.xlane.xlu0 %3694
        %v3696 = vcvt.f32.s32 %v3695
        %v3697 = vcvt.f32.s32 %v3691
        %v3698 = vshll.u32 %v3697, 16
        %v3699 = vadd.s32 %v3698, %v3696
        %v3700 = vand.u32 %v3265, 65535
        %v3701 = vshra.s32 %v3265, 16
        %v3702 = vcvt.s32.f32 %v3700
        %v3703 = vcvt.s32.f32 %v3701
        %3704 = vmin.xlane.f32.xlu0 %v3703
        %v3705 = vpop.xlane.xlu0 %3704
        %vm3706 = vcmp.eq.f32.partialorder %v3703, %v3705
        %v3707 = vsel %vm3706, %v3702, inf
        %3708 = vmin.xlane.f32.xlu0 %v3707
        %v3709 = vpop.xlane.xlu0 %3708
        %v3710 = vcvt.f32.s32 %v3709
        %v3711 = vcvt.f32.s32 %v3705
        %v3712 = vshll.u32 %v3711, 16
        %v3713 = vadd.s32 %v3712, %v3710
        %v3714 = vsub.f32 %v3139, %v771
        %v3715 = vsub.f32 %v3141, %v773
        %v3716 = vsub.f32 %v3143, %v775
        %v3717 = vsub.f32 %v3145, %v777
        %v3718 = vsub.f32 %v3147, %v779
        %v3719 = vsub.f32 %v3149, %v781
        %v3720 = vsub.f32 %v3151, %v783
        %v3721 = vsub.f32 %v3153, %v785
        %v3722 = vsub.f32 %v3155, %v787
        %v3723 = vsub.f32 %v3157, %v789
        %v3724 = vsub.f32 %v3159, %v791
        %v3725 = vsub.f32 %v3161, %v793
        %v3726 = vsub.f32 %v3163, %v795
        %v3727 = vsub.f32 %v3165, %v797
        %v3728 = vsub.f32 %v3167, %v799
        %v3729 = vsub.f32 %v3169, %v801
        %v3730 = vsub.f32 %v3171, %v803
        %v3731 = vsub.f32 %v3173, %v805
        %v3732 = vsub.f32 %v3175, %v807
        %v3733 = vsub.f32 %v3177, %v809
        %v3734 = vsub.f32 %v3179, %v811
        %v3735 = vsub.f32 %v3181, %v813
        %v3736 = vsub.f32 %v3183, %v815
        %v3737 = vsub.f32 %v3185, %v817
        %v3738 = vsub.f32 %v3187, %v819
        %v3739 = vsub.f32 %v3189, %v821
        %v3740 = vsub.f32 %v3191, %v823
        %v3741 = vsub.f32 %v3193, %v825
        %v3742 = vsub.f32 %v3195, %v827
        %v3743 = vsub.f32 %v3197, %v829
        %v3744 = vsub.f32 %v3199, %v831
        %v3745 = vsub.f32 %v3201, %v833
        %v3746 = vmul.f32 %v3714, 1.442695
        %v3747 = vpow.pop %v3746
        %v3748 = vmul.f32 %v3715, 1.442695
        %v3749 = vpow.pop %v3748
        %v3750 = vmul.f32 %v3716, 1.442695
        %v3751 = vpow.pop %v3750
        %v3752 = vmul.f32 %v3717, 1.442695
        %v3753 = vpow.pop %v3752
        %v3754 = vmul.f32 %v3718, 1.442695
        %v3755 = vpow.pop %v3754
        %v3756 = vmul.f32 %v3719, 1.442695
        %v3757 = vpow.pop %v3756
        %v3758 = vmul.f32 %v3720, 1.442695
        %v3759 = vpow.pop %v3758
        %v3760 = vmul.f32 %v3721, 1.442695
        %v3761 = vpow.pop %v3760
        %v3762 = vmul.f32 %v3722, 1.442695
        %v3763 = vpow.pop %v3762
        %v3764 = vmul.f32 %v3723, 1.442695
        %v3765 = vpow.pop %v3764
        %v3766 = vmul.f32 %v3724, 1.442695
        %v3767 = vpow.pop %v3766
        %v3768 = vmul.f32 %v3725, 1.442695
        %v3769 = vpow.pop %v3768
        %v3770 = vmul.f32 %v3726, 1.442695
        %v3771 = vpow.pop %v3770
        %v3772 = vmul.f32 %v3727, 1.442695
        %v3773 = vpow.pop %v3772
        %v3774 = vmul.f32 %v3728, 1.442695
        %v3775 = vpow.pop %v3774
        %v3776 = vmul.f32 %v3729, 1.442695
        %v3777 = vpow.pop %v3776
        %v3778 = vmul.f32 %v3730, 1.442695
        %v3779 = vpow.pop %v3778
        %v3780 = vmul.f32 %v3731, 1.442695
        %v3781 = vpow.pop %v3780
        %v3782 = vmul.f32 %v3732, 1.442695
        %v3783 = vpow.pop %v3782
        %v3784 = vmul.f32 %v3733, 1.442695
        %v3785 = vpow.pop %v3784
        %v3786 = vmul.f32 %v3734, 1.442695
        %v3787 = vpow.pop %v3786
        %v3788 = vmul.f32 %v3735, 1.442695
        %v3789 = vpow.pop %v3788
        %v3790 = vmul.f32 %v3736, 1.442695
        %v3791 = vpow.pop %v3790
        %v3792 = vmul.f32 %v3737, 1.442695
        %v3793 = vpow.pop %v3792
        %v3794 = vmul.f32 %v3738, 1.442695
        %v3795 = vpow.pop %v3794
        %v3796 = vmul.f32 %v3739, 1.442695
        %v3797 = vpow.pop %v3796
        %v3798 = vmul.f32 %v3740, 1.442695
        %v3799 = vpow.pop %v3798
        %v3800 = vmul.f32 %v3741, 1.442695
        %v3801 = vpow.pop %v3800
        %v3802 = vmul.f32 %v3742, 1.442695
        %v3803 = vpow.pop %v3802
        %v3804 = vmul.f32 %v3743, 1.442695
        %v3805 = vpow.pop %v3804
        %v3806 = vmul.f32 %v3744, 1.442695
        %v3807 = vpow.pop %v3806
        %v3808 = vmul.f32 %v3745, 1.442695
        %v3809 = vpow.pop %v3808
        %vm3810 = vcmp.eq.s32.totalorder %v736, %v3279
        %vm3811 = vcmp.eq.s32.totalorder %v736, %v3293
        %vm3812 = vcmp.eq.s32.totalorder %v736, %v3307
        %vm3813 = vcmp.eq.s32.totalorder %v736, %v3321
        %vm3814 = vcmp.eq.s32.totalorder %v736, %v3335
        %vm3815 = vcmp.eq.s32.totalorder %v736, %v3349
        %vm3816 = vcmp.eq.s32.totalorder %v736, %v3363
        %vm3817 = vcmp.eq.s32.totalorder %v736, %v3377
        %vm3818 = vcmp.eq.s32.totalorder %v736, %v3391
        %vm3819 = vcmp.eq.s32.totalorder %v736, %v3405
        %vm3820 = vcmp.eq.s32.totalorder %v736, %v3419
        %vm3821 = vcmp.eq.s32.totalorder %v736, %v3433
        %vm3822 = vcmp.eq.s32.totalorder %v736, %v3447
        %vm3823 = vcmp.eq.s32.totalorder %v736, %v3461
        %vm3824 = vcmp.eq.s32.totalorder %v736, %v3475
        %vm3825 = vcmp.eq.s32.totalorder %v736, %v3489
        %vm3826 = vcmp.eq.s32.totalorder %v736, %v3503
        %vm3827 = vcmp.eq.s32.totalorder %v736, %v3517
        %vm3828 = vcmp.eq.s32.totalorder %v736, %v3531
        %vm3829 = vcmp.eq.s32.totalorder %v736, %v3545
        %vm3830 = vcmp.eq.s32.totalorder %v736, %v3559
        %vm3831 = vcmp.eq.s32.totalorder %v736, %v3573
        %vm3832 = vcmp.eq.s32.totalorder %v736, %v3587
        %vm3833 = vcmp.eq.s32.totalorder %v736, %v3601
        %vm3834 = vcmp.eq.s32.totalorder %v736, %v3615
        %vm3835 = vcmp.eq.s32.totalorder %v736, %v3629
        %vm3836 = vcmp.eq.s32.totalorder %v736, %v3643
        %vm3837 = vcmp.eq.s32.totalorder %v736, %v3657
        %vm3838 = vcmp.eq.s32.totalorder %v736, %v3671
        %vm3839 = vcmp.eq.s32.totalorder %v736, %v3685
        %vm3840 = vcmp.eq.s32.totalorder %v736, %v3699
        %vm3841 = vcmp.eq.s32.totalorder %v736, %v3713
        %v3842 = vsel %vm3810, -1e+30, %v3106
        %v3843 = vsel %vm3811, -1e+30, %v3107
        %v3844 = vsel %vm3812, -1e+30, %v3108
        %v3845 = vsel %vm3813, -1e+30, %v3109
        %v3846 = vsel %vm3814, -1e+30, %v3110
        %v3847 = vsel %vm3815, -1e+30, %v3111
        %v3848 = vsel %vm3816, -1e+30, %v3112
        %v3849 = vsel %vm3817, -1e+30, %v3113
        %v3850 = vsel %vm3818, -1e+30, %v3114
        %v3851 = vsel %vm3819, -1e+30, %v3115
        %v3852 = vsel %vm3820, -1e+30, %v3116
        %v3853 = vsel %vm3821, -1e+30, %v3117
        %v3854 = vsel %vm3822, -1e+30, %v3118
        %v3855 = vsel %vm3823, -1e+30, %v3119
        %v3856 = vsel %vm3824, -1e+30, %v3120
        %v3857 = vsel %vm3825, -1e+30, %v3121
        %v3858 = vsel %vm3826, -1e+30, %v3122
        %v3859 = vsel %vm3827, -1e+30, %v3123
        %v3860 = vsel %vm3828, -1e+30, %v3124
        %v3861 = vsel %vm3829, -1e+30, %v3125
        %v3862 = vsel %vm3830, -1e+30, %v3126
        %v3863 = vsel %vm3831, -1e+30, %v3127
        %v3864 = vsel %vm3832, -1e+30, %v3128
        %v3865 = vsel %vm3833, -1e+30, %v3129
        %v3866 = vsel %vm3834, -1e+30, %v3130
        %v3867 = vsel %vm3835, -1e+30, %v3131
        %v3868 = vsel %vm3836, -1e+30, %v3132
        %v3869 = vsel %vm3837, -1e+30, %v3133
        %v3870 = vsel %vm3838, -1e+30, %v3134
        %v3871 = vsel %vm3839, -1e+30, %v3135
        %v3872 = vsel %vm3840, -1e+30, %v3136
        %v3873 = vsel %vm3841, -1e+30, %v3137
        %3874 = vmax.xlane.f32.xlu0 %v3842
        %v3875 = vpop.xlane.xlu0 %3874
        %3876 = vmax.xlane.f32.xlu0 %v3843
        %v3877 = vpop.xlane.xlu0 %3876
        %3878 = vmax.xlane.f32.xlu0 %v3844
        %v3879 = vpop.xlane.xlu0 %3878
        %3880 = vmax.xlane.f32.xlu0 %v3845
        %v3881 = vpop.xlane.xlu0 %3880
        %3882 = vmax.xlane.f32.xlu0 %v3846
        %v3883 = vpop.xlane.xlu0 %3882
        %3884 = vmax.xlane.f32.xlu0 %v3847
        %v3885 = vpop.xlane.xlu0 %3884
        %3886 = vmax.xlane.f32.xlu0 %v3848
        %v3887 = vpop.xlane.xlu0 %3886
        %3888 = vmax.xlane.f32.xlu0 %v3849
        %v3889 = vpop.xlane.xlu0 %3888
        %3890 = vmax.xlane.f32.xlu0 %v3850
        %v3891 = vpop.xlane.xlu0 %3890
        %3892 = vmax.xlane.f32.xlu0 %v3851
        %v3893 = vpop.xlane.xlu0 %3892
        %3894 = vmax.xlane.f32.xlu0 %v3852
        %v3895 = vpop.xlane.xlu0 %3894
        %3896 = vmax.xlane.f32.xlu0 %v3853
        %v3897 = vpop.xlane.xlu0 %3896
        %3898 = vmax.xlane.f32.xlu0 %v3854
        %v3899 = vpop.xlane.xlu0 %3898
        %3900 = vmax.xlane.f32.xlu0 %v3855
        %v3901 = vpop.xlane.xlu0 %3900
        %3902 = vmax.xlane.f32.xlu0 %v3856
        %v3903 = vpop.xlane.xlu0 %3902
        %3904 = vmax.xlane.f32.xlu0 %v3857
        %v3905 = vpop.xlane.xlu0 %3904
        %3906 = vmax.xlane.f32.xlu0 %v3858
        %v3907 = vpop.xlane.xlu0 %3906
        %3908 = vmax.xlane.f32.xlu0 %v3859
        %v3909 = vpop.xlane.xlu0 %3908
        %3910 = vmax.xlane.f32.xlu0 %v3860
        %v3911 = vpop.xlane.xlu0 %3910
        %3912 = vmax.xlane.f32.xlu0 %v3861
        %v3913 = vpop.xlane.xlu0 %3912
        %3914 = vmax.xlane.f32.xlu0 %v3862
        %v3915 = vpop.xlane.xlu0 %3914
        %3916 = vmax.xlane.f32.xlu0 %v3863
        %v3917 = vpop.xlane.xlu0 %3916
        %3918 = vmax.xlane.f32.xlu0 %v3864
        %v3919 = vpop.xlane.xlu0 %3918
        %3920 = vmax.xlane.f32.xlu0 %v3865
        %v3921 = vpop.xlane.xlu0 %3920
        %3922 = vmax.xlane.f32.xlu0 %v3866
        %v3923 = vpop.xlane.xlu0 %3922
        %3924 = vmax.xlane.f32.xlu0 %v3867
        %v3925 = vpop.xlane.xlu0 %3924
        %3926 = vmax.xlane.f32.xlu0 %v3868
        %v3927 = vpop.xlane.xlu0 %3926
        %3928 = vmax.xlane.f32.xlu0 %v3869
        %v3929 = vpop.xlane.xlu0 %3928
        %3930 = vmax.xlane.f32.xlu0 %v3870
        %v3931 = vpop.xlane.xlu0 %3930
        %3932 = vmax.xlane.f32.xlu0 %v3871
        %v3933 = vpop.xlane.xlu0 %3932
        %3934 = vmax.xlane.f32.xlu0 %v3872
        %v3935 = vpop.xlane.xlu0 %3934
        %3936 = vmax.xlane.f32.xlu0 %v3873
        %v3937 = vpop.xlane.xlu0 %3936
        %vm3938 = vcmp.eq.f32.partialorder %v3842, %v3875
        %vm3939 = vcmp.eq.f32.partialorder %v3843, %v3877
        %vm3940 = vcmp.eq.f32.partialorder %v3844, %v3879
        %vm3941 = vcmp.eq.f32.partialorder %v3845, %v3881
        %vm3942 = vcmp.eq.f32.partialorder %v3846, %v3883
        %vm3943 = vcmp.eq.f32.partialorder %v3847, %v3885
        %vm3944 = vcmp.eq.f32.partialorder %v3848, %v3887
        %vm3945 = vcmp.eq.f32.partialorder %v3849, %v3889
        %vm3946 = vcmp.eq.f32.partialorder %v3850, %v3891
        %vm3947 = vcmp.eq.f32.partialorder %v3851, %v3893
        %vm3948 = vcmp.eq.f32.partialorder %v3852, %v3895
        %vm3949 = vcmp.eq.f32.partialorder %v3853, %v3897
        %vm3950 = vcmp.eq.f32.partialorder %v3854, %v3899
        %vm3951 = vcmp.eq.f32.partialorder %v3855, %v3901
        %vm3952 = vcmp.eq.f32.partialorder %v3856, %v3903
        %vm3953 = vcmp.eq.f32.partialorder %v3857, %v3905
        %vm3954 = vcmp.eq.f32.partialorder %v3858, %v3907
        %vm3955 = vcmp.eq.f32.partialorder %v3859, %v3909
        %vm3956 = vcmp.eq.f32.partialorder %v3860, %v3911
        %vm3957 = vcmp.eq.f32.partialorder %v3861, %v3913
        %vm3958 = vcmp.eq.f32.partialorder %v3862, %v3915
        %vm3959 = vcmp.eq.f32.partialorder %v3863, %v3917
        %vm3960 = vcmp.eq.f32.partialorder %v3864, %v3919
        %vm3961 = vcmp.eq.f32.partialorder %v3865, %v3921
        %vm3962 = vcmp.eq.f32.partialorder %v3866, %v3923
        %vm3963 = vcmp.eq.f32.partialorder %v3867, %v3925
        %vm3964 = vcmp.eq.f32.partialorder %v3868, %v3927
        %vm3965 = vcmp.eq.f32.partialorder %v3869, %v3929
        %vm3966 = vcmp.eq.f32.partialorder %v3870, %v3931
        %vm3967 = vcmp.eq.f32.partialorder %v3871, %v3933
        %vm3968 = vcmp.eq.f32.partialorder %v3872, %v3935
        %vm3969 = vcmp.eq.f32.partialorder %v3873, %v3937
        %v3970 = vsel %vm3938, %v736, 128
        %v3971 = vsel %vm3939, %v736, 128
        %v3972 = vsel %vm3940, %v736, 128
        %v3973 = vsel %vm3941, %v736, 128
        %v3974 = vsel %vm3942, %v736, 128
        %v3975 = vsel %vm3943, %v736, 128
        %v3976 = vsel %vm3944, %v736, 128
        %v3977 = vsel %vm3945, %v736, 128
        %v3978 = vsel %vm3946, %v736, 128
        %v3979 = vsel %vm3947, %v736, 128
        %v3980 = vsel %vm3948, %v736, 128
        %v3981 = vsel %vm3949, %v736, 128
        %v3982 = vsel %vm3950, %v736, 128
        %v3983 = vsel %vm3951, %v736, 128
        %v3984 = vsel %vm3952, %v736, 128
        %v3985 = vsel %vm3953, %v736, 128
        %v3986 = vsel %vm3954, %v736, 128
        %v3987 = vsel %vm3955, %v736, 128
        %v3988 = vsel %vm3956, %v736, 128
        %v3989 = vsel %vm3957, %v736, 128
        %v3990 = vsel %vm3958, %v736, 128
        %v3991 = vsel %vm3959, %v736, 128
        %v3992 = vsel %vm3960, %v736, 128
        %v3993 = vsel %vm3961, %v736, 128
        %v3994 = vsel %vm3962, %v736, 128
        %v3995 = vsel %vm3963, %v736, 128
        %v3996 = vsel %vm3964, %v736, 128
        %v3997 = vsel %vm3965, %v736, 128
        %v3998 = vsel %vm3966, %v736, 128
        %v3999 = vsel %vm3967, %v736, 128
        %v4000 = vsel %vm3968, %v736, 128
        %v4001 = vsel %vm3969, %v736, 128
        %v4002 = vand.u32 %v3970, 65535
        %v4003 = vshra.s32 %v3970, 16
        %v4004 = vcvt.s32.f32 %v4002
        %v4005 = vcvt.s32.f32 %v4003
        %4006 = vmin.xlane.f32.xlu0 %v4005
        %v4007 = vpop.xlane.xlu0 %4006
        %vm4008 = vcmp.eq.f32.partialorder %v4005, %v4007
        %v4009 = vsel %vm4008, %v4004, inf
        %4010 = vmin.xlane.f32.xlu0 %v4009
        %v4011 = vpop.xlane.xlu0 %4010
        %v4012 = vcvt.f32.s32 %v4011
        %v4013 = vcvt.f32.s32 %v4007
        %v4014 = vshll.u32 %v4013, 16
        %v4015 = vadd.s32 %v4014, %v4012
        %v4016 = vand.u32 %v3971, 65535
        %v4017 = vshra.s32 %v3971, 16
        %v4018 = vcvt.s32.f32 %v4016
        %v4019 = vcvt.s32.f32 %v4017
        %4020 = vmin.xlane.f32.xlu0 %v4019
        %v4021 = vpop.xlane.xlu0 %4020
        %vm4022 = vcmp.eq.f32.partialorder %v4019, %v4021
        %v4023 = vsel %vm4022, %v4018, inf
        %4024 = vmin.xlane.f32.xlu0 %v4023
        %v4025 = vpop.xlane.xlu0 %4024
        %v4026 = vcvt.f32.s32 %v4025
        %v4027 = vcvt.f32.s32 %v4021
        %v4028 = vshll.u32 %v4027, 16
        %v4029 = vadd.s32 %v4028, %v4026
        %v4030 = vand.u32 %v3972, 65535
        %v4031 = vshra.s32 %v3972, 16
        %v4032 = vcvt.s32.f32 %v4030
        %v4033 = vcvt.s32.f32 %v4031
        %4034 = vmin.xlane.f32.xlu0 %v4033
        %v4035 = vpop.xlane.xlu0 %4034
        %vm4036 = vcmp.eq.f32.partialorder %v4033, %v4035
        %v4037 = vsel %vm4036, %v4032, inf
        %4038 = vmin.xlane.f32.xlu0 %v4037
        %v4039 = vpop.xlane.xlu0 %4038
        %v4040 = vcvt.f32.s32 %v4039
        %v4041 = vcvt.f32.s32 %v4035
        %v4042 = vshll.u32 %v4041, 16
        %v4043 = vadd.s32 %v4042, %v4040
        %v4044 = vand.u32 %v3973, 65535
        %v4045 = vshra.s32 %v3973, 16
        %v4046 = vcvt.s32.f32 %v4044
        %v4047 = vcvt.s32.f32 %v4045
        %4048 = vmin.xlane.f32.xlu0 %v4047
        %v4049 = vpop.xlane.xlu0 %4048
        %vm4050 = vcmp.eq.f32.partialorder %v4047, %v4049
        %v4051 = vsel %vm4050, %v4046, inf
        %4052 = vmin.xlane.f32.xlu0 %v4051
        %v4053 = vpop.xlane.xlu0 %4052
        %v4054 = vcvt.f32.s32 %v4053
        %v4055 = vcvt.f32.s32 %v4049
        %v4056 = vshll.u32 %v4055, 16
        %v4057 = vadd.s32 %v4056, %v4054
        %v4058 = vand.u32 %v3974, 65535
        %v4059 = vshra.s32 %v3974, 16
        %v4060 = vcvt.s32.f32 %v4058
        %v4061 = vcvt.s32.f32 %v4059
        %4062 = vmin.xlane.f32.xlu0 %v4061
        %v4063 = vpop.xlane.xlu0 %4062
        %vm4064 = vcmp.eq.f32.partialorder %v4061, %v4063
        %v4065 = vsel %vm4064, %v4060, inf
        %4066 = vmin.xlane.f32.xlu0 %v4065
        %v4067 = vpop.xlane.xlu0 %4066
        %v4068 = vcvt.f32.s32 %v4067
        %v4069 = vcvt.f32.s32 %v4063
        %v4070 = vshll.u32 %v4069, 16
        %v4071 = vadd.s32 %v4070, %v4068
        %v4072 = vand.u32 %v3975, 65535
        %v4073 = vshra.s32 %v3975, 16
        %v4074 = vcvt.s32.f32 %v4072
        %v4075 = vcvt.s32.f32 %v4073
        %4076 = vmin.xlane.f32.xlu0 %v4075
        %v4077 = vpop.xlane.xlu0 %4076
        %vm4078 = vcmp.eq.f32.partialorder %v4075, %v4077
        %v4079 = vsel %vm4078, %v4074, inf
        %4080 = vmin.xlane.f32.xlu0 %v4079
        %v4081 = vpop.xlane.xlu0 %4080
        %v4082 = vcvt.f32.s32 %v4081
        %v4083 = vcvt.f32.s32 %v4077
        %v4084 = vshll.u32 %v4083, 16
        %v4085 = vadd.s32 %v4084, %v4082
        %v4086 = vand.u32 %v3976, 65535
        %v4087 = vshra.s32 %v3976, 16
        %v4088 = vcvt.s32.f32 %v4086
        %v4089 = vcvt.s32.f32 %v4087
        %4090 = vmin.xlane.f32.xlu0 %v4089
        %v4091 = vpop.xlane.xlu0 %4090
        %vm4092 = vcmp.eq.f32.partialorder %v4089, %v4091
        %v4093 = vsel %vm4092, %v4088, inf
        %4094 = vmin.xlane.f32.xlu0 %v4093
        %v4095 = vpop.xlane.xlu0 %4094
        %v4096 = vcvt.f32.s32 %v4095
        %v4097 = vcvt.f32.s32 %v4091
        %v4098 = vshll.u32 %v4097, 16
        %v4099 = vadd.s32 %v4098, %v4096
        %v4100 = vand.u32 %v3977, 65535
        %v4101 = vshra.s32 %v3977, 16
        %v4102 = vcvt.s32.f32 %v4100
        %v4103 = vcvt.s32.f32 %v4101
        %4104 = vmin.xlane.f32.xlu0 %v4103
        %v4105 = vpop.xlane.xlu0 %4104
        %vm4106 = vcmp.eq.f32.partialorder %v4103, %v4105
        %v4107 = vsel %vm4106, %v4102, inf
        %4108 = vmin.xlane.f32.xlu0 %v4107
        %v4109 = vpop.xlane.xlu0 %4108
        %v4110 = vcvt.f32.s32 %v4109
        %v4111 = vcvt.f32.s32 %v4105
        %v4112 = vshll.u32 %v4111, 16
        %v4113 = vadd.s32 %v4112, %v4110
        %v4114 = vand.u32 %v3978, 65535
        %v4115 = vshra.s32 %v3978, 16
        %v4116 = vcvt.s32.f32 %v4114
        %v4117 = vcvt.s32.f32 %v4115
        %4118 = vmin.xlane.f32.xlu0 %v4117
        %v4119 = vpop.xlane.xlu0 %4118
        %vm4120 = vcmp.eq.f32.partialorder %v4117, %v4119
        %v4121 = vsel %vm4120, %v4116, inf
        %4122 = vmin.xlane.f32.xlu0 %v4121
        %v4123 = vpop.xlane.xlu0 %4122
        %v4124 = vcvt.f32.s32 %v4123
        %v4125 = vcvt.f32.s32 %v4119
        %v4126 = vshll.u32 %v4125, 16
        %v4127 = vadd.s32 %v4126, %v4124
        %v4128 = vand.u32 %v3979, 65535
        %v4129 = vshra.s32 %v3979, 16
        %v4130 = vcvt.s32.f32 %v4128
        %v4131 = vcvt.s32.f32 %v4129
        %4132 = vmin.xlane.f32.xlu0 %v4131
        %v4133 = vpop.xlane.xlu0 %4132
        %vm4134 = vcmp.eq.f32.partialorder %v4131, %v4133
        %v4135 = vsel %vm4134, %v4130, inf
        %4136 = vmin.xlane.f32.xlu0 %v4135
        %v4137 = vpop.xlane.xlu0 %4136
        %v4138 = vcvt.f32.s32 %v4137
        %v4139 = vcvt.f32.s32 %v4133
        %v4140 = vshll.u32 %v4139, 16
        %v4141 = vadd.s32 %v4140, %v4138
        %v4142 = vand.u32 %v3980, 65535
        %v4143 = vshra.s32 %v3980, 16
        %v4144 = vcvt.s32.f32 %v4142
        %v4145 = vcvt.s32.f32 %v4143
        %4146 = vmin.xlane.f32.xlu0 %v4145
        %v4147 = vpop.xlane.xlu0 %4146
        %vm4148 = vcmp.eq.f32.partialorder %v4145, %v4147
        %v4149 = vsel %vm4148, %v4144, inf
        %4150 = vmin.xlane.f32.xlu0 %v4149
        %v4151 = vpop.xlane.xlu0 %4150
        %v4152 = vcvt.f32.s32 %v4151
        %v4153 = vcvt.f32.s32 %v4147
        %v4154 = vshll.u32 %v4153, 16
        %v4155 = vadd.s32 %v4154, %v4152
        %v4156 = vand.u32 %v3981, 65535
        %v4157 = vshra.s32 %v3981, 16
        %v4158 = vcvt.s32.f32 %v4156
        %v4159 = vcvt.s32.f32 %v4157
        %4160 = vmin.xlane.f32.xlu0 %v4159
        %v4161 = vpop.xlane.xlu0 %4160
        %vm4162 = vcmp.eq.f32.partialorder %v4159, %v4161
        %v4163 = vsel %vm4162, %v4158, inf
        %4164 = vmin.xlane.f32.xlu0 %v4163
        %v4165 = vpop.xlane.xlu0 %4164
        %v4166 = vcvt.f32.s32 %v4165
        %v4167 = vcvt.f32.s32 %v4161
        %v4168 = vshll.u32 %v4167, 16
        %v4169 = vadd.s32 %v4168, %v4166
        %v4170 = vand.u32 %v3982, 65535
        %v4171 = vshra.s32 %v3982, 16
        %v4172 = vcvt.s32.f32 %v4170
        %v4173 = vcvt.s32.f32 %v4171
        %4174 = vmin.xlane.f32.xlu0 %v4173
        %v4175 = vpop.xlane.xlu0 %4174
        %vm4176 = vcmp.eq.f32.partialorder %v4173, %v4175
        %v4177 = vsel %vm4176, %v4172, inf
        %4178 = vmin.xlane.f32.xlu0 %v4177
        %v4179 = vpop.xlane.xlu0 %4178
        %v4180 = vcvt.f32.s32 %v4179
        %v4181 = vcvt.f32.s32 %v4175
        %v4182 = vshll.u32 %v4181, 16
        %v4183 = vadd.s32 %v4182, %v4180
        %v4184 = vand.u32 %v3983, 65535
        %v4185 = vshra.s32 %v3983, 16
        %v4186 = vcvt.s32.f32 %v4184
        %v4187 = vcvt.s32.f32 %v4185
        %4188 = vmin.xlane.f32.xlu0 %v4187
        %v4189 = vpop.xlane.xlu0 %4188
        %vm4190 = vcmp.eq.f32.partialorder %v4187, %v4189
        %v4191 = vsel %vm4190, %v4186, inf
        %4192 = vmin.xlane.f32.xlu0 %v4191
        %v4193 = vpop.xlane.xlu0 %4192
        %v4194 = vcvt.f32.s32 %v4193
        %v4195 = vcvt.f32.s32 %v4189
        %v4196 = vshll.u32 %v4195, 16
        %v4197 = vadd.s32 %v4196, %v4194
        %v4198 = vand.u32 %v3984, 65535
        %v4199 = vshra.s32 %v3984, 16
        %v4200 = vcvt.s32.f32 %v4198
        %v4201 = vcvt.s32.f32 %v4199
        %4202 = vmin.xlane.f32.xlu0 %v4201
        %v4203 = vpop.xlane.xlu0 %4202
        %vm4204 = vcmp.eq.f32.partialorder %v4201, %v4203
        %v4205 = vsel %vm4204, %v4200, inf
        %4206 = vmin.xlane.f32.xlu0 %v4205
        %v4207 = vpop.xlane.xlu0 %4206
        %v4208 = vcvt.f32.s32 %v4207
        %v4209 = vcvt.f32.s32 %v4203
        %v4210 = vshll.u32 %v4209, 16
        %v4211 = vadd.s32 %v4210, %v4208
        %v4212 = vand.u32 %v3985, 65535
        %v4213 = vshra.s32 %v3985, 16
        %v4214 = vcvt.s32.f32 %v4212
        %v4215 = vcvt.s32.f32 %v4213
        %4216 = vmin.xlane.f32.xlu0 %v4215
        %v4217 = vpop.xlane.xlu0 %4216
        %vm4218 = vcmp.eq.f32.partialorder %v4215, %v4217
        %v4219 = vsel %vm4218, %v4214, inf
        %4220 = vmin.xlane.f32.xlu0 %v4219
        %v4221 = vpop.xlane.xlu0 %4220
        %v4222 = vcvt.f32.s32 %v4221
        %v4223 = vcvt.f32.s32 %v4217
        %v4224 = vshll.u32 %v4223, 16
        %v4225 = vadd.s32 %v4224, %v4222
        %v4226 = vand.u32 %v3986, 65535
        %v4227 = vshra.s32 %v3986, 16
        %v4228 = vcvt.s32.f32 %v4226
        %v4229 = vcvt.s32.f32 %v4227
        %4230 = vmin.xlane.f32.xlu0 %v4229
        %v4231 = vpop.xlane.xlu0 %4230
        %vm4232 = vcmp.eq.f32.partialorder %v4229, %v4231
        %v4233 = vsel %vm4232, %v4228, inf
        %4234 = vmin.xlane.f32.xlu0 %v4233
        %v4235 = vpop.xlane.xlu0 %4234
        %v4236 = vcvt.f32.s32 %v4235
        %v4237 = vcvt.f32.s32 %v4231
        %v4238 = vshll.u32 %v4237, 16
        %v4239 = vadd.s32 %v4238, %v4236
        %v4240 = vand.u32 %v3987, 65535
        %v4241 = vshra.s32 %v3987, 16
        %v4242 = vcvt.s32.f32 %v4240
        %v4243 = vcvt.s32.f32 %v4241
        %4244 = vmin.xlane.f32.xlu0 %v4243
        %v4245 = vpop.xlane.xlu0 %4244
        %vm4246 = vcmp.eq.f32.partialorder %v4243, %v4245
        %v4247 = vsel %vm4246, %v4242, inf
        %4248 = vmin.xlane.f32.xlu0 %v4247
        %v4249 = vpop.xlane.xlu0 %4248
        %v4250 = vcvt.f32.s32 %v4249
        %v4251 = vcvt.f32.s32 %v4245
        %v4252 = vshll.u32 %v4251, 16
        %v4253 = vadd.s32 %v4252, %v4250
        %v4254 = vand.u32 %v3988, 65535
        %v4255 = vshra.s32 %v3988, 16
        %v4256 = vcvt.s32.f32 %v4254
        %v4257 = vcvt.s32.f32 %v4255
        %4258 = vmin.xlane.f32.xlu0 %v4257
        %v4259 = vpop.xlane.xlu0 %4258
        %vm4260 = vcmp.eq.f32.partialorder %v4257, %v4259
        %v4261 = vsel %vm4260, %v4256, inf
        %4262 = vmin.xlane.f32.xlu0 %v4261
        %v4263 = vpop.xlane.xlu0 %4262
        %v4264 = vcvt.f32.s32 %v4263
        %v4265 = vcvt.f32.s32 %v4259
        %v4266 = vshll.u32 %v4265, 16
        %v4267 = vadd.s32 %v4266, %v4264
        %v4268 = vand.u32 %v3989, 65535
        %v4269 = vshra.s32 %v3989, 16
        %v4270 = vcvt.s32.f32 %v4268
        %v4271 = vcvt.s32.f32 %v4269
        %4272 = vmin.xlane.f32.xlu0 %v4271
        %v4273 = vpop.xlane.xlu0 %4272
        %vm4274 = vcmp.eq.f32.partialorder %v4271, %v4273
        %v4275 = vsel %vm4274, %v4270, inf
        %4276 = vmin.xlane.f32.xlu0 %v4275
        %v4277 = vpop.xlane.xlu0 %4276
        %v4278 = vcvt.f32.s32 %v4277
        %v4279 = vcvt.f32.s32 %v4273
        %v4280 = vshll.u32 %v4279, 16
        %v4281 = vadd.s32 %v4280, %v4278
        %v4282 = vand.u32 %v3990, 65535
        %v4283 = vshra.s32 %v3990, 16
        %v4284 = vcvt.s32.f32 %v4282
        %v4285 = vcvt.s32.f32 %v4283
        %4286 = vmin.xlane.f32.xlu0 %v4285
        %v4287 = vpop.xlane.xlu0 %4286
        %vm4288 = vcmp.eq.f32.partialorder %v4285, %v4287
        %v4289 = vsel %vm4288, %v4284, inf
        %4290 = vmin.xlane.f32.xlu0 %v4289
        %v4291 = vpop.xlane.xlu0 %4290
        %v4292 = vcvt.f32.s32 %v4291
        %v4293 = vcvt.f32.s32 %v4287
        %v4294 = vshll.u32 %v4293, 16
        %v4295 = vadd.s32 %v4294, %v4292
        %v4296 = vand.u32 %v3991, 65535
        %v4297 = vshra.s32 %v3991, 16
        %v4298 = vcvt.s32.f32 %v4296
        %v4299 = vcvt.s32.f32 %v4297
        %4300 = vmin.xlane.f32.xlu0 %v4299
        %v4301 = vpop.xlane.xlu0 %4300
        %vm4302 = vcmp.eq.f32.partialorder %v4299, %v4301
        %v4303 = vsel %vm4302, %v4298, inf
        %4304 = vmin.xlane.f32.xlu0 %v4303
        %v4305 = vpop.xlane.xlu0 %4304
        %v4306 = vcvt.f32.s32 %v4305
        %v4307 = vcvt.f32.s32 %v4301
        %v4308 = vshll.u32 %v4307, 16
        %v4309 = vadd.s32 %v4308, %v4306
        %v4310 = vand.u32 %v3992, 65535
        %v4311 = vshra.s32 %v3992, 16
        %v4312 = vcvt.s32.f32 %v4310
        %v4313 = vcvt.s32.f32 %v4311
        %4314 = vmin.xlane.f32.xlu0 %v4313
        %v4315 = vpop.xlane.xlu0 %4314
        %vm4316 = vcmp.eq.f32.partialorder %v4313, %v4315
        %v4317 = vsel %vm4316, %v4312, inf
        %4318 = vmin.xlane.f32.xlu0 %v4317
        %v4319 = vpop.xlane.xlu0 %4318
        %v4320 = vcvt.f32.s32 %v4319
        %v4321 = vcvt.f32.s32 %v4315
        %v4322 = vshll.u32 %v4321, 16
        %v4323 = vadd.s32 %v4322, %v4320
        %v4324 = vand.u32 %v3993, 65535
        %v4325 = vshra.s32 %v3993, 16
        %v4326 = vcvt.s32.f32 %v4324
        %v4327 = vcvt.s32.f32 %v4325
        %4328 = vmin.xlane.f32.xlu0 %v4327
        %v4329 = vpop.xlane.xlu0 %4328
        %vm4330 = vcmp.eq.f32.partialorder %v4327, %v4329
        %v4331 = vsel %vm4330, %v4326, inf
        %4332 = vmin.xlane.f32.xlu0 %v4331
        %v4333 = vpop.xlane.xlu0 %4332
        %v4334 = vcvt.f32.s32 %v4333
        %v4335 = vcvt.f32.s32 %v4329
        %v4336 = vshll.u32 %v4335, 16
        %v4337 = vadd.s32 %v4336, %v4334
        %v4338 = vand.u32 %v3994, 65535
        %v4339 = vshra.s32 %v3994, 16
        %v4340 = vcvt.s32.f32 %v4338
        %v4341 = vcvt.s32.f32 %v4339
        %4342 = vmin.xlane.f32.xlu0 %v4341
        %v4343 = vpop.xlane.xlu0 %4342
        %vm4344 = vcmp.eq.f32.partialorder %v4341, %v4343
        %v4345 = vsel %vm4344, %v4340, inf
        %4346 = vmin.xlane.f32.xlu0 %v4345
        %v4347 = vpop.xlane.xlu0 %4346
        %v4348 = vcvt.f32.s32 %v4347
        %v4349 = vcvt.f32.s32 %v4343
        %v4350 = vshll.u32 %v4349, 16
        %v4351 = vadd.s32 %v4350, %v4348
        %v4352 = vand.u32 %v3995, 65535
        %v4353 = vshra.s32 %v3995, 16
        %v4354 = vcvt.s32.f32 %v4352
        %v4355 = vcvt.s32.f32 %v4353
        %4356 = vmin.xlane.f32.xlu0 %v4355
        %v4357 = vpop.xlane.xlu0 %4356
        %vm4358 = vcmp.eq.f32.partialorder %v4355, %v4357
        %v4359 = vsel %vm4358, %v4354, inf
        %4360 = vmin.xlane.f32.xlu0 %v4359
        %v4361 = vpop.xlane.xlu0 %4360
        %v4362 = vcvt.f32.s32 %v4361
        %v4363 = vcvt.f32.s32 %v4357
        %v4364 = vshll.u32 %v4363, 16
        %v4365 = vadd.s32 %v4364, %v4362
        %v4366 = vand.u32 %v3996, 65535
        %v4367 = vshra.s32 %v3996, 16
        %v4368 = vcvt.s32.f32 %v4366
        %v4369 = vcvt.s32.f32 %v4367
        %4370 = vmin.xlane.f32.xlu0 %v4369
        %v4371 = vpop.xlane.xlu0 %4370
        %vm4372 = vcmp.eq.f32.partialorder %v4369, %v4371
        %v4373 = vsel %vm4372, %v4368, inf
        %4374 = vmin.xlane.f32.xlu0 %v4373
        %v4375 = vpop.xlane.xlu0 %4374
        %v4376 = vcvt.f32.s32 %v4375
        %v4377 = vcvt.f32.s32 %v4371
        %v4378 = vshll.u32 %v4377, 16
        %v4379 = vadd.s32 %v4378, %v4376
        %v4380 = vand.u32 %v3997, 65535
        %v4381 = vshra.s32 %v3997, 16
        %v4382 = vcvt.s32.f32 %v4380
        %v4383 = vcvt.s32.f32 %v4381
        %4384 = vmin.xlane.f32.xlu0 %v4383
        %v4385 = vpop.xlane.xlu0 %4384
        %vm4386 = vcmp.eq.f32.partialorder %v4383, %v4385
        %v4387 = vsel %vm4386, %v4382, inf
        %4388 = vmin.xlane.f32.xlu0 %v4387
        %v4389 = vpop.xlane.xlu0 %4388
        %v4390 = vcvt.f32.s32 %v4389
        %v4391 = vcvt.f32.s32 %v4385
        %v4392 = vshll.u32 %v4391, 16
        %v4393 = vadd.s32 %v4392, %v4390
        %v4394 = vand.u32 %v3998, 65535
        %v4395 = vshra.s32 %v3998, 16
        %v4396 = vcvt.s32.f32 %v4394
        %v4397 = vcvt.s32.f32 %v4395
        %4398 = vmin.xlane.f32.xlu0 %v4397
        %v4399 = vpop.xlane.xlu0 %4398
        %vm4400 = vcmp.eq.f32.partialorder %v4397, %v4399
        %v4401 = vsel %vm4400, %v4396, inf
        %4402 = vmin.xlane.f32.xlu0 %v4401
        %v4403 = vpop.xlane.xlu0 %4402
        %v4404 = vcvt.f32.s32 %v4403
        %v4405 = vcvt.f32.s32 %v4399
        %v4406 = vshll.u32 %v4405, 16
        %v4407 = vadd.s32 %v4406, %v4404
        %v4408 = vand.u32 %v3999, 65535
        %v4409 = vshra.s32 %v3999, 16
        %v4410 = vcvt.s32.f32 %v4408
        %v4411 = vcvt.s32.f32 %v4409
        %4412 = vmin.xlane.f32.xlu0 %v4411
        %v4413 = vpop.xlane.xlu0 %4412
        %vm4414 = vcmp.eq.f32.partialorder %v4411, %v4413
        %v4415 = vsel %vm4414, %v4410, inf
        %4416 = vmin.xlane.f32.xlu0 %v4415
        %v4417 = vpop.xlane.xlu0 %4416
        %v4418 = vcvt.f32.s32 %v4417
        %v4419 = vcvt.f32.s32 %v4413
        %v4420 = vshll.u32 %v4419, 16
        %v4421 = vadd.s32 %v4420, %v4418
        %v4422 = vand.u32 %v4000, 65535
        %v4423 = vshra.s32 %v4000, 16
        %v4424 = vcvt.s32.f32 %v4422
        %v4425 = vcvt.s32.f32 %v4423
        %4426 = vmin.xlane.f32.xlu0 %v4425
        %v4427 = vpop.xlane.xlu0 %4426
        %vm4428 = vcmp.eq.f32.partialorder %v4425, %v4427
        %v4429 = vsel %vm4428, %v4424, inf
        %4430 = vmin.xlane.f32.xlu0 %v4429
        %v4431 = vpop.xlane.xlu0 %4430
        %v4432 = vcvt.f32.s32 %v4431
        %v4433 = vcvt.f32.s32 %v4427
        %v4434 = vshll.u32 %v4433, 16
        %v4435 = vadd.s32 %v4434, %v4432
        %v4436 = vand.u32 %v4001, 65535
        %v4437 = vshra.s32 %v4001, 16
        %v4438 = vcvt.s32.f32 %v4436
        %v4439 = vcvt.s32.f32 %v4437
        %4440 = vmin.xlane.f32.xlu0 %v4439
        %v4441 = vpop.xlane.xlu0 %4440
        %vm4442 = vcmp.eq.f32.partialorder %v4439, %v4441
        %v4443 = vsel %vm4442, %v4438, inf
        %4444 = vmin.xlane.f32.xlu0 %v4443
        %v4445 = vpop.xlane.xlu0 %4444
        %v4446 = vcvt.f32.s32 %v4445
        %v4447 = vcvt.f32.s32 %v4441
        %v4448 = vshll.u32 %v4447, 16
        %v4449 = vadd.s32 %v4448, %v4446
        %v4450 = vsub.f32 %v3875, %v771
        %v4451 = vsub.f32 %v3877, %v773
        %v4452 = vsub.f32 %v3879, %v775
        %v4453 = vsub.f32 %v3881, %v777
        %v4454 = vsub.f32 %v3883, %v779
        %v4455 = vsub.f32 %v3885, %v781
        %v4456 = vsub.f32 %v3887, %v783
        %v4457 = vsub.f32 %v3889, %v785
        %v4458 = vsub.f32 %v3891, %v787
        %v4459 = vsub.f32 %v3893, %v789
        %v4460 = vsub.f32 %v3895, %v791
        %v4461 = vsub.f32 %v3897, %v793
        %v4462 = vsub.f32 %v3899, %v795
        %v4463 = vsub.f32 %v3901, %v797
        %v4464 = vsub.f32 %v3903, %v799
        %v4465 = vsub.f32 %v3905, %v801
        %v4466 = vsub.f32 %v3907, %v803
        %v4467 = vsub.f32 %v3909, %v805
        %v4468 = vsub.f32 %v3911, %v807
        %v4469 = vsub.f32 %v3913, %v809
        %v4470 = vsub.f32 %v3915, %v811
        %v4471 = vsub.f32 %v3917, %v813
        %v4472 = vsub.f32 %v3919, %v815
        %v4473 = vsub.f32 %v3921, %v817
        %v4474 = vsub.f32 %v3923, %v819
        %v4475 = vsub.f32 %v3925, %v821
        %v4476 = vsub.f32 %v3927, %v823
        %v4477 = vsub.f32 %v3929, %v825
        %v4478 = vsub.f32 %v3931, %v827
        %v4479 = vsub.f32 %v3933, %v829
        %v4480 = vsub.f32 %v3935, %v831
        %v4481 = vsub.f32 %v3937, %v833
        %v4482 = vmul.f32 %v4450, 1.442695
        %v4483 = vpow.pop %v4482
        %v4484 = vmul.f32 %v4451, 1.442695
        %v4485 = vpow.pop %v4484
        %v4486 = vmul.f32 %v4452, 1.442695
        %v4487 = vpow.pop %v4486
        %v4488 = vmul.f32 %v4453, 1.442695
        %v4489 = vpow.pop %v4488
        %v4490 = vmul.f32 %v4454, 1.442695
        %v4491 = vpow.pop %v4490
        %v4492 = vmul.f32 %v4455, 1.442695
        %v4493 = vpow.pop %v4492
        %v4494 = vmul.f32 %v4456, 1.442695
        %v4495 = vpow.pop %v4494
        %v4496 = vmul.f32 %v4457, 1.442695
        %v4497 = vpow.pop %v4496
        %v4498 = vmul.f32 %v4458, 1.442695
        %v4499 = vpow.pop %v4498
        %v4500 = vmul.f32 %v4459, 1.442695
        %v4501 = vpow.pop %v4500
        %v4502 = vmul.f32 %v4460, 1.442695
        %v4503 = vpow.pop %v4502
        %v4504 = vmul.f32 %v4461, 1.442695
        %v4505 = vpow.pop %v4504
        %v4506 = vmul.f32 %v4462, 1.442695
        %v4507 = vpow.pop %v4506
        %v4508 = vmul.f32 %v4463, 1.442695
        %v4509 = vpow.pop %v4508
        %v4510 = vmul.f32 %v4464, 1.442695
        %v4511 = vpow.pop %v4510
        %v4512 = vmul.f32 %v4465, 1.442695
        %v4513 = vpow.pop %v4512
        %v4514 = vmul.f32 %v4466, 1.442695
        %v4515 = vpow.pop %v4514
        %v4516 = vmul.f32 %v4467, 1.442695
        %v4517 = vpow.pop %v4516
        %v4518 = vmul.f32 %v4468, 1.442695
        %v4519 = vpow.pop %v4518
        %v4520 = vmul.f32 %v4469, 1.442695
        %v4521 = vpow.pop %v4520
        %v4522 = vmul.f32 %v4470, 1.442695
        %v4523 = vpow.pop %v4522
        %v4524 = vmul.f32 %v4471, 1.442695
        %v4525 = vpow.pop %v4524
        %v4526 = vmul.f32 %v4472, 1.442695
        %v4527 = vpow.pop %v4526
        %v4528 = vmul.f32 %v4473, 1.442695
        %v4529 = vpow.pop %v4528
        %v4530 = vmul.f32 %v4474, 1.442695
        %v4531 = vpow.pop %v4530
        %v4532 = vmul.f32 %v4475, 1.442695
        %v4533 = vpow.pop %v4532
        %v4534 = vmul.f32 %v4476, 1.442695
        %v4535 = vpow.pop %v4534
        %v4536 = vmul.f32 %v4477, 1.442695
        %v4537 = vpow.pop %v4536
        %v4538 = vmul.f32 %v4478, 1.442695
        %v4539 = vpow.pop %v4538
        %v4540 = vmul.f32 %v4479, 1.442695
        %v4541 = vpow.pop %v4540
        %v4542 = vmul.f32 %v4480, 1.442695
        %v4543 = vpow.pop %v4542
        %v4544 = vmul.f32 %v4481, 1.442695
        %v4545 = vpow.pop %v4544
        %vm4546 = vcmp.eq.s32.totalorder %v736, %v4015
        %vm4547 = vcmp.eq.s32.totalorder %v736, %v4029
        %vm4548 = vcmp.eq.s32.totalorder %v736, %v4043
        %vm4549 = vcmp.eq.s32.totalorder %v736, %v4057
        %vm4550 = vcmp.eq.s32.totalorder %v736, %v4071
        %vm4551 = vcmp.eq.s32.totalorder %v736, %v4085
        %vm4552 = vcmp.eq.s32.totalorder %v736, %v4099
        %vm4553 = vcmp.eq.s32.totalorder %v736, %v4113
        %vm4554 = vcmp.eq.s32.totalorder %v736, %v4127
        %vm4555 = vcmp.eq.s32.totalorder %v736, %v4141
        %vm4556 = vcmp.eq.s32.totalorder %v736, %v4155
        %vm4557 = vcmp.eq.s32.totalorder %v736, %v4169
        %vm4558 = vcmp.eq.s32.totalorder %v736, %v4183
        %vm4559 = vcmp.eq.s32.totalorder %v736, %v4197
        %vm4560 = vcmp.eq.s32.totalorder %v736, %v4211
        %vm4561 = vcmp.eq.s32.totalorder %v736, %v4225
        %vm4562 = vcmp.eq.s32.totalorder %v736, %v4239
        %vm4563 = vcmp.eq.s32.totalorder %v736, %v4253
        %vm4564 = vcmp.eq.s32.totalorder %v736, %v4267
        %vm4565 = vcmp.eq.s32.totalorder %v736, %v4281
        %vm4566 = vcmp.eq.s32.totalorder %v736, %v4295
        %vm4567 = vcmp.eq.s32.totalorder %v736, %v4309
        %vm4568 = vcmp.eq.s32.totalorder %v736, %v4323
        %vm4569 = vcmp.eq.s32.totalorder %v736, %v4337
        %vm4570 = vcmp.eq.s32.totalorder %v736, %v4351
        %vm4571 = vcmp.eq.s32.totalorder %v736, %v4365
        %vm4572 = vcmp.eq.s32.totalorder %v736, %v4379
        %vm4573 = vcmp.eq.s32.totalorder %v736, %v4393
        %vm4574 = vcmp.eq.s32.totalorder %v736, %v4407
        %vm4575 = vcmp.eq.s32.totalorder %v736, %v4421
        %vm4576 = vcmp.eq.s32.totalorder %v736, %v4435
        %vm4577 = vcmp.eq.s32.totalorder %v736, %v4449
        %v4578 = vsel %vm4546, -1e+30, %v3842
        %v4579 = vsel %vm4547, -1e+30, %v3843
        %v4580 = vsel %vm4548, -1e+30, %v3844
        %v4581 = vsel %vm4549, -1e+30, %v3845
        %v4582 = vsel %vm4550, -1e+30, %v3846
        %v4583 = vsel %vm4551, -1e+30, %v3847
        %v4584 = vsel %vm4552, -1e+30, %v3848
        %v4585 = vsel %vm4553, -1e+30, %v3849
        %v4586 = vsel %vm4554, -1e+30, %v3850
        %v4587 = vsel %vm4555, -1e+30, %v3851
        %v4588 = vsel %vm4556, -1e+30, %v3852
        %v4589 = vsel %vm4557, -1e+30, %v3853
        %v4590 = vsel %vm4558, -1e+30, %v3854
        %v4591 = vsel %vm4559, -1e+30, %v3855
        %v4592 = vsel %vm4560, -1e+30, %v3856
        %v4593 = vsel %vm4561, -1e+30, %v3857
        %v4594 = vsel %vm4562, -1e+30, %v3858
        %v4595 = vsel %vm4563, -1e+30, %v3859
        %v4596 = vsel %vm4564, -1e+30, %v3860
        %v4597 = vsel %vm4565, -1e+30, %v3861
        %v4598 = vsel %vm4566, -1e+30, %v3862
        %v4599 = vsel %vm4567, -1e+30, %v3863
        %v4600 = vsel %vm4568, -1e+30, %v3864
        %v4601 = vsel %vm4569, -1e+30, %v3865
        %v4602 = vsel %vm4570, -1e+30, %v3866
        %v4603 = vsel %vm4571, -1e+30, %v3867
        %v4604 = vsel %vm4572, -1e+30, %v3868
        %v4605 = vsel %vm4573, -1e+30, %v3869
        %v4606 = vsel %vm4574, -1e+30, %v3870
        %v4607 = vsel %vm4575, -1e+30, %v3871
        %v4608 = vsel %vm4576, -1e+30, %v3872
        %v4609 = vsel %vm4577, -1e+30, %v3873
        %4610 = vmax.xlane.f32.xlu0 %v4578
        %v4611 = vpop.xlane.xlu0 %4610
        %4612 = vmax.xlane.f32.xlu0 %v4579
        %v4613 = vpop.xlane.xlu0 %4612
        %4614 = vmax.xlane.f32.xlu0 %v4580
        %v4615 = vpop.xlane.xlu0 %4614
        %4616 = vmax.xlane.f32.xlu0 %v4581
        %v4617 = vpop.xlane.xlu0 %4616
        %4618 = vmax.xlane.f32.xlu0 %v4582
        %v4619 = vpop.xlane.xlu0 %4618
        %4620 = vmax.xlane.f32.xlu0 %v4583
        %v4621 = vpop.xlane.xlu0 %4620
        %4622 = vmax.xlane.f32.xlu0 %v4584
        %v4623 = vpop.xlane.xlu0 %4622
        %4624 = vmax.xlane.f32.xlu0 %v4585
        %v4625 = vpop.xlane.xlu0 %4624
        %4626 = vmax.xlane.f32.xlu0 %v4586
        %v4627 = vpop.xlane.xlu0 %4626
        %4628 = vmax.xlane.f32.xlu0 %v4587
        %v4629 = vpop.xlane.xlu0 %4628
        %4630 = vmax.xlane.f32.xlu0 %v4588
        %v4631 = vpop.xlane.xlu0 %4630
        %4632 = vmax.xlane.f32.xlu0 %v4589
        %v4633 = vpop.xlane.xlu0 %4632
        %4634 = vmax.xlane.f32.xlu0 %v4590
        %v4635 = vpop.xlane.xlu0 %4634
        %4636 = vmax.xlane.f32.xlu0 %v4591
        %v4637 = vpop.xlane.xlu0 %4636
        %4638 = vmax.xlane.f32.xlu0 %v4592
        %v4639 = vpop.xlane.xlu0 %4638
        %4640 = vmax.xlane.f32.xlu0 %v4593
        %v4641 = vpop.xlane.xlu0 %4640
        %4642 = vmax.xlane.f32.xlu0 %v4594
        %v4643 = vpop.xlane.xlu0 %4642
        %4644 = vmax.xlane.f32.xlu0 %v4595
        %v4645 = vpop.xlane.xlu0 %4644
        %4646 = vmax.xlane.f32.xlu0 %v4596
        %v4647 = vpop.xlane.xlu0 %4646
        %4648 = vmax.xlane.f32.xlu0 %v4597
        %v4649 = vpop.xlane.xlu0 %4648
        %4650 = vmax.xlane.f32.xlu0 %v4598
        %v4651 = vpop.xlane.xlu0 %4650
        %4652 = vmax.xlane.f32.xlu0 %v4599
        %v4653 = vpop.xlane.xlu0 %4652
        %4654 = vmax.xlane.f32.xlu0 %v4600
        %v4655 = vpop.xlane.xlu0 %4654
        %4656 = vmax.xlane.f32.xlu0 %v4601
        %v4657 = vpop.xlane.xlu0 %4656
        %4658 = vmax.xlane.f32.xlu0 %v4602
        %v4659 = vpop.xlane.xlu0 %4658
        %4660 = vmax.xlane.f32.xlu0 %v4603
        %v4661 = vpop.xlane.xlu0 %4660
        %4662 = vmax.xlane.f32.xlu0 %v4604
        %v4663 = vpop.xlane.xlu0 %4662
        %4664 = vmax.xlane.f32.xlu0 %v4605
        %v4665 = vpop.xlane.xlu0 %4664
        %4666 = vmax.xlane.f32.xlu0 %v4606
        %v4667 = vpop.xlane.xlu0 %4666
        %4668 = vmax.xlane.f32.xlu0 %v4607
        %v4669 = vpop.xlane.xlu0 %4668
        %4670 = vmax.xlane.f32.xlu0 %v4608
        %v4671 = vpop.xlane.xlu0 %4670
        %4672 = vmax.xlane.f32.xlu0 %v4609
        %v4673 = vpop.xlane.xlu0 %4672
        %vm4674 = vcmp.eq.f32.partialorder %v4578, %v4611
        %vm4675 = vcmp.eq.f32.partialorder %v4579, %v4613
        %vm4676 = vcmp.eq.f32.partialorder %v4580, %v4615
        %vm4677 = vcmp.eq.f32.partialorder %v4581, %v4617
        %vm4678 = vcmp.eq.f32.partialorder %v4582, %v4619
        %vm4679 = vcmp.eq.f32.partialorder %v4583, %v4621
        %vm4680 = vcmp.eq.f32.partialorder %v4584, %v4623
        %vm4681 = vcmp.eq.f32.partialorder %v4585, %v4625
        %vm4682 = vcmp.eq.f32.partialorder %v4586, %v4627
        %vm4683 = vcmp.eq.f32.partialorder %v4587, %v4629
        %vm4684 = vcmp.eq.f32.partialorder %v4588, %v4631
        %vm4685 = vcmp.eq.f32.partialorder %v4589, %v4633
        %vm4686 = vcmp.eq.f32.partialorder %v4590, %v4635
        %vm4687 = vcmp.eq.f32.partialorder %v4591, %v4637
        %vm4688 = vcmp.eq.f32.partialorder %v4592, %v4639
        %vm4689 = vcmp.eq.f32.partialorder %v4593, %v4641
        %vm4690 = vcmp.eq.f32.partialorder %v4594, %v4643
        %vm4691 = vcmp.eq.f32.partialorder %v4595, %v4645
        %vm4692 = vcmp.eq.f32.partialorder %v4596, %v4647
        %vm4693 = vcmp.eq.f32.partialorder %v4597, %v4649
        %vm4694 = vcmp.eq.f32.partialorder %v4598, %v4651
        %vm4695 = vcmp.eq.f32.partialorder %v4599, %v4653
        %vm4696 = vcmp.eq.f32.partialorder %v4600, %v4655
        %vm4697 = vcmp.eq.f32.partialorder %v4601, %v4657
        %vm4698 = vcmp.eq.f32.partialorder %v4602, %v4659
        %vm4699 = vcmp.eq.f32.partialorder %v4603, %v4661
        %vm4700 = vcmp.eq.f32.partialorder %v4604, %v4663
        %vm4701 = vcmp.eq.f32.partialorder %v4605, %v4665
        %vm4702 = vcmp.eq.f32.partialorder %v4606, %v4667
        %vm4703 = vcmp.eq.f32.partialorder %v4607, %v4669
        %vm4704 = vcmp.eq.f32.partialorder %v4608, %v4671
        %vm4705 = vcmp.eq.f32.partialorder %v4609, %v4673
        %v4706 = vsel %vm4674, %v736, 128
        %v4707 = vsel %vm4675, %v736, 128
        %v4708 = vsel %vm4676, %v736, 128
        %v4709 = vsel %vm4677, %v736, 128
        %v4710 = vsel %vm4678, %v736, 128
        %v4711 = vsel %vm4679, %v736, 128
        %v4712 = vsel %vm4680, %v736, 128
        %v4713 = vsel %vm4681, %v736, 128
        %v4714 = vsel %vm4682, %v736, 128
        %v4715 = vsel %vm4683, %v736, 128
        %v4716 = vsel %vm4684, %v736, 128
        %v4717 = vsel %vm4685, %v736, 128
        %v4718 = vsel %vm4686, %v736, 128
        %v4719 = vsel %vm4687, %v736, 128
        %v4720 = vsel %vm4688, %v736, 128
        %v4721 = vsel %vm4689, %v736, 128
        %v4722 = vsel %vm4690, %v736, 128
        %v4723 = vsel %vm4691, %v736, 128
        %v4724 = vsel %vm4692, %v736, 128
        %v4725 = vsel %vm4693, %v736, 128
        %v4726 = vsel %vm4694, %v736, 128
        %v4727 = vsel %vm4695, %v736, 128
        %v4728 = vsel %vm4696, %v736, 128
        %v4729 = vsel %vm4697, %v736, 128
        %v4730 = vsel %vm4698, %v736, 128
        %v4731 = vsel %vm4699, %v736, 128
        %v4732 = vsel %vm4700, %v736, 128
        %v4733 = vsel %vm4701, %v736, 128
        %v4734 = vsel %vm4702, %v736, 128
        %v4735 = vsel %vm4703, %v736, 128
        %v4736 = vsel %vm4704, %v736, 128
        %v4737 = vsel %vm4705, %v736, 128
        %v4738 = vand.u32 %v4706, 65535
        %v4739 = vshra.s32 %v4706, 16
        %v4740 = vcvt.s32.f32 %v4738
        %v4741 = vcvt.s32.f32 %v4739
        %4742 = vmin.xlane.f32.xlu0 %v4741
        %v4743 = vpop.xlane.xlu0 %4742
        %vm4744 = vcmp.eq.f32.partialorder %v4741, %v4743
        %v4745 = vsel %vm4744, %v4740, inf
        %4746 = vmin.xlane.f32.xlu0 %v4745
        %v4747 = vpop.xlane.xlu0 %4746
        %v4748 = vcvt.f32.s32 %v4747
        %v4749 = vcvt.f32.s32 %v4743
        %v4750 = vshll.u32 %v4749, 16
        %v4751 = vadd.s32 %v4750, %v4748
        %v4752 = vand.u32 %v4707, 65535
        %v4753 = vshra.s32 %v4707, 16
        %v4754 = vcvt.s32.f32 %v4752
        %v4755 = vcvt.s32.f32 %v4753
        %4756 = vmin.xlane.f32.xlu0 %v4755
        %v4757 = vpop.xlane.xlu0 %4756
        %vm4758 = vcmp.eq.f32.partialorder %v4755, %v4757
        %v4759 = vsel %vm4758, %v4754, inf
        %4760 = vmin.xlane.f32.xlu0 %v4759
        %v4761 = vpop.xlane.xlu0 %4760
        %v4762 = vcvt.f32.s32 %v4761
        %v4763 = vcvt.f32.s32 %v4757
        %v4764 = vshll.u32 %v4763, 16
        %v4765 = vadd.s32 %v4764, %v4762
        %v4766 = vand.u32 %v4708, 65535
        %v4767 = vshra.s32 %v4708, 16
        %v4768 = vcvt.s32.f32 %v4766
        %v4769 = vcvt.s32.f32 %v4767
        %4770 = vmin.xlane.f32.xlu0 %v4769
        %v4771 = vpop.xlane.xlu0 %4770
        %vm4772 = vcmp.eq.f32.partialorder %v4769, %v4771
        %v4773 = vsel %vm4772, %v4768, inf
        %4774 = vmin.xlane.f32.xlu0 %v4773
        %v4775 = vpop.xlane.xlu0 %4774
        %v4776 = vcvt.f32.s32 %v4775
        %v4777 = vcvt.f32.s32 %v4771
        %v4778 = vshll.u32 %v4777, 16
        %v4779 = vadd.s32 %v4778, %v4776
        %v4780 = vand.u32 %v4709, 65535
        %v4781 = vshra.s32 %v4709, 16
        %v4782 = vcvt.s32.f32 %v4780
        %v4783 = vcvt.s32.f32 %v4781
        %4784 = vmin.xlane.f32.xlu0 %v4783
        %v4785 = vpop.xlane.xlu0 %4784
        %vm4786 = vcmp.eq.f32.partialorder %v4783, %v4785
        %v4787 = vsel %vm4786, %v4782, inf
        %4788 = vmin.xlane.f32.xlu0 %v4787
        %v4789 = vpop.xlane.xlu0 %4788
        %v4790 = vcvt.f32.s32 %v4789
        %v4791 = vcvt.f32.s32 %v4785
        %v4792 = vshll.u32 %v4791, 16
        %v4793 = vadd.s32 %v4792, %v4790
        %v4794 = vand.u32 %v4710, 65535
        %v4795 = vshra.s32 %v4710, 16
        %v4796 = vcvt.s32.f32 %v4794
        %v4797 = vcvt.s32.f32 %v4795
        %4798 = vmin.xlane.f32.xlu0 %v4797
        %v4799 = vpop.xlane.xlu0 %4798
        %vm4800 = vcmp.eq.f32.partialorder %v4797, %v4799
        %v4801 = vsel %vm4800, %v4796, inf
        %4802 = vmin.xlane.f32.xlu0 %v4801
        %v4803 = vpop.xlane.xlu0 %4802
        %v4804 = vcvt.f32.s32 %v4803
        %v4805 = vcvt.f32.s32 %v4799
        %v4806 = vshll.u32 %v4805, 16
        %v4807 = vadd.s32 %v4806, %v4804
        %v4808 = vand.u32 %v4711, 65535
        %v4809 = vshra.s32 %v4711, 16
        %v4810 = vcvt.s32.f32 %v4808
        %v4811 = vcvt.s32.f32 %v4809
        %4812 = vmin.xlane.f32.xlu0 %v4811
        %v4813 = vpop.xlane.xlu0 %4812
        %vm4814 = vcmp.eq.f32.partialorder %v4811, %v4813
        %v4815 = vsel %vm4814, %v4810, inf
        %4816 = vmin.xlane.f32.xlu0 %v4815
        %v4817 = vpop.xlane.xlu0 %4816
        %v4818 = vcvt.f32.s32 %v4817
        %v4819 = vcvt.f32.s32 %v4813
        %v4820 = vshll.u32 %v4819, 16
        %v4821 = vadd.s32 %v4820, %v4818
        %v4822 = vand.u32 %v4712, 65535
        %v4823 = vshra.s32 %v4712, 16
        %v4824 = vcvt.s32.f32 %v4822
        %v4825 = vcvt.s32.f32 %v4823
        %4826 = vmin.xlane.f32.xlu0 %v4825
        %v4827 = vpop.xlane.xlu0 %4826
        %vm4828 = vcmp.eq.f32.partialorder %v4825, %v4827
        %v4829 = vsel %vm4828, %v4824, inf
        %4830 = vmin.xlane.f32.xlu0 %v4829
        %v4831 = vpop.xlane.xlu0 %4830
        %v4832 = vcvt.f32.s32 %v4831
        %v4833 = vcvt.f32.s32 %v4827
        %v4834 = vshll.u32 %v4833, 16
        %v4835 = vadd.s32 %v4834, %v4832
        %v4836 = vand.u32 %v4713, 65535
        %v4837 = vshra.s32 %v4713, 16
        %v4838 = vcvt.s32.f32 %v4836
        %v4839 = vcvt.s32.f32 %v4837
        %4840 = vmin.xlane.f32.xlu0 %v4839
        %v4841 = vpop.xlane.xlu0 %4840
        %vm4842 = vcmp.eq.f32.partialorder %v4839, %v4841
        %v4843 = vsel %vm4842, %v4838, inf
        %4844 = vmin.xlane.f32.xlu0 %v4843
        %v4845 = vpop.xlane.xlu0 %4844
        %v4846 = vcvt.f32.s32 %v4845
        %v4847 = vcvt.f32.s32 %v4841
        %v4848 = vshll.u32 %v4847, 16
        %v4849 = vadd.s32 %v4848, %v4846
        %v4850 = vand.u32 %v4714, 65535
        %v4851 = vshra.s32 %v4714, 16
        %v4852 = vcvt.s32.f32 %v4850
        %v4853 = vcvt.s32.f32 %v4851
        %4854 = vmin.xlane.f32.xlu0 %v4853
        %v4855 = vpop.xlane.xlu0 %4854
        %vm4856 = vcmp.eq.f32.partialorder %v4853, %v4855
        %v4857 = vsel %vm4856, %v4852, inf
        %4858 = vmin.xlane.f32.xlu0 %v4857
        %v4859 = vpop.xlane.xlu0 %4858
        %v4860 = vcvt.f32.s32 %v4859
        %v4861 = vcvt.f32.s32 %v4855
        %v4862 = vshll.u32 %v4861, 16
        %v4863 = vadd.s32 %v4862, %v4860
        %v4864 = vand.u32 %v4715, 65535
        %v4865 = vshra.s32 %v4715, 16
        %v4866 = vcvt.s32.f32 %v4864
        %v4867 = vcvt.s32.f32 %v4865
        %4868 = vmin.xlane.f32.xlu0 %v4867
        %v4869 = vpop.xlane.xlu0 %4868
        %vm4870 = vcmp.eq.f32.partialorder %v4867, %v4869
        %v4871 = vsel %vm4870, %v4866, inf
        %4872 = vmin.xlane.f32.xlu0 %v4871
        %v4873 = vpop.xlane.xlu0 %4872
        %v4874 = vcvt.f32.s32 %v4873
        %v4875 = vcvt.f32.s32 %v4869
        %v4876 = vshll.u32 %v4875, 16
        %v4877 = vadd.s32 %v4876, %v4874
        %v4878 = vand.u32 %v4716, 65535
        %v4879 = vshra.s32 %v4716, 16
        %v4880 = vcvt.s32.f32 %v4878
        %v4881 = vcvt.s32.f32 %v4879
        %4882 = vmin.xlane.f32.xlu0 %v4881
        %v4883 = vpop.xlane.xlu0 %4882
        %vm4884 = vcmp.eq.f32.partialorder %v4881, %v4883
        %v4885 = vsel %vm4884, %v4880, inf
        %4886 = vmin.xlane.f32.xlu0 %v4885
        %v4887 = vpop.xlane.xlu0 %4886
        %v4888 = vcvt.f32.s32 %v4887
        %v4889 = vcvt.f32.s32 %v4883
        %v4890 = vshll.u32 %v4889, 16
        %v4891 = vadd.s32 %v4890, %v4888
        %v4892 = vand.u32 %v4717, 65535
        %v4893 = vshra.s32 %v4717, 16
        %v4894 = vcvt.s32.f32 %v4892
        %v4895 = vcvt.s32.f32 %v4893
        %4896 = vmin.xlane.f32.xlu0 %v4895
        %v4897 = vpop.xlane.xlu0 %4896
        %vm4898 = vcmp.eq.f32.partialorder %v4895, %v4897
        %v4899 = vsel %vm4898, %v4894, inf
        %4900 = vmin.xlane.f32.xlu0 %v4899
        %v4901 = vpop.xlane.xlu0 %4900
        %v4902 = vcvt.f32.s32 %v4901
        %v4903 = vcvt.f32.s32 %v4897
        %v4904 = vshll.u32 %v4903, 16
        %v4905 = vadd.s32 %v4904, %v4902
        %v4906 = vand.u32 %v4718, 65535
        %v4907 = vshra.s32 %v4718, 16
        %v4908 = vcvt.s32.f32 %v4906
        %v4909 = vcvt.s32.f32 %v4907
        %4910 = vmin.xlane.f32.xlu0 %v4909
        %v4911 = vpop.xlane.xlu0 %4910
        %vm4912 = vcmp.eq.f32.partialorder %v4909, %v4911
        %v4913 = vsel %vm4912, %v4908, inf
        %4914 = vmin.xlane.f32.xlu0 %v4913
        %v4915 = vpop.xlane.xlu0 %4914
        %v4916 = vcvt.f32.s32 %v4915
        %v4917 = vcvt.f32.s32 %v4911
        %v4918 = vshll.u32 %v4917, 16
        %v4919 = vadd.s32 %v4918, %v4916
        %v4920 = vand.u32 %v4719, 65535
        %v4921 = vshra.s32 %v4719, 16
        %v4922 = vcvt.s32.f32 %v4920
        %v4923 = vcvt.s32.f32 %v4921
        %4924 = vmin.xlane.f32.xlu0 %v4923
        %v4925 = vpop.xlane.xlu0 %4924
        %vm4926 = vcmp.eq.f32.partialorder %v4923, %v4925
        %v4927 = vsel %vm4926, %v4922, inf
        %4928 = vmin.xlane.f32.xlu0 %v4927
        %v4929 = vpop.xlane.xlu0 %4928
        %v4930 = vcvt.f32.s32 %v4929
        %v4931 = vcvt.f32.s32 %v4925
        %v4932 = vshll.u32 %v4931, 16
        %v4933 = vadd.s32 %v4932, %v4930
        %v4934 = vand.u32 %v4720, 65535
        %v4935 = vshra.s32 %v4720, 16
        %v4936 = vcvt.s32.f32 %v4934
        %v4937 = vcvt.s32.f32 %v4935
        %4938 = vmin.xlane.f32.xlu0 %v4937
        %v4939 = vpop.xlane.xlu0 %4938
        %vm4940 = vcmp.eq.f32.partialorder %v4937, %v4939
        %v4941 = vsel %vm4940, %v4936, inf
        %4942 = vmin.xlane.f32.xlu0 %v4941
        %v4943 = vpop.xlane.xlu0 %4942
        %v4944 = vcvt.f32.s32 %v4943
        %v4945 = vcvt.f32.s32 %v4939
        %v4946 = vshll.u32 %v4945, 16
        %v4947 = vadd.s32 %v4946, %v4944
        %v4948 = vand.u32 %v4721, 65535
        %v4949 = vshra.s32 %v4721, 16
        %v4950 = vcvt.s32.f32 %v4948
        %v4951 = vcvt.s32.f32 %v4949
        %4952 = vmin.xlane.f32.xlu0 %v4951
        %v4953 = vpop.xlane.xlu0 %4952
        %vm4954 = vcmp.eq.f32.partialorder %v4951, %v4953
        %v4955 = vsel %vm4954, %v4950, inf
        %4956 = vmin.xlane.f32.xlu0 %v4955
        %v4957 = vpop.xlane.xlu0 %4956
        %v4958 = vcvt.f32.s32 %v4957
        %v4959 = vcvt.f32.s32 %v4953
        %v4960 = vshll.u32 %v4959, 16
        %v4961 = vadd.s32 %v4960, %v4958
        %v4962 = vand.u32 %v4722, 65535
        %v4963 = vshra.s32 %v4722, 16
        %v4964 = vcvt.s32.f32 %v4962
        %v4965 = vcvt.s32.f32 %v4963
        %4966 = vmin.xlane.f32.xlu0 %v4965
        %v4967 = vpop.xlane.xlu0 %4966
        %vm4968 = vcmp.eq.f32.partialorder %v4965, %v4967
        %v4969 = vsel %vm4968, %v4964, inf
        %4970 = vmin.xlane.f32.xlu0 %v4969
        %v4971 = vpop.xlane.xlu0 %4970
        %v4972 = vcvt.f32.s32 %v4971
        %v4973 = vcvt.f32.s32 %v4967
        %v4974 = vshll.u32 %v4973, 16
        %v4975 = vadd.s32 %v4974, %v4972
        %v4976 = vand.u32 %v4723, 65535
        %v4977 = vshra.s32 %v4723, 16
        %v4978 = vcvt.s32.f32 %v4976
        %v4979 = vcvt.s32.f32 %v4977
        %4980 = vmin.xlane.f32.xlu0 %v4979
        %v4981 = vpop.xlane.xlu0 %4980
        %vm4982 = vcmp.eq.f32.partialorder %v4979, %v4981
        %v4983 = vsel %vm4982, %v4978, inf
        %4984 = vmin.xlane.f32.xlu0 %v4983
        %v4985 = vpop.xlane.xlu0 %4984
        %v4986 = vcvt.f32.s32 %v4985
        %v4987 = vcvt.f32.s32 %v4981
        %v4988 = vshll.u32 %v4987, 16
        %v4989 = vadd.s32 %v4988, %v4986
        %v4990 = vand.u32 %v4724, 65535
        %v4991 = vshra.s32 %v4724, 16
        %v4992 = vcvt.s32.f32 %v4990
        %v4993 = vcvt.s32.f32 %v4991
        %4994 = vmin.xlane.f32.xlu0 %v4993
        %v4995 = vpop.xlane.xlu0 %4994
        %vm4996 = vcmp.eq.f32.partialorder %v4993, %v4995
        %v4997 = vsel %vm4996, %v4992, inf
        %4998 = vmin.xlane.f32.xlu0 %v4997
        %v4999 = vpop.xlane.xlu0 %4998
        %v5000 = vcvt.f32.s32 %v4999
        %v5001 = vcvt.f32.s32 %v4995
        %v5002 = vshll.u32 %v5001, 16
        %v5003 = vadd.s32 %v5002, %v5000
        %v5004 = vand.u32 %v4725, 65535
        %v5005 = vshra.s32 %v4725, 16
        %v5006 = vcvt.s32.f32 %v5004
        %v5007 = vcvt.s32.f32 %v5005
        %5008 = vmin.xlane.f32.xlu0 %v5007
        %v5009 = vpop.xlane.xlu0 %5008
        %vm5010 = vcmp.eq.f32.partialorder %v5007, %v5009
        %v5011 = vsel %vm5010, %v5006, inf
        %5012 = vmin.xlane.f32.xlu0 %v5011
        %v5013 = vpop.xlane.xlu0 %5012
        %v5014 = vcvt.f32.s32 %v5013
        %v5015 = vcvt.f32.s32 %v5009
        %v5016 = vshll.u32 %v5015, 16
        %v5017 = vadd.s32 %v5016, %v5014
        %v5018 = vand.u32 %v4726, 65535
        %v5019 = vshra.s32 %v4726, 16
        %v5020 = vcvt.s32.f32 %v5018
        %v5021 = vcvt.s32.f32 %v5019
        %5022 = vmin.xlane.f32.xlu0 %v5021
        %v5023 = vpop.xlane.xlu0 %5022
        %vm5024 = vcmp.eq.f32.partialorder %v5021, %v5023
        %v5025 = vsel %vm5024, %v5020, inf
        %5026 = vmin.xlane.f32.xlu0 %v5025
        %v5027 = vpop.xlane.xlu0 %5026
        %v5028 = vcvt.f32.s32 %v5027
        %v5029 = vcvt.f32.s32 %v5023
        %v5030 = vshll.u32 %v5029, 16
        %v5031 = vadd.s32 %v5030, %v5028
        %v5032 = vand.u32 %v4727, 65535
        %v5033 = vshra.s32 %v4727, 16
        %v5034 = vcvt.s32.f32 %v5032
        %v5035 = vcvt.s32.f32 %v5033
        %5036 = vmin.xlane.f32.xlu0 %v5035
        %v5037 = vpop.xlane.xlu0 %5036
        %vm5038 = vcmp.eq.f32.partialorder %v5035, %v5037
        %v5039 = vsel %vm5038, %v5034, inf
        %5040 = vmin.xlane.f32.xlu0 %v5039
        %v5041 = vpop.xlane.xlu0 %5040
        %v5042 = vcvt.f32.s32 %v5041
        %v5043 = vcvt.f32.s32 %v5037
        %v5044 = vshll.u32 %v5043, 16
        %v5045 = vadd.s32 %v5044, %v5042
        %v5046 = vand.u32 %v4728, 65535
        %v5047 = vshra.s32 %v4728, 16
        %v5048 = vcvt.s32.f32 %v5046
        %v5049 = vcvt.s32.f32 %v5047
        %5050 = vmin.xlane.f32.xlu0 %v5049
        %v5051 = vpop.xlane.xlu0 %5050
        %vm5052 = vcmp.eq.f32.partialorder %v5049, %v5051
        %v5053 = vsel %vm5052, %v5048, inf
        %5054 = vmin.xlane.f32.xlu0 %v5053
        %v5055 = vpop.xlane.xlu0 %5054
        %v5056 = vcvt.f32.s32 %v5055
        %v5057 = vcvt.f32.s32 %v5051
        %v5058 = vshll.u32 %v5057, 16
        %v5059 = vadd.s32 %v5058, %v5056
        %v5060 = vand.u32 %v4729, 65535
        %v5061 = vshra.s32 %v4729, 16
        %v5062 = vcvt.s32.f32 %v5060
        %v5063 = vcvt.s32.f32 %v5061
        %5064 = vmin.xlane.f32.xlu0 %v5063
        %v5065 = vpop.xlane.xlu0 %5064
        %vm5066 = vcmp.eq.f32.partialorder %v5063, %v5065
        %v5067 = vsel %vm5066, %v5062, inf
        %5068 = vmin.xlane.f32.xlu0 %v5067
        %v5069 = vpop.xlane.xlu0 %5068
        %v5070 = vcvt.f32.s32 %v5069
        %v5071 = vcvt.f32.s32 %v5065
        %v5072 = vshll.u32 %v5071, 16
        %v5073 = vadd.s32 %v5072, %v5070
        %v5074 = vand.u32 %v4730, 65535
        %v5075 = vshra.s32 %v4730, 16
        %v5076 = vcvt.s32.f32 %v5074
        %v5077 = vcvt.s32.f32 %v5075
        %5078 = vmin.xlane.f32.xlu0 %v5077
        %v5079 = vpop.xlane.xlu0 %5078
        %vm5080 = vcmp.eq.f32.partialorder %v5077, %v5079
        %v5081 = vsel %vm5080, %v5076, inf
        %5082 = vmin.xlane.f32.xlu0 %v5081
        %v5083 = vpop.xlane.xlu0 %5082
        %v5084 = vcvt.f32.s32 %v5083
        %v5085 = vcvt.f32.s32 %v5079
        %v5086 = vshll.u32 %v5085, 16
        %v5087 = vadd.s32 %v5086, %v5084
        %v5088 = vand.u32 %v4731, 65535
        %v5089 = vshra.s32 %v4731, 16
        %v5090 = vcvt.s32.f32 %v5088
        %v5091 = vcvt.s32.f32 %v5089
        %5092 = vmin.xlane.f32.xlu0 %v5091
        %v5093 = vpop.xlane.xlu0 %5092
        %vm5094 = vcmp.eq.f32.partialorder %v5091, %v5093
        %v5095 = vsel %vm5094, %v5090, inf
        %5096 = vmin.xlane.f32.xlu0 %v5095
        %v5097 = vpop.xlane.xlu0 %5096
        %v5098 = vcvt.f32.s32 %v5097
        %v5099 = vcvt.f32.s32 %v5093
        %v5100 = vshll.u32 %v5099, 16
        %v5101 = vadd.s32 %v5100, %v5098
        %v5102 = vand.u32 %v4732, 65535
        %v5103 = vshra.s32 %v4732, 16
        %v5104 = vcvt.s32.f32 %v5102
        %v5105 = vcvt.s32.f32 %v5103
        %5106 = vmin.xlane.f32.xlu0 %v5105
        %v5107 = vpop.xlane.xlu0 %5106
        %vm5108 = vcmp.eq.f32.partialorder %v5105, %v5107
        %v5109 = vsel %vm5108, %v5104, inf
        %5110 = vmin.xlane.f32.xlu0 %v5109
        %v5111 = vpop.xlane.xlu0 %5110
        %v5112 = vcvt.f32.s32 %v5111
        %v5113 = vcvt.f32.s32 %v5107
        %v5114 = vshll.u32 %v5113, 16
        %v5115 = vadd.s32 %v5114, %v5112
        %v5116 = vand.u32 %v4733, 65535
        %v5117 = vshra.s32 %v4733, 16
        %v5118 = vcvt.s32.f32 %v5116
        %v5119 = vcvt.s32.f32 %v5117
        %5120 = vmin.xlane.f32.xlu0 %v5119
        %v5121 = vpop.xlane.xlu0 %5120
        %vm5122 = vcmp.eq.f32.partialorder %v5119, %v5121
        %v5123 = vsel %vm5122, %v5118, inf
        %5124 = vmin.xlane.f32.xlu0 %v5123
        %v5125 = vpop.xlane.xlu0 %5124
        %v5126 = vcvt.f32.s32 %v5125
        %v5127 = vcvt.f32.s32 %v5121
        %v5128 = vshll.u32 %v5127, 16
        %v5129 = vadd.s32 %v5128, %v5126
        %v5130 = vand.u32 %v4734, 65535
        %v5131 = vshra.s32 %v4734, 16
        %v5132 = vcvt.s32.f32 %v5130
        %v5133 = vcvt.s32.f32 %v5131
        %5134 = vmin.xlane.f32.xlu0 %v5133
        %v5135 = vpop.xlane.xlu0 %5134
        %vm5136 = vcmp.eq.f32.partialorder %v5133, %v5135
        %v5137 = vsel %vm5136, %v5132, inf
        %5138 = vmin.xlane.f32.xlu0 %v5137
        %v5139 = vpop.xlane.xlu0 %5138
        %v5140 = vcvt.f32.s32 %v5139
        %v5141 = vcvt.f32.s32 %v5135
        %v5142 = vshll.u32 %v5141, 16
        %v5143 = vadd.s32 %v5142, %v5140
        %v5144 = vand.u32 %v4735, 65535
        %v5145 = vshra.s32 %v4735, 16
        %v5146 = vcvt.s32.f32 %v5144
        %v5147 = vcvt.s32.f32 %v5145
        %5148 = vmin.xlane.f32.xlu0 %v5147
        %v5149 = vpop.xlane.xlu0 %5148
        %vm5150 = vcmp.eq.f32.partialorder %v5147, %v5149
        %v5151 = vsel %vm5150, %v5146, inf
        %5152 = vmin.xlane.f32.xlu0 %v5151
        %v5153 = vpop.xlane.xlu0 %5152
        %v5154 = vcvt.f32.s32 %v5153
        %v5155 = vcvt.f32.s32 %v5149
        %v5156 = vshll.u32 %v5155, 16
        %v5157 = vadd.s32 %v5156, %v5154
        %v5158 = vand.u32 %v4736, 65535
        %v5159 = vshra.s32 %v4736, 16
        %v5160 = vcvt.s32.f32 %v5158
        %v5161 = vcvt.s32.f32 %v5159
        %5162 = vmin.xlane.f32.xlu0 %v5161
        %v5163 = vpop.xlane.xlu0 %5162
        %vm5164 = vcmp.eq.f32.partialorder %v5161, %v5163
        %v5165 = vsel %vm5164, %v5160, inf
        %5166 = vmin.xlane.f32.xlu0 %v5165
        %v5167 = vpop.xlane.xlu0 %5166
        %v5168 = vcvt.f32.s32 %v5167
        %v5169 = vcvt.f32.s32 %v5163
        %v5170 = vshll.u32 %v5169, 16
        %v5171 = vadd.s32 %v5170, %v5168
        %v5172 = vand.u32 %v4737, 65535
        %v5173 = vshra.s32 %v4737, 16
        %v5174 = vcvt.s32.f32 %v5172
        %v5175 = vcvt.s32.f32 %v5173
        %5176 = vmin.xlane.f32.xlu0 %v5175
        %v5177 = vpop.xlane.xlu0 %5176
        %vm5178 = vcmp.eq.f32.partialorder %v5175, %v5177
        %v5179 = vsel %vm5178, %v5174, inf
        %5180 = vmin.xlane.f32.xlu0 %v5179
        %v5181 = vpop.xlane.xlu0 %5180
        %v5182 = vcvt.f32.s32 %v5181
        %v5183 = vcvt.f32.s32 %v5177
        %v5184 = vshll.u32 %v5183, 16
        %v5185 = vadd.s32 %v5184, %v5182
        %v5186 = vsub.f32 %v4611, %v771
        %v5187 = vsub.f32 %v4613, %v773
        %v5188 = vsub.f32 %v4615, %v775
        %v5189 = vsub.f32 %v4617, %v777
        %v5190 = vsub.f32 %v4619, %v779
        %v5191 = vsub.f32 %v4621, %v781
        %v5192 = vsub.f32 %v4623, %v783
        %v5193 = vsub.f32 %v4625, %v785
        %v5194 = vsub.f32 %v4627, %v787
        %v5195 = vsub.f32 %v4629, %v789
        %v5196 = vsub.f32 %v4631, %v791
        %v5197 = vsub.f32 %v4633, %v793
        %v5198 = vsub.f32 %v4635, %v795
        %v5199 = vsub.f32 %v4637, %v797
        %v5200 = vsub.f32 %v4639, %v799
        %v5201 = vsub.f32 %v4641, %v801
        %v5202 = vsub.f32 %v4643, %v803
        %v5203 = vsub.f32 %v4645, %v805
        %v5204 = vsub.f32 %v4647, %v807
        %v5205 = vsub.f32 %v4649, %v809
        %v5206 = vsub.f32 %v4651, %v811
        %v5207 = vsub.f32 %v4653, %v813
        %v5208 = vsub.f32 %v4655, %v815
        %v5209 = vsub.f32 %v4657, %v817
        %v5210 = vsub.f32 %v4659, %v819
        %v5211 = vsub.f32 %v4661, %v821
        %v5212 = vsub.f32 %v4663, %v823
        %v5213 = vsub.f32 %v4665, %v825
        %v5214 = vsub.f32 %v4667, %v827
        %v5215 = vsub.f32 %v4669, %v829
        %v5216 = vsub.f32 %v4671, %v831
        %v5217 = vsub.f32 %v4673, %v833
        %v5218 = vmul.f32 %v5186, 1.442695
        %v5219 = vpow.pop %v5218
        %v5220 = vmul.f32 %v5187, 1.442695
        %v5221 = vpow.pop %v5220
        %v5222 = vmul.f32 %v5188, 1.442695
        %v5223 = vpow.pop %v5222
        %v5224 = vmul.f32 %v5189, 1.442695
        %v5225 = vpow.pop %v5224
        %v5226 = vmul.f32 %v5190, 1.442695
        %v5227 = vpow.pop %v5226
        %v5228 = vmul.f32 %v5191, 1.442695
        %v5229 = vpow.pop %v5228
        %v5230 = vmul.f32 %v5192, 1.442695
        %v5231 = vpow.pop %v5230
        %v5232 = vmul.f32 %v5193, 1.442695
        %v5233 = vpow.pop %v5232
        %v5234 = vmul.f32 %v5194, 1.442695
        %v5235 = vpow.pop %v5234
        %v5236 = vmul.f32 %v5195, 1.442695
        %v5237 = vpow.pop %v5236
        %v5238 = vmul.f32 %v5196, 1.442695
        %v5239 = vpow.pop %v5238
        %v5240 = vmul.f32 %v5197, 1.442695
        %v5241 = vpow.pop %v5240
        %v5242 = vmul.f32 %v5198, 1.442695
        %v5243 = vpow.pop %v5242
        %v5244 = vmul.f32 %v5199, 1.442695
        %v5245 = vpow.pop %v5244
        %v5246 = vmul.f32 %v5200, 1.442695
        %v5247 = vpow.pop %v5246
        %v5248 = vmul.f32 %v5201, 1.442695
        %v5249 = vpow.pop %v5248
        %v5250 = vmul.f32 %v5202, 1.442695
        %v5251 = vpow.pop %v5250
        %v5252 = vmul.f32 %v5203, 1.442695
        %v5253 = vpow.pop %v5252
        %v5254 = vmul.f32 %v5204, 1.442695
        %v5255 = vpow.pop %v5254
        %v5256 = vmul.f32 %v5205, 1.442695
        %v5257 = vpow.pop %v5256
        %v5258 = vmul.f32 %v5206, 1.442695
        %v5259 = vpow.pop %v5258
        %v5260 = vmul.f32 %v5207, 1.442695
        %v5261 = vpow.pop %v5260
        %v5262 = vmul.f32 %v5208, 1.442695
        %v5263 = vpow.pop %v5262
        %v5264 = vmul.f32 %v5209, 1.442695
        %v5265 = vpow.pop %v5264
        %v5266 = vmul.f32 %v5210, 1.442695
        %v5267 = vpow.pop %v5266
        %v5268 = vmul.f32 %v5211, 1.442695
        %v5269 = vpow.pop %v5268
        %v5270 = vmul.f32 %v5212, 1.442695
        %v5271 = vpow.pop %v5270
        %v5272 = vmul.f32 %v5213, 1.442695
        %v5273 = vpow.pop %v5272
        %v5274 = vmul.f32 %v5214, 1.442695
        %v5275 = vpow.pop %v5274
        %v5276 = vmul.f32 %v5215, 1.442695
        %v5277 = vpow.pop %v5276
        %v5278 = vmul.f32 %v5216, 1.442695
        %v5279 = vpow.pop %v5278
        %v5280 = vmul.f32 %v5217, 1.442695
        %v5281 = vpow.pop %v5280
        %vm5282 = vcmask 7168
        %v5283 = vsel %vm5282, %v1539, %v2275
        %v5284 = vsel %vm5282, %v1541, %v2277
        %v5285 = vsel %vm5282, %v1543, %v2279
        %v5286 = vsel %vm5282, %v1545, %v2281
        %v5287 = vsel %vm5282, %v1547, %v2283
        %v5288 = vsel %vm5282, %v1549, %v2285
        %v5289 = vsel %vm5282, %v1551, %v2287
        %v5290 = vsel %vm5282, %v1553, %v2289
        %v5291 = vsel %vm5282, %v1555, %v2291
        %v5292 = vsel %vm5282, %v1557, %v2293
        %v5293 = vsel %vm5282, %v1559, %v2295
        %v5294 = vsel %vm5282, %v1561, %v2297
        %v5295 = vsel %vm5282, %v1563, %v2299
        %v5296 = vsel %vm5282, %v1565, %v2301
        %v5297 = vsel %vm5282, %v1567, %v2303
        %v5298 = vsel %vm5282, %v1569, %v2305
        %v5299 = vsel %vm5282, %v1571, %v2307
        %v5300 = vsel %vm5282, %v1573, %v2309
        %v5301 = vsel %vm5282, %v1575, %v2311
        %v5302 = vsel %vm5282, %v1577, %v2313
        %v5303 = vsel %vm5282, %v1579, %v2315
        %v5304 = vsel %vm5282, %v1581, %v2317
        %v5305 = vsel %vm5282, %v1583, %v2319
        %v5306 = vsel %vm5282, %v1585, %v2321
        %v5307 = vsel %vm5282, %v1587, %v2323
        %v5308 = vsel %vm5282, %v1589, %v2325
        %v5309 = vsel %vm5282, %v1591, %v2327
        %v5310 = vsel %vm5282, %v1593, %v2329
        %v5311 = vsel %vm5282, %v1595, %v2331
        %v5312 = vsel %vm5282, %v1597, %v2333
        %v5313 = vsel %vm5282, %v1599, %v2335
        %v5314 = vsel %vm5282, %v1601, %v2337
        %vm5315 = vcmask 15360
        %v5316 = vsel %vm5315, %v5283, %v3011
        %v5317 = vsel %vm5315, %v5284, %v3013
        %v5318 = vsel %vm5315, %v5285, %v3015
        %v5319 = vsel %vm5315, %v5286, %v3017
        %v5320 = vsel %vm5315, %v5287, %v3019
        %v5321 = vsel %vm5315, %v5288, %v3021
        %v5322 = vsel %vm5315, %v5289, %v3023
        %v5323 = vsel %vm5315, %v5290, %v3025
        %v5324 = vsel %vm5315, %v5291, %v3027
        %v5325 = vsel %vm5315, %v5292, %v3029
        %v5326 = vsel %vm5315, %v5293, %v3031
        %v5327 = vsel %vm5315, %v5294, %v3033
        %v5328 = vsel %vm5315, %v5295, %v3035
        %v5329 = vsel %vm5315, %v5296, %v3037
        %v5330 = vsel %vm5315, %v5297, %v3039
        %v5331 = vsel %vm5315, %v5298, %v3041
        %v5332 = vsel %vm5315, %v5299, %v3043
        %v5333 = vsel %vm5315, %v5300, %v3045
        %v5334 = vsel %vm5315, %v5301, %v3047
        %v5335 = vsel %vm5315, %v5302, %v3049
        %v5336 = vsel %vm5315, %v5303, %v3051
        %v5337 = vsel %vm5315, %v5304, %v3053
        %v5338 = vsel %vm5315, %v5305, %v3055
        %v5339 = vsel %vm5315, %v5306, %v3057
        %v5340 = vsel %vm5315, %v5307, %v3059
        %v5341 = vsel %vm5315, %v5308, %v3061
        %v5342 = vsel %vm5315, %v5309, %v3063
        %v5343 = vsel %vm5315, %v5310, %v3065
        %v5344 = vsel %vm5315, %v5311, %v3067
        %v5345 = vsel %vm5315, %v5312, %v3069
        %v5346 = vsel %vm5315, %v5313, %v3071
        %v5347 = vsel %vm5315, %v5314, %v3073
        %vm5348 = vcmask 23552
        %v5349 = vsel %vm5348, %v5316, %v3747
        %v5350 = vsel %vm5348, %v5317, %v3749
        %v5351 = vsel %vm5348, %v5318, %v3751
        %v5352 = vsel %vm5348, %v5319, %v3753
        %v5353 = vsel %vm5348, %v5320, %v3755
        %v5354 = vsel %vm5348, %v5321, %v3757
        %v5355 = vsel %vm5348, %v5322, %v3759
        %v5356 = vsel %vm5348, %v5323, %v3761
        %v5357 = vsel %vm5348, %v5324, %v3763
        %v5358 = vsel %vm5348, %v5325, %v3765
        %v5359 = vsel %vm5348, %v5326, %v3767
        %v5360 = vsel %vm5348, %v5327, %v3769
        %v5361 = vsel %vm5348, %v5328, %v3771
        %v5362 = vsel %vm5348, %v5329, %v3773
        %v5363 = vsel %vm5348, %v5330, %v3775
        %v5364 = vsel %vm5348, %v5331, %v3777
        %v5365 = vsel %vm5348, %v5332, %v3779
        %v5366 = vsel %vm5348, %v5333, %v3781
        %v5367 = vsel %vm5348, %v5334, %v3783
        %v5368 = vsel %vm5348, %v5335, %v3785
        %v5369 = vsel %vm5348, %v5336, %v3787
        %v5370 = vsel %vm5348, %v5337, %v3789
        %v5371 = vsel %vm5348, %v5338, %v3791
        %v5372 = vsel %vm5348, %v5339, %v3793
        %v5373 = vsel %vm5348, %v5340, %v3795
        %v5374 = vsel %vm5348, %v5341, %v3797
        %v5375 = vsel %vm5348, %v5342, %v3799
        %v5376 = vsel %vm5348, %v5343, %v3801
        %v5377 = vsel %vm5348, %v5344, %v3803
        %v5378 = vsel %vm5348, %v5345, %v3805
        %v5379 = vsel %vm5348, %v5346, %v3807
        %v5380 = vsel %vm5348, %v5347, %v3809
        %vm5381 = vcmask 31744
        %v5382 = vsel %vm5381, %v5349, %v4483
        %v5383 = vsel %vm5381, %v5350, %v4485
        %v5384 = vsel %vm5381, %v5351, %v4487
        %v5385 = vsel %vm5381, %v5352, %v4489
        %v5386 = vsel %vm5381, %v5353, %v4491
        %v5387 = vsel %vm5381, %v5354, %v4493
        %v5388 = vsel %vm5381, %v5355, %v4495
        %v5389 = vsel %vm5381, %v5356, %v4497
        %v5390 = vsel %vm5381, %v5357, %v4499
        %v5391 = vsel %vm5381, %v5358, %v4501
        %v5392 = vsel %vm5381, %v5359, %v4503
        %v5393 = vsel %vm5381, %v5360, %v4505
        %v5394 = vsel %vm5381, %v5361, %v4507
        %v5395 = vsel %vm5381, %v5362, %v4509
        %v5396 = vsel %vm5381, %v5363, %v4511
        %v5397 = vsel %vm5381, %v5364, %v4513
        %v5398 = vsel %vm5381, %v5365, %v4515
        %v5399 = vsel %vm5381, %v5366, %v4517
        %v5400 = vsel %vm5381, %v5367, %v4519
        %v5401 = vsel %vm5381, %v5368, %v4521
        %v5402 = vsel %vm5381, %v5369, %v4523
        %v5403 = vsel %vm5381, %v5370, %v4525
        %v5404 = vsel %vm5381, %v5371, %v4527
        %v5405 = vsel %vm5381, %v5372, %v4529
        %v5406 = vsel %vm5381, %v5373, %v4531
        %v5407 = vsel %vm5381, %v5374, %v4533
        %v5408 = vsel %vm5381, %v5375, %v4535
        %v5409 = vsel %vm5381, %v5376, %v4537
        %v5410 = vsel %vm5381, %v5377, %v4539
        %v5411 = vsel %vm5381, %v5378, %v4541
        %v5412 = vsel %vm5381, %v5379, %v4543
        %v5413 = vsel %vm5381, %v5380, %v4545
        %vm5414 = vcmask 39936
        %v5415 = vsel %vm5414, %v5382, %v5219
        %v5416 = vsel %vm5414, %v5383, %v5221
        %v5417 = vsel %vm5414, %v5384, %v5223
        %v5418 = vsel %vm5414, %v5385, %v5225
        %v5419 = vsel %vm5414, %v5386, %v5227
        %v5420 = vsel %vm5414, %v5387, %v5229
        %v5421 = vsel %vm5414, %v5388, %v5231
        %v5422 = vsel %vm5414, %v5389, %v5233
        %v5423 = vsel %vm5414, %v5390, %v5235
        %v5424 = vsel %vm5414, %v5391, %v5237
        %v5425 = vsel %vm5414, %v5392, %v5239
        %v5426 = vsel %vm5414, %v5393, %v5241
        %v5427 = vsel %vm5414, %v5394, %v5243
        %v5428 = vsel %vm5414, %v5395, %v5245
        %v5429 = vsel %vm5414, %v5396, %v5247
        %v5430 = vsel %vm5414, %v5397, %v5249
        %v5431 = vsel %vm5414, %v5398, %v5251
        %v5432 = vsel %vm5414, %v5399, %v5253
        %v5433 = vsel %vm5414, %v5400, %v5255
        %v5434 = vsel %vm5414, %v5401, %v5257
        %v5435 = vsel %vm5414, %v5402, %v5259
        %v5436 = vsel %vm5414, %v5403, %v5261
        %v5437 = vsel %vm5414, %v5404, %v5263
        %v5438 = vsel %vm5414, %v5405, %v5265
        %v5439 = vsel %vm5414, %v5406, %v5267
        %v5440 = vsel %vm5414, %v5407, %v5269
        %v5441 = vsel %vm5414, %v5408, %v5271
        %v5442 = vsel %vm5414, %v5409, %v5273
        %v5443 = vsel %vm5414, %v5410, %v5275
        %v5444 = vsel %vm5414, %v5411, %v5277
        %v5445 = vsel %vm5414, %v5412, %v5279
        %v5446 = vsel %vm5414, %v5413, %v5281
        %v5447 = vrcp.pop %v931
        %v5448 = vrcp.pop %v933
        %v5449 = vrcp.pop %v935
        %v5450 = vrcp.pop %v937
        %v5451 = vrcp.pop %v939
        %v5452 = vrcp.pop %v941
        %v5453 = vrcp.pop %v943
        %v5454 = vrcp.pop %v945
        %v5455 = vrcp.pop %v947
        %v5456 = vrcp.pop %v949
        %v5457 = vrcp.pop %v951
        %v5458 = vrcp.pop %v953
        %v5459 = vrcp.pop %v955
        %v5460 = vrcp.pop %v957
        %v5461 = vrcp.pop %v959
        %v5462 = vrcp.pop %v961
        %v5463 = vrcp.pop %v963
        %v5464 = vrcp.pop %v965
        %v5465 = vrcp.pop %v967
        %v5466 = vrcp.pop %v969
        %v5467 = vrcp.pop %v971
        %v5468 = vrcp.pop %v973
        %v5469 = vrcp.pop %v975
        %v5470 = vrcp.pop %v977
        %v5471 = vrcp.pop %v979
        %v5472 = vrcp.pop %v981
        %v5473 = vrcp.pop %v983
        %v5474 = vrcp.pop %v985
        %v5475 = vrcp.pop %v987
        %v5476 = vrcp.pop %v989
        %v5477 = vrcp.pop %v991
        %v5478 = vrcp.pop %v993
        %v5479 = vmul.f32 %v5415, %v5447
        %v5480 = vmul.f32 %v5416, %v5448
        %v5481 = vmul.f32 %v5417, %v5449
        %v5482 = vmul.f32 %v5418, %v5450
        %v5483 = vmul.f32 %v5419, %v5451
        %v5484 = vmul.f32 %v5420, %v5452
        %v5485 = vmul.f32 %v5421, %v5453
        %v5486 = vmul.f32 %v5422, %v5454
        %v5487 = vmul.f32 %v5423, %v5455
        %v5488 = vmul.f32 %v5424, %v5456
        %v5489 = vmul.f32 %v5425, %v5457
        %v5490 = vmul.f32 %v5426, %v5458
        %v5491 = vmul.f32 %v5427, %v5459
        %v5492 = vmul.f32 %v5428, %v5460
        %v5493 = vmul.f32 %v5429, %v5461
        %v5494 = vmul.f32 %v5430, %v5462
        %v5495 = vmul.f32 %v5431, %v5463
        %v5496 = vmul.f32 %v5432, %v5464
        %v5497 = vmul.f32 %v5433, %v5465
        %v5498 = vmul.f32 %v5434, %v5466
        %v5499 = vmul.f32 %v5435, %v5467
        %v5500 = vmul.f32 %v5436, %v5468
        %v5501 = vmul.f32 %v5437, %v5469
        %v5502 = vmul.f32 %v5438, %v5470
        %v5503 = vmul.f32 %v5439, %v5471
        %v5504 = vmul.f32 %v5440, %v5472
        %v5505 = vmul.f32 %v5441, %v5473
        %v5506 = vmul.f32 %v5442, %v5474
        %v5507 = vmul.f32 %v5443, %v5475
        %v5508 = vmul.f32 %v5444, %v5476
        %v5509 = vmul.f32 %v5445, %v5477
        %v5510 = vmul.f32 %v5446, %v5478
        %v5511 = vsel %vm5282, %v1071, %v1807
        %v5512 = vsel %vm5282, %v1085, %v1821
        %v5513 = vsel %vm5282, %v1099, %v1835
        %v5514 = vsel %vm5282, %v1113, %v1849
        %v5515 = vsel %vm5282, %v1127, %v1863
        %v5516 = vsel %vm5282, %v1141, %v1877
        %v5517 = vsel %vm5282, %v1155, %v1891
        %v5518 = vsel %vm5282, %v1169, %v1905
        %v5519 = vsel %vm5282, %v1183, %v1919
        %v5520 = vsel %vm5282, %v1197, %v1933
        %v5521 = vsel %vm5282, %v1211, %v1947
        %v5522 = vsel %vm5282, %v1225, %v1961
        %v5523 = vsel %vm5282, %v1239, %v1975
        %v5524 = vsel %vm5282, %v1253, %v1989
        %v5525 = vsel %vm5282, %v1267, %v2003
        %v5526 = vsel %vm5282, %v1281, %v2017
        %v5527 = vsel %vm5282, %v1295, %v2031
        %v5528 = vsel %vm5282, %v1309, %v2045
        %v5529 = vsel %vm5282, %v1323, %v2059
        %v5530 = vsel %vm5282, %v1337, %v2073
        %v5531 = vsel %vm5282, %v1351, %v2087
        %v5532 = vsel %vm5282, %v1365, %v2101
        %v5533 = vsel %vm5282, %v1379, %v2115
        %v5534 = vsel %vm5282, %v1393, %v2129
        %v5535 = vsel %vm5282, %v1407, %v2143
        %v5536 = vsel %vm5282, %v1421, %v2157
        %v5537 = vsel %vm5282, %v1435, %v2171
        %v5538 = vsel %vm5282, %v1449, %v2185
        %v5539 = vsel %vm5282, %v1463, %v2199
        %v5540 = vsel %vm5282, %v1477, %v2213
        %v5541 = vsel %vm5282, %v1491, %v2227
        %v5542 = vsel %vm5282, %v1505, %v2241
        %v5543 = vsel %vm5315, %v5511, %v2543
        %v5544 = vsel %vm5315, %v5512, %v2557
        %v5545 = vsel %vm5315, %v5513, %v2571
        %v5546 = vsel %vm5315, %v5514, %v2585
        %v5547 = vsel %vm5315, %v5515, %v2599
        %v5548 = vsel %vm5315, %v5516, %v2613
        %v5549 = vsel %vm5315, %v5517, %v2627
        %v5550 = vsel %vm5315, %v5518, %v2641
        %v5551 = vsel %vm5315, %v5519, %v2655
        %v5552 = vsel %vm5315, %v5520, %v2669
        %v5553 = vsel %vm5315, %v5521, %v2683
        %v5554 = vsel %vm5315, %v5522, %v2697
        %v5555 = vsel %vm5315, %v5523, %v2711
        %v5556 = vsel %vm5315, %v5524, %v2725
        %v5557 = vsel %vm5315, %v5525, %v2739
        %v5558 = vsel %vm5315, %v5526, %v2753
        %v5559 = vsel %vm5315, %v5527, %v2767
        %v5560 = vsel %vm5315, %v5528, %v2781
        %v5561 = vsel %vm5315, %v5529, %v2795
        %v5562 = vsel %vm5315, %v5530, %v2809
        %v5563 = vsel %vm5315, %v5531, %v2823
        %v5564 = vsel %vm5315, %v5532, %v2837
        %v5565 = vsel %vm5315, %v5533, %v2851
        %v5566 = vsel %vm5315, %v5534, %v2865
        %v5567 = vsel %vm5315, %v5535, %v2879
        %v5568 = vsel %vm5315, %v5536, %v2893
        %v5569 = vsel %vm5315, %v5537, %v2907
        %v5570 = vsel %vm5315, %v5538, %v2921
        %v5571 = vsel %vm5315, %v5539, %v2935
        %v5572 = vsel %vm5315, %v5540, %v2949
        %v5573 = vsel %vm5315, %v5541, %v2963
        %v5574 = vsel %vm5315, %v5542, %v2977
        %v5575 = vsel %vm5348, %v5543, %v3279
        %v5576 = vsel %vm5348, %v5544, %v3293
        %v5577 = vsel %vm5348, %v5545, %v3307
        %v5578 = vsel %vm5348, %v5546, %v3321
        %v5579 = vsel %vm5348, %v5547, %v3335
        %v5580 = vsel %vm5348, %v5548, %v3349
        %v5581 = vsel %vm5348, %v5549, %v3363
        %v5582 = vsel %vm5348, %v5550, %v3377
        %v5583 = vsel %vm5348, %v5551, %v3391
        %v5584 = vsel %vm5348, %v5552, %v3405
        %v5585 = vsel %vm5348, %v5553, %v3419
        %v5586 = vsel %vm5348, %v5554, %v3433
        %v5587 = vsel %vm5348, %v5555, %v3447
        %v5588 = vsel %vm5348, %v5556, %v3461
        %v5589 = vsel %vm5348, %v5557, %v3475
        %v5590 = vsel %vm5348, %v5558, %v3489
        %v5591 = vsel %vm5348, %v5559, %v3503
        %v5592 = vsel %vm5348, %v5560, %v3517
        %v5593 = vsel %vm5348, %v5561, %v3531
        %v5594 = vsel %vm5348, %v5562, %v3545
        %v5595 = vsel %vm5348, %v5563, %v3559
        %v5596 = vsel %vm5348, %v5564, %v3573
        %v5597 = vsel %vm5348, %v5565, %v3587
        %v5598 = vsel %vm5348, %v5566, %v3601
        %v5599 = vsel %vm5348, %v5567, %v3615
        %v5600 = vsel %vm5348, %v5568, %v3629
        %v5601 = vsel %vm5348, %v5569, %v3643
        %v5602 = vsel %vm5348, %v5570, %v3657
        %v5603 = vsel %vm5348, %v5571, %v3671
        %v5604 = vsel %vm5348, %v5572, %v3685
        %v5605 = vsel %vm5348, %v5573, %v3699
        %v5606 = vsel %vm5348, %v5574, %v3713
        %v5607 = vsel %vm5381, %v5575, %v4015
        %v5608 = vsel %vm5381, %v5576, %v4029
        %v5609 = vsel %vm5381, %v5577, %v4043
        %v5610 = vsel %vm5381, %v5578, %v4057
        %v5611 = vsel %vm5381, %v5579, %v4071
        %v5612 = vsel %vm5381, %v5580, %v4085
        %v5613 = vsel %vm5381, %v5581, %v4099
        %v5614 = vsel %vm5381, %v5582, %v4113
        %v5615 = vsel %vm5381, %v5583, %v4127
        %v5616 = vsel %vm5381, %v5584, %v4141
        %v5617 = vsel %vm5381, %v5585, %v4155
        %v5618 = vsel %vm5381, %v5586, %v4169
        %v5619 = vsel %vm5381, %v5587, %v4183
        %v5620 = vsel %vm5381, %v5588, %v4197
        %v5621 = vsel %vm5381, %v5589, %v4211
        %v5622 = vsel %vm5381, %v5590, %v4225
        %v5623 = vsel %vm5381, %v5591, %v4239
        %v5624 = vsel %vm5381, %v5592, %v4253
        %v5625 = vsel %vm5381, %v5593, %v4267
        %v5626 = vsel %vm5381, %v5594, %v4281
        %v5627 = vsel %vm5381, %v5595, %v4295
        %v5628 = vsel %vm5381, %v5596, %v4309
        %v5629 = vsel %vm5381, %v5597, %v4323
        %v5630 = vsel %vm5381, %v5598, %v4337
        %v5631 = vsel %vm5381, %v5599, %v4351
        %v5632 = vsel %vm5381, %v5600, %v4365
        %v5633 = vsel %vm5381, %v5601, %v4379
        %v5634 = vsel %vm5381, %v5602, %v4393
        %v5635 = vsel %vm5381, %v5603, %v4407
        %v5636 = vsel %vm5381, %v5604, %v4421
        %v5637 = vsel %vm5381, %v5605, %v4435
        %v5638 = vsel %vm5381, %v5606, %v4449
        %v5639 = vsel %vm5414, %v5607, %v4751
        %v5640 = vsel %vm5414, %v5608, %v4765
        %v5641 = vsel %vm5414, %v5609, %v4779
        %v5642 = vsel %vm5414, %v5610, %v4793
        %v5643 = vsel %vm5414, %v5611, %v4807
        %v5644 = vsel %vm5414, %v5612, %v4821
        %v5645 = vsel %vm5414, %v5613, %v4835
        %v5646 = vsel %vm5414, %v5614, %v4849
        %v5647 = vsel %vm5414, %v5615, %v4863
        %v5648 = vsel %vm5414, %v5616, %v4877
        %v5649 = vsel %vm5414, %v5617, %v4891
        %v5650 = vsel %vm5414, %v5618, %v4905
        %v5651 = vsel %vm5414, %v5619, %v4919
        %v5652 = vsel %vm5414, %v5620, %v4933
        %v5653 = vsel %vm5414, %v5621, %v4947
        %v5654 = vsel %vm5414, %v5622, %v4961
        %v5655 = vsel %vm5414, %v5623, %v4975
        %v5656 = vsel %vm5414, %v5624, %v4989
        %v5657 = vsel %vm5414, %v5625, %v5003
        %v5658 = vsel %vm5414, %v5626, %v5017
        %v5659 = vsel %vm5414, %v5627, %v5031
        %v5660 = vsel %vm5414, %v5628, %v5045
        %v5661 = vsel %vm5414, %v5629, %v5059
        %v5662 = vsel %vm5414, %v5630, %v5073
        %v5663 = vsel %vm5414, %v5631, %v5087
        %v5664 = vsel %vm5414, %v5632, %v5101
        %v5665 = vsel %vm5414, %v5633, %v5115
        %v5666 = vsel %vm5414, %v5634, %v5129
        %v5667 = vsel %vm5414, %v5635, %v5143
        %v5668 = vsel %vm5414, %v5636, %v5157
        %v5669 = vsel %vm5414, %v5637, %v5171
        %v5670 = vsel %vm5414, %v5638, %v5185
        %5671 = vst [vmem:[%s213] sm:$0xf] 0
        %5672 = vst [vmem:[%s213 + $0x4] sm:$0xf] 0
        %5673 = vst [vmem:[%s213 + $0x8] sm:$0xf] 0
        %5674 = vst [vmem:[%s213 + $0xc] sm:$0xf] 0
        %5675 = vst [vmem:[%s213 + $0x10] sm:$0xf] 0
        %5676 = vst [vmem:[%s213 + $0x14] sm:$0xf] 0
        %5677 = vst [vmem:[%s213 + $0x18] sm:$0xf] 0
        %5678 = vst [vmem:[%s213 + $0x1c] sm:$0xf] 0
        %5679 = vst [vmem:[%s213 + $0x20] sm:$0xf] 0
        %5680 = vst [vmem:[%s213 + $0x24] sm:$0xf] 0
        %5681 = vst [vmem:[%s213 + $0x28] sm:$0xf] 0
        %5682 = vst [vmem:[%s213 + $0x2c] sm:$0xf] 0
        %5683 = vst [vmem:[%s213 + $0x30] sm:$0xf] 0
        %5684 = vst [vmem:[%s213 + $0x34] sm:$0xf] 0
        %5685 = vst [vmem:[%s213 + $0x38] sm:$0xf] 0
        %5686 = vst [vmem:[%s213 + $0x3c] sm:$0xf] 0
        %5687 = vst [vmem:[%s213 + $0x40] sm:$0xf] 0
        %5688 = vst [vmem:[%s213 + $0x44] sm:$0xf] 0
        %5689 = vst [vmem:[%s213 + $0x48] sm:$0xf] 0
        %5690 = vst [vmem:[%s213 + $0x4c] sm:$0xf] 0
        %5691 = vst [vmem:[%s213 + $0x50] sm:$0xf] 0
        %5692 = vst [vmem:[%s213 + $0x54] sm:$0xf] 0
        %5693 = vst [vmem:[%s213 + $0x58] sm:$0xf] 0
        %5694 = vst [vmem:[%s213 + $0x5c] sm:$0xf] 0
        %5695 = vst [vmem:[%s213 + $0x60] sm:$0xf] 0
        %5696 = vst [vmem:[%s213 + $0x64] sm:$0xf] 0
        %5697 = vst [vmem:[%s213 + $0x68] sm:$0xf] 0
        %5698 = vst [vmem:[%s213 + $0x6c] sm:$0xf] 0
        %5699 = vst [vmem:[%s213 + $0x70] sm:$0xf] 0
        %5700 = vst [vmem:[%s213 + $0x74] sm:$0xf] 0
        %5701 = vst [vmem:[%s213 + $0x78] sm:$0xf] 0
        %5702 = vst [vmem:[%s213 + $0x7c] sm:$0xf] 0
        %5703 = vst [vmem:[%s219] sm:$0xff] 0
        %5704 = vst [vmem:[%s219 + $0x8] sm:$0xff] 0
        %5705 = vst [vmem:[%s219 + $0x10] sm:$0xff] 0
        %5706 = vst [vmem:[%s219 + $0x18] sm:$0xff] 0
        %5707 = vst [vmem:[%s219 + $0x20] sm:$0xff] 0
        %5708 = vst [vmem:[%s219 + $0x28] sm:$0xff] 0
        %5709 = vst [vmem:[%s219 + $0x30] sm:$0xff] 0
        %5710 = vst [vmem:[%s219 + $0x38] sm:$0xff] 0
        %5711 = vst [vmem:[%s219 + $0x40] sm:$0xff] 0
        %5712 = vst [vmem:[%s219 + $0x48] sm:$0xff] 0
        %5713 = vst [vmem:[%s219 + $0x50] sm:$0xff] 0
        %5714 = vst [vmem:[%s219 + $0x58] sm:$0xff] 0
        %5715 = vst [vmem:[%s219 + $0x60] sm:$0xff] 0
        %5716 = vst [vmem:[%s219 + $0x68] sm:$0xff] 0
        %5717 = vst [vmem:[%s219 + $0x70] sm:$0xff] 0
        %5718 = vst [vmem:[%s219 + $0x78] sm:$0xff] 0
        %5719 = vst [vmem:[%s219 + $0x80] sm:$0xff] 0
        %5720 = vst [vmem:[%s219 + $0x88] sm:$0xff] 0
        %5721 = vst [vmem:[%s219 + $0x90] sm:$0xff] 0
        %5722 = vst [vmem:[%s219 + $0x98] sm:$0xff] 0
        %5723 = vst [vmem:[%s219 + $0xa0] sm:$0xff] 0
        %5724 = vst [vmem:[%s219 + $0xa8] sm:$0xff] 0
        %5725 = vst [vmem:[%s219 + $0xb0] sm:$0xff] 0
        %5726 = vst [vmem:[%s219 + $0xb8] sm:$0xff] 0
        %5727 = vst [vmem:[%s219 + $0xc0] sm:$0xff] 0
        %5728 = vst [vmem:[%s219 + $0xc8] sm:$0xff] 0
        %5729 = vst [vmem:[%s219 + $0xd0] sm:$0xff] 0
        %5730 = vst [vmem:[%s219 + $0xd8] sm:$0xff] 0
        %5731 = vst [vmem:[%s219 + $0xe0] sm:$0xff] 0
        %5732 = vst [vmem:[%s219 + $0xe8] sm:$0xff] 0
        %5733 = vst [vmem:[%s219 + $0xf0] sm:$0xff] 0
        %5734 = vst [vmem:[%s219 + $0xf8] sm:$0xff] 0
        %v5735 = vpack.c.bf16 %v5479, %v5479
        %v5736 = vpack.c.bf16 %v5480, %v5480
        %v5737 = vpack.c.bf16 %v5481, %v5481
        %v5738 = vpack.c.bf16 %v5482, %v5482
        %v5739 = vpack.c.bf16 %v5483, %v5483
        %v5740 = vpack.c.bf16 %v5484, %v5484
        %v5741 = vpack.c.bf16 %v5485, %v5485
        %v5742 = vpack.c.bf16 %v5486, %v5486
        %v5743 = vpack.c.bf16 %v5487, %v5487
        %v5744 = vpack.c.bf16 %v5488, %v5488
        %v5745 = vpack.c.bf16 %v5489, %v5489
        %v5746 = vpack.c.bf16 %v5490, %v5490
        %v5747 = vpack.c.bf16 %v5491, %v5491
        %v5748 = vpack.c.bf16 %v5492, %v5492
        %v5749 = vpack.c.bf16 %v5493, %v5493
        %v5750 = vpack.c.bf16 %v5494, %v5494
        %v5751 = vpack.c.bf16 %v5495, %v5495
        %v5752 = vpack.c.bf16 %v5496, %v5496
        %v5753 = vpack.c.bf16 %v5497, %v5497
        %v5754 = vpack.c.bf16 %v5498, %v5498
        %v5755 = vpack.c.bf16 %v5499, %v5499
        %v5756 = vpack.c.bf16 %v5500, %v5500
        %v5757 = vpack.c.bf16 %v5501, %v5501
        %v5758 = vpack.c.bf16 %v5502, %v5502
        %v5759 = vpack.c.bf16 %v5503, %v5503
        %v5760 = vpack.c.bf16 %v5504, %v5504
        %v5761 = vpack.c.bf16 %v5505, %v5505
        %v5762 = vpack.c.bf16 %v5506, %v5506
        %v5763 = vpack.c.bf16 %v5507, %v5507
        %v5764 = vpack.c.bf16 %v5508, %v5508
        %v5765 = vpack.c.bf16 %v5509, %v5509
        %v5766 = vpack.c.bf16 %v5510, %v5510
        %vm5767 = vcmask 44032
        %5768 = vst.msk [vmem:[%s213] sm:$0xf] %vm5767, %v5735
        %5769 = vst.msk [vmem:[%s213 + $0x4] sm:$0xf] %vm5767, %v5736
        %5770 = vst.msk [vmem:[%s213 + $0x8] sm:$0xf] %vm5767, %v5737
        %5771 = vst.msk [vmem:[%s213 + $0xc] sm:$0xf] %vm5767, %v5738
        %5772 = vst.msk [vmem:[%s213 + $0x10] sm:$0xf] %vm5767, %v5739
        %5773 = vst.msk [vmem:[%s213 + $0x14] sm:$0xf] %vm5767, %v5740
        %5774 = vst.msk [vmem:[%s213 + $0x18] sm:$0xf] %vm5767, %v5741
        %5775 = vst.msk [vmem:[%s213 + $0x1c] sm:$0xf] %vm5767, %v5742
        %5776 = vst.msk [vmem:[%s213 + $0x20] sm:$0xf] %vm5767, %v5743
        %5777 = vst.msk [vmem:[%s213 + $0x24] sm:$0xf] %vm5767, %v5744
        %5778 = vst.msk [vmem:[%s213 + $0x28] sm:$0xf] %vm5767, %v5745
        %5779 = vst.msk [vmem:[%s213 + $0x2c] sm:$0xf] %vm5767, %v5746
        %5780 = vst.msk [vmem:[%s213 + $0x30] sm:$0xf] %vm5767, %v5747
        %5781 = vst.msk [vmem:[%s213 + $0x34] sm:$0xf] %vm5767, %v5748
        %5782 = vst.msk [vmem:[%s213 + $0x38] sm:$0xf] %vm5767, %v5749
        %5783 = vst.msk [vmem:[%s213 + $0x3c] sm:$0xf] %vm5767, %v5750
        %5784 = vst.msk [vmem:[%s213 + $0x40] sm:$0xf] %vm5767, %v5751
        %5785 = vst.msk [vmem:[%s213 + $0x44] sm:$0xf] %vm5767, %v5752
        %5786 = vst.msk [vmem:[%s213 + $0x48] sm:$0xf] %vm5767, %v5753
        %5787 = vst.msk [vmem:[%s213 + $0x4c] sm:$0xf] %vm5767, %v5754
        %5788 = vst.msk [vmem:[%s213 + $0x50] sm:$0xf] %vm5767, %v5755
        %5789 = vst.msk [vmem:[%s213 + $0x54] sm:$0xf] %vm5767, %v5756
        %5790 = vst.msk [vmem:[%s213 + $0x58] sm:$0xf] %vm5767, %v5757
        %5791 = vst.msk [vmem:[%s213 + $0x5c] sm:$0xf] %vm5767, %v5758
        %5792 = vst.msk [vmem:[%s213 + $0x60] sm:$0xf] %vm5767, %v5759
        %5793 = vst.msk [vmem:[%s213 + $0x64] sm:$0xf] %vm5767, %v5760
        %5794 = vst.msk [vmem:[%s213 + $0x68] sm:$0xf] %vm5767, %v5761
        %5795 = vst.msk [vmem:[%s213 + $0x6c] sm:$0xf] %vm5767, %v5762
        %5796 = vst.msk [vmem:[%s213 + $0x70] sm:$0xf] %vm5767, %v5763
        %5797 = vst.msk [vmem:[%s213 + $0x74] sm:$0xf] %vm5767, %v5764
        %5798 = vst.msk [vmem:[%s213 + $0x78] sm:$0xf] %vm5767, %v5765
        %5799 = vst.msk [vmem:[%s213 + $0x7c] sm:$0xf] %vm5767, %v5766
        %vm5800 = vcmask 48128
        %5801 = vst.msk [vmem:[%s219] sm:$0xff] %vm5800, %v5639
        %5802 = vst.msk [vmem:[%s219 + $0x8] sm:$0xff] %vm5800, %v5640
        %5803 = vst.msk [vmem:[%s219 + $0x10] sm:$0xff] %vm5800, %v5641
        %5804 = vst.msk [vmem:[%s219 + $0x18] sm:$0xff] %vm5800, %v5642
        %5805 = vst.msk [vmem:[%s219 + $0x20] sm:$0xff] %vm5800, %v5643
        %5806 = vst.msk [vmem:[%s219 + $0x28] sm:$0xff] %vm5800, %v5644
        %5807 = vst.msk [vmem:[%s219 + $0x30] sm:$0xff] %vm5800, %v5645
        %5808 = vst.msk [vmem:[%s219 + $0x38] sm:$0xff] %vm5800, %v5646
        %5809 = vst.msk [vmem:[%s219 + $0x40] sm:$0xff] %vm5800, %v5647
        %5810 = vst.msk [vmem:[%s219 + $0x48] sm:$0xff] %vm5800, %v5648
        %5811 = vst.msk [vmem:[%s219 + $0x50] sm:$0xff] %vm5800, %v5649
        %5812 = vst.msk [vmem:[%s219 + $0x58] sm:$0xff] %vm5800, %v5650
        %5813 = vst.msk [vmem:[%s219 + $0x60] sm:$0xff] %vm5800, %v5651
        %5814 = vst.msk [vmem:[%s219 + $0x68] sm:$0xff] %vm5800, %v5652
        %5815 = vst.msk [vmem:[%s219 + $0x70] sm:$0xff] %vm5800, %v5653
        %5816 = vst.msk [vmem:[%s219 + $0x78] sm:$0xff] %vm5800, %v5654
        %5817 = vst.msk [vmem:[%s219 + $0x80] sm:$0xff] %vm5800, %v5655
        %5818 = vst.msk [vmem:[%s219 + $0x88] sm:$0xff] %vm5800, %v5656
        %5819 = vst.msk [vmem:[%s219 + $0x90] sm:$0xff] %vm5800, %v5657
        %5820 = vst.msk [vmem:[%s219 + $0x98] sm:$0xff] %vm5800, %v5658
        %5821 = vst.msk [vmem:[%s219 + $0xa0] sm:$0xff] %vm5800, %v5659
        %5822 = vst.msk [vmem:[%s219 + $0xa8] sm:$0xff] %vm5800, %v5660
        %5823 = vst.msk [vmem:[%s219 + $0xb0] sm:$0xff] %vm5800, %v5661
        %5824 = vst.msk [vmem:[%s219 + $0xb8] sm:$0xff] %vm5800, %v5662
        %5825 = vst.msk [vmem:[%s219 + $0xc0] sm:$0xff] %vm5800, %v5663
        %5826 = vst.msk [vmem:[%s219 + $0xc8] sm:$0xff] %vm5800, %v5664
        %5827 = vst.msk [vmem:[%s219 + $0xd0] sm:$0xff] %vm5800, %v5665
        %5828 = vst.msk [vmem:[%s219 + $0xd8] sm:$0xff] %vm5800, %v5666
        %5829 = vst.msk [vmem:[%s219 + $0xe0] sm:$0xff] %vm5800, %v5667
        %5830 = vst.msk [vmem:[%s219 + $0xe8] sm:$0xff] %vm5800, %v5668
        %5831 = vst.msk [vmem:[%s219 + $0xf0] sm:$0xff] %vm5800, %v5669
        %5832 = vst.msk [vmem:[%s219 + $0xf8] sm:$0xff] %vm5800, %v5670
        %s5833 = sand.u32 %s74, 1
        %s5834 = sand.u32 %s74, 1
        %s5835 = smul.addr %s5834, 128
        %s5836 = scalar_lea.vmem [#allocation6], %s5835
        %s5837 = sand.u32 %s100, 1
        %s5838 = sand.u32 %s100, 1
        %s5839 = smul.addr %s5838, 256
        %s5840 = scalar_lea.vmem [#allocation7], %s5839
        // Predicated region
        $region37: #{gate_forward.1} parent=27 // pred_check
          %p5841 = pneg %p84
        $region38: #{gate_forward.1} parent=27 // pred_check_branch
          %5843 = sbr.rel (%p5841) target = $region40
        $region39: #{gate_forward.1} parent=27 // pred_region
          %s5844 = smul.u32 32, %s19
          %s5845 = ssub.s32 48, %s5844
          %p5846 = scmp.lt.s32.totalorder %s5845, 32
          %s5847 = scalar_select %p5846, %s5845, 32
          %s5848 = smul.u32 4, %s5847
          %p5849 = scmp.ne.s32.totalorder 0, %s5848
          %s5850 = smul.addr %s5844, 4
          %s5851 = scalar_lea.vmem %s2, %s5850
          // Predicated region
          $region41: #{gate_forward.1} parent=39 // pred_check
            %p5852 = pneg %p5849
          $region42: #{gate_forward.1} parent=39 // pred_check_branch
            %5854 = sbr.rel (%p5852) target = $region44
          $region43: #{gate_forward.1} parent=39 // pred_region
            // Predicated region
            $region45: #{gate_forward.1} parent=43 // pred_check
              _
            $region46: #{gate_forward.1} parent=43 // pred_check_branch
              %5856 = sbr.rel target = $region48
            $region47: #{gate_forward.1} parent=43 // pred_region
              // Predicated region
              $region67: #{gate_forward.1} parent=47 // pred_check
                _
              $region68: #{gate_forward.1} parent=47 // pred_check_branch
                %5968 = sbr.rel (0) target = $region70
              $region69: #{gate_forward.1} parent=47 // pred_region
                %s5970 = ssub.s32 16, 1
                %s5971 = sshrl.u32 %s5847, 5
                // While loop
                $region71: #{gate_forward.1} parent=69 // loop_pre_header
                  _
                $region72: #{gate_forward.1} parent=69 // loop_header
                  %s5973 = sphi 0, %s5975
                  %p5974 = scmp.ge.s32.totalorder %s5973, %s5971
                  %s5978 = sphi 0, %s6047
                  %s5979 = sphi %s5836, %s6050
                  %s5980 = sphi %s5851, %s6051
                $region73: #{gate_forward.1} parent=69 // loop_header_branch
                  %5977 = sbr.rel (%p5974) target = $region77
                $region74: #{gate_forward.1} parent=69 // loop_body
                  %v5981 = vld [vmem:[%s5979] sm:%s5970]
                  %5982 = vst [vmem:[%s5980] sm:%s5970] %v5981
                  %v5983 = vld [vmem:[%s5979 + $0x4] sm:%s5970]
                  %5984 = vst [vmem:[%s5980 + $0x4] sm:%s5970] %v5983
                  %v5985 = vld [vmem:[%s5979 + $0x8] sm:%s5970]
                  %5986 = vst [vmem:[%s5980 + $0x8] sm:%s5970] %v5985
                  %v5987 = vld [vmem:[%s5979 + $0xc] sm:%s5970]
                  %5988 = vst [vmem:[%s5980 + $0xc] sm:%s5970] %v5987
                  %v5989 = vld [vmem:[%s5979 + $0x10] sm:%s5970]
                  %5990 = vst [vmem:[%s5980 + $0x10] sm:%s5970] %v5989
                  %v5991 = vld [vmem:[%s5979 + $0x14] sm:%s5970]
                  %5992 = vst [vmem:[%s5980 + $0x14] sm:%s5970] %v5991
                  %v5993 = vld [vmem:[%s5979 + $0x18] sm:%s5970]
                  %5994 = vst [vmem:[%s5980 + $0x18] sm:%s5970] %v5993
                  %v5995 = vld [vmem:[%s5979 + $0x1c] sm:%s5970]
                  %5996 = vst [vmem:[%s5980 + $0x1c] sm:%s5970] %v5995
                  %v5997 = vld [vmem:[%s5979 + $0x20] sm:%s5970]
                  %5998 = vst [vmem:[%s5980 + $0x20] sm:%s5970] %v5997
                  %v5999 = vld [vmem:[%s5979 + $0x24] sm:%s5970]
                  %6000 = vst [vmem:[%s5980 + $0x24] sm:%s5970] %v5999
                  %v6001 = vld [vmem:[%s5979 + $0x28] sm:%s5970]
                  %6002 = vst [vmem:[%s5980 + $0x28] sm:%s5970] %v6001
                  %v6003 = vld [vmem:[%s5979 + $0x2c] sm:%s5970]
                  %6004 = vst [vmem:[%s5980 + $0x2c] sm:%s5970] %v6003
                  %v6005 = vld [vmem:[%s5979 + $0x30] sm:%s5970]
                  %6006 = vst [vmem:[%s5980 + $0x30] sm:%s5970] %v6005
                  %v6007 = vld [vmem:[%s5979 + $0x34] sm:%s5970]
                  %6008 = vst [vmem:[%s5980 + $0x34] sm:%s5970] %v6007
                  %v6009 = vld [vmem:[%s5979 + $0x38] sm:%s5970]
                  %6010 = vst [vmem:[%s5980 + $0x38] sm:%s5970] %v6009
                  %v6011 = vld [vmem:[%s5979 + $0x3c] sm:%s5970]
                  %6012 = vst [vmem:[%s5980 + $0x3c] sm:%s5970] %v6011
                  %v6013 = vld [vmem:[%s5979 + $0x40] sm:%s5970]
                  %6014 = vst [vmem:[%s5980 + $0x40] sm:%s5970] %v6013
                  %v6015 = vld [vmem:[%s5979 + $0x44] sm:%s5970]
                  %6016 = vst [vmem:[%s5980 + $0x44] sm:%s5970] %v6015
                  %v6017 = vld [vmem:[%s5979 + $0x48] sm:%s5970]
                  %6018 = vst [vmem:[%s5980 + $0x48] sm:%s5970] %v6017
                  %v6019 = vld [vmem:[%s5979 + $0x4c] sm:%s5970]
                  %6020 = vst [vmem:[%s5980 + $0x4c] sm:%s5970] %v6019
                  %v6021 = vld [vmem:[%s5979 + $0x50] sm:%s5970]
                  %6022 = vst [vmem:[%s5980 + $0x50] sm:%s5970] %v6021
                  %v6023 = vld [vmem:[%s5979 + $0x54] sm:%s5970]
                  %6024 = vst [vmem:[%s5980 + $0x54] sm:%s5970] %v6023
                  %v6025 = vld [vmem:[%s5979 + $0x58] sm:%s5970]
                  %6026 = vst [vmem:[%s5980 + $0x58] sm:%s5970] %v6025
                  %v6027 = vld [vmem:[%s5979 + $0x5c] sm:%s5970]
                  %6028 = vst [vmem:[%s5980 + $0x5c] sm:%s5970] %v6027
                  %v6029 = vld [vmem:[%s5979 + $0x60] sm:%s5970]
                  %6030 = vst [vmem:[%s5980 + $0x60] sm:%s5970] %v6029
                  %v6031 = vld [vmem:[%s5979 + $0x64] sm:%s5970]
                  %6032 = vst [vmem:[%s5980 + $0x64] sm:%s5970] %v6031
                  %v6033 = vld [vmem:[%s5979 + $0x68] sm:%s5970]
                  %6034 = vst [vmem:[%s5980 + $0x68] sm:%s5970] %v6033
                  %v6035 = vld [vmem:[%s5979 + $0x6c] sm:%s5970]
                  %6036 = vst [vmem:[%s5980 + $0x6c] sm:%s5970] %v6035
                  %v6037 = vld [vmem:[%s5979 + $0x70] sm:%s5970]
                  %6038 = vst [vmem:[%s5980 + $0x70] sm:%s5970] %v6037
                  %v6039 = vld [vmem:[%s5979 + $0x74] sm:%s5970]
                  %6040 = vst [vmem:[%s5980 + $0x74] sm:%s5970] %v6039
                  %v6041 = vld [vmem:[%s5979 + $0x78] sm:%s5970]
                  %6042 = vst [vmem:[%s5980 + $0x78] sm:%s5970] %v6041
                  %v6043 = vld [vmem:[%s5979 + $0x7c] sm:%s5970]
                  %6044 = vst [vmem:[%s5980 + $0x7c] sm:%s5970] %v6043
                  %s6045 = sadd.s32 1, %s5978
                  %p6046 = scmp.ge.s32.totalorder %s6045, %s5971
                  %s6047 = scalar_select %p6046, 0, %s6045
                  %s6048 = smul.u32 %s6047, 128
                  %s6049 = smul.u32 %s6047, 128
                  %s6050 = scalar_lea.vmem %s5836, %s6048 [#allocation6]
                  %s6051 = scalar_lea.vmem %s5851, %s6049
                $region75: #{gate_forward.1} parent=69 // loop_footer
                  %s5975 = sadd.s32 %s5973, 1
                $region76: #{gate_forward.1} parent=69 // loop_footer_branch
                  %5972 = sbr.rel target = $region72
                $region77: #{gate_forward.1} parent=69 // loop_exit
                  _
                %s6052 = sshrl.u32 %s5847, 5
                %s6053 = sand.u32 %s5847, 31
                %s6054 = smul.u32 %s6052, 32
                %s6055 = smul.u32 4, %s6054
                %s6056 = scalar_lea.vmem %s5836, %s6055 [#allocation6]
                %s6057 = smul.u32 4, %s6054
                %s6058 = scalar_lea.vmem %s5851, %s6057
                // While loop
                $region78: #{gate_forward.1} parent=69 // loop_pre_header
                  _
                $region79: #{gate_forward.1} parent=69 // loop_header
                  %s6060 = sphi 0, %s6062
                  %p6061 = scmp.ge.s32.totalorder %s6060, %s6053
                  %s6065 = sphi 0, %s6072
                  %s6066 = sphi %s6056, %s6075
                  %s6067 = sphi %s6058, %s6076
                $region80: #{gate_forward.1} parent=69 // loop_header_branch
                  %6064 = sbr.rel (%p6061) target = $region84
                $region81: #{gate_forward.1} parent=69 // loop_body
                  %v6068 = vld [vmem:[%s6066] sm:%s5970]
                  %6069 = vst [vmem:[%s6067] sm:%s5970] %v6068
                  %s6070 = sadd.s32 1, %s6065
                  %p6071 = scmp.ge.s32.totalorder %s6070, %s6053
                  %s6072 = scalar_select %p6071, 0, %s6070
                  %s6073 = smul.u32 %s6072, 4
                  %s6074 = smul.u32 %s6072, 4
                  %s6075 = scalar_lea.vmem %s6056, %s6073 [#allocation6]
                  %s6076 = scalar_lea.vmem %s6058, %s6074
                $region82: #{gate_forward.1} parent=69 // loop_footer
                  %s6062 = sadd.s32 %s6060, 1
                $region83: #{gate_forward.1} parent=69 // loop_footer_branch
                  %6059 = sbr.rel target = $region79
                $region84: #{gate_forward.1} parent=69 // loop_exit
                  _
              $region70: #{gate_forward.1} parent=47 // pred_fallthru
                _
            $region48: #{gate_forward.1} parent=43 // pred_fallthru
              _
            // Predicated region
            $region49: #{gate_forward.1} parent=43 // pred_check
              _
            $region50: #{gate_forward.1} parent=43 // pred_check_branch
              %5858 = sbr.rel (0) target = $region52
            $region51: #{gate_forward.1} parent=43 // pred_region
              %s5860 = ssub.s32 16, 1
              %s5861 = sshrl.u32 %s5847, 5
              // While loop
              $region53: #{gate_forward.1} parent=51 // loop_pre_header
                _
              $region54: #{gate_forward.1} parent=51 // loop_header
                %s5863 = sphi 0, %s5865
                %p5864 = scmp.ge.s32.totalorder %s5863, %s5861
                %s5868 = sphi 0, %s5937
                %s5869 = sphi %s5836, %s5940
                %s5870 = sphi %s5851, %s5941
              $region55: #{gate_forward.1} parent=51 // loop_header_branch
                %5867 = sbr.rel (%p5864) target = $region59
              $region56: #{gate_forward.1} parent=51 // loop_body
                %v5871 = vld [vmem:[%s5869] sm:%s5860]
                %5872 = vst [vmem:[%s5870] sm:%s5860] %v5871
                %v5873 = vld [vmem:[%s5869 + $0x4] sm:%s5860]
                %5874 = vst [vmem:[%s5870 + $0x4] sm:%s5860] %v5873
                %v5875 = vld [vmem:[%s5869 + $0x8] sm:%s5860]
                %5876 = vst [vmem:[%s5870 + $0x8] sm:%s5860] %v5875
                %v5877 = vld [vmem:[%s5869 + $0xc] sm:%s5860]
                %5878 = vst [vmem:[%s5870 + $0xc] sm:%s5860] %v5877
                %v5879 = vld [vmem:[%s5869 + $0x10] sm:%s5860]
                %5880 = vst [vmem:[%s5870 + $0x10] sm:%s5860] %v5879
                %v5881 = vld [vmem:[%s5869 + $0x14] sm:%s5860]
                %5882 = vst [vmem:[%s5870 + $0x14] sm:%s5860] %v5881
                %v5883 = vld [vmem:[%s5869 + $0x18] sm:%s5860]
                %5884 = vst [vmem:[%s5870 + $0x18] sm:%s5860] %v5883
                %v5885 = vld [vmem:[%s5869 + $0x1c] sm:%s5860]
                %5886 = vst [vmem:[%s5870 + $0x1c] sm:%s5860] %v5885
                %v5887 = vld [vmem:[%s5869 + $0x20] sm:%s5860]
                %5888 = vst [vmem:[%s5870 + $0x20] sm:%s5860] %v5887
                %v5889 = vld [vmem:[%s5869 + $0x24] sm:%s5860]
                %5890 = vst [vmem:[%s5870 + $0x24] sm:%s5860] %v5889
                %v5891 = vld [vmem:[%s5869 + $0x28] sm:%s5860]
                %5892 = vst [vmem:[%s5870 + $0x28] sm:%s5860] %v5891
                %v5893 = vld [vmem:[%s5869 + $0x2c] sm:%s5860]
                %5894 = vst [vmem:[%s5870 + $0x2c] sm:%s5860] %v5893
                %v5895 = vld [vmem:[%s5869 + $0x30] sm:%s5860]
                %5896 = vst [vmem:[%s5870 + $0x30] sm:%s5860] %v5895
                %v5897 = vld [vmem:[%s5869 + $0x34] sm:%s5860]
                %5898 = vst [vmem:[%s5870 + $0x34] sm:%s5860] %v5897
                %v5899 = vld [vmem:[%s5869 + $0x38] sm:%s5860]
                %5900 = vst [vmem:[%s5870 + $0x38] sm:%s5860] %v5899
                %v5901 = vld [vmem:[%s5869 + $0x3c] sm:%s5860]
                %5902 = vst [vmem:[%s5870 + $0x3c] sm:%s5860] %v5901
                %v5903 = vld [vmem:[%s5869 + $0x40] sm:%s5860]
                %5904 = vst [vmem:[%s5870 + $0x40] sm:%s5860] %v5903
                %v5905 = vld [vmem:[%s5869 + $0x44] sm:%s5860]
                %5906 = vst [vmem:[%s5870 + $0x44] sm:%s5860] %v5905
                %v5907 = vld [vmem:[%s5869 + $0x48] sm:%s5860]
                %5908 = vst [vmem:[%s5870 + $0x48] sm:%s5860] %v5907
                %v5909 = vld [vmem:[%s5869 + $0x4c] sm:%s5860]
                %5910 = vst [vmem:[%s5870 + $0x4c] sm:%s5860] %v5909
                %v5911 = vld [vmem:[%s5869 + $0x50] sm:%s5860]
                %5912 = vst [vmem:[%s5870 + $0x50] sm:%s5860] %v5911
                %v5913 = vld [vmem:[%s5869 + $0x54] sm:%s5860]
                %5914 = vst [vmem:[%s5870 + $0x54] sm:%s5860] %v5913
                %v5915 = vld [vmem:[%s5869 + $0x58] sm:%s5860]
                %5916 = vst [vmem:[%s5870 + $0x58] sm:%s5860] %v5915
                %v5917 = vld [vmem:[%s5869 + $0x5c] sm:%s5860]
                %5918 = vst [vmem:[%s5870 + $0x5c] sm:%s5860] %v5917
                %v5919 = vld [vmem:[%s5869 + $0x60] sm:%s5860]
                %5920 = vst [vmem:[%s5870 + $0x60] sm:%s5860] %v5919
                %v5921 = vld [vmem:[%s5869 + $0x64] sm:%s5860]
                %5922 = vst [vmem:[%s5870 + $0x64] sm:%s5860] %v5921
                %v5923 = vld [vmem:[%s5869 + $0x68] sm:%s5860]
                %5924 = vst [vmem:[%s5870 + $0x68] sm:%s5860] %v5923
                %v5925 = vld [vmem:[%s5869 + $0x6c] sm:%s5860]
                %5926 = vst [vmem:[%s5870 + $0x6c] sm:%s5860] %v5925
                %v5927 = vld [vmem:[%s5869 + $0x70] sm:%s5860]
                %5928 = vst [vmem:[%s5870 + $0x70] sm:%s5860] %v5927
                %v5929 = vld [vmem:[%s5869 + $0x74] sm:%s5860]
                %5930 = vst [vmem:[%s5870 + $0x74] sm:%s5860] %v5929
                %v5931 = vld [vmem:[%s5869 + $0x78] sm:%s5860]
                %5932 = vst [vmem:[%s5870 + $0x78] sm:%s5860] %v5931
                %v5933 = vld [vmem:[%s5869 + $0x7c] sm:%s5860]
                %5934 = vst [vmem:[%s5870 + $0x7c] sm:%s5860] %v5933
                %s5935 = sadd.s32 1, %s5868
                %p5936 = scmp.ge.s32.totalorder %s5935, %s5861
                %s5937 = scalar_select %p5936, 0, %s5935
                %s5938 = smul.u32 %s5937, 128
                %s5939 = smul.u32 %s5937, 128
                %s5940 = scalar_lea.vmem %s5836, %s5938 [#allocation6]
                %s5941 = scalar_lea.vmem %s5851, %s5939
              $region57: #{gate_forward.1} parent=51 // loop_footer
                %s5865 = sadd.s32 %s5863, 1
              $region58: #{gate_forward.1} parent=51 // loop_footer_branch
                %5862 = sbr.rel target = $region54
              $region59: #{gate_forward.1} parent=51 // loop_exit
                _
              %s5942 = sshrl.u32 %s5847, 5
              %s5943 = sand.u32 %s5847, 31
              %s5944 = smul.u32 %s5942, 32
              %s5945 = smul.u32 4, %s5944
              %s5946 = scalar_lea.vmem %s5836, %s5945 [#allocation6]
              %s5947 = smul.u32 4, %s5944
              %s5948 = scalar_lea.vmem %s5851, %s5947
              // While loop
              $region60: #{gate_forward.1} parent=51 // loop_pre_header
                _
              $region61: #{gate_forward.1} parent=51 // loop_header
                %s5950 = sphi 0, %s5952
                %p5951 = scmp.ge.s32.totalorder %s5950, %s5943
                %s5955 = sphi 0, %s5962
                %s5956 = sphi %s5946, %s5965
                %s5957 = sphi %s5948, %s5966
              $region62: #{gate_forward.1} parent=51 // loop_header_branch
                %5954 = sbr.rel (%p5951) target = $region66
              $region63: #{gate_forward.1} parent=51 // loop_body
                %v5958 = vld [vmem:[%s5956] sm:%s5860]
                %5959 = vst [vmem:[%s5957] sm:%s5860] %v5958
                %s5960 = sadd.s32 1, %s5955
                %p5961 = scmp.ge.s32.totalorder %s5960, %s5943
                %s5962 = scalar_select %p5961, 0, %s5960
                %s5963 = smul.u32 %s5962, 4
                %s5964 = smul.u32 %s5962, 4
                %s5965 = scalar_lea.vmem %s5946, %s5963 [#allocation6]
                %s5966 = scalar_lea.vmem %s5948, %s5964
              $region64: #{gate_forward.1} parent=51 // loop_footer
                %s5952 = sadd.s32 %s5950, 1
              $region65: #{gate_forward.1} parent=51 // loop_footer_branch
                %5949 = sbr.rel target = $region61
              $region66: #{gate_forward.1} parent=51 // loop_exit
                _
            $region52: #{gate_forward.1} parent=43 // pred_fallthru
              _
          $region44: #{gate_forward.1} parent=39 // pred_fallthru
            _
          %6077 = vnop
        $region40: #{gate_forward.1} parent=27 // pred_fallthru
          _
        // Predicated region
        $region85: #{gate_forward.1} parent=27 // pred_check
          %p6078 = pneg %p110
        $region86: #{gate_forward.1} parent=27 // pred_check_branch
          %6080 = sbr.rel (%p6078) target = $region88
        $region87: #{gate_forward.1} parent=27 // pred_region
          %s6081 = smul.u32 32, %s19
          %s6082 = ssub.s32 48, %s6081
          %p6083 = scmp.lt.s32.totalorder %s6082, 32
          %s6084 = scalar_select %p6083, %s6082, 32
          %s6085 = smul.u32 8, %s6084
          %p6086 = scmp.ne.s32.totalorder 0, %s6085
          %s6087 = smul.addr %s6081, 8
          %s6088 = scalar_lea.vmem %s3, %s6087
          // Predicated region
          $region89: #{gate_forward.1} parent=87 // pred_check
            %p6089 = pneg %p6086
          $region90: #{gate_forward.1} parent=87 // pred_check_branch
            %6091 = sbr.rel (%p6089) target = $region92
          $region91: #{gate_forward.1} parent=87 // pred_region
            // Predicated region
            $region93: #{gate_forward.1} parent=91 // pred_check
              _
            $region94: #{gate_forward.1} parent=91 // pred_check_branch
              %6093 = sbr.rel (0) target = $region96
            $region95: #{gate_forward.1} parent=91 // pred_region
              // Predicated region
              $region115: #{gate_forward.1} parent=95 // pred_check
                _
              $region116: #{gate_forward.1} parent=95 // pred_check_branch
                %6205 = sbr.rel (0) target = $region118
              $region117: #{gate_forward.1} parent=95 // pred_region
                %s6206 = sshrl.u32 %s6084, 5
                // While loop
                $region119: #{gate_forward.1} parent=117 // loop_pre_header
                  _
                $region120: #{gate_forward.1} parent=117 // loop_header
                  %s6208 = sphi 0, %s6210
                  %p6209 = scmp.ge.s32.totalorder %s6208, %s6206
                  %s6213 = sphi 0, %s6282
                  %s6214 = sphi %s5840, %s6285
                  %s6215 = sphi %s6088, %s6286
                $region121: #{gate_forward.1} parent=117 // loop_header_branch
                  %6212 = sbr.rel (%p6209) target = $region125
                $region122: #{gate_forward.1} parent=117 // loop_body
                  %v6216 = vld [vmem:[%s6214] sm:$0xff]
                  %6217 = vst [vmem:[%s6215] sm:$0xff] %v6216
                  %v6218 = vld [vmem:[%s6214 + $0x8] sm:$0xff]
                  %6219 = vst [vmem:[%s6215 + $0x8] sm:$0xff] %v6218
                  %v6220 = vld [vmem:[%s6214 + $0x10] sm:$0xff]
                  %6221 = vst [vmem:[%s6215 + $0x10] sm:$0xff] %v6220
                  %v6222 = vld [vmem:[%s6214 + $0x18] sm:$0xff]
                  %6223 = vst [vmem:[%s6215 + $0x18] sm:$0xff] %v6222
                  %v6224 = vld [vmem:[%s6214 + $0x20] sm:$0xff]
                  %6225 = vst [vmem:[%s6215 + $0x20] sm:$0xff] %v6224
                  %v6226 = vld [vmem:[%s6214 + $0x28] sm:$0xff]
                  %6227 = vst [vmem:[%s6215 + $0x28] sm:$0xff] %v6226
                  %v6228 = vld [vmem:[%s6214 + $0x30] sm:$0xff]
                  %6229 = vst [vmem:[%s6215 + $0x30] sm:$0xff] %v6228
                  %v6230 = vld [vmem:[%s6214 + $0x38] sm:$0xff]
                  %6231 = vst [vmem:[%s6215 + $0x38] sm:$0xff] %v6230
                  %v6232 = vld [vmem:[%s6214 + $0x40] sm:$0xff]
                  %6233 = vst [vmem:[%s6215 + $0x40] sm:$0xff] %v6232
                  %v6234 = vld [vmem:[%s6214 + $0x48] sm:$0xff]
                  %6235 = vst [vmem:[%s6215 + $0x48] sm:$0xff] %v6234
                  %v6236 = vld [vmem:[%s6214 + $0x50] sm:$0xff]
                  %6237 = vst [vmem:[%s6215 + $0x50] sm:$0xff] %v6236
                  %v6238 = vld [vmem:[%s6214 + $0x58] sm:$0xff]
                  %6239 = vst [vmem:[%s6215 + $0x58] sm:$0xff] %v6238
                  %v6240 = vld [vmem:[%s6214 + $0x60] sm:$0xff]
                  %6241 = vst [vmem:[%s6215 + $0x60] sm:$0xff] %v6240
                  %v6242 = vld [vmem:[%s6214 + $0x68] sm:$0xff]
                  %6243 = vst [vmem:[%s6215 + $0x68] sm:$0xff] %v6242
                  %v6244 = vld [vmem:[%s6214 + $0x70] sm:$0xff]
                  %6245 = vst [vmem:[%s6215 + $0x70] sm:$0xff] %v6244
                  %v6246 = vld [vmem:[%s6214 + $0x78] sm:$0xff]
                  %6247 = vst [vmem:[%s6215 + $0x78] sm:$0xff] %v6246
                  %v6248 = vld [vmem:[%s6214 + $0x80] sm:$0xff]
                  %6249 = vst [vmem:[%s6215 + $0x80] sm:$0xff] %v6248
                  %v6250 = vld [vmem:[%s6214 + $0x88] sm:$0xff]
                  %6251 = vst [vmem:[%s6215 + $0x88] sm:$0xff] %v6250
                  %v6252 = vld [vmem:[%s6214 + $0x90] sm:$0xff]
                  %6253 = vst [vmem:[%s6215 + $0x90] sm:$0xff] %v6252
                  %v6254 = vld [vmem:[%s6214 + $0x98] sm:$0xff]
                  %6255 = vst [vmem:[%s6215 + $0x98] sm:$0xff] %v6254
                  %v6256 = vld [vmem:[%s6214 + $0xa0] sm:$0xff]
                  %6257 = vst [vmem:[%s6215 + $0xa0] sm:$0xff] %v6256
                  %v6258 = vld [vmem:[%s6214 + $0xa8] sm:$0xff]
                  %6259 = vst [vmem:[%s6215 + $0xa8] sm:$0xff] %v6258
                  %v6260 = vld [vmem:[%s6214 + $0xb0] sm:$0xff]
                  %6261 = vst [vmem:[%s6215 + $0xb0] sm:$0xff] %v6260
                  %v6262 = vld [vmem:[%s6214 + $0xb8] sm:$0xff]
                  %6263 = vst [vmem:[%s6215 + $0xb8] sm:$0xff] %v6262
                  %v6264 = vld [vmem:[%s6214 + $0xc0] sm:$0xff]
                  %6265 = vst [vmem:[%s6215 + $0xc0] sm:$0xff] %v6264
                  %v6266 = vld [vmem:[%s6214 + $0xc8] sm:$0xff]
                  %6267 = vst [vmem:[%s6215 + $0xc8] sm:$0xff] %v6266
                  %v6268 = vld [vmem:[%s6214 + $0xd0] sm:$0xff]
                  %6269 = vst [vmem:[%s6215 + $0xd0] sm:$0xff] %v6268
                  %v6270 = vld [vmem:[%s6214 + $0xd8] sm:$0xff]
                  %6271 = vst [vmem:[%s6215 + $0xd8] sm:$0xff] %v6270
                  %v6272 = vld [vmem:[%s6214 + $0xe0] sm:$0xff]
                  %6273 = vst [vmem:[%s6215 + $0xe0] sm:$0xff] %v6272
                  %v6274 = vld [vmem:[%s6214 + $0xe8] sm:$0xff]
                  %6275 = vst [vmem:[%s6215 + $0xe8] sm:$0xff] %v6274
                  %v6276 = vld [vmem:[%s6214 + $0xf0] sm:$0xff]
                  %6277 = vst [vmem:[%s6215 + $0xf0] sm:$0xff] %v6276
                  %v6278 = vld [vmem:[%s6214 + $0xf8] sm:$0xff]
                  %6279 = vst [vmem:[%s6215 + $0xf8] sm:$0xff] %v6278
                  %s6280 = sadd.s32 1, %s6213
                  %p6281 = scmp.ge.s32.totalorder %s6280, %s6206
                  %s6282 = scalar_select %p6281, 0, %s6280
                  %s6283 = smul.u32 %s6282, 256
                  %s6284 = smul.u32 %s6282, 256
                  %s6285 = scalar_lea.vmem %s5840, %s6283 [#allocation7]
                  %s6286 = scalar_lea.vmem %s6088, %s6284
                $region123: #{gate_forward.1} parent=117 // loop_footer
                  %s6210 = sadd.s32 %s6208, 1
                $region124: #{gate_forward.1} parent=117 // loop_footer_branch
                  %6207 = sbr.rel target = $region120
                $region125: #{gate_forward.1} parent=117 // loop_exit
                  _
                %s6287 = sshrl.u32 %s6084, 5
                %s6288 = sand.u32 %s6084, 31
                %s6289 = smul.u32 %s6287, 32
                %s6290 = smul.u32 8, %s6289
                %s6291 = scalar_lea.vmem %s5840, %s6290 [#allocation7]
                %s6292 = smul.u32 8, %s6289
                %s6293 = scalar_lea.vmem %s6088, %s6292
                // While loop
                $region126: #{gate_forward.1} parent=117 // loop_pre_header
                  _
                $region127: #{gate_forward.1} parent=117 // loop_header
                  %s6295 = sphi 0, %s6297
                  %p6296 = scmp.ge.s32.totalorder %s6295, %s6288
                  %s6300 = sphi 0, %s6307
                  %s6301 = sphi %s6291, %s6310
                  %s6302 = sphi %s6293, %s6311
                $region128: #{gate_forward.1} parent=117 // loop_header_branch
                  %6299 = sbr.rel (%p6296) target = $region132
                $region129: #{gate_forward.1} parent=117 // loop_body
                  %v6303 = vld [vmem:[%s6301] sm:$0xff]
                  %6304 = vst [vmem:[%s6302] sm:$0xff] %v6303
                  %s6305 = sadd.s32 1, %s6300
                  %p6306 = scmp.ge.s32.totalorder %s6305, %s6288
                  %s6307 = scalar_select %p6306, 0, %s6305
                  %s6308 = smul.u32 %s6307, 8
                  %s6309 = smul.u32 %s6307, 8
                  %s6310 = scalar_lea.vmem %s6291, %s6308 [#allocation7]
                  %s6311 = scalar_lea.vmem %s6293, %s6309
                $region130: #{gate_forward.1} parent=117 // loop_footer
                  %s6297 = sadd.s32 %s6295, 1
                $region131: #{gate_forward.1} parent=117 // loop_footer_branch
                  %6294 = sbr.rel target = $region127
                $region132: #{gate_forward.1} parent=117 // loop_exit
                  _
              $region118: #{gate_forward.1} parent=95 // pred_fallthru
                _
              // Predicated region
              $region133: #{gate_forward.1} parent=95 // pred_check
                _
              $region134: #{gate_forward.1} parent=95 // pred_check_branch
                %6313 = sbr.rel target = $region136
              $region135: #{gate_forward.1} parent=95 // pred_region
                _
              $region136: #{gate_forward.1} parent=95 // pred_fallthru
                _
            $region96: #{gate_forward.1} parent=91 // pred_fallthru
              _
            // Predicated region
            $region97: #{gate_forward.1} parent=91 // pred_check
              _
            $region98: #{gate_forward.1} parent=91 // pred_check_branch
              %6095 = sbr.rel target = $region100
            $region99: #{gate_forward.1} parent=91 // pred_region
              %s6097 = ssub.s32 256, 1
              %s6098 = sshrl.u32 %s6084, 5
              // While loop
              $region101: #{gate_forward.1} parent=99 // loop_pre_header
                _
              $region102: #{gate_forward.1} parent=99 // loop_header
                %s6100 = sphi 0, %s6102
                %p6101 = scmp.ge.s32.totalorder %s6100, %s6098
                %s6105 = sphi 0, %s6174
                %s6106 = sphi %s5840, %s6177
                %s6107 = sphi %s6088, %s6178
              $region103: #{gate_forward.1} parent=99 // loop_header_branch
                %6104 = sbr.rel (%p6101) target = $region107
              $region104: #{gate_forward.1} parent=99 // loop_body
                %v6108 = vld [vmem:[%s6106] sm:%s6097]
                %6109 = vst [vmem:[%s6107] sm:%s6097] %v6108
                %v6110 = vld [vmem:[%s6106 + $0x8] sm:%s6097]
                %6111 = vst [vmem:[%s6107 + $0x8] sm:%s6097] %v6110
                %v6112 = vld [vmem:[%s6106 + $0x10] sm:%s6097]
                %6113 = vst [vmem:[%s6107 + $0x10] sm:%s6097] %v6112
                %v6114 = vld [vmem:[%s6106 + $0x18] sm:%s6097]
                %6115 = vst [vmem:[%s6107 + $0x18] sm:%s6097] %v6114
                %v6116 = vld [vmem:[%s6106 + $0x20] sm:%s6097]
                %6117 = vst [vmem:[%s6107 + $0x20] sm:%s6097] %v6116
                %v6118 = vld [vmem:[%s6106 + $0x28] sm:%s6097]
                %6119 = vst [vmem:[%s6107 + $0x28] sm:%s6097] %v6118
                %v6120 = vld [vmem:[%s6106 + $0x30] sm:%s6097]
                %6121 = vst [vmem:[%s6107 + $0x30] sm:%s6097] %v6120
                %v6122 = vld [vmem:[%s6106 + $0x38] sm:%s6097]
                %6123 = vst [vmem:[%s6107 + $0x38] sm:%s6097] %v6122
                %v6124 = vld [vmem:[%s6106 + $0x40] sm:%s6097]
                %6125 = vst [vmem:[%s6107 + $0x40] sm:%s6097] %v6124
                %v6126 = vld [vmem:[%s6106 + $0x48] sm:%s6097]
                %6127 = vst [vmem:[%s6107 + $0x48] sm:%s6097] %v6126
                %v6128 = vld [vmem:[%s6106 + $0x50] sm:%s6097]
                %6129 = vst [vmem:[%s6107 + $0x50] sm:%s6097] %v6128
                %v6130 = vld [vmem:[%s6106 + $0x58] sm:%s6097]
                %6131 = vst [vmem:[%s6107 + $0x58] sm:%s6097] %v6130
                %v6132 = vld [vmem:[%s6106 + $0x60] sm:%s6097]
                %6133 = vst [vmem:[%s6107 + $0x60] sm:%s6097] %v6132
                %v6134 = vld [vmem:[%s6106 + $0x68] sm:%s6097]
                %6135 = vst [vmem:[%s6107 + $0x68] sm:%s6097] %v6134
                %v6136 = vld [vmem:[%s6106 + $0x70] sm:%s6097]
                %6137 = vst [vmem:[%s6107 + $0x70] sm:%s6097] %v6136
                %v6138 = vld [vmem:[%s6106 + $0x78] sm:%s6097]
                %6139 = vst [vmem:[%s6107 + $0x78] sm:%s6097] %v6138
                %v6140 = vld [vmem:[%s6106 + $0x80] sm:%s6097]
                %6141 = vst [vmem:[%s6107 + $0x80] sm:%s6097] %v6140
                %v6142 = vld [vmem:[%s6106 + $0x88] sm:%s6097]
                %6143 = vst [vmem:[%s6107 + $0x88] sm:%s6097] %v6142
                %v6144 = vld [vmem:[%s6106 + $0x90] sm:%s6097]
                %6145 = vst [vmem:[%s6107 + $0x90] sm:%s6097] %v6144
                %v6146 = vld [vmem:[%s6106 + $0x98] sm:%s6097]
                %6147 = vst [vmem:[%s6107 + $0x98] sm:%s6097] %v6146
                %v6148 = vld [vmem:[%s6106 + $0xa0] sm:%s6097]
                %6149 = vst [vmem:[%s6107 + $0xa0] sm:%s6097] %v6148
                %v6150 = vld [vmem:[%s6106 + $0xa8] sm:%s6097]
                %6151 = vst [vmem:[%s6107 + $0xa8] sm:%s6097] %v6150
                %v6152 = vld [vmem:[%s6106 + $0xb0] sm:%s6097]
                %6153 = vst [vmem:[%s6107 + $0xb0] sm:%s6097] %v6152
                %v6154 = vld [vmem:[%s6106 + $0xb8] sm:%s6097]
                %6155 = vst [vmem:[%s6107 + $0xb8] sm:%s6097] %v6154
                %v6156 = vld [vmem:[%s6106 + $0xc0] sm:%s6097]
                %6157 = vst [vmem:[%s6107 + $0xc0] sm:%s6097] %v6156
                %v6158 = vld [vmem:[%s6106 + $0xc8] sm:%s6097]
                %6159 = vst [vmem:[%s6107 + $0xc8] sm:%s6097] %v6158
                %v6160 = vld [vmem:[%s6106 + $0xd0] sm:%s6097]
                %6161 = vst [vmem:[%s6107 + $0xd0] sm:%s6097] %v6160
                %v6162 = vld [vmem:[%s6106 + $0xd8] sm:%s6097]
                %6163 = vst [vmem:[%s6107 + $0xd8] sm:%s6097] %v6162
                %v6164 = vld [vmem:[%s6106 + $0xe0] sm:%s6097]
                %6165 = vst [vmem:[%s6107 + $0xe0] sm:%s6097] %v6164
                %v6166 = vld [vmem:[%s6106 + $0xe8] sm:%s6097]
                %6167 = vst [vmem:[%s6107 + $0xe8] sm:%s6097] %v6166
                %v6168 = vld [vmem:[%s6106 + $0xf0] sm:%s6097]
                %6169 = vst [vmem:[%s6107 + $0xf0] sm:%s6097] %v6168
                %v6170 = vld [vmem:[%s6106 + $0xf8] sm:%s6097]
                %6171 = vst [vmem:[%s6107 + $0xf8] sm:%s6097] %v6170
                %s6172 = sadd.s32 1, %s6105
                %p6173 = scmp.ge.s32.totalorder %s6172, %s6098
                %s6174 = scalar_select %p6173, 0, %s6172
                %s6175 = smul.u32 %s6174, 256
                %s6176 = smul.u32 %s6174, 256
                %s6177 = scalar_lea.vmem %s5840, %s6175 [#allocation7]
                %s6178 = scalar_lea.vmem %s6088, %s6176
              $region105: #{gate_forward.1} parent=99 // loop_footer
                %s6102 = sadd.s32 %s6100, 1
              $region106: #{gate_forward.1} parent=99 // loop_footer_branch
                %6099 = sbr.rel target = $region102
              $region107: #{gate_forward.1} parent=99 // loop_exit
                _
              %s6179 = sshrl.u32 %s6084, 5
              %s6180 = sand.u32 %s6084, 31
              %s6181 = smul.u32 %s6179, 32
              %s6182 = smul.u32 8, %s6181
              %s6183 = scalar_lea.vmem %s5840, %s6182 [#allocation7]
              %s6184 = smul.u32 8, %s6181
              %s6185 = scalar_lea.vmem %s6088, %s6184
              // While loop
              $region108: #{gate_forward.1} parent=99 // loop_pre_header
                _
              $region109: #{gate_forward.1} parent=99 // loop_header
                %s6187 = sphi 0, %s6189
                %p6188 = scmp.ge.s32.totalorder %s6187, %s6180
                %s6192 = sphi 0, %s6199
                %s6193 = sphi %s6183, %s6202
                %s6194 = sphi %s6185, %s6203
              $region110: #{gate_forward.1} parent=99 // loop_header_branch
                %6191 = sbr.rel (%p6188) target = $region114
              $region111: #{gate_forward.1} parent=99 // loop_body
                %v6195 = vld [vmem:[%s6193] sm:%s6097]
                %6196 = vst [vmem:[%s6194] sm:%s6097] %v6195
                %s6197 = sadd.s32 1, %s6192
                %p6198 = scmp.ge.s32.totalorder %s6197, %s6180
                %s6199 = scalar_select %p6198, 0, %s6197
                %s6200 = smul.u32 %s6199, 8
                %s6201 = smul.u32 %s6199, 8
                %s6202 = scalar_lea.vmem %s6183, %s6200 [#allocation7]
                %s6203 = scalar_lea.vmem %s6185, %s6201
              $region112: #{gate_forward.1} parent=99 // loop_footer
                %s6189 = sadd.s32 %s6187, 1
              $region113: #{gate_forward.1} parent=99 // loop_footer_branch
                %6186 = sbr.rel target = $region109
              $region114: #{gate_forward.1} parent=99 // loop_exit
                _
            $region100: #{gate_forward.1} parent=91 // pred_fallthru
              _
          $region92: #{gate_forward.1} parent=87 // pred_fallthru
            _
          %6314 = vnop
        $region88: #{gate_forward.1} parent=27 // pred_fallthru
          _
      $region28: #{gate_forward.1} parent=5 // pred_fallthru
        _
      %p6315 = scmp.le.s32.totalorder 2, %s14
      // Predicated region
      $region137: #{gate_forward.1} parent=5 // pred_check
        %p6316 = pneg %p6315
      $region138: #{gate_forward.1} parent=5 // pred_check_branch
        %6318 = sbr.rel (%p6316) target = $region140
      $region139: #{gate_forward.1} parent=5 // pred_region
        %s6319 = ssub.s32 %s14, 2
        // Predicated region
        $region141: #{gate_forward.1} parent=139 // pred_check
          %p6320 = pneg %p90
        $region142: #{gate_forward.1} parent=139 // pred_check_branch
          %6322 = sbr.rel (%p6320) target = $region144
        $region143: #{gate_forward.1} parent=139 // pred_region
          %s6323 = sand.u32 %s75, 1
          %s6324 = sand.u32 %s75, 1
          %s6325 = smul.addr %s6324, 128
          %s6326 = scalar_lea.vmem [#allocation6], %s6325
        $region144: #{gate_forward.1} parent=139 // pred_fallthru
          _
        // Predicated region
        $region145: #{gate_forward.1} parent=139 // pred_check
          %p6327 = pneg %p116
        $region146: #{gate_forward.1} parent=139 // pred_check_branch
          %6329 = sbr.rel (%p6327) target = $region148
        $region147: #{gate_forward.1} parent=139 // pred_region
          %s6330 = sand.u32 %s101, 1
          %s6331 = sand.u32 %s101, 1
          %s6332 = smul.addr %s6331, 256
          %s6333 = scalar_lea.vmem [#allocation7], %s6332
        $region148: #{gate_forward.1} parent=139 // pred_fallthru
          _
      $region140: #{gate_forward.1} parent=5 // pred_fallthru
        _
    $region6: #{gate_forward.1} parent=1 // loop_footer
      %s18 = sadd.s32 1, %s14
    $region7: #{gate_forward.1} parent=1 // loop_footer_branch
      %13 = sbr.rel target = $region3
    $region8: #{gate_forward.1} parent=1 // loop_exit
      _
    %6334 = vsyncpa [#allocation3], 1
    %s6335 = scalar_lea.sflag [#allocation3], 1
    %6336 = vsyncpa %s6335, 1
    %6337 = vsyncpa [#allocation5], 1

</llo_original>
